<compile_context>
chip_gen: v6e
topology: v6e:2x2x1
jax: 0.10.0
libtpu: 0.0.40
codegen_flags: <defaults>
</compile_context>

<pallas_src>
import functools
import math

import jax
import jax.numpy as jnp
from jax.experimental import pallas as pl
from jax.experimental.pallas import tpu as pltpu

SQRT2 = math.sqrt(2.0)
NEG_SLOPE = 0.2
HIGHEST = jax.lax.Precision.HIGHEST


# ------------------------------ Pallas kernels --------------------------------
def _conv_bias_lrelu_kernel(p_ref, w_ref, b_ref, o_ref):
    """o = leaky_relu(W @ patches + b, 0.2); output block is (Cout, lane_block)."""
    acc = jnp.dot(w_ref[...], p_ref[...],
                  preferred_element_type=jnp.float32, precision=HIGHEST)
    acc = acc + b_ref[...]
    o_ref[...] = jnp.where(acc >= 0.0, acc, NEG_SLOPE * acc)


def _conv2_tail_kernel(*refs, downsample, has_proj):
    """Fused tail: conv2 matmul + bias + LeakyReLU + [avg-pool via pooling matmul]
    + [1x1 projection of the identity] + (y + identity) / sqrt(2)."""
    it = iter(refs)
    p2_ref = next(it)
    w2_ref = next(it)
    b2_ref = next(it)
    pool_ref = next(it) if downsample else None
    xf_ref = next(it)
    wp_ref = next(it) if has_proj else None
    bp_ref = next(it) if has_proj else None
    o_ref = next(it)

    y = jnp.dot(w2_ref[...], p2_ref[...],
                preferred_element_type=jnp.float32, precision=HIGHEST)
    y = y + b2_ref[...]
    y = jnp.where(y >= 0.0, y, NEG_SLOPE * y)

    ident = xf_ref[...]
    if downsample:
        pool = pool_ref[...]
        y = jnp.dot(y, pool, preferred_element_type=jnp.float32, precision=HIGHEST)
        ident = jnp.dot(ident, pool, preferred_element_type=jnp.float32,
                        precision=HIGHEST)
    if has_proj:
        ident = jnp.dot(wp_ref[...], ident,
                        preferred_element_type=jnp.float32, precision=HIGHEST)
        ident = ident + bp_ref[...]

    o_ref[...] = (y + ident) * (1.0 / SQRT2)


# ------------------------------ Pallas wrappers --------------------------------
def conv_bias_lrelu(patches, wmat, bias):
    """patches: (K, S) lane-dense, wmat: (Cout, K), bias: (Cout,) -> (Cout, S)."""
    K, S = patches.shape
    Cout = wmat.shape[0]
    s_blk = 256 if (S % 256 == 0 and S > 256) else S
    return pl.pallas_call(
        _conv_bias_lrelu_kernel,
        grid=(S // s_blk,),
        out_shape=jax.ShapeDtypeStruct((Cout, S), jnp.float32),
        in_specs=[
            pl.BlockSpec((K, s_blk), lambda i: (0, i)),
            pl.BlockSpec((Cout, K), lambda i: (0, 0)),
            pl.BlockSpec((Cout, 1), lambda i: (0, 0)),
        ],
        out_specs=pl.BlockSpec((Cout, s_blk), lambda i: (0, i)),
        compiler_params=pltpu.CompilerParams(dimension_semantics=("parallel",)),
    )(patches.astype(jnp.float32), wmat.astype(jnp.float32),
      bias.reshape(-1, 1).astype(jnp.float32))


def conv2_tail(p2, w2m, b2, xf, pool=None, wpm=None, bpm=None):
    """Single fused kernel for conv2 + LeakyReLU + [pool] + [proj] + residual merge."""
    downsample = pool is not None
    has_proj = wpm is not None
    Cout = w2m.shape[0]
    S = p2.shape[1]
    So = pool.shape[1] if downsample else S

    inputs = [p2.astype(jnp.float32), w2m.astype(jnp.float32),
              b2.reshape(-1, 1).astype(jnp.float32)]
    if downsample:
        inputs.append(pool.astype(jnp.float32))
    inputs.append(xf.astype(jnp.float32))
    if has_proj:
        inputs.append(wpm.astype(jnp.float32))
        inputs.append(bpm.reshape(-1, 1).astype(jnp.float32))

    in_specs = [pl.BlockSpec(a.shape, lambda i: (0, 0)) for a in inputs]  # all 2-D
    kern = functools.partial(_conv2_tail_kernel,
                             downsample=downsample, has_proj=has_proj)
    return pl.pallas_call(
        kern,
        grid=(1,),
        out_shape=jax.ShapeDtypeStruct((Cout, So), jnp.float32),
        in_specs=in_specs,
        out_specs=pl.BlockSpec((Cout, So), lambda i: (0, 0)),
        compiler_params=pltpu.CompilerParams(dimension_semantics=("arbitrary",)),
    )(*inputs)


# ---------------------------- addressing glue (XLA) ----------------------------
def add_coords_nchw(x):
    """AddCoords(with_r=False): cat([x, xx (varies along H), yy (varies along W)])."""
    B, _, H, W = x.shape
    xx = jnp.arange(H, dtype=jnp.float32) / max(H - 1, 1) * 2.0 - 1.0
    yy = jnp.arange(W, dtype=jnp.float32) / max(W - 1, 1) * 2.0 - 1.0
    xx = jnp.broadcast_to(xx[:, None], (H, W))
    yy = jnp.broadcast_to(yy[None, :], (H, W))
    coords = jnp.broadcast_to(jnp.stack([xx, yy])[None], (B, 2, H, W))
    return jnp.concatenate([x.astype(jnp.float32), coords], axis=1)


def im2col_cfirst(x, ksize, stride, padding):
    """NCHW -> (C*k*k, B*Ho*Wo); rows ordered c*k*k + dy*k + dx (matches
    w.reshape(Cout, C*k*k)); columns ordered b*Ho*Wo + ho*Wo + wo (lane-dense)."""
    B, C, H, W = x.shape
    xp = jnp.pad(x, ((0, 0), (0, 0), (padding, padding), (padding, padding)))
    Hp, Wp = H + 2 * padding, W + 2 * padding
    Ho = (Hp - ksize) // stride + 1
    Wo = (Wp - ksize) // stride + 1
    taps = [xp[:, :, dy:dy + stride * (Ho - 1) + 1:stride,
                     dx:dx + stride * (Wo - 1) + 1:stride]
            for dy in range(ksize) for dx in range(ksize)]
    t = jnp.stack(taps, axis=2)                    # (B, C, k*k, Ho, Wo)
    t = t.transpose(1, 2, 0, 3, 4)                 # (C, k*k, B, Ho, Wo)
    return t.reshape(C * ksize * ksize, B * Ho * Wo), (Ho, Wo)


def pad_contraction(patches, wmat, mult=8):
    """Zero-pad contraction dim (patch rows / weight cols) to a multiple of 8."""
    K = patches.shape[0]
    Kp = ((K + mult - 1) // mult) * mult
    if Kp != K:
        patches = jnp.pad(patches, ((0, Kp - K), (0, 0)))
        wmat = jnp.pad(wmat, ((0, 0), (0, Kp - K)))
    return patches, wmat


def make_avgpool2_matrix(B, H, W):
    """Constant (B*H*W, B*Ho*Wo) matrix P with y_flat @ P == avg_pool2d(y, 2) flat."""
    Ho, Wo = H // 2, W // 2
    i_in = jnp.arange(B * H * W)
    b_i, r_i = i_in // (H * W), i_in % (H * W)
    h_i, w_i = r_i // W, r_i % W
    i_out = jnp.arange(B * Ho * Wo)
    b_o, r_o = i_out // (Ho * Wo), i_out % (Ho * Wo)
    h_o, w_o = r_o // Wo, r_o % Wo
    match = ((b_i[:, None] == b_o[None, :])
             & ((h_i // 2)[:, None] == h_o[None, :])
             & ((w_i // 2)[:, None] == w_o[None, :])
             & (h_i < 2 * Ho)[:, None] & (w_i < 2 * Wo)[:, None])
    return 0.25 * match.astype(jnp.float32)


# -------------------------------- forward pass ---------------------------------
@functools.partial(jax.jit, static_argnames=("stride", "downsample"))
def residual_coordconv_block(params, x, stride=1, downsample=False):
    x = x.astype(jnp.float32)
    B, Cin, H, W = x.shape
    planes = params["w1"].shape[0]
    has_proj = "wproj" in params        # proj exists iff inplanes != planes

    # CoordConv1 (3x3, stride, pad=1) + LeakyReLU(0.2): one fused Pallas matmul.
    p1, (H1, W1) = im2col_cfirst(add_coords_nchw(x), 3, stride, 1)
    w1m = params["w1"].reshape(planes, -1)
    p1, w1m = pad_contraction(p1, w1m)
    y1 = conv_bias_lrelu(p1, w1m, params["b1"])                 # (planes, B*H1*W1)
    y1_nchw = y1.reshape(planes, B, H1, W1).transpose(1, 0, 2, 3)

    # The residual merge requires the conv branch to keep the identity's size.
    assert (H1, W1) == (H, W), "ResidualCoordConvBlock requires stride=1"

    # CoordConv2 + LeakyReLU + [avg_pool2d(2)] + [1x1 proj] + merge: one fused kernel.
    p2, (H2, W2) = im2col_cfirst(add_coords_nchw(y1_nchw), 3, 1, 1)
    w2m = params["w2"].reshape(planes, -1)
    p2, w2m = pad_contraction(p2, w2m)

    xf = x.transpose(1, 0, 2, 3).reshape(Cin, B * H * W)        # identity, lane-dense
    pool = make_avgpool2_matrix(B, H2, W2) if downsample else None
    Ho, Wo = (H2 // 2, W2 // 2) if downsample else (H2, W2)

    wpm = bpm = None
    if has_proj:
        wpm = params["wproj"].reshape(planes, Cin)
        xf, wpm = pad_contraction(xf, wpm)
        bpm = params["bproj"]

    out = conv2_tail(p2, w2m, params["b2"], xf, pool=pool, wpm=wpm, bpm=bpm)
    return out.reshape(planes, B, Ho, Wo).transpose(1, 0, 2, 3)


# ------------------------ pure-JAX reference (for checking) --------------------
def _reference_forward(params, x, stride=1, downsample=False):
    def conv(x_, w, b, s, p):
        y = jax.lax.conv_general_dilated(
            x_, w, window_strides=(s, s), padding=[(p, p), (p, p)],
            dimension_numbers=("NCHW", "OIHW", "NCHW"), precision=HIGHEST)
        return y + b[None, :, None, None]

    def lrelu(v):
        return jnp.where(v >= 0.0, v, NEG_SLOPE * v)

    def avgpool2(v):
        B, C, H, W = v.shape
        return v[:, :, :H // 2 * 2, :W // 2 * 2].reshape(
            B, C, H // 2, 2, W // 2, 2).mean(axis=(3, 5))

    y = lrelu(conv(add_coords_nchw(x), params["w1"], params["b1"], stride, 1))
    y = lrelu(conv(add_coords_nchw(y), params["w2"], params["b2"], 1, 1))
    ident = x.astype(jnp.float32)
    if downsample:
        y, ident = avgpool2(y), avgpool2(ident)
    if "wproj" in params:
        ident = conv(ident, params["wproj"], params["bproj"], 1, 0)
    return (y + ident) / SQRT2


# ------------------------------------ main --------------------------------------
if __name__ == "__main__":
    key = jax.random.PRNGKey(0)
    ks = jax.random.split(key, 10)
    B, Cin, H, W = 2, 4, 16, 16
    planes = 32

    def conv_w(k, cout, cin, ksize):
        return (jax.random.normal(k, (cout, cin, ksize, ksize), jnp.float32)
                / math.sqrt(cin * ksize * ksize))

    # Config A: inplanes != planes -> 1x1 projection, downsample=True (avg_pool path).
    params_a = {
        "w1": conv_w(ks[0], planes, Cin + 2, 3),
        "b1": 0.1 * jax.random.normal(ks[1], (planes,), jnp.float32),
        "w2": conv_w(ks[2], planes, planes + 2, 3),
        "b2": 0.1 * jax.random.normal(ks[3], (planes,), jnp.float32),
        "wproj": conv_w(ks[4], planes, Cin, 1),
        "bproj": 0.1 * jax.random.normal(ks[5], (planes,), jnp.float32),
    }
    x_a = jax.random.normal(ks[6], (B, Cin, H, W), jnp.float32)
    out_a = jax.block_until_ready(
        residual_coordconv_block(params_a, x_a, downsample=True))
    assert out_a.shape == (B, planes, H // 2, W // 2), out_a.shape
    err_a = float(jnp.max(jnp.abs(out_a - _reference_forward(
        params_a, x_a, downsample=True))))
    assert err_a < 1e-2, f"config A mismatch: {err_a}"

    # Config B: inplanes == planes -> proj is None, downsample=False.
    params_b = {
        "w1": conv_w(ks[7], planes, planes + 2, 3),
        "b1": 0.1 * jax.random.normal(ks[8], (planes,), jnp.float32),
        "w2": params_a["w2"],
        "b2": params_a["b2"],
    }
    x_b = jax.random.normal(ks[9], (B, planes, H, W), jnp.float32)
    out_b = jax.block_until_ready(
        residual_coordconv_block(params_b, x_b, downsample=False))
    assert out_b.shape == (B, planes, H, W), out_b.shape
    err_b = float(jnp.max(jnp.abs(out_b - _reference_forward(
        params_b, x_b, downsample=False))))
    assert err_b < 1e-2, f"config B mismatch: {err_b}"

    print("KERNEL_OK")
</pallas_src>

<mosaic_0001>
module attributes {stable_mosaic.version = 11 : i64} {
  func.func @_conv_bias_lrelu_kernel(%arg0: i32, %arg1: memref<56x256xf32, #tpu.memory_space<vmem>>, %arg2: memref<32x56xf32, #tpu.memory_space<vmem>>, %arg3: memref<32x1xf32, #tpu.memory_space<vmem>>, %arg4: memref<32x256xf32, #tpu.memory_space<vmem>>) attributes {dimension_semantics = [#tpu.dimension_semantics<parallel>], iteration_bounds = array<i64: 2>, scalar_prefetch = 0 : i64, scratch_operands = 0 : i64, tpu.core_type = #tpu.core_type<tc>, window_params = [{transform_indices = @transform_0, window_bounds = array<i64: 56, 256>}, {pipeline_mode = #tpu.pipeline_mode<synchronous>, transform_indices = @transform_1, window_bounds = array<i64: 32, 56>}, {pipeline_mode = #tpu.pipeline_mode<synchronous>, transform_indices = @transform_2, window_bounds = array<i64: 32, 1>}, {transform_indices = @transform_3, window_bounds = array<i64: 32, 256>}]} {
    %c0 = arith.constant 0 : index
    %c0_0 = arith.constant 0 : index
    %0 = vector.load %arg2[%c0, %c0_0] : memref<32x56xf32, #tpu.memory_space<vmem>>, vector<32x56xf32>
    %c0_1 = arith.constant 0 : index
    %c0_2 = arith.constant 0 : index
    %1 = vector.load %arg1[%c0_1, %c0_2] : memref<56x256xf32, #tpu.memory_space<vmem>>, vector<56x256xf32>
    %cst = arith.constant dense<0.000000e+00> : vector<32x256xf32>
    %2 = tpu.matmul %0, %1, %cst {dimension_numbers = #tpu.dot_dimension_numbers<[1], [0], [0], [1], [0, 0, 1, 1], [], []>, precision = #tpu.contract_precision<fp32>} : vector<32x56xf32>, vector<56x256xf32>, vector<32x256xf32> -> vector<32x256xf32>
    %c0_3 = arith.constant 0 : index
    %c0_4 = arith.constant 0 : index
    %3 = vector.load %arg3[%c0_3, %c0_4] : memref<32x1xf32, #tpu.memory_space<vmem>>, vector<32x1xf32>
    %4 = vector.broadcast %3 : vector<32x1xf32> to vector<32x256xf32>
    %5 = arith.addf %2, %4 : vector<32x256xf32>
    %cst_5 = arith.constant 0.000000e+00 : f32
    %6 = vector.broadcast %cst_5 : f32 to vector<32x256xf32>
    %7 = arith.cmpf oge, %5, %6 : vector<32x256xf32>
    %cst_6 = arith.constant 2.000000e-01 : f32
    %8 = vector.broadcast %cst_6 : f32 to vector<32x256xf32>
    %9 = arith.mulf %8, %5 : vector<32x256xf32>
    %10 = arith.select %7, %5, %9 : vector<32x256xi1>, vector<32x256xf32>
    %c0_7 = arith.constant 0 : index
    %c0_8 = arith.constant 0 : index
    %11 = vector.load %arg4[%c0_7, %c0_8] : memref<32x256xf32, #tpu.memory_space<vmem>>, vector<32x256xf32>
    tpu.vector_store %arg4[%c0_7, %c0_8], %10 {strides = array<i32>} : memref<32x256xf32, #tpu.memory_space<vmem>>, vector<32x256xf32>,
    return
  }
  func.func @transform_0(%arg0: i32) -> (i32, i32) {
    %c0_i32 = arith.constant 0 : i32
    %c0_i32_0 = arith.constant 0 : i32
    return %c0_i32, %arg0 : i32, i32
  }
  func.func @transform_1(%arg0: i32) -> (i32, i32) {
    %c0_i32 = arith.constant 0 : i32
    %c0_i32_0 = arith.constant 0 : i32
    %c0_i32_1 = arith.constant 0 : i32
    return %c0_i32, %c0_i32_0 : i32, i32
  }
  func.func @transform_2(%arg0: i32) -> (i32, i32) {
    %c0_i32 = arith.constant 0 : i32
    %c0_i32_0 = arith.constant 0 : i32
    %c0_i32_1 = arith.constant 0 : i32
    return %c0_i32, %c0_i32_0 : i32, i32
  }
  func.func @transform_3(%arg0: i32) -> (i32, i32) {
    %c0_i32 = arith.constant 0 : i32
    %c0_i32_0 = arith.constant 0 : i32
    return %c0_i32, %arg0 : i32, i32
  }
}

module attributes {stable_mosaic.version = 11 : i64} {
  func.func @_conv2_tail_kernel(%arg0: i32, %arg1: memref<312x512xf32, #tpu.memory_space<vmem>>, %arg2: memref<32x312xf32, #tpu.memory_space<vmem>>, %arg3: memref<32x1xf32, #tpu.memory_space<vmem>>, %arg4: memref<512x128xf32, #tpu.memory_space<vmem>>, %arg5: memref<8x512xf32, #tpu.memory_space<vmem>>, %arg6: memref<32x8xf32, #tpu.memory_space<vmem>>, %arg7: memref<32x1xf32, #tpu.memory_space<vmem>>, %arg8: memref<32x128xf32, #tpu.memory_space<vmem>>) attributes {dimension_semantics = [#tpu.dimension_semantics<arbitrary>], iteration_bounds = array<i64: 1>, scalar_prefetch = 0 : i64, scratch_operands = 0 : i64, tpu.core_type = #tpu.core_type<tc>, window_params = [{pipeline_mode = #tpu.pipeline_mode<synchronous>, transform_indices = @transform_0, window_bounds = array<i64: 312, 512>}, {pipeline_mode = #tpu.pipeline_mode<synchronous>, transform_indices = @transform_1, window_bounds = array<i64: 32, 312>}, {pipeline_mode = #tpu.pipeline_mode<synchronous>, transform_indices = @transform_2, window_bounds = array<i64: 32, 1>}, {pipeline_mode = #tpu.pipeline_mode<synchronous>, transform_indices = @transform_3, window_bounds = array<i64: 512, 128>}, {pipeline_mode = #tpu.pipeline_mode<synchronous>, transform_indices = @transform_4, window_bounds = array<i64: 8, 512>}, {pipeline_mode = #tpu.pipeline_mode<synchronous>, transform_indices = @transform_5, window_bounds = array<i64: 32, 8>}, {pipeline_mode = #tpu.pipeline_mode<synchronous>, transform_indices = @transform_6, window_bounds = array<i64: 32, 1>}, {pipeline_mode = #tpu.pipeline_mode<synchronous>, transform_indices = @transform_7, window_bounds = array<i64: 32, 128>}]} {
    %c0 = arith.constant 0 : index
    %c0_0 = arith.constant 0 : index
    %0 = vector.load %arg2[%c0, %c0_0] : memref<32x312xf32, #tpu.memory_space<vmem>>, vector<32x312xf32>
    %c0_1 = arith.constant 0 : index
    %c0_2 = arith.constant 0 : index
    %1 = vector.load %arg1[%c0_1, %c0_2] : memref<312x512xf32, #tpu.memory_space<vmem>>, vector<312x512xf32>
    %cst = arith.constant dense<0.000000e+00> : vector<32x512xf32>
    %2 = tpu.matmul %0, %1, %cst {dimension_numbers = #tpu.dot_dimension_numbers<[1], [0], [0], [1], [0, 0, 1, 1], [], []>, precision = #tpu.contract_precision<fp32>} : vector<32x312xf32>, vector<312x512xf32>, vector<32x512xf32> -> vector<32x512xf32>
    %c0_3 = arith.constant 0 : index
    %c0_4 = arith.constant 0 : index
    %3 = vector.load %arg3[%c0_3, %c0_4] : memref<32x1xf32, #tpu.memory_space<vmem>>, vector<32x1xf32>
    %4 = vector.broadcast %3 : vector<32x1xf32> to vector<32x512xf32>
    %5 = arith.addf %2, %4 : vector<32x512xf32>
    %cst_5 = arith.constant 0.000000e+00 : f32
    %6 = vector.broadcast %cst_5 : f32 to vector<32x512xf32>
    %7 = arith.cmpf oge, %5, %6 : vector<32x512xf32>
    %cst_6 = arith.constant 2.000000e-01 : f32
    %8 = vector.broadcast %cst_6 : f32 to vector<32x512xf32>
    %9 = arith.mulf %8, %5 : vector<32x512xf32>
    %10 = arith.select %7, %5, %9 : vector<32x512xi1>, vector<32x512xf32>
    %c0_7 = arith.constant 0 : index
    %c0_8 = arith.constant 0 : index
    %11 = vector.load %arg5[%c0_7, %c0_8] : memref<8x512xf32, #tpu.memory_space<vmem>>, vector<8x512xf32>
    %c0_9 = arith.constant 0 : index
    %c0_10 = arith.constant 0 : index
    %12 = vector.load %arg4[%c0_9, %c0_10] : memref<512x128xf32, #tpu.memory_space<vmem>>, vector<512x128xf32>
    %cst_11 = arith.constant dense<0.000000e+00> : vector<32x128xf32>
    %13 = tpu.matmul %10, %12, %cst_11 {dimension_numbers = #tpu.dot_dimension_numbers<[1], [0], [0], [1], [0, 0, 1, 1], [], []>, precision = #tpu.contract_precision<fp32>} : vector<32x512xf32>, vector<512x128xf32>, vector<32x128xf32> -> vector<32x128xf32>
    %cst_12 = arith.constant dense<0.000000e+00> : vector<8x128xf32>
    %14 = tpu.matmul %11, %12, %cst_12 {dimension_numbers = #tpu.dot_dimension_numbers<[1], [0], [0], [1], [0, 0, 1, 1], [], []>, precision = #tpu.contract_precision<fp32>} : vector<8x512xf32>, vector<512x128xf32>, vector<8x128xf32> -> vector<8x128xf32>
    %c0_13 = arith.constant 0 : index
    %c0_14 = arith.constant 0 : index
    %15 = vector.load %arg6[%c0_13, %c0_14] : memref<32x8xf32, #tpu.memory_space<vmem>>, vector<32x8xf32>
    %cst_15 = arith.constant dense<0.000000e+00> : vector<32x128xf32>
    %16 = tpu.matmul %15, %14, %cst_15 {dimension_numbers = #tpu.dot_dimension_numbers<[1], [0], [0], [1], [0, 0, 1, 1], [], []>, precision = #tpu.contract_precision<fp32>} : vector<32x8xf32>, vector<8x128xf32>, vector<32x128xf32> -> vector<32x128xf32>
    %c0_16 = arith.constant 0 : index
    %c0_17 = arith.constant 0 : index
    %17 = vector.load %arg7[%c0_16, %c0_17] : memref<32x1xf32, #tpu.memory_space<vmem>>, vector<32x1xf32>
    %18 = vector.broadcast %17 : vector<32x1xf32> to vector<32x128xf32>
    %19 = arith.addf %16, %18 : vector<32x128xf32>
    %20 = arith.addf %13, %19 : vector<32x128xf32>
    %cst_18 = arith.constant 0.707106769 : f32
    %21 = vector.broadcast %cst_18 : f32 to vector<32x128xf32>
    %22 = arith.mulf %20, %21 : vector<32x128xf32>
    %c0_19 = arith.constant 0 : index
    %c0_20 = arith.constant 0 : index
    %23 = vector.load %arg8[%c0_19, %c0_20] : memref<32x128xf32, #tpu.memory_space<vmem>>, vector<32x128xf32>
    tpu.vector_store %arg8[%c0_19, %c0_20], %22 {strides = array<i32>} : memref<32x128xf32, #tpu.memory_space<vmem>>, vector<32x128xf32>,
    return
  }
  func.func @transform_0(%arg0: i32) -> (i32, i32) {
    %c0_i32 = arith.constant 0 : i32
    %c0_i32_0 = arith.constant 0 : i32
    %c0_i32_1 = arith.constant 0 : i32
    return %c0_i32, %c0_i32_0 : i32, i32
  }
  func.func @transform_1(%arg0: i32) -> (i32, i32) {
    %c0_i32 = arith.constant 0 : i32
    %c0_i32_0 = arith.constant 0 : i32
    %c0_i32_1 = arith.constant 0 : i32
    return %c0_i32, %c0_i32_0 : i32, i32
  }
  func.func @transform_2(%arg0: i32) -> (i32, i32) {
    %c0_i32 = arith.constant 0 : i32
    %c0_i32_0 = arith.constant 0 : i32
    %c0_i32_1 = arith.constant 0 : i32
    return %c0_i32, %c0_i32_0 : i32, i32
  }
  func.func @transform_3(%arg0: i32) -> (i32, i32) {
    %c0_i32 = arith.constant 0 : i32
    %c0_i32_0 = arith.constant 0 : i32
    %c0_i32_1 = arith.constant 0 : i32
    return %c0_i32, %c0_i32_0 : i32, i32
  }
  func.func @transform_4(%arg0: i32) -> (i32, i32) {
    %c0_i32 = arith.constant 0 : i32
    %c0_i32_0 = arith.constant 0 : i32
    %c0_i32_1 = arith.constant 0 : i32
    return %c0_i32, %c0_i32_0 : i32, i32
  }
  func.func @transform_5(%arg0: i32) -> (i32, i32) {
    %c0_i32 = arith.constant 0 : i32
    %c0_i32_0 = arith.constant 0 : i32
    %c0_i32_1 = arith.constant 0 : i32
    return %c0_i32, %c0_i32_0 : i32, i32
  }
  func.func @transform_6(%arg0: i32) -> (i32, i32) {
    %c0_i32 = arith.constant 0 : i32
    %c0_i32_0 = arith.constant 0 : i32
    %c0_i32_1 = arith.constant 0 : i32
    return %c0_i32, %c0_i32_0 : i32, i32
  }
  func.func @transform_7(%arg0: i32) -> (i32, i32) {
    %c0_i32 = arith.constant 0 : i32
    %c0_i32_0 = arith.constant 0 : i32
    %c0_i32_1 = arith.constant 0 : i32
    return %c0_i32, %c0_i32_0 : i32, i32
  }
}

</mosaic_0001>

<llo_original>
// kernel: residual_coordconv_block.2
$region0: #{residual_coordconv_block.2}
  #allocation0 [shape = 'u32[]', space=smem, size = 0x4, offset = 0x4, fixed_abs, tag = 'smem constant byte address 0x4 - core index']
  #allocation1 [shape = 'u32[144,128]{1,0:T(1,128)}', space=vmem, size = 0x12000, scoped, tag = 'internal scratch']
  %s0 = inlined_call_operand.vmem [shape: f32[56,512], index: 0, kind: input, shape index: {}]
  %s1 = inlined_call_operand.vmem [shape: f32[32,56], index: 1, kind: input, shape index: {}]
  %s2 = inlined_call_operand.vmem [shape: f32[32,1], index: 2, kind: input, shape index: {}]
  %s3 = inlined_call_operand.vmem [shape: f32[32,512], index: 3, kind: output, shape index: {}]
  %s4 = sld [smem:[#allocation0]]
  $region87: #{residual_coordconv_block.2} parent=0
    _
  %s6 = ssub.s32 1, %s4
  %s7 = scalar_select 0, %s6, %s4
  $region1: #{residual_coordconv_block.2} parent=0
    #allocation2 [shape = 'u8[114688]{0}', space=vmem, size = 0x1c000, scoped, tag = 'input window, operand 0']
    #allocation3 [shape = 'u8[65536]{0}', space=vmem, size = 0x10000, scoped, tag = 'output window, operand 0']
    loop: start=0, step=1, limit=4
    $region2: #{residual_coordconv_block.2} parent=1 // loop_pre_header
      _
    $region3: #{residual_coordconv_block.2} parent=1 // loop_header
      %s9 = sphi 0, %s13
      %p10 = scmp.ge.s32.totalorder %s9, 4
      %s19 = sphi 0, %s21
      %s22 = sphi 0, %s19
      %s23 = sphi 0, %s22
      %s39 = sphi 0, %s23
      %s43 = sphi 0, %s43
      %s45 = sphi 0, %s43
      %s46 = sphi 0, %s45
      %s60 = sphi 0, %s46
      %s64 = sphi 0, %s64
      %s66 = sphi 0, %s64
      %s67 = sphi 0, %s66
      %s81 = sphi 0, %s67
      %s87 = sphi 0, %s89
      %s90 = sphi 0, %s87
      %s91 = sphi 0, %s90
      %s107 = sphi 0, %s91
    $region4: #{residual_coordconv_block.2} parent=1 // loop_header_branch
      %12 = sbr.rel (%p10) target = $region8
    $region5: #{residual_coordconv_block.2} parent=1 // loop_body
      %s14 = ssub.s32 %s9, 1
      %s15 = ssub.s32 %s9, 2
      %s16 = sadd.s32 %s9, 1
      %s17 = ssub.s32 %s9, %s16
      %p18 = scmp.eq.s32.totalorder %s17, 0
      %s20 = sadd.s32 %s19, 1
      %s21 = scalar_select %p18, %s19, %s20
      %p24 = pneg %p18
      %p25 = scmp.eq.s32.totalorder %s9, 1
      %p26 = por %p24, %p25
      %p27 = scmp.ne.s32.totalorder %s19, %s22
      %p28 = scmp.eq.s32.totalorder %s9, 0
      %p29 = por %p27, %p28
      %p30 = scmp.ne.s32.totalorder %s19, %s22
      %p31 = scmp.eq.s32.totalorder %s14, 1
      %p32 = por %p30, %p31
      %p33 = scmp.ne.s32.totalorder %s22, %s23
      %p34 = scmp.eq.s32.totalorder %s14, 0
      %p35 = por %p33, %p34
      %p36 = scmp.ne.s32.totalorder %s22, %s23
      %p37 = scmp.eq.s32.totalorder %s15, 1
      %p38 = por %p36, %p37
      %p40 = scmp.ne.s32.totalorder %s23, %s39
      %p41 = scmp.eq.s32.totalorder %s15, 0
      %p42 = por %p40, %p41
      %s44 = sadd.s32 %s43, 1
      %p47 = scmp.eq.s32.totalorder %s9, 1
      %p48 = scmp.ne.s32.totalorder %s43, %s45
      %p49 = scmp.eq.s32.totalorder %s9, 0
      %p50 = por %p48, %p49
      %p51 = scmp.ne.s32.totalorder %s43, %s45
      %p52 = scmp.eq.s32.totalorder %s14, 1
      %p53 = por %p51, %p52
      %p54 = scmp.ne.s32.totalorder %s45, %s46
      %p55 = scmp.eq.s32.totalorder %s14, 0
      %p56 = por %p54, %p55
      %p57 = scmp.ne.s32.totalorder %s45, %s46
      %p58 = scmp.eq.s32.totalorder %s15, 1
      %p59 = por %p57, %p58
      %p61 = scmp.ne.s32.totalorder %s46, %s60
      %p62 = scmp.eq.s32.totalorder %s15, 0
      %p63 = por %p61, %p62
      %s65 = sadd.s32 %s64, 1
      %p68 = scmp.eq.s32.totalorder %s9, 1
      %p69 = scmp.ne.s32.totalorder %s64, %s66
      %p70 = scmp.eq.s32.totalorder %s9, 0
      %p71 = por %p69, %p70
      %p72 = scmp.ne.s32.totalorder %s64, %s66
      %p73 = scmp.eq.s32.totalorder %s14, 1
      %p74 = por %p72, %p73
      %p75 = scmp.ne.s32.totalorder %s66, %s67
      %p76 = scmp.eq.s32.totalorder %s14, 0
      %p77 = por %p75, %p76
      %p78 = scmp.ne.s32.totalorder %s66, %s67
      %p79 = scmp.eq.s32.totalorder %s15, 1
      %p80 = por %p78, %p79
      %p82 = scmp.ne.s32.totalorder %s67, %s81
      %p83 = scmp.eq.s32.totalorder %s15, 0
      %p84 = por %p82, %p83
      %s85 = ssub.s32 %s9, %s16
      %p86 = scmp.eq.s32.totalorder %s85, 0
      %s88 = sadd.s32 %s87, 1
      %s89 = scalar_select %p86, %s87, %s88
      %p92 = pneg %p86
      %p93 = scmp.eq.s32.totalorder %s9, 1
      %p94 = por %p92, %p93
      %p95 = scmp.ne.s32.totalorder %s87, %s90
      %p96 = scmp.eq.s32.totalorder %s9, 0
      %p97 = por %p95, %p96
      %p98 = scmp.ne.s32.totalorder %s87, %s90
      %p99 = scmp.eq.s32.totalorder %s14, 1
      %p100 = por %p98, %p99
      %p101 = scmp.ne.s32.totalorder %s90, %s91
      %p102 = scmp.eq.s32.totalorder %s14, 0
      %p103 = por %p101, %p102
      %p104 = scmp.ne.s32.totalorder %s90, %s91
      %p105 = scmp.eq.s32.totalorder %s15, 1
      %p106 = por %p104, %p105
      %p108 = scmp.ne.s32.totalorder %s91, %s107
      %p109 = scmp.eq.s32.totalorder %s15, 0
      %p110 = por %p108, %p109
      %p111 = scmp.le.s32.totalorder 1, %s9
      %p112 = scmp.lt.s32.totalorder %s9, 3
      %p113 = pnand %p111, %p112
      %p114 = pneg %p113
      // Predicated region
      $region9: #{residual_coordconv_block.2} parent=5 // pred_check
        _
      $region10: #{residual_coordconv_block.2} parent=5 // pred_check_branch
        %116 = sbr.rel (%p113) target = $region12
      $region11: #{residual_coordconv_block.2} parent=5 // pred_region
        %s117 = ssub.s32 %s9, 1
        // Predicated region
        $region13: #{residual_coordconv_block.2} parent=11 // pred_check
          %p118 = pneg %p56
        $region14: #{residual_coordconv_block.2} parent=11 // pred_check_branch
          %120 = sbr.rel (%p118) target = $region16
        $region15: #{residual_coordconv_block.2} parent=11 // pred_region
          _
        $region16: #{residual_coordconv_block.2} parent=11 // pred_fallthru
          _
        // Predicated region
        $region17: #{residual_coordconv_block.2} parent=11 // pred_check
          %p121 = pneg %p77
        $region18: #{residual_coordconv_block.2} parent=11 // pred_check_branch
          %123 = sbr.rel (%p121) target = $region20
        $region19: #{residual_coordconv_block.2} parent=11 // pred_region
          _
        $region20: #{residual_coordconv_block.2} parent=11 // pred_fallthru
          _
      $region12: #{residual_coordconv_block.2} parent=5 // pred_fallthru
        _
      %p124 = scmp.lt.s32.totalorder %s9, 2
      // Predicated region
      $region21: #{residual_coordconv_block.2} parent=5 // pred_check
        %p125 = pneg %p124
      $region22: #{residual_coordconv_block.2} parent=5 // pred_check_branch
        %127 = sbr.rel (%p125) target = $region24
      $region23: #{residual_coordconv_block.2} parent=5 // pred_region
        // Predicated region
        $region25: #{residual_coordconv_block.2} parent=23 // pred_check
          %p128 = pneg %p29
        $region26: #{residual_coordconv_block.2} parent=23 // pred_check_branch
          %130 = sbr.rel (%p128) target = $region28
        $region27: #{residual_coordconv_block.2} parent=23 // pred_region
          %s131 = sand.u32 %s19, 1
          %s132 = sand.u32 %s19, 1
          %s133 = smul.addr %s132, 112
          %s134 = scalar_lea.vmem [#allocation2], %s133
          %s135 = smul.u32 2, %s9
          %s136 = smul.addr %s135, 8
          %s137 = scalar_lea.vmem %s0, %s136
          // Predicated region
          $region29: #{residual_coordconv_block.2} parent=27 // pred_check
            _
          $region30: #{residual_coordconv_block.2} parent=27 // pred_check_branch
            %139 = sbr.rel (0) target = $region32
          $region31: #{residual_coordconv_block.2} parent=27 // pred_region
            // Predicated region
            $region33: #{residual_coordconv_block.2} parent=31 // pred_check
              _
            $region34: #{residual_coordconv_block.2} parent=31 // pred_check_branch
              %141 = sbr.rel (0) target = $region36
            $region35: #{residual_coordconv_block.2} parent=31 // pred_region
              loop: start=0, step=1, limit=1
              $region37: #{residual_coordconv_block.2} parent=35 // loop_pre_header
                _
              $region38: #{residual_coordconv_block.2} parent=35 // loop_header
                %s143 = sphi 0, %s147
                %p144 = scmp.ge.s32.totalorder %s143, 1
                %s148 = sphi %s137, %s137
                %s149 = sphi %s134, %s134
              $region39: #{residual_coordconv_block.2} parent=35 // loop_header_branch
                %146 = sbr.rel (%p144) target = $region43
              $region40: #{residual_coordconv_block.2} parent=35 // loop_body
                %v150 = vld [vmem:[%s148] sm:$0xff]
                %151 = vst [vmem:[%s149] sm:$0xff] %v150
                %v152 = vld [vmem:[%s148 + $0x8] sm:$0xff]
                %153 = vst [vmem:[%s149 + $0x8] sm:$0xff] %v152
                %v154 = vld [vmem:[%s148 + $0x20] sm:$0xff]
                %155 = vst [vmem:[%s149 + $0x10] sm:$0xff] %v154
                %v156 = vld [vmem:[%s148 + $0x28] sm:$0xff]
                %157 = vst [vmem:[%s149 + $0x18] sm:$0xff] %v156
                %v158 = vld [vmem:[%s148 + $0x40] sm:$0xff]
                %159 = vst [vmem:[%s149 + $0x20] sm:$0xff] %v158
                %v160 = vld [vmem:[%s148 + $0x48] sm:$0xff]
                %161 = vst [vmem:[%s149 + $0x28] sm:$0xff] %v160
                %v162 = vld [vmem:[%s148 + $0x60] sm:$0xff]
                %163 = vst [vmem:[%s149 + $0x30] sm:$0xff] %v162
                %v164 = vld [vmem:[%s148 + $0x68] sm:$0xff]
                %165 = vst [vmem:[%s149 + $0x38] sm:$0xff] %v164
                %v166 = vld [vmem:[%s148 + $0x80] sm:$0xff]
                %167 = vst [vmem:[%s149 + $0x40] sm:$0xff] %v166
                %v168 = vld [vmem:[%s148 + $0x88] sm:$0xff]
                %169 = vst [vmem:[%s149 + $0x48] sm:$0xff] %v168
                %v170 = vld [vmem:[%s148 + $0xa0] sm:$0xff]
                %171 = vst [vmem:[%s149 + $0x50] sm:$0xff] %v170
                %v172 = vld [vmem:[%s148 + $0xa8] sm:$0xff]
                %173 = vst [vmem:[%s149 + $0x58] sm:$0xff] %v172
                %v174 = vld [vmem:[%s148 + $0xc0] sm:$0xff]
                %175 = vst [vmem:[%s149 + $0x60] sm:$0xff] %v174
                %v176 = vld [vmem:[%s148 + $0xc8] sm:$0xff]
                %177 = vst [vmem:[%s149 + $0x68] sm:$0xff] %v176
              $region41: #{residual_coordconv_block.2} parent=35 // loop_footer
                %s147 = sadd.s32 1, %s143
              $region42: #{residual_coordconv_block.2} parent=35 // loop_footer_branch
                %142 = sbr.rel target = $region38
              $region43: #{residual_coordconv_block.2} parent=35 // loop_exit
                _
            $region36: #{residual_coordconv_block.2} parent=31 // pred_fallthru
              _
            // Predicated region
            $region44: #{residual_coordconv_block.2} parent=31 // pred_check
              _
            $region45: #{residual_coordconv_block.2} parent=31 // pred_check_branch
              %179 = sbr.rel target = $region47
            $region46: #{residual_coordconv_block.2} parent=31 // pred_region
              _
            $region47: #{residual_coordconv_block.2} parent=31 // pred_fallthru
              _
          $region32: #{residual_coordconv_block.2} parent=27 // pred_fallthru
            _
          %180 = vnop
        $region28: #{residual_coordconv_block.2} parent=23 // pred_fallthru
          _
      $region24: #{residual_coordconv_block.2} parent=5 // pred_fallthru
        _
      %p181 = scmp.le.s32.totalorder 1, %s9
      %p182 = scmp.lt.s32.totalorder %s9, 3
      %p183 = pnand %p181, %p182
      %p184 = pneg %p183
      // Predicated region
      $region48: #{residual_coordconv_block.2} parent=5 // pred_check
        _
      $region49: #{residual_coordconv_block.2} parent=5 // pred_check_branch
        %186 = sbr.rel (%p183) target = $region51
      $region50: #{residual_coordconv_block.2} parent=5 // pred_region
        %s187 = ssub.s32 %s9, 1
        %s188 = sand.u32 %s22, 1
        %s189 = sand.u32 %s22, 1
        %s190 = smul.addr %s189, 112
        %s191 = scalar_lea.vmem [#allocation2], %s190
        // Predicated region
        $region52: #{residual_coordconv_block.2} parent=50 // pred_check
          %p192 = pneg %p35
        $region53: #{residual_coordconv_block.2} parent=50 // pred_check_branch
          %194 = sbr.rel (%p192) target = $region55
        $region54: #{residual_coordconv_block.2} parent=50 // pred_region
          _
        $region55: #{residual_coordconv_block.2} parent=50 // pred_fallthru
          _
        %s195 = sand.u32 %s22, 1
        %s196 = sand.u32 %s22, 1
        %s197 = smul.addr %s196, 112
        %s198 = scalar_lea.vmem [#allocation2], %s197
        %p199 = pneg %p35
        %p200 = pneg %p32
        %p201 = pneg %p56
        %p202 = pneg %p53
        %p203 = pneg %p77
        %p204 = pneg %p74
        %p205 = pneg %p103
        %p206 = pneg %p100
        %s207 = sand.u32 %s90, 1
        %s208 = sand.u32 %s90, 1
        %s209 = smul.addr %s208, 64
        %s210 = scalar_lea.vmem [#allocation3], %s209
        %s211 = smul.u32 2, %s14
        %s212 = smul.u32 2, %s14
        %v213 = vld [vmem:[%s1] sm:$0xff]
        %v214 = vld [vmem:[%s1 + $0x8] sm:$0xff]
        %v215 = vld [vmem:[%s1 + $0x10] sm:$0xff]
        %v216 = vld [vmem:[%s1 + $0x18] sm:$0xff]
        %v217 = vld [vmem:[%s191] sm:$0xff]
        %v218 = vld [vmem:[%s191 + $0x8] sm:$0xff]
        %v219 = vld [vmem:[%s191 + $0x10] sm:$0xff]
        %v220 = vld [vmem:[%s191 + $0x18] sm:$0xff]
        %v221 = vld [vmem:[%s191 + $0x20] sm:$0xff]
        %v222 = vld [vmem:[%s191 + $0x28] sm:$0xff]
        %v223 = vld [vmem:[%s191 + $0x30] sm:$0xff]
        %v224 = vld [vmem:[%s191 + $0x38] sm:$0xff]
        %v225 = vld [vmem:[%s191 + $0x40] sm:$0xff]
        %v226 = vld [vmem:[%s191 + $0x48] sm:$0xff]
        %v227 = vld [vmem:[%s191 + $0x50] sm:$0xff]
        %v228 = vld [vmem:[%s191 + $0x58] sm:$0xff]
        %v229 = vld [vmem:[%s191 + $0x60] sm:$0xff]
        %v230 = vld [vmem:[%s191 + $0x68] sm:$0xff]
        %v231 = vld [vmem:[%s2] sm:$0xff]
        %v232 = vld [vmem:[%s2 + $0x8] sm:$0xff]
        %v233 = vld [vmem:[%s2 + $0x10] sm:$0xff]
        %v234 = vld [vmem:[%s2 + $0x18] sm:$0xff]
        %236 = vset.pattern.permute.xlu0 0
        %237 = vperm.xlu0 %236, %v231
        %v238 = vpop.permute.xlu0 %237
        %241 = vset.pattern.permute.xlu0 0
        %242 = vperm.xlu0 %241, %v232
        %v243 = vpop.permute.xlu0 %242
        %246 = vset.pattern.permute.xlu0 0
        %247 = vperm.xlu0 %246, %v233
        %v248 = vpop.permute.xlu0 %247
        %251 = vset.pattern.permute.xlu0 0
        %252 = vperm.xlu0 %251, %v234
        %v253 = vpop.permute.xlu0 %252
        %vm255 = vcmask 457728
        %v257 = vsel %vm255, %v213, 0
        %v260 = vsel %vm255, %v214, 0
        %v263 = vsel %vm255, %v215, 0
        %v266 = vsel %vm255, %v216, 0
        %268 = vmatprep.subr.mxu0 0.0
        %269 = vmatpush1.msra.mxu0 0.0
        %270 = vmatprep.subr.mxu0 0.0
        %271 = vmatpush1.msra.mxu0 0.0
        %272 = vmatprep.subr.mxu0 0.0
        %273 = vmatpush1.msra.mxu0 0.0
        %274 = vmatprep.subr.mxu0 0.0
        %275 = vmatpush1.msra.mxu0 0.0
        %276 = vmatprep.subr.mxu0 0.0
        %277 = vmatpush1.msra.mxu0 0.0
        %278 = vmatprep.subr.mxu0 0.0
        %279 = vmatpush1.msra.mxu0 0.0
        %280 = vmatprep.subr.mxu0 0.0
        %281 = vmatpush1.msra.mxu0 0.0
        %282 = vmatprep.subr.mxu0 0.0
        %283 = vmatpush1.msra.mxu0 0.0
        %284 = vmatprep.subr.mxu0 0.0
        %285 = vmatpush1.msra.mxu0 0.0
        %v286 = vand.u32 %v230, 4294901760
        %287 = vmatprep.subr.mxu0 %v286
        %v288 = vand.u32 %v229, 4294901760
        %289 = vmatpush1.msra.mxu0 %v288
        %v290 = vand.u32 %v228, 4294901760
        %291 = vmatprep.subr.mxu0 %v290
        %v292 = vand.u32 %v227, 4294901760
        %293 = vmatpush1.msra.mxu0 %v292
        %v294 = vand.u32 %v226, 4294901760
        %295 = vmatprep.subr.mxu0 %v294
        %v296 = vand.u32 %v225, 4294901760
        %297 = vmatpush1.msra.mxu0 %v296
        %v298 = vand.u32 %v224, 4294901760
        %299 = vmatprep.subr.mxu0 %v298
        %v300 = vand.u32 %v223, 4294901760
        %301 = vmatpush1.msra.mxu0 %v300
        %v302 = vand.u32 %v222, 4294901760
        %303 = vmatprep.subr.mxu0 %v302
        %v304 = vand.u32 %v221, 4294901760
        %305 = vmatpush1.msra.mxu0 %v304
        %v306 = vand.u32 %v220, 4294901760
        %307 = vmatprep.subr.mxu0 %v306
        %v308 = vand.u32 %v219, 4294901760
        %309 = vmatpush1.msra.mxu0 %v308
        %v310 = vand.u32 %v218, 4294901760
        %311 = vmatprep.subr.mxu0 %v310
        %v312 = vand.u32 %v217, 4294901760
        %313 = vmatpush1.msra.mxu0 %v312
        %314 = vmatprep.subr.mxu0 0.0
        %315 = vmatpush2.msra.mxu0 0.0
        %316 = vmatprep.subr.mxu0 0.0
        %317 = vmatpush2.msra.mxu0 0.0
        %318 = vmatprep.subr.mxu0 0.0
        %319 = vmatpush2.msra.mxu0 0.0
        %320 = vmatprep.subr.mxu0 0.0
        %321 = vmatpush2.msra.mxu0 0.0
        %322 = vmatprep.subr.mxu0 0.0
        %323 = vmatpush2.msra.mxu0 0.0
        %324 = vmatprep.subr.mxu0 0.0
        %325 = vmatpush2.msra.mxu0 0.0
        %326 = vmatprep.subr.mxu0 0.0
        %327 = vmatpush2.msra.mxu0 0.0
        %328 = vmatprep.subr.mxu0 0.0
        %329 = vmatpush2.msra.mxu0 0.0
        %330 = vmatprep.subr.mxu0 0.0
        %331 = vmatpush2.msra.mxu0 0.0
        %332 = vmatprep.subr.mxu0 0.0
        %333 = vmatpush2.msra.mxu0 0.0
        %334 = vmatprep.subr.mxu0 0.0
        %335 = vmatpush2.msra.mxu0 0.0
        %336 = vmatprep.subr.mxu0 0.0
        %337 = vmatpush2.msra.mxu0 0.0
        %338 = vmatprep.subr.mxu0 0.0
        %339 = vmatpush2.msra.mxu0 0.0
        %340 = vmatprep.subr.mxu0 0.0
        %341 = vmatpush2.msra.mxu0 0.0
        %342 = vmatprep.subr.mxu0 0.0
        %343 = vmatpush2.msra.mxu0 0.0
        %344 = vmatprep.subr.mxu0 0.0
        %345 = vmatpush2.msra.mxu0 0.0
        %346 = vmatprep.mubr.f32.mxu0 0.0
        %v347 = vand.u32 %v257, 4294901760
        %v348 = vsub.f32 %v257, %v347
        %v349 = vand.u32 %v348, 4294901760
        %v350 = vsub.f32 %v348, %v349
        %v351 = vand.u32 %v350, 4294901760
        %352 = vmatmul.mubr.f32.gmra.mxu0 %v351
        %v353 = vpop.f32.mrf.mxu0
        %v354 = vadd.f32 %v238, %v353
        %v355 = vpop.f32.mrf.mxu0
        %v356 = vadd.f32 %v238, %v355
        %357 = vmatprep.mubr.f32.mxu0 0.0
        %v358 = vand.u32 %v260, 4294901760
        %v359 = vsub.f32 %v260, %v358
        %v360 = vand.u32 %v359, 4294901760
        %v361 = vsub.f32 %v359, %v360
        %v362 = vand.u32 %v361, 4294901760
        %363 = vmatmul.mubr.f32.gmra.mxu0 %v362
        %v364 = vpop.f32.mrf.mxu0
        %v365 = vadd.f32 %v243, %v364
        %v366 = vpop.f32.mrf.mxu0
        %v367 = vadd.f32 %v243, %v366
        %368 = vmatprep.mubr.f32.mxu0 0.0
        %v369 = vand.u32 %v263, 4294901760
        %v370 = vsub.f32 %v263, %v369
        %v371 = vand.u32 %v370, 4294901760
        %v372 = vsub.f32 %v370, %v371
        %v373 = vand.u32 %v372, 4294901760
        %374 = vmatmul.mubr.f32.gmra.mxu0 %v373
        %v375 = vpop.f32.mrf.mxu0
        %v376 = vadd.f32 %v248, %v375
        %v377 = vpop.f32.mrf.mxu0
        %v378 = vadd.f32 %v248, %v377
        %379 = vmatprep.mubr.f32.mxu0 0.0
        %v380 = vand.u32 %v266, 4294901760
        %v381 = vsub.f32 %v266, %v380
        %v382 = vand.u32 %v381, 4294901760
        %v383 = vsub.f32 %v381, %v382
        %v384 = vand.u32 %v383, 4294901760
        %385 = vmatmul.mubr.f32.gmra.mxu0 %v384
        %v386 = vpop.f32.mrf.mxu0
        %v387 = vadd.f32 %v253, %v386
        %v388 = vpop.f32.mrf.mxu0
        %v389 = vadd.f32 %v253, %v388
        %390 = vdwg.mxu0
        %391 = vmatprep.subr.mxu0 0.0
        %392 = vmatpush1.msra.mxu0 0.0
        %393 = vmatprep.subr.mxu0 0.0
        %394 = vmatpush1.msra.mxu0 0.0
        %395 = vmatprep.subr.mxu0 0.0
        %396 = vmatpush1.msra.mxu0 0.0
        %397 = vmatprep.subr.mxu0 0.0
        %398 = vmatpush1.msra.mxu0 0.0
        %399 = vmatprep.subr.mxu0 0.0
        %400 = vmatpush1.msra.mxu0 0.0
        %401 = vmatprep.subr.mxu0 0.0
        %402 = vmatpush1.msra.mxu0 0.0
        %403 = vmatprep.subr.mxu0 0.0
        %404 = vmatpush1.msra.mxu0 0.0
        %405 = vmatprep.subr.mxu0 0.0
        %406 = vmatpush1.msra.mxu0 0.0
        %407 = vmatprep.subr.mxu0 0.0
        %408 = vmatpush1.msra.mxu0 0.0
        %v409 = vand.u32 %v230, 4294901760
        %v410 = vsub.f32 %v230, %v409
        %v411 = vand.u32 %v410, 4294901760
        %v412 = vsub.f32 %v410, %v411
        %v413 = vand.u32 %v412, 4294901760
        %414 = vmatprep.subr.mxu0 %v413
        %v415 = vand.u32 %v229, 4294901760
        %v416 = vsub.f32 %v229, %v415
        %v417 = vand.u32 %v416, 4294901760
        %v418 = vsub.f32 %v416, %v417
        %v419 = vand.u32 %v418, 4294901760
        %420 = vmatpush1.msra.mxu0 %v419
        %v421 = vand.u32 %v228, 4294901760
        %v422 = vsub.f32 %v228, %v421
        %v423 = vand.u32 %v422, 4294901760
        %v424 = vsub.f32 %v422, %v423
        %v425 = vand.u32 %v424, 4294901760
        %426 = vmatprep.subr.mxu0 %v425
        %v427 = vand.u32 %v227, 4294901760
        %v428 = vsub.f32 %v227, %v427
        %v429 = vand.u32 %v428, 4294901760
        %v430 = vsub.f32 %v428, %v429
        %v431 = vand.u32 %v430, 4294901760
        %432 = vmatpush1.msra.mxu0 %v431
        %v433 = vand.u32 %v226, 4294901760
        %v434 = vsub.f32 %v226, %v433
        %v435 = vand.u32 %v434, 4294901760
        %v436 = vsub.f32 %v434, %v435
        %v437 = vand.u32 %v436, 4294901760
        %438 = vmatprep.subr.mxu0 %v437
        %v439 = vand.u32 %v225, 4294901760
        %v440 = vsub.f32 %v225, %v439
        %v441 = vand.u32 %v440, 4294901760
        %v442 = vsub.f32 %v440, %v441
        %v443 = vand.u32 %v442, 4294901760
        %444 = vmatpush1.msra.mxu0 %v443
        %v445 = vand.u32 %v224, 4294901760
        %v446 = vsub.f32 %v224, %v445
        %v447 = vand.u32 %v446, 4294901760
        %v448 = vsub.f32 %v446, %v447
        %v449 = vand.u32 %v448, 4294901760
        %450 = vmatprep.subr.mxu0 %v449
        %v451 = vand.u32 %v223, 4294901760
        %v452 = vsub.f32 %v223, %v451
        %v453 = vand.u32 %v452, 4294901760
        %v454 = vsub.f32 %v452, %v453
        %v455 = vand.u32 %v454, 4294901760
        %456 = vmatpush1.msra.mxu0 %v455
        %v457 = vand.u32 %v222, 4294901760
        %v458 = vsub.f32 %v222, %v457
        %v459 = vand.u32 %v458, 4294901760
        %v460 = vsub.f32 %v458, %v459
        %v461 = vand.u32 %v460, 4294901760
        %462 = vmatprep.subr.mxu0 %v461
        %v463 = vand.u32 %v221, 4294901760
        %v464 = vsub.f32 %v221, %v463
        %v465 = vand.u32 %v464, 4294901760
        %v466 = vsub.f32 %v464, %v465
        %v467 = vand.u32 %v466, 4294901760
        %468 = vmatpush1.msra.mxu0 %v467
        %v469 = vand.u32 %v220, 4294901760
        %v470 = vsub.f32 %v220, %v469
        %v471 = vand.u32 %v470, 4294901760
        %v472 = vsub.f32 %v470, %v471
        %v473 = vand.u32 %v472, 4294901760
        %474 = vmatprep.subr.mxu0 %v473
        %v475 = vand.u32 %v219, 4294901760
        %v476 = vsub.f32 %v219, %v475
        %v477 = vand.u32 %v476, 4294901760
        %v478 = vsub.f32 %v476, %v477
        %v479 = vand.u32 %v478, 4294901760
        %480 = vmatpush1.msra.mxu0 %v479
        %v481 = vand.u32 %v218, 4294901760
        %v482 = vsub.f32 %v218, %v481
        %v483 = vand.u32 %v482, 4294901760
        %v484 = vsub.f32 %v482, %v483
        %v485 = vand.u32 %v484, 4294901760
        %486 = vmatprep.subr.mxu0 %v485
        %v487 = vand.u32 %v217, 4294901760
        %v488 = vsub.f32 %v217, %v487
        %v489 = vand.u32 %v488, 4294901760
        %v490 = vsub.f32 %v488, %v489
        %v491 = vand.u32 %v490, 4294901760
        %492 = vmatpush1.msra.mxu0 %v491
        %493 = vmatprep.subr.mxu0 0.0
        %494 = vmatpush2.msra.mxu0 0.0
        %495 = vmatprep.subr.mxu0 0.0
        %496 = vmatpush2.msra.mxu0 0.0
        %497 = vmatprep.subr.mxu0 0.0
        %498 = vmatpush2.msra.mxu0 0.0
        %499 = vmatprep.subr.mxu0 0.0
        %500 = vmatpush2.msra.mxu0 0.0
        %501 = vmatprep.subr.mxu0 0.0
        %502 = vmatpush2.msra.mxu0 0.0
        %503 = vmatprep.subr.mxu0 0.0
        %504 = vmatpush2.msra.mxu0 0.0
        %505 = vmatprep.subr.mxu0 0.0
        %506 = vmatpush2.msra.mxu0 0.0
        %507 = vmatprep.subr.mxu0 0.0
        %508 = vmatpush2.msra.mxu0 0.0
        %509 = vmatprep.subr.mxu0 0.0
        %510 = vmatpush2.msra.mxu0 0.0
        %511 = vmatprep.subr.mxu0 0.0
        %512 = vmatpush2.msra.mxu0 0.0
        %513 = vmatprep.subr.mxu0 0.0
        %514 = vmatpush2.msra.mxu0 0.0
        %515 = vmatprep.subr.mxu0 0.0
        %516 = vmatpush2.msra.mxu0 0.0
        %517 = vmatprep.subr.mxu0 0.0
        %518 = vmatpush2.msra.mxu0 0.0
        %519 = vmatprep.subr.mxu0 0.0
        %520 = vmatpush2.msra.mxu0 0.0
        %521 = vmatprep.subr.mxu0 0.0
        %522 = vmatpush2.msra.mxu0 0.0
        %523 = vmatprep.subr.mxu0 0.0
        %524 = vmatpush2.msra.mxu0 0.0
        %525 = vmatprep.mubr.f32.mxu0 0.0
        %v526 = vand.u32 %v257, 4294901760
        %527 = vmatmul.mubr.f32.gmra.mxu0 %v526
        %v528 = vpop.f32.mrf.mxu0
        %v529 = vadd.f32 %v354, %v528
        %v530 = vpop.f32.mrf.mxu0
        %v531 = vadd.f32 %v356, %v530
        %532 = vmatprep.mubr.f32.mxu0 0.0
        %v533 = vand.u32 %v260, 4294901760
        %534 = vmatmul.mubr.f32.gmra.mxu0 %v533
        %v535 = vpop.f32.mrf.mxu0
        %v536 = vadd.f32 %v365, %v535
        %v537 = vpop.f32.mrf.mxu0
        %v538 = vadd.f32 %v367, %v537
        %539 = vmatprep.mubr.f32.mxu0 0.0
        %v540 = vand.u32 %v263, 4294901760
        %541 = vmatmul.mubr.f32.gmra.mxu0 %v540
        %v542 = vpop.f32.mrf.mxu0
        %v543 = vadd.f32 %v376, %v542
        %v544 = vpop.f32.mrf.mxu0
        %v545 = vadd.f32 %v378, %v544
        %546 = vmatprep.mubr.f32.mxu0 0.0
        %v547 = vand.u32 %v266, 4294901760
        %548 = vmatmul.mubr.f32.gmra.mxu0 %v547
        %v549 = vpop.f32.mrf.mxu0
        %v550 = vadd.f32 %v387, %v549
        %v551 = vpop.f32.mrf.mxu0
        %v552 = vadd.f32 %v389, %v551
        %553 = vdwg.mxu0
        %554 = vmatprep.subr.mxu0 0.0
        %555 = vmatpush1.msra.mxu0 0.0
        %556 = vmatprep.subr.mxu0 0.0
        %557 = vmatpush1.msra.mxu0 0.0
        %558 = vmatprep.subr.mxu0 0.0
        %559 = vmatpush1.msra.mxu0 0.0
        %560 = vmatprep.subr.mxu0 0.0
        %561 = vmatpush1.msra.mxu0 0.0
        %562 = vmatprep.subr.mxu0 0.0
        %563 = vmatpush1.msra.mxu0 0.0
        %564 = vmatprep.subr.mxu0 0.0
        %565 = vmatpush1.msra.mxu0 0.0
        %566 = vmatprep.subr.mxu0 0.0
        %567 = vmatpush1.msra.mxu0 0.0
        %568 = vmatprep.subr.mxu0 0.0
        %569 = vmatpush1.msra.mxu0 0.0
        %570 = vmatprep.subr.mxu0 0.0
        %571 = vmatpush1.msra.mxu0 0.0
        %v572 = vand.u32 %v230, 4294901760
        %v573 = vsub.f32 %v230, %v572
        %574 = vmatprep.subr.mxu0 %v573
        %v575 = vand.u32 %v229, 4294901760
        %v576 = vsub.f32 %v229, %v575
        %577 = vmatpush1.msra.mxu0 %v576
        %v578 = vand.u32 %v228, 4294901760
        %v579 = vsub.f32 %v228, %v578
        %580 = vmatprep.subr.mxu0 %v579
        %v581 = vand.u32 %v227, 4294901760
        %v582 = vsub.f32 %v227, %v581
        %583 = vmatpush1.msra.mxu0 %v582
        %v584 = vand.u32 %v226, 4294901760
        %v585 = vsub.f32 %v226, %v584
        %586 = vmatprep.subr.mxu0 %v585
        %v587 = vand.u32 %v225, 4294901760
        %v588 = vsub.f32 %v225, %v587
        %589 = vmatpush1.msra.mxu0 %v588
        %v590 = vand.u32 %v224, 4294901760
        %v591 = vsub.f32 %v224, %v590
        %592 = vmatprep.subr.mxu0 %v591
        %v593 = vand.u32 %v223, 4294901760
        %v594 = vsub.f32 %v223, %v593
        %595 = vmatpush1.msra.mxu0 %v594
        %v596 = vand.u32 %v222, 4294901760
        %v597 = vsub.f32 %v222, %v596
        %598 = vmatprep.subr.mxu0 %v597
        %v599 = vand.u32 %v221, 4294901760
        %v600 = vsub.f32 %v221, %v599
        %601 = vmatpush1.msra.mxu0 %v600
        %v602 = vand.u32 %v220, 4294901760
        %v603 = vsub.f32 %v220, %v602
        %604 = vmatprep.subr.mxu0 %v603
        %v605 = vand.u32 %v219, 4294901760
        %v606 = vsub.f32 %v219, %v605
        %607 = vmatpush1.msra.mxu0 %v606
        %v608 = vand.u32 %v218, 4294901760
        %v609 = vsub.f32 %v218, %v608
        %610 = vmatprep.subr.mxu0 %v609
        %v611 = vand.u32 %v217, 4294901760
        %v612 = vsub.f32 %v217, %v611
        %613 = vmatpush1.msra.mxu0 %v612
        %614 = vmatprep.subr.mxu0 0.0
        %615 = vmatpush2.msra.mxu0 0.0
        %616 = vmatprep.subr.mxu0 0.0
        %617 = vmatpush2.msra.mxu0 0.0
        %618 = vmatprep.subr.mxu0 0.0
        %619 = vmatpush2.msra.mxu0 0.0
        %620 = vmatprep.subr.mxu0 0.0
        %621 = vmatpush2.msra.mxu0 0.0
        %622 = vmatprep.subr.mxu0 0.0
        %623 = vmatpush2.msra.mxu0 0.0
        %624 = vmatprep.subr.mxu0 0.0
        %625 = vmatpush2.msra.mxu0 0.0
        %626 = vmatprep.subr.mxu0 0.0
        %627 = vmatpush2.msra.mxu0 0.0
        %628 = vmatprep.subr.mxu0 0.0
        %629 = vmatpush2.msra.mxu0 0.0
        %630 = vmatprep.subr.mxu0 0.0
        %631 = vmatpush2.msra.mxu0 0.0
        %632 = vmatprep.subr.mxu0 0.0
        %633 = vmatpush2.msra.mxu0 0.0
        %634 = vmatprep.subr.mxu0 0.0
        %635 = vmatpush2.msra.mxu0 0.0
        %636 = vmatprep.subr.mxu0 0.0
        %637 = vmatpush2.msra.mxu0 0.0
        %638 = vmatprep.subr.mxu0 0.0
        %639 = vmatpush2.msra.mxu0 0.0
        %640 = vmatprep.subr.mxu0 0.0
        %641 = vmatpush2.msra.mxu0 0.0
        %642 = vmatprep.subr.mxu0 0.0
        %643 = vmatpush2.msra.mxu0 0.0
        %644 = vmatprep.subr.mxu0 0.0
        %645 = vmatpush2.msra.mxu0 0.0
        %646 = vmatprep.mubr.f32.mxu0 0.0
        %v647 = vand.u32 %v257, 4294901760
        %v648 = vsub.f32 %v257, %v647
        %649 = vmatmul.mubr.f32.gmra.mxu0 %v648
        %v650 = vpop.f32.mrf.mxu0
        %v651 = vadd.f32 %v529, %v650
        %v652 = vpop.f32.mrf.mxu0
        %v653 = vadd.f32 %v531, %v652
        %654 = vmatprep.mubr.f32.mxu0 0.0
        %v655 = vand.u32 %v260, 4294901760
        %v656 = vsub.f32 %v260, %v655
        %657 = vmatmul.mubr.f32.gmra.mxu0 %v656
        %v658 = vpop.f32.mrf.mxu0
        %v659 = vadd.f32 %v536, %v658
        %v660 = vpop.f32.mrf.mxu0
        %v661 = vadd.f32 %v538, %v660
        %662 = vmatprep.mubr.f32.mxu0 0.0
        %v663 = vand.u32 %v263, 4294901760
        %v664 = vsub.f32 %v263, %v663
        %665 = vmatmul.mubr.f32.gmra.mxu0 %v664
        %v666 = vpop.f32.mrf.mxu0
        %v667 = vadd.f32 %v543, %v666
        %v668 = vpop.f32.mrf.mxu0
        %v669 = vadd.f32 %v545, %v668
        %670 = vmatprep.mubr.f32.mxu0 0.0
        %v671 = vand.u32 %v266, 4294901760
        %v672 = vsub.f32 %v266, %v671
        %673 = vmatmul.mubr.f32.gmra.mxu0 %v672
        %v674 = vpop.f32.mrf.mxu0
        %v675 = vadd.f32 %v550, %v674
        %v676 = vpop.f32.mrf.mxu0
        %v677 = vadd.f32 %v552, %v676
        %678 = vdwg.mxu0
        %679 = vmatprep.subr.mxu0 0.0
        %680 = vmatpush1.msra.mxu0 0.0
        %681 = vmatprep.subr.mxu0 0.0
        %682 = vmatpush1.msra.mxu0 0.0
        %683 = vmatprep.subr.mxu0 0.0
        %684 = vmatpush1.msra.mxu0 0.0
        %685 = vmatprep.subr.mxu0 0.0
        %686 = vmatpush1.msra.mxu0 0.0
        %687 = vmatprep.subr.mxu0 0.0
        %688 = vmatpush1.msra.mxu0 0.0
        %689 = vmatprep.subr.mxu0 0.0
        %690 = vmatpush1.msra.mxu0 0.0
        %691 = vmatprep.subr.mxu0 0.0
        %692 = vmatpush1.msra.mxu0 0.0
        %693 = vmatprep.subr.mxu0 0.0
        %694 = vmatpush1.msra.mxu0 0.0
        %695 = vmatprep.subr.mxu0 0.0
        %696 = vmatpush1.msra.mxu0 0.0
        %v697 = vand.u32 %v230, 4294901760
        %698 = vmatprep.subr.mxu0 %v697
        %v699 = vand.u32 %v229, 4294901760
        %700 = vmatpush1.msra.mxu0 %v699
        %v701 = vand.u32 %v228, 4294901760
        %702 = vmatprep.subr.mxu0 %v701
        %v703 = vand.u32 %v227, 4294901760
        %704 = vmatpush1.msra.mxu0 %v703
        %v705 = vand.u32 %v226, 4294901760
        %706 = vmatprep.subr.mxu0 %v705
        %v707 = vand.u32 %v225, 4294901760
        %708 = vmatpush1.msra.mxu0 %v707
        %v709 = vand.u32 %v224, 4294901760
        %710 = vmatprep.subr.mxu0 %v709
        %v711 = vand.u32 %v223, 4294901760
        %712 = vmatpush1.msra.mxu0 %v711
        %v713 = vand.u32 %v222, 4294901760
        %714 = vmatprep.subr.mxu0 %v713
        %v715 = vand.u32 %v221, 4294901760
        %716 = vmatpush1.msra.mxu0 %v715
        %v717 = vand.u32 %v220, 4294901760
        %718 = vmatprep.subr.mxu0 %v717
        %v719 = vand.u32 %v219, 4294901760
        %720 = vmatpush1.msra.mxu0 %v719
        %v721 = vand.u32 %v218, 4294901760
        %722 = vmatprep.subr.mxu0 %v721
        %v723 = vand.u32 %v217, 4294901760
        %724 = vmatpush1.msra.mxu0 %v723
        %725 = vmatprep.subr.mxu0 0.0
        %726 = vmatpush2.msra.mxu0 0.0
        %727 = vmatprep.subr.mxu0 0.0
        %728 = vmatpush2.msra.mxu0 0.0
        %729 = vmatprep.subr.mxu0 0.0
        %730 = vmatpush2.msra.mxu0 0.0
        %731 = vmatprep.subr.mxu0 0.0
        %732 = vmatpush2.msra.mxu0 0.0
        %733 = vmatprep.subr.mxu0 0.0
        %734 = vmatpush2.msra.mxu0 0.0
        %735 = vmatprep.subr.mxu0 0.0
        %736 = vmatpush2.msra.mxu0 0.0
        %737 = vmatprep.subr.mxu0 0.0
        %738 = vmatpush2.msra.mxu0 0.0
        %739 = vmatprep.subr.mxu0 0.0
        %740 = vmatpush2.msra.mxu0 0.0
        %741 = vmatprep.subr.mxu0 0.0
        %742 = vmatpush2.msra.mxu0 0.0
        %743 = vmatprep.subr.mxu0 0.0
        %744 = vmatpush2.msra.mxu0 0.0
        %745 = vmatprep.subr.mxu0 0.0
        %746 = vmatpush2.msra.mxu0 0.0
        %747 = vmatprep.subr.mxu0 0.0
        %748 = vmatpush2.msra.mxu0 0.0
        %749 = vmatprep.subr.mxu0 0.0
        %750 = vmatpush2.msra.mxu0 0.0
        %751 = vmatprep.subr.mxu0 0.0
        %752 = vmatpush2.msra.mxu0 0.0
        %753 = vmatprep.subr.mxu0 0.0
        %754 = vmatpush2.msra.mxu0 0.0
        %755 = vmatprep.subr.mxu0 0.0
        %756 = vmatpush2.msra.mxu0 0.0
        %757 = vmatprep.mubr.f32.mxu0 0.0
        %v758 = vand.u32 %v257, 4294901760
        %v759 = vsub.f32 %v257, %v758
        %v760 = vand.u32 %v759, 4294901760
        %761 = vmatmul.mubr.f32.gmra.mxu0 %v760
        %v762 = vpop.f32.mrf.mxu0
        %v763 = vadd.f32 %v651, %v762
        %v764 = vpop.f32.mrf.mxu0
        %v765 = vadd.f32 %v653, %v764
        %766 = vmatprep.mubr.f32.mxu0 0.0
        %v767 = vand.u32 %v260, 4294901760
        %v768 = vsub.f32 %v260, %v767
        %v769 = vand.u32 %v768, 4294901760
        %770 = vmatmul.mubr.f32.gmra.mxu0 %v769
        %v771 = vpop.f32.mrf.mxu0
        %v772 = vadd.f32 %v659, %v771
        %v773 = vpop.f32.mrf.mxu0
        %v774 = vadd.f32 %v661, %v773
        %775 = vmatprep.mubr.f32.mxu0 0.0
        %v776 = vand.u32 %v263, 4294901760
        %v777 = vsub.f32 %v263, %v776
        %v778 = vand.u32 %v777, 4294901760
        %779 = vmatmul.mubr.f32.gmra.mxu0 %v778
        %v780 = vpop.f32.mrf.mxu0
        %v781 = vadd.f32 %v667, %v780
        %v782 = vpop.f32.mrf.mxu0
        %v783 = vadd.f32 %v669, %v782
        %784 = vmatprep.mubr.f32.mxu0 0.0
        %v785 = vand.u32 %v266, 4294901760
        %v786 = vsub.f32 %v266, %v785
        %v787 = vand.u32 %v786, 4294901760
        %788 = vmatmul.mubr.f32.gmra.mxu0 %v787
        %v789 = vpop.f32.mrf.mxu0
        %v790 = vadd.f32 %v675, %v789
        %v791 = vpop.f32.mrf.mxu0
        %v792 = vadd.f32 %v677, %v791
        %793 = vdwg.mxu0
        %794 = vmatprep.subr.mxu0 0.0
        %795 = vmatpush1.msra.mxu0 0.0
        %796 = vmatprep.subr.mxu0 0.0
        %797 = vmatpush1.msra.mxu0 0.0
        %798 = vmatprep.subr.mxu0 0.0
        %799 = vmatpush1.msra.mxu0 0.0
        %800 = vmatprep.subr.mxu0 0.0
        %801 = vmatpush1.msra.mxu0 0.0
        %802 = vmatprep.subr.mxu0 0.0
        %803 = vmatpush1.msra.mxu0 0.0
        %804 = vmatprep.subr.mxu0 0.0
        %805 = vmatpush1.msra.mxu0 0.0
        %806 = vmatprep.subr.mxu0 0.0
        %807 = vmatpush1.msra.mxu0 0.0
        %808 = vmatprep.subr.mxu0 0.0
        %809 = vmatpush1.msra.mxu0 0.0
        %810 = vmatprep.subr.mxu0 0.0
        %811 = vmatpush1.msra.mxu0 0.0
        %v812 = vand.u32 %v230, 4294901760
        %v813 = vsub.f32 %v230, %v812
        %v814 = vand.u32 %v813, 4294901760
        %815 = vmatprep.subr.mxu0 %v814
        %v816 = vand.u32 %v229, 4294901760
        %v817 = vsub.f32 %v229, %v816
        %v818 = vand.u32 %v817, 4294901760
        %819 = vmatpush1.msra.mxu0 %v818
        %v820 = vand.u32 %v228, 4294901760
        %v821 = vsub.f32 %v228, %v820
        %v822 = vand.u32 %v821, 4294901760
        %823 = vmatprep.subr.mxu0 %v822
        %v824 = vand.u32 %v227, 4294901760
        %v825 = vsub.f32 %v227, %v824
        %v826 = vand.u32 %v825, 4294901760
        %827 = vmatpush1.msra.mxu0 %v826
        %v828 = vand.u32 %v226, 4294901760
        %v829 = vsub.f32 %v226, %v828
        %v830 = vand.u32 %v829, 4294901760
        %831 = vmatprep.subr.mxu0 %v830
        %v832 = vand.u32 %v225, 4294901760
        %v833 = vsub.f32 %v225, %v832
        %v834 = vand.u32 %v833, 4294901760
        %835 = vmatpush1.msra.mxu0 %v834
        %v836 = vand.u32 %v224, 4294901760
        %v837 = vsub.f32 %v224, %v836
        %v838 = vand.u32 %v837, 4294901760
        %839 = vmatprep.subr.mxu0 %v838
        %v840 = vand.u32 %v223, 4294901760
        %v841 = vsub.f32 %v223, %v840
        %v842 = vand.u32 %v841, 4294901760
        %843 = vmatpush1.msra.mxu0 %v842
        %v844 = vand.u32 %v222, 4294901760
        %v845 = vsub.f32 %v222, %v844
        %v846 = vand.u32 %v845, 4294901760
        %847 = vmatprep.subr.mxu0 %v846
        %v848 = vand.u32 %v221, 4294901760
        %v849 = vsub.f32 %v221, %v848
        %v850 = vand.u32 %v849, 4294901760
        %851 = vmatpush1.msra.mxu0 %v850
        %v852 = vand.u32 %v220, 4294901760
        %v853 = vsub.f32 %v220, %v852
        %v854 = vand.u32 %v853, 4294901760
        %855 = vmatprep.subr.mxu0 %v854
        %v856 = vand.u32 %v219, 4294901760
        %v857 = vsub.f32 %v219, %v856
        %v858 = vand.u32 %v857, 4294901760
        %859 = vmatpush1.msra.mxu0 %v858
        %v860 = vand.u32 %v218, 4294901760
        %v861 = vsub.f32 %v218, %v860
        %v862 = vand.u32 %v861, 4294901760
        %863 = vmatprep.subr.mxu0 %v862
        %v864 = vand.u32 %v217, 4294901760
        %v865 = vsub.f32 %v217, %v864
        %v866 = vand.u32 %v865, 4294901760
        %867 = vmatpush1.msra.mxu0 %v866
        %868 = vmatprep.subr.mxu0 0.0
        %869 = vmatpush2.msra.mxu0 0.0
        %870 = vmatprep.subr.mxu0 0.0
        %871 = vmatpush2.msra.mxu0 0.0
        %872 = vmatprep.subr.mxu0 0.0
        %873 = vmatpush2.msra.mxu0 0.0
        %874 = vmatprep.subr.mxu0 0.0
        %875 = vmatpush2.msra.mxu0 0.0
        %876 = vmatprep.subr.mxu0 0.0
        %877 = vmatpush2.msra.mxu0 0.0
        %878 = vmatprep.subr.mxu0 0.0
        %879 = vmatpush2.msra.mxu0 0.0
        %880 = vmatprep.subr.mxu0 0.0
        %881 = vmatpush2.msra.mxu0 0.0
        %882 = vmatprep.subr.mxu0 0.0
        %883 = vmatpush2.msra.mxu0 0.0
        %884 = vmatprep.subr.mxu0 0.0
        %885 = vmatpush2.msra.mxu0 0.0
        %886 = vmatprep.subr.mxu0 0.0
        %887 = vmatpush2.msra.mxu0 0.0
        %888 = vmatprep.subr.mxu0 0.0
        %889 = vmatpush2.msra.mxu0 0.0
        %890 = vmatprep.subr.mxu0 0.0
        %891 = vmatpush2.msra.mxu0 0.0
        %892 = vmatprep.subr.mxu0 0.0
        %893 = vmatpush2.msra.mxu0 0.0
        %894 = vmatprep.subr.mxu0 0.0
        %895 = vmatpush2.msra.mxu0 0.0
        %896 = vmatprep.subr.mxu0 0.0
        %897 = vmatpush2.msra.mxu0 0.0
        %898 = vmatprep.subr.mxu0 0.0
        %899 = vmatpush2.msra.mxu0 0.0
        %900 = vmatprep.mubr.f32.mxu0 0.0
        %v901 = vand.u32 %v257, 4294901760
        %902 = vmatmul.mubr.f32.gmra.mxu0 %v901
        %v903 = vpop.f32.mrf.mxu0
        %v904 = vadd.f32 %v763, %v903
        %v905 = vpop.f32.mrf.mxu0
        %v906 = vadd.f32 %v765, %v905
        %907 = vmatprep.mubr.f32.mxu0 0.0
        %v908 = vand.u32 %v260, 4294901760
        %909 = vmatmul.mubr.f32.gmra.mxu0 %v908
        %v910 = vpop.f32.mrf.mxu0
        %v911 = vadd.f32 %v772, %v910
        %v912 = vpop.f32.mrf.mxu0
        %v913 = vadd.f32 %v774, %v912
        %914 = vmatprep.mubr.f32.mxu0 0.0
        %v915 = vand.u32 %v263, 4294901760
        %916 = vmatmul.mubr.f32.gmra.mxu0 %v915
        %v917 = vpop.f32.mrf.mxu0
        %v918 = vadd.f32 %v781, %v917
        %v919 = vpop.f32.mrf.mxu0
        %v920 = vadd.f32 %v783, %v919
        %921 = vmatprep.mubr.f32.mxu0 0.0
        %v922 = vand.u32 %v266, 4294901760
        %923 = vmatmul.mubr.f32.gmra.mxu0 %v922
        %v924 = vpop.f32.mrf.mxu0
        %v925 = vadd.f32 %v790, %v924
        %v926 = vpop.f32.mrf.mxu0
        %v927 = vadd.f32 %v792, %v926
        %928 = vdwg.mxu0
        %929 = vmatprep.subr.mxu0 0.0
        %930 = vmatpush1.msra.mxu0 0.0
        %931 = vmatprep.subr.mxu0 0.0
        %932 = vmatpush1.msra.mxu0 0.0
        %933 = vmatprep.subr.mxu0 0.0
        %934 = vmatpush1.msra.mxu0 0.0
        %935 = vmatprep.subr.mxu0 0.0
        %936 = vmatpush1.msra.mxu0 0.0
        %937 = vmatprep.subr.mxu0 0.0
        %938 = vmatpush1.msra.mxu0 0.0
        %939 = vmatprep.subr.mxu0 0.0
        %940 = vmatpush1.msra.mxu0 0.0
        %941 = vmatprep.subr.mxu0 0.0
        %942 = vmatpush1.msra.mxu0 0.0
        %943 = vmatprep.subr.mxu0 0.0
        %944 = vmatpush1.msra.mxu0 0.0
        %945 = vmatprep.subr.mxu0 0.0
        %946 = vmatpush1.msra.mxu0 0.0
        %v947 = vand.u32 %v230, 4294901760
        %948 = vmatprep.subr.mxu0 %v947
        %v949 = vand.u32 %v229, 4294901760
        %950 = vmatpush1.msra.mxu0 %v949
        %v951 = vand.u32 %v228, 4294901760
        %952 = vmatprep.subr.mxu0 %v951
        %v953 = vand.u32 %v227, 4294901760
        %954 = vmatpush1.msra.mxu0 %v953
        %v955 = vand.u32 %v226, 4294901760
        %956 = vmatprep.subr.mxu0 %v955
        %v957 = vand.u32 %v225, 4294901760
        %958 = vmatpush1.msra.mxu0 %v957
        %v959 = vand.u32 %v224, 4294901760
        %960 = vmatprep.subr.mxu0 %v959
        %v961 = vand.u32 %v223, 4294901760
        %962 = vmatpush1.msra.mxu0 %v961
        %v963 = vand.u32 %v222, 4294901760
        %964 = vmatprep.subr.mxu0 %v963
        %v965 = vand.u32 %v221, 4294901760
        %966 = vmatpush1.msra.mxu0 %v965
        %v967 = vand.u32 %v220, 4294901760
        %968 = vmatprep.subr.mxu0 %v967
        %v969 = vand.u32 %v219, 4294901760
        %970 = vmatpush1.msra.mxu0 %v969
        %v971 = vand.u32 %v218, 4294901760
        %972 = vmatprep.subr.mxu0 %v971
        %v973 = vand.u32 %v217, 4294901760
        %974 = vmatpush1.msra.mxu0 %v973
        %975 = vmatprep.subr.mxu0 0.0
        %976 = vmatpush2.msra.mxu0 0.0
        %977 = vmatprep.subr.mxu0 0.0
        %978 = vmatpush2.msra.mxu0 0.0
        %979 = vmatprep.subr.mxu0 0.0
        %980 = vmatpush2.msra.mxu0 0.0
        %981 = vmatprep.subr.mxu0 0.0
        %982 = vmatpush2.msra.mxu0 0.0
        %983 = vmatprep.subr.mxu0 0.0
        %984 = vmatpush2.msra.mxu0 0.0
        %985 = vmatprep.subr.mxu0 0.0
        %986 = vmatpush2.msra.mxu0 0.0
        %987 = vmatprep.subr.mxu0 0.0
        %988 = vmatpush2.msra.mxu0 0.0
        %989 = vmatprep.subr.mxu0 0.0
        %990 = vmatpush2.msra.mxu0 0.0
        %991 = vmatprep.subr.mxu0 0.0
        %992 = vmatpush2.msra.mxu0 0.0
        %993 = vmatprep.subr.mxu0 0.0
        %994 = vmatpush2.msra.mxu0 0.0
        %995 = vmatprep.subr.mxu0 0.0
        %996 = vmatpush2.msra.mxu0 0.0
        %997 = vmatprep.subr.mxu0 0.0
        %998 = vmatpush2.msra.mxu0 0.0
        %999 = vmatprep.subr.mxu0 0.0
        %1000 = vmatpush2.msra.mxu0 0.0
        %1001 = vmatprep.subr.mxu0 0.0
        %1002 = vmatpush2.msra.mxu0 0.0
        %1003 = vmatprep.subr.mxu0 0.0
        %1004 = vmatpush2.msra.mxu0 0.0
        %1005 = vmatprep.subr.mxu0 0.0
        %1006 = vmatpush2.msra.mxu0 0.0
        %1007 = vmatprep.mubr.f32.mxu0 0.0
        %v1008 = vand.u32 %v257, 4294901760
        %1009 = vmatmul.mubr.f32.gmra.mxu0 %v1008
        %v1010 = vpop.f32.mrf.mxu0
        %v1011 = vadd.f32 %v904, %v1010
        %v1012 = vpop.f32.mrf.mxu0
        %v1013 = vadd.f32 %v906, %v1012
        %1014 = vmatprep.mubr.f32.mxu0 0.0
        %v1015 = vand.u32 %v260, 4294901760
        %1016 = vmatmul.mubr.f32.gmra.mxu0 %v1015
        %v1017 = vpop.f32.mrf.mxu0
        %v1018 = vadd.f32 %v911, %v1017
        %v1019 = vpop.f32.mrf.mxu0
        %v1020 = vadd.f32 %v913, %v1019
        %1021 = vmatprep.mubr.f32.mxu0 0.0
        %v1022 = vand.u32 %v263, 4294901760
        %1023 = vmatmul.mubr.f32.gmra.mxu0 %v1022
        %v1024 = vpop.f32.mrf.mxu0
        %v1025 = vadd.f32 %v918, %v1024
        %v1026 = vpop.f32.mrf.mxu0
        %v1027 = vadd.f32 %v920, %v1026
        %1028 = vmatprep.mubr.f32.mxu0 0.0
        %v1029 = vand.u32 %v266, 4294901760
        %1030 = vmatmul.mubr.f32.gmra.mxu0 %v1029
        %v1031 = vpop.f32.mrf.mxu0
        %v1032 = vadd.f32 %v925, %v1031
        %v1033 = vpop.f32.mrf.mxu0
        %v1034 = vadd.f32 %v927, %v1033
        %1035 = vdwg.mxu0
        %vm1036 = vcmp.ge.f32.partialorder %v1011, 0.0
        %vm1037 = vcmp.ge.f32.partialorder %v1013, 0.0
        %vm1038 = vcmp.ge.f32.partialorder %v1018, 0.0
        %vm1039 = vcmp.ge.f32.partialorder %v1020, 0.0
        %vm1040 = vcmp.ge.f32.partialorder %v1025, 0.0
        %vm1041 = vcmp.ge.f32.partialorder %v1027, 0.0
        %vm1042 = vcmp.ge.f32.partialorder %v1032, 0.0
        %vm1043 = vcmp.ge.f32.partialorder %v1034, 0.0
        %v1044 = vmul.f32 %v1011, 0.2
        %v1045 = vmul.f32 %v1013, 0.2
        %v1046 = vmul.f32 %v1018, 0.2
        %v1047 = vmul.f32 %v1020, 0.2
        %v1048 = vmul.f32 %v1025, 0.2
        %v1049 = vmul.f32 %v1027, 0.2
        %v1050 = vmul.f32 %v1032, 0.2
        %v1051 = vmul.f32 %v1034, 0.2
        %v1052 = vsel %vm1036, %v1011, %v1044
        %v1053 = vsel %vm1037, %v1013, %v1045
        %v1054 = vsel %vm1038, %v1018, %v1046
        %v1055 = vsel %vm1039, %v1020, %v1047
        %v1056 = vsel %vm1040, %v1025, %v1048
        %v1057 = vsel %vm1041, %v1027, %v1049
        %v1058 = vsel %vm1042, %v1032, %v1050
        %v1059 = vsel %vm1043, %v1034, %v1051
        %1060 = vst [vmem:[%s210] sm:$0xff] %v1052
        %1061 = vst [vmem:[%s210 + $0x8] sm:$0xff] %v1053
        %1062 = vst [vmem:[%s210 + $0x10] sm:$0xff] %v1054
        %1063 = vst [vmem:[%s210 + $0x18] sm:$0xff] %v1055
        %1064 = vst [vmem:[%s210 + $0x20] sm:$0xff] %v1056
        %1065 = vst [vmem:[%s210 + $0x28] sm:$0xff] %v1057
        %1066 = vst [vmem:[%s210 + $0x30] sm:$0xff] %v1058
        %1067 = vst [vmem:[%s210 + $0x38] sm:$0xff] %v1059
        %s1068 = sand.u32 %s90, 1
        %s1069 = sand.u32 %s90, 1
        %s1070 = smul.addr %s1069, 64
        %s1071 = scalar_lea.vmem [#allocation3], %s1070
        // Predicated region
        $region56: #{residual_coordconv_block.2} parent=50 // pred_check
          %p1072 = pneg %p100
        $region57: #{residual_coordconv_block.2} parent=50 // pred_check_branch
          %1074 = sbr.rel (%p1072) target = $region59
        $region58: #{residual_coordconv_block.2} parent=50 // pred_region
          %s1075 = smul.u32 2, %s14
          %s1076 = smul.addr %s1075, 8
          %s1077 = scalar_lea.vmem %s3, %s1076
          // Predicated region
          $region60: #{residual_coordconv_block.2} parent=58 // pred_check
            _
          $region61: #{residual_coordconv_block.2} parent=58 // pred_check_branch
            %1079 = sbr.rel (0) target = $region63
          $region62: #{residual_coordconv_block.2} parent=58 // pred_region
            // Predicated region
            $region64: #{residual_coordconv_block.2} parent=62 // pred_check
              _
            $region65: #{residual_coordconv_block.2} parent=62 // pred_check_branch
              %1081 = sbr.rel (0) target = $region67
            $region66: #{residual_coordconv_block.2} parent=62 // pred_region
              loop: start=0, step=1, limit=1
              $region68: #{residual_coordconv_block.2} parent=66 // loop_pre_header
                _
              $region69: #{residual_coordconv_block.2} parent=66 // loop_header
                %s1083 = sphi 0, %s1087
                %p1084 = scmp.ge.s32.totalorder %s1083, 1
                %s1088 = sphi %s1071, %s1071
                %s1089 = sphi %s1077, %s1077
              $region70: #{residual_coordconv_block.2} parent=66 // loop_header_branch
                %1086 = sbr.rel (%p1084) target = $region74
              $region71: #{residual_coordconv_block.2} parent=66 // loop_body
                %v1090 = vld [vmem:[%s1088] sm:$0xff]
                %1091 = vst [vmem:[%s1089] sm:$0xff] %v1090
                %v1092 = vld [vmem:[%s1088 + $0x8] sm:$0xff]
                %1093 = vst [vmem:[%s1089 + $0x8] sm:$0xff] %v1092
                %v1094 = vld [vmem:[%s1088 + $0x10] sm:$0xff]
                %1095 = vst [vmem:[%s1089 + $0x20] sm:$0xff] %v1094
                %v1096 = vld [vmem:[%s1088 + $0x18] sm:$0xff]
                %1097 = vst [vmem:[%s1089 + $0x28] sm:$0xff] %v1096
                %v1098 = vld [vmem:[%s1088 + $0x20] sm:$0xff]
                %1099 = vst [vmem:[%s1089 + $0x40] sm:$0xff] %v1098
                %v1100 = vld [vmem:[%s1088 + $0x28] sm:$0xff]
                %1101 = vst [vmem:[%s1089 + $0x48] sm:$0xff] %v1100
                %v1102 = vld [vmem:[%s1088 + $0x30] sm:$0xff]
                %1103 = vst [vmem:[%s1089 + $0x60] sm:$0xff] %v1102
                %v1104 = vld [vmem:[%s1088 + $0x38] sm:$0xff]
                %1105 = vst [vmem:[%s1089 + $0x68] sm:$0xff] %v1104
              $region72: #{residual_coordconv_block.2} parent=66 // loop_footer
                %s1087 = sadd.s32 1, %s1083
              $region73: #{residual_coordconv_block.2} parent=66 // loop_footer_branch
                %1082 = sbr.rel target = $region69
              $region74: #{residual_coordconv_block.2} parent=66 // loop_exit
                _
            $region67: #{residual_coordconv_block.2} parent=62 // pred_fallthru
              _
            // Predicated region
            $region75: #{residual_coordconv_block.2} parent=62 // pred_check
              _
            $region76: #{residual_coordconv_block.2} parent=62 // pred_check_branch
              %1107 = sbr.rel target = $region78
            $region77: #{residual_coordconv_block.2} parent=62 // pred_region
              _
            $region78: #{residual_coordconv_block.2} parent=62 // pred_fallthru
              _
          $region63: #{residual_coordconv_block.2} parent=58 // pred_fallthru
            _
          %1108 = vnop
        $region59: #{residual_coordconv_block.2} parent=50 // pred_fallthru
          _
      $region51: #{residual_coordconv_block.2} parent=5 // pred_fallthru
        _
      %p1109 = scmp.le.s32.totalorder 2, %s9
      // Predicated region
      $region79: #{residual_coordconv_block.2} parent=5 // pred_check
        %p1110 = pneg %p1109
      $region80: #{residual_coordconv_block.2} parent=5 // pred_check_branch
        %1112 = sbr.rel (%p1110) target = $region82
      $region81: #{residual_coordconv_block.2} parent=5 // pred_region
        %s1113 = ssub.s32 %s9, 2
        // Predicated region
        $region83: #{residual_coordconv_block.2} parent=81 // pred_check
          %p1114 = pneg %p106
        $region84: #{residual_coordconv_block.2} parent=81 // pred_check_branch
          %1116 = sbr.rel (%p1114) target = $region86
        $region85: #{residual_coordconv_block.2} parent=81 // pred_region
          %s1117 = sand.u32 %s91, 1
          %s1118 = sand.u32 %s91, 1
          %s1119 = smul.addr %s1118, 64
          %s1120 = scalar_lea.vmem [#allocation3], %s1119
        $region86: #{residual_coordconv_block.2} parent=81 // pred_fallthru
          _
      $region82: #{residual_coordconv_block.2} parent=5 // pred_fallthru
        _
    $region6: #{residual_coordconv_block.2} parent=1 // loop_footer
      %s13 = sadd.s32 1, %s9
    $region7: #{residual_coordconv_block.2} parent=1 // loop_footer_branch
      %8 = sbr.rel target = $region3
    $region8: #{residual_coordconv_block.2} parent=1 // loop_exit
      _

// kernel: residual_coordconv_block.3
$region0: #{residual_coordconv_block.3}
  #allocation0 [shape = 'u32[]', space=smem, size = 0x4, offset = 0x4, fixed_abs, tag = 'smem constant byte address 0x4 - core index']
  #allocation1 [shape = 'u32[144,128]{1,0:T(1,128)}', space=vmem, size = 0x12000, scoped, tag = 'internal scratch']
  %s0 = inlined_call_operand.vmem [shape: f32[312,512], index: 0, kind: input, shape index: {}]
  %s1 = inlined_call_operand.vmem [shape: f32[32,312], index: 1, kind: input, shape index: {}]
  %s2 = inlined_call_operand.vmem [shape: f32[32,1], index: 2, kind: input, shape index: {}]
  %s3 = inlined_call_operand.vmem [shape: f32[512,128], index: 3, kind: input, shape index: {}]
  %s4 = inlined_call_operand.vmem [shape: f32[8,512], index: 4, kind: input, shape index: {}]
  %s5 = inlined_call_operand.vmem [shape: f32[32,8], index: 5, kind: input, shape index: {}]
  %s6 = inlined_call_operand.vmem [shape: f32[32,1], index: 6, kind: input, shape index: {}]
  %s7 = inlined_call_operand.vmem [shape: f32[32,128], index: 7, kind: output, shape index: {}]
  %s8 = sld [smem:[#allocation0]]
  $region38: #{residual_coordconv_block.3} parent=0
    _
  %s10 = ssub.s32 1, %s8
  %s11 = scalar_select 0, %s10, %s8
  // Predicated region
  $region2: #{residual_coordconv_block.3} parent=0 // pred_check
    _
  $region3: #{residual_coordconv_block.3} parent=0 // pred_check_branch
    %13 = sbr.rel (0) target = $region5
  $region4: #{residual_coordconv_block.3} parent=0 // pred_region
    _
  $region5: #{residual_coordconv_block.3} parent=0 // pred_fallthru
    _
  // Predicated region
  $region6: #{residual_coordconv_block.3} parent=0 // pred_check
    _
  $region7: #{residual_coordconv_block.3} parent=0 // pred_check_branch
    %15 = sbr.rel (0) target = $region9
  $region8: #{residual_coordconv_block.3} parent=0 // pred_region
    _
  $region9: #{residual_coordconv_block.3} parent=0 // pred_fallthru
    _
  // Predicated region
  $region10: #{residual_coordconv_block.3} parent=0 // pred_check
    _
  $region11: #{residual_coordconv_block.3} parent=0 // pred_check_branch
    %17 = sbr.rel (0) target = $region13
  $region12: #{residual_coordconv_block.3} parent=0 // pred_region
    _
  $region13: #{residual_coordconv_block.3} parent=0 // pred_fallthru
    _
  // Predicated region
  $region14: #{residual_coordconv_block.3} parent=0 // pred_check
    _
  $region15: #{residual_coordconv_block.3} parent=0 // pred_check_branch
    %19 = sbr.rel (0) target = $region17
  $region16: #{residual_coordconv_block.3} parent=0 // pred_region
    _
  $region17: #{residual_coordconv_block.3} parent=0 // pred_fallthru
    _
  // Predicated region
  $region18: #{residual_coordconv_block.3} parent=0 // pred_check
    _
  $region19: #{residual_coordconv_block.3} parent=0 // pred_check_branch
    %21 = sbr.rel (0) target = $region21
  $region20: #{residual_coordconv_block.3} parent=0 // pred_region
    _
  $region21: #{residual_coordconv_block.3} parent=0 // pred_fallthru
    _
  // Predicated region
  $region22: #{residual_coordconv_block.3} parent=0 // pred_check
    _
  $region23: #{residual_coordconv_block.3} parent=0 // pred_check_branch
    %23 = sbr.rel (0) target = $region25
  $region24: #{residual_coordconv_block.3} parent=0 // pred_region
    _
  $region25: #{residual_coordconv_block.3} parent=0 // pred_fallthru
    _
  // Predicated region
  $region26: #{residual_coordconv_block.3} parent=0 // pred_check
    _
  $region27: #{residual_coordconv_block.3} parent=0 // pred_check_branch
    %25 = sbr.rel (0) target = $region29
  $region28: #{residual_coordconv_block.3} parent=0 // pred_region
    _
  $region29: #{residual_coordconv_block.3} parent=0 // pred_fallthru
    _
  %v26 = vld [vmem:[%s1] sm:$0xff]
  %v27 = vld [vmem:[%s1 + $0x8] sm:$0xff]
  %v28 = vld [vmem:[%s1 + $0x10] sm:$0xff]
  %v29 = vld [vmem:[%s1 + $0x18] sm:$0xff]
  %v30 = vld [vmem:[%s1 + $0x20] sm:$0xff]
  %v31 = vld [vmem:[%s1 + $0x28] sm:$0xff]
  %v32 = vld [vmem:[%s1 + $0x30] sm:$0xff]
  %v33 = vld [vmem:[%s1 + $0x38] sm:$0xff]
  %v34 = vld [vmem:[%s1 + $0x40] sm:$0xff]
  %v35 = vld [vmem:[%s1 + $0x48] sm:$0xff]
  %v36 = vld [vmem:[%s1 + $0x50] sm:$0xff]
  %v37 = vld [vmem:[%s1 + $0x58] sm:$0xff]
  %v38 = vld [vmem:[%s0] sm:$0xff]
  %v39 = vld [vmem:[%s0 + $0x8] sm:$0xff]
  %v40 = vld [vmem:[%s0 + $0x10] sm:$0xff]
  %v41 = vld [vmem:[%s0 + $0x18] sm:$0xff]
  %v42 = vld [vmem:[%s0 + $0x20] sm:$0xff]
  %v43 = vld [vmem:[%s0 + $0x28] sm:$0xff]
  %v44 = vld [vmem:[%s0 + $0x30] sm:$0xff]
  %v45 = vld [vmem:[%s0 + $0x38] sm:$0xff]
  %v46 = vld [vmem:[%s0 + $0x40] sm:$0xff]
  %v47 = vld [vmem:[%s0 + $0x48] sm:$0xff]
  %v48 = vld [vmem:[%s0 + $0x50] sm:$0xff]
  %v49 = vld [vmem:[%s0 + $0x58] sm:$0xff]
  %v50 = vld [vmem:[%s0 + $0x60] sm:$0xff]
  %v51 = vld [vmem:[%s0 + $0x68] sm:$0xff]
  %v52 = vld [vmem:[%s0 + $0x70] sm:$0xff]
  %v53 = vld [vmem:[%s0 + $0x78] sm:$0xff]
  %v54 = vld [vmem:[%s0 + $0x80] sm:$0xff]
  %v55 = vld [vmem:[%s0 + $0x88] sm:$0xff]
  %v56 = vld [vmem:[%s0 + $0x90] sm:$0xff]
  %v57 = vld [vmem:[%s0 + $0x98] sm:$0xff]
  %v58 = vld [vmem:[%s0 + $0xa0] sm:$0xff]
  %v59 = vld [vmem:[%s0 + $0xa8] sm:$0xff]
  %v60 = vld [vmem:[%s0 + $0xb0] sm:$0xff]
  %v61 = vld [vmem:[%s0 + $0xb8] sm:$0xff]
  %v62 = vld [vmem:[%s0 + $0xc0] sm:$0xff]
  %v63 = vld [vmem:[%s0 + $0xc8] sm:$0xff]
  %v64 = vld [vmem:[%s0 + $0xd0] sm:$0xff]
  %v65 = vld [vmem:[%s0 + $0xd8] sm:$0xff]
  %v66 = vld [vmem:[%s0 + $0xe0] sm:$0xff]
  %v67 = vld [vmem:[%s0 + $0xe8] sm:$0xff]
  %v68 = vld [vmem:[%s0 + $0xf0] sm:$0xff]
  %v69 = vld [vmem:[%s0 + $0xf8] sm:$0xff]
  %v70 = vld [vmem:[%s0 + $0x100] sm:$0xff]
  %v71 = vld [vmem:[%s0 + $0x108] sm:$0xff]
  %v72 = vld [vmem:[%s0 + $0x110] sm:$0xff]
  %v73 = vld [vmem:[%s0 + $0x118] sm:$0xff]
  %v74 = vld [vmem:[%s0 + $0x120] sm:$0xff]
  %v75 = vld [vmem:[%s0 + $0x128] sm:$0xff]
  %v76 = vld [vmem:[%s0 + $0x130] sm:$0xff]
  %v77 = vld [vmem:[%s0 + $0x138] sm:$0xff]
  %v78 = vld [vmem:[%s0 + $0x140] sm:$0xff]
  %v79 = vld [vmem:[%s0 + $0x148] sm:$0xff]
  %v80 = vld [vmem:[%s0 + $0x150] sm:$0xff]
  %v81 = vld [vmem:[%s0 + $0x158] sm:$0xff]
  %v82 = vld [vmem:[%s0 + $0x160] sm:$0xff]
  %v83 = vld [vmem:[%s0 + $0x168] sm:$0xff]
  %v84 = vld [vmem:[%s0 + $0x170] sm:$0xff]
  %v85 = vld [vmem:[%s0 + $0x178] sm:$0xff]
  %v86 = vld [vmem:[%s0 + $0x180] sm:$0xff]
  %v87 = vld [vmem:[%s0 + $0x188] sm:$0xff]
  %v88 = vld [vmem:[%s0 + $0x190] sm:$0xff]
  %v89 = vld [vmem:[%s0 + $0x198] sm:$0xff]
  %v90 = vld [vmem:[%s0 + $0x1a0] sm:$0xff]
  %v91 = vld [vmem:[%s0 + $0x1a8] sm:$0xff]
  %v92 = vld [vmem:[%s0 + $0x1b0] sm:$0xff]
  %v93 = vld [vmem:[%s0 + $0x1b8] sm:$0xff]
  %v94 = vld [vmem:[%s0 + $0x1c0] sm:$0xff]
  %v95 = vld [vmem:[%s0 + $0x1c8] sm:$0xff]
  %v96 = vld [vmem:[%s0 + $0x1d0] sm:$0xff]
  %v97 = vld [vmem:[%s0 + $0x1d8] sm:$0xff]
  %v98 = vld [vmem:[%s0 + $0x1e0] sm:$0xff]
  %v99 = vld [vmem:[%s0 + $0x1e8] sm:$0xff]
  %v100 = vld [vmem:[%s0 + $0x1f0] sm:$0xff]
  %v101 = vld [vmem:[%s0 + $0x1f8] sm:$0xff]
  %v102 = vld [vmem:[%s0 + $0x200] sm:$0xff]
  %v103 = vld [vmem:[%s0 + $0x208] sm:$0xff]
  %v104 = vld [vmem:[%s0 + $0x210] sm:$0xff]
  %v105 = vld [vmem:[%s0 + $0x218] sm:$0xff]
  %v106 = vld [vmem:[%s0 + $0x220] sm:$0xff]
  %v107 = vld [vmem:[%s0 + $0x228] sm:$0xff]
  %v108 = vld [vmem:[%s0 + $0x230] sm:$0xff]
  %v109 = vld [vmem:[%s0 + $0x238] sm:$0xff]
  %v110 = vld [vmem:[%s0 + $0x240] sm:$0xff]
  %v111 = vld [vmem:[%s0 + $0x248] sm:$0xff]
  %v112 = vld [vmem:[%s0 + $0x250] sm:$0xff]
  %v113 = vld [vmem:[%s0 + $0x258] sm:$0xff]
  %v114 = vld [vmem:[%s0 + $0x260] sm:$0xff]
  %v115 = vld [vmem:[%s0 + $0x268] sm:$0xff]
  %v116 = vld [vmem:[%s0 + $0x270] sm:$0xff]
  %v117 = vld [vmem:[%s0 + $0x278] sm:$0xff]
  %v118 = vld [vmem:[%s0 + $0x280] sm:$0xff]
  %v119 = vld [vmem:[%s0 + $0x288] sm:$0xff]
  %v120 = vld [vmem:[%s0 + $0x290] sm:$0xff]
  %v121 = vld [vmem:[%s0 + $0x298] sm:$0xff]
  %v122 = vld [vmem:[%s0 + $0x2a0] sm:$0xff]
  %v123 = vld [vmem:[%s0 + $0x2a8] sm:$0xff]
  %v124 = vld [vmem:[%s0 + $0x2b0] sm:$0xff]
  %v125 = vld [vmem:[%s0 + $0x2b8] sm:$0xff]
  %v126 = vld [vmem:[%s0 + $0x2c0] sm:$0xff]
  %v127 = vld [vmem:[%s0 + $0x2c8] sm:$0xff]
  %v128 = vld [vmem:[%s0 + $0x2d0] sm:$0xff]
  %v129 = vld [vmem:[%s0 + $0x2d8] sm:$0xff]
  %v130 = vld [vmem:[%s0 + $0x2e0] sm:$0xff]
  %v131 = vld [vmem:[%s0 + $0x2e8] sm:$0xff]
  %v132 = vld [vmem:[%s0 + $0x2f0] sm:$0xff]
  %v133 = vld [vmem:[%s0 + $0x2f8] sm:$0xff]
  %v134 = vld [vmem:[%s0 + $0x300] sm:$0xff]
  %v135 = vld [vmem:[%s0 + $0x308] sm:$0xff]
  %v136 = vld [vmem:[%s0 + $0x310] sm:$0xff]
  %v137 = vld [vmem:[%s0 + $0x318] sm:$0xff]
  %v138 = vld [vmem:[%s0 + $0x320] sm:$0xff]
  %v139 = vld [vmem:[%s0 + $0x328] sm:$0xff]
  %v140 = vld [vmem:[%s0 + $0x330] sm:$0xff]
  %v141 = vld [vmem:[%s0 + $0x338] sm:$0xff]
  %v142 = vld [vmem:[%s0 + $0x340] sm:$0xff]
  %v143 = vld [vmem:[%s0 + $0x348] sm:$0xff]
  %v144 = vld [vmem:[%s0 + $0x350] sm:$0xff]
  %v145 = vld [vmem:[%s0 + $0x358] sm:$0xff]
  %v146 = vld [vmem:[%s0 + $0x360] sm:$0xff]
  %v147 = vld [vmem:[%s0 + $0x368] sm:$0xff]
  %v148 = vld [vmem:[%s0 + $0x370] sm:$0xff]
  %v149 = vld [vmem:[%s0 + $0x378] sm:$0xff]
  %v150 = vld [vmem:[%s0 + $0x380] sm:$0xff]
  %v151 = vld [vmem:[%s0 + $0x388] sm:$0xff]
  %v152 = vld [vmem:[%s0 + $0x390] sm:$0xff]
  %v153 = vld [vmem:[%s0 + $0x398] sm:$0xff]
  %v154 = vld [vmem:[%s0 + $0x3a0] sm:$0xff]
  %v155 = vld [vmem:[%s0 + $0x3a8] sm:$0xff]
  %v156 = vld [vmem:[%s0 + $0x3b0] sm:$0xff]
  %v157 = vld [vmem:[%s0 + $0x3b8] sm:$0xff]
  %v158 = vld [vmem:[%s0 + $0x3c0] sm:$0xff]
  %v159 = vld [vmem:[%s0 + $0x3c8] sm:$0xff]
  %v160 = vld [vmem:[%s0 + $0x3d0] sm:$0xff]
  %v161 = vld [vmem:[%s0 + $0x3d8] sm:$0xff]
  %v162 = vld [vmem:[%s0 + $0x3e0] sm:$0xff]
  %v163 = vld [vmem:[%s0 + $0x3e8] sm:$0xff]
  %v164 = vld [vmem:[%s0 + $0x3f0] sm:$0xff]
  %v165 = vld [vmem:[%s0 + $0x3f8] sm:$0xff]
  %v166 = vld [vmem:[%s0 + $0x400] sm:$0xff]
  %v167 = vld [vmem:[%s0 + $0x408] sm:$0xff]
  %v168 = vld [vmem:[%s0 + $0x410] sm:$0xff]
  %v169 = vld [vmem:[%s0 + $0x418] sm:$0xff]
  %v170 = vld [vmem:[%s0 + $0x420] sm:$0xff]
  %v171 = vld [vmem:[%s0 + $0x428] sm:$0xff]
  %v172 = vld [vmem:[%s0 + $0x430] sm:$0xff]
  %v173 = vld [vmem:[%s0 + $0x438] sm:$0xff]
  %v174 = vld [vmem:[%s0 + $0x440] sm:$0xff]
  %v175 = vld [vmem:[%s0 + $0x448] sm:$0xff]
  %v176 = vld [vmem:[%s0 + $0x450] sm:$0xff]
  %v177 = vld [vmem:[%s0 + $0x458] sm:$0xff]
  %v178 = vld [vmem:[%s0 + $0x460] sm:$0xff]
  %v179 = vld [vmem:[%s0 + $0x468] sm:$0xff]
  %v180 = vld [vmem:[%s0 + $0x470] sm:$0xff]
  %v181 = vld [vmem:[%s0 + $0x478] sm:$0xff]
  %v182 = vld [vmem:[%s0 + $0x480] sm:$0xff]
  %v183 = vld [vmem:[%s0 + $0x488] sm:$0xff]
  %v184 = vld [vmem:[%s0 + $0x490] sm:$0xff]
  %v185 = vld [vmem:[%s0 + $0x498] sm:$0xff]
  %v186 = vld [vmem:[%s0 + $0x4a0] sm:$0xff]
  %v187 = vld [vmem:[%s0 + $0x4a8] sm:$0xff]
  %v188 = vld [vmem:[%s0 + $0x4b0] sm:$0xff]
  %v189 = vld [vmem:[%s0 + $0x4b8] sm:$0xff]
  %v190 = vld [vmem:[%s0 + $0x4c0] sm:$0xff]
  %v191 = vld [vmem:[%s0 + $0x4c8] sm:$0xff]
  %v192 = vld [vmem:[%s0 + $0x4d0] sm:$0xff]
  %v193 = vld [vmem:[%s0 + $0x4d8] sm:$0xff]
  %v194 = vld [vmem:[%s2] sm:$0xff]
  %v195 = vld [vmem:[%s2 + $0x8] sm:$0xff]
  %v196 = vld [vmem:[%s2 + $0x10] sm:$0xff]
  %v197 = vld [vmem:[%s2 + $0x18] sm:$0xff]
  %199 = vset.pattern.permute.xlu0 0
  %200 = vperm.xlu0 %199, %v194
  %v201 = vpop.permute.xlu0 %200
  %204 = vset.pattern.permute.xlu0 0
  %205 = vperm.xlu0 %204, %v195
  %v206 = vpop.permute.xlu0 %205
  %209 = vset.pattern.permute.xlu0 0
  %210 = vperm.xlu0 %209, %v196
  %v211 = vpop.permute.xlu0 %210
  %214 = vset.pattern.permute.xlu0 0
  %215 = vperm.xlu0 %214, %v197
  %v216 = vpop.permute.xlu0 %215
  %vm218 = vcmask 457728
  %v220 = vsel %vm218, %v28, 0
  %v223 = vsel %vm218, %v31, 0
  %v226 = vsel %vm218, %v34, 0
  %v229 = vsel %vm218, %v37, 0
  %v231 = vand.u32 %v99, 4294901760
  %232 = vmatprep.subr.mxu0 %v231
  %v233 = vand.u32 %v98, 4294901760
  %234 = vmatpush1.msra.mxu0 %v233
  %v235 = vand.u32 %v95, 4294901760
  %236 = vmatprep.subr.mxu0 %v235
  %v237 = vand.u32 %v94, 4294901760
  %238 = vmatpush1.msra.mxu0 %v237
  %v239 = vand.u32 %v91, 4294901760
  %240 = vmatprep.subr.mxu0 %v239
  %v241 = vand.u32 %v90, 4294901760
  %242 = vmatpush1.msra.mxu0 %v241
  %v243 = vand.u32 %v87, 4294901760
  %244 = vmatprep.subr.mxu0 %v243
  %v245 = vand.u32 %v86, 4294901760
  %246 = vmatpush1.msra.mxu0 %v245
  %v247 = vand.u32 %v83, 4294901760
  %248 = vmatprep.subr.mxu0 %v247
  %v249 = vand.u32 %v82, 4294901760
  %250 = vmatpush1.msra.mxu0 %v249
  %v251 = vand.u32 %v79, 4294901760
  %252 = vmatprep.subr.mxu0 %v251
  %v253 = vand.u32 %v78, 4294901760
  %254 = vmatpush1.msra.mxu0 %v253
  %v255 = vand.u32 %v75, 4294901760
  %256 = vmatprep.subr.mxu0 %v255
  %v257 = vand.u32 %v74, 4294901760
  %258 = vmatpush1.msra.mxu0 %v257
  %v259 = vand.u32 %v71, 4294901760
  %260 = vmatprep.subr.mxu0 %v259
  %v261 = vand.u32 %v70, 4294901760
  %262 = vmatpush1.msra.mxu0 %v261
  %v263 = vand.u32 %v67, 4294901760
  %264 = vmatprep.subr.mxu0 %v263
  %v265 = vand.u32 %v66, 4294901760
  %266 = vmatpush1.msra.mxu0 %v265
  %v267 = vand.u32 %v63, 4294901760
  %268 = vmatprep.subr.mxu0 %v267
  %v269 = vand.u32 %v62, 4294901760
  %270 = vmatpush1.msra.mxu0 %v269
  %v271 = vand.u32 %v59, 4294901760
  %272 = vmatprep.subr.mxu0 %v271
  %v273 = vand.u32 %v58, 4294901760
  %274 = vmatpush1.msra.mxu0 %v273
  %v275 = vand.u32 %v55, 4294901760
  %276 = vmatprep.subr.mxu0 %v275
  %v277 = vand.u32 %v54, 4294901760
  %278 = vmatpush1.msra.mxu0 %v277
  %v279 = vand.u32 %v51, 4294901760
  %280 = vmatprep.subr.mxu0 %v279
  %v281 = vand.u32 %v50, 4294901760
  %282 = vmatpush1.msra.mxu0 %v281
  %v283 = vand.u32 %v47, 4294901760
  %284 = vmatprep.subr.mxu0 %v283
  %v285 = vand.u32 %v46, 4294901760
  %286 = vmatpush1.msra.mxu0 %v285
  %v287 = vand.u32 %v43, 4294901760
  %288 = vmatprep.subr.mxu0 %v287
  %v289 = vand.u32 %v42, 4294901760
  %290 = vmatpush1.msra.mxu0 %v289
  %v291 = vand.u32 %v39, 4294901760
  %292 = vmatprep.subr.mxu0 %v291
  %v293 = vand.u32 %v38, 4294901760
  %294 = vmatpush1.msra.mxu0 %v293
  %v295 = vand.u32 %v163, 4294901760
  %296 = vmatprep.subr.mxu0 %v295
  %v297 = vand.u32 %v162, 4294901760
  %298 = vmatpush2.msra.mxu0 %v297
  %v299 = vand.u32 %v159, 4294901760
  %300 = vmatprep.subr.mxu0 %v299
  %v301 = vand.u32 %v158, 4294901760
  %302 = vmatpush2.msra.mxu0 %v301
  %v303 = vand.u32 %v155, 4294901760
  %304 = vmatprep.subr.mxu0 %v303
  %v305 = vand.u32 %v154, 4294901760
  %306 = vmatpush2.msra.mxu0 %v305
  %v307 = vand.u32 %v151, 4294901760
  %308 = vmatprep.subr.mxu0 %v307
  %v309 = vand.u32 %v150, 4294901760
  %310 = vmatpush2.msra.mxu0 %v309
  %v311 = vand.u32 %v147, 4294901760
  %312 = vmatprep.subr.mxu0 %v311
  %v313 = vand.u32 %v146, 4294901760
  %314 = vmatpush2.msra.mxu0 %v313
  %v315 = vand.u32 %v143, 4294901760
  %316 = vmatprep.subr.mxu0 %v315
  %v317 = vand.u32 %v142, 4294901760
  %318 = vmatpush2.msra.mxu0 %v317
  %v319 = vand.u32 %v139, 4294901760
  %320 = vmatprep.subr.mxu0 %v319
  %v321 = vand.u32 %v138, 4294901760
  %322 = vmatpush2.msra.mxu0 %v321
  %v323 = vand.u32 %v135, 4294901760
  %324 = vmatprep.subr.mxu0 %v323
  %v325 = vand.u32 %v134, 4294901760
  %326 = vmatpush2.msra.mxu0 %v325
  %v327 = vand.u32 %v131, 4294901760
  %328 = vmatprep.subr.mxu0 %v327
  %v329 = vand.u32 %v130, 4294901760
  %330 = vmatpush2.msra.mxu0 %v329
  %v331 = vand.u32 %v127, 4294901760
  %332 = vmatprep.subr.mxu0 %v331
  %v333 = vand.u32 %v126, 4294901760
  %334 = vmatpush2.msra.mxu0 %v333
  %v335 = vand.u32 %v123, 4294901760
  %336 = vmatprep.subr.mxu0 %v335
  %v337 = vand.u32 %v122, 4294901760
  %338 = vmatpush2.msra.mxu0 %v337
  %v339 = vand.u32 %v119, 4294901760
  %340 = vmatprep.subr.mxu0 %v339
  %v341 = vand.u32 %v118, 4294901760
  %342 = vmatpush2.msra.mxu0 %v341
  %v343 = vand.u32 %v115, 4294901760
  %344 = vmatprep.subr.mxu0 %v343
  %v345 = vand.u32 %v114, 4294901760
  %346 = vmatpush2.msra.mxu0 %v345
  %v347 = vand.u32 %v111, 4294901760
  %348 = vmatprep.subr.mxu0 %v347
  %v349 = vand.u32 %v110, 4294901760
  %350 = vmatpush2.msra.mxu0 %v349
  %v351 = vand.u32 %v107, 4294901760
  %352 = vmatprep.subr.mxu0 %v351
  %v353 = vand.u32 %v106, 4294901760
  %354 = vmatpush2.msra.mxu0 %v353
  %v355 = vand.u32 %v103, 4294901760
  %356 = vmatprep.subr.mxu0 %v355
  %v357 = vand.u32 %v102, 4294901760
  %358 = vmatpush2.msra.mxu0 %v357
  %v359 = vand.u32 %v27, 4294901760
  %v360 = vsub.f32 %v27, %v359
  %v361 = vand.u32 %v360, 4294901760
  %v362 = vsub.f32 %v360, %v361
  %v363 = vand.u32 %v362, 4294901760
  %364 = vmatprep.mubr.f32.mxu0 %v363
  %v365 = vand.u32 %v26, 4294901760
  %v366 = vsub.f32 %v26, %v365
  %v367 = vand.u32 %v366, 4294901760
  %v368 = vsub.f32 %v366, %v367
  %v369 = vand.u32 %v368, 4294901760
  %370 = vmatmul.mubr.f32.gmra.mxu0 %v369
  %v371 = vpop.f32.mrf.mxu0
  %v372 = vadd.f32 %v201, %v371
  %v373 = vpop.f32.mrf.mxu0
  %v374 = vadd.f32 %v201, %v373
  %v375 = vand.u32 %v30, 4294901760
  %v376 = vsub.f32 %v30, %v375
  %v377 = vand.u32 %v376, 4294901760
  %v378 = vsub.f32 %v376, %v377
  %v379 = vand.u32 %v378, 4294901760
  %380 = vmatprep.mubr.f32.mxu0 %v379
  %v381 = vand.u32 %v29, 4294901760
  %v382 = vsub.f32 %v29, %v381
  %v383 = vand.u32 %v382, 4294901760
  %v384 = vsub.f32 %v382, %v383
  %v385 = vand.u32 %v384, 4294901760
  %386 = vmatmul.mubr.f32.gmra.mxu0 %v385
  %v387 = vpop.f32.mrf.mxu0
  %v388 = vadd.f32 %v206, %v387
  %v389 = vpop.f32.mrf.mxu0
  %v390 = vadd.f32 %v206, %v389
  %v391 = vand.u32 %v33, 4294901760
  %v392 = vsub.f32 %v33, %v391
  %v393 = vand.u32 %v392, 4294901760
  %v394 = vsub.f32 %v392, %v393
  %v395 = vand.u32 %v394, 4294901760
  %396 = vmatprep.mubr.f32.mxu0 %v395
  %v397 = vand.u32 %v32, 4294901760
  %v398 = vsub.f32 %v32, %v397
  %v399 = vand.u32 %v398, 4294901760
  %v400 = vsub.f32 %v398, %v399
  %v401 = vand.u32 %v400, 4294901760
  %402 = vmatmul.mubr.f32.gmra.mxu0 %v401
  %v403 = vpop.f32.mrf.mxu0
  %v404 = vadd.f32 %v211, %v403
  %v405 = vpop.f32.mrf.mxu0
  %v406 = vadd.f32 %v211, %v405
  %v407 = vand.u32 %v36, 4294901760
  %v408 = vsub.f32 %v36, %v407
  %v409 = vand.u32 %v408, 4294901760
  %v410 = vsub.f32 %v408, %v409
  %v411 = vand.u32 %v410, 4294901760
  %412 = vmatprep.mubr.f32.mxu0 %v411
  %v413 = vand.u32 %v35, 4294901760
  %v414 = vsub.f32 %v35, %v413
  %v415 = vand.u32 %v414, 4294901760
  %v416 = vsub.f32 %v414, %v415
  %v417 = vand.u32 %v416, 4294901760
  %418 = vmatmul.mubr.f32.gmra.mxu0 %v417
  %v419 = vpop.f32.mrf.mxu0
  %v420 = vadd.f32 %v216, %v419
  %v421 = vpop.f32.mrf.mxu0
  %v422 = vadd.f32 %v216, %v421
  %423 = vdwg.mxu0
  %v424 = vand.u32 %v99, 4294901760
  %v425 = vsub.f32 %v99, %v424
  %v426 = vand.u32 %v425, 4294901760
  %v427 = vsub.f32 %v425, %v426
  %v428 = vand.u32 %v427, 4294901760
  %429 = vmatprep.subr.mxu0 %v428
  %v430 = vand.u32 %v98, 4294901760
  %v431 = vsub.f32 %v98, %v430
  %v432 = vand.u32 %v431, 4294901760
  %v433 = vsub.f32 %v431, %v432
  %v434 = vand.u32 %v433, 4294901760
  %435 = vmatpush1.msra.mxu0 %v434
  %v436 = vand.u32 %v95, 4294901760
  %v437 = vsub.f32 %v95, %v436
  %v438 = vand.u32 %v437, 4294901760
  %v439 = vsub.f32 %v437, %v438
  %v440 = vand.u32 %v439, 4294901760
  %441 = vmatprep.subr.mxu0 %v440
  %v442 = vand.u32 %v94, 4294901760
  %v443 = vsub.f32 %v94, %v442
  %v444 = vand.u32 %v443, 4294901760
  %v445 = vsub.f32 %v443, %v444
  %v446 = vand.u32 %v445, 4294901760
  %447 = vmatpush1.msra.mxu0 %v446
  %v448 = vand.u32 %v91, 4294901760
  %v449 = vsub.f32 %v91, %v448
  %v450 = vand.u32 %v449, 4294901760
  %v451 = vsub.f32 %v449, %v450
  %v452 = vand.u32 %v451, 4294901760
  %453 = vmatprep.subr.mxu0 %v452
  %v454 = vand.u32 %v90, 4294901760
  %v455 = vsub.f32 %v90, %v454
  %v456 = vand.u32 %v455, 4294901760
  %v457 = vsub.f32 %v455, %v456
  %v458 = vand.u32 %v457, 4294901760
  %459 = vmatpush1.msra.mxu0 %v458
  %v460 = vand.u32 %v87, 4294901760
  %v461 = vsub.f32 %v87, %v460
  %v462 = vand.u32 %v461, 4294901760
  %v463 = vsub.f32 %v461, %v462
  %v464 = vand.u32 %v463, 4294901760
  %465 = vmatprep.subr.mxu0 %v464
  %v466 = vand.u32 %v86, 4294901760
  %v467 = vsub.f32 %v86, %v466
  %v468 = vand.u32 %v467, 4294901760
  %v469 = vsub.f32 %v467, %v468
  %v470 = vand.u32 %v469, 4294901760
  %471 = vmatpush1.msra.mxu0 %v470
  %v472 = vand.u32 %v83, 4294901760
  %v473 = vsub.f32 %v83, %v472
  %v474 = vand.u32 %v473, 4294901760
  %v475 = vsub.f32 %v473, %v474
  %v476 = vand.u32 %v475, 4294901760
  %477 = vmatprep.subr.mxu0 %v476
  %v478 = vand.u32 %v82, 4294901760
  %v479 = vsub.f32 %v82, %v478
  %v480 = vand.u32 %v479, 4294901760
  %v481 = vsub.f32 %v479, %v480
  %v482 = vand.u32 %v481, 4294901760
  %483 = vmatpush1.msra.mxu0 %v482
  %v484 = vand.u32 %v79, 4294901760
  %v485 = vsub.f32 %v79, %v484
  %v486 = vand.u32 %v485, 4294901760
  %v487 = vsub.f32 %v485, %v486
  %v488 = vand.u32 %v487, 4294901760
  %489 = vmatprep.subr.mxu0 %v488
  %v490 = vand.u32 %v78, 4294901760
  %v491 = vsub.f32 %v78, %v490
  %v492 = vand.u32 %v491, 4294901760
  %v493 = vsub.f32 %v491, %v492
  %v494 = vand.u32 %v493, 4294901760
  %495 = vmatpush1.msra.mxu0 %v494
  %v496 = vand.u32 %v75, 4294901760
  %v497 = vsub.f32 %v75, %v496
  %v498 = vand.u32 %v497, 4294901760
  %v499 = vsub.f32 %v497, %v498
  %v500 = vand.u32 %v499, 4294901760
  %501 = vmatprep.subr.mxu0 %v500
  %v502 = vand.u32 %v74, 4294901760
  %v503 = vsub.f32 %v74, %v502
  %v504 = vand.u32 %v503, 4294901760
  %v505 = vsub.f32 %v503, %v504
  %v506 = vand.u32 %v505, 4294901760
  %507 = vmatpush1.msra.mxu0 %v506
  %v508 = vand.u32 %v71, 4294901760
  %v509 = vsub.f32 %v71, %v508
  %v510 = vand.u32 %v509, 4294901760
  %v511 = vsub.f32 %v509, %v510
  %v512 = vand.u32 %v511, 4294901760
  %513 = vmatprep.subr.mxu0 %v512
  %v514 = vand.u32 %v70, 4294901760
  %v515 = vsub.f32 %v70, %v514
  %v516 = vand.u32 %v515, 4294901760
  %v517 = vsub.f32 %v515, %v516
  %v518 = vand.u32 %v517, 4294901760
  %519 = vmatpush1.msra.mxu0 %v518
  %v520 = vand.u32 %v67, 4294901760
  %v521 = vsub.f32 %v67, %v520
  %v522 = vand.u32 %v521, 4294901760
  %v523 = vsub.f32 %v521, %v522
  %v524 = vand.u32 %v523, 4294901760
  %525 = vmatprep.subr.mxu0 %v524
  %v526 = vand.u32 %v66, 4294901760
  %v527 = vsub.f32 %v66, %v526
  %v528 = vand.u32 %v527, 4294901760
  %v529 = vsub.f32 %v527, %v528
  %v530 = vand.u32 %v529, 4294901760
  %531 = vmatpush1.msra.mxu0 %v530
  %v532 = vand.u32 %v63, 4294901760
  %v533 = vsub.f32 %v63, %v532
  %v534 = vand.u32 %v533, 4294901760
  %v535 = vsub.f32 %v533, %v534
  %v536 = vand.u32 %v535, 4294901760
  %537 = vmatprep.subr.mxu0 %v536
  %v538 = vand.u32 %v62, 4294901760
  %v539 = vsub.f32 %v62, %v538
  %v540 = vand.u32 %v539, 4294901760
  %v541 = vsub.f32 %v539, %v540
  %v542 = vand.u32 %v541, 4294901760
  %543 = vmatpush1.msra.mxu0 %v542
  %v544 = vand.u32 %v59, 4294901760
  %v545 = vsub.f32 %v59, %v544
  %v546 = vand.u32 %v545, 4294901760
  %v547 = vsub.f32 %v545, %v546
  %v548 = vand.u32 %v547, 4294901760
  %549 = vmatprep.subr.mxu0 %v548
  %v550 = vand.u32 %v58, 4294901760
  %v551 = vsub.f32 %v58, %v550
  %v552 = vand.u32 %v551, 4294901760
  %v553 = vsub.f32 %v551, %v552
  %v554 = vand.u32 %v553, 4294901760
  %555 = vmatpush1.msra.mxu0 %v554
  %v556 = vand.u32 %v55, 4294901760
  %v557 = vsub.f32 %v55, %v556
  %v558 = vand.u32 %v557, 4294901760
  %v559 = vsub.f32 %v557, %v558
  %v560 = vand.u32 %v559, 4294901760
  %561 = vmatprep.subr.mxu0 %v560
  %v562 = vand.u32 %v54, 4294901760
  %v563 = vsub.f32 %v54, %v562
  %v564 = vand.u32 %v563, 4294901760
  %v565 = vsub.f32 %v563, %v564
  %v566 = vand.u32 %v565, 4294901760
  %567 = vmatpush1.msra.mxu0 %v566
  %v568 = vand.u32 %v51, 4294901760
  %v569 = vsub.f32 %v51, %v568
  %v570 = vand.u32 %v569, 4294901760
  %v571 = vsub.f32 %v569, %v570
  %v572 = vand.u32 %v571, 4294901760
  %573 = vmatprep.subr.mxu0 %v572
  %v574 = vand.u32 %v50, 4294901760
  %v575 = vsub.f32 %v50, %v574
  %v576 = vand.u32 %v575, 4294901760
  %v577 = vsub.f32 %v575, %v576
  %v578 = vand.u32 %v577, 4294901760
  %579 = vmatpush1.msra.mxu0 %v578
  %v580 = vand.u32 %v47, 4294901760
  %v581 = vsub.f32 %v47, %v580
  %v582 = vand.u32 %v581, 4294901760
  %v583 = vsub.f32 %v581, %v582
  %v584 = vand.u32 %v583, 4294901760
  %585 = vmatprep.subr.mxu0 %v584
  %v586 = vand.u32 %v46, 4294901760
  %v587 = vsub.f32 %v46, %v586
  %v588 = vand.u32 %v587, 4294901760
  %v589 = vsub.f32 %v587, %v588
  %v590 = vand.u32 %v589, 4294901760
  %591 = vmatpush1.msra.mxu0 %v590
  %v592 = vand.u32 %v43, 4294901760
  %v593 = vsub.f32 %v43, %v592
  %v594 = vand.u32 %v593, 4294901760
  %v595 = vsub.f32 %v593, %v594
  %v596 = vand.u32 %v595, 4294901760
  %597 = vmatprep.subr.mxu0 %v596
  %v598 = vand.u32 %v42, 4294901760
  %v599 = vsub.f32 %v42, %v598
  %v600 = vand.u32 %v599, 4294901760
  %v601 = vsub.f32 %v599, %v600
  %v602 = vand.u32 %v601, 4294901760
  %603 = vmatpush1.msra.mxu0 %v602
  %v604 = vand.u32 %v39, 4294901760
  %v605 = vsub.f32 %v39, %v604
  %v606 = vand.u32 %v605, 4294901760
  %v607 = vsub.f32 %v605, %v606
  %v608 = vand.u32 %v607, 4294901760
  %609 = vmatprep.subr.mxu0 %v608
  %v610 = vand.u32 %v38, 4294901760
  %v611 = vsub.f32 %v38, %v610
  %v612 = vand.u32 %v611, 4294901760
  %v613 = vsub.f32 %v611, %v612
  %v614 = vand.u32 %v613, 4294901760
  %615 = vmatpush1.msra.mxu0 %v614
  %v616 = vand.u32 %v163, 4294901760
  %v617 = vsub.f32 %v163, %v616
  %v618 = vand.u32 %v617, 4294901760
  %v619 = vsub.f32 %v617, %v618
  %v620 = vand.u32 %v619, 4294901760
  %621 = vmatprep.subr.mxu0 %v620
  %v622 = vand.u32 %v162, 4294901760
  %v623 = vsub.f32 %v162, %v622
  %v624 = vand.u32 %v623, 4294901760
  %v625 = vsub.f32 %v623, %v624
  %v626 = vand.u32 %v625, 4294901760
  %627 = vmatpush2.msra.mxu0 %v626
  %v628 = vand.u32 %v159, 4294901760
  %v629 = vsub.f32 %v159, %v628
  %v630 = vand.u32 %v629, 4294901760
  %v631 = vsub.f32 %v629, %v630
  %v632 = vand.u32 %v631, 4294901760
  %633 = vmatprep.subr.mxu0 %v632
  %v634 = vand.u32 %v158, 4294901760
  %v635 = vsub.f32 %v158, %v634
  %v636 = vand.u32 %v635, 4294901760
  %v637 = vsub.f32 %v635, %v636
  %v638 = vand.u32 %v637, 4294901760
  %639 = vmatpush2.msra.mxu0 %v638
  %v640 = vand.u32 %v155, 4294901760
  %v641 = vsub.f32 %v155, %v640
  %v642 = vand.u32 %v641, 4294901760
  %v643 = vsub.f32 %v641, %v642
  %v644 = vand.u32 %v643, 4294901760
  %645 = vmatprep.subr.mxu0 %v644
  %v646 = vand.u32 %v154, 4294901760
  %v647 = vsub.f32 %v154, %v646
  %v648 = vand.u32 %v647, 4294901760
  %v649 = vsub.f32 %v647, %v648
  %v650 = vand.u32 %v649, 4294901760
  %651 = vmatpush2.msra.mxu0 %v650
  %v652 = vand.u32 %v151, 4294901760
  %v653 = vsub.f32 %v151, %v652
  %v654 = vand.u32 %v653, 4294901760
  %v655 = vsub.f32 %v653, %v654
  %v656 = vand.u32 %v655, 4294901760
  %657 = vmatprep.subr.mxu0 %v656
  %v658 = vand.u32 %v150, 4294901760
  %v659 = vsub.f32 %v150, %v658
  %v660 = vand.u32 %v659, 4294901760
  %v661 = vsub.f32 %v659, %v660
  %v662 = vand.u32 %v661, 4294901760
  %663 = vmatpush2.msra.mxu0 %v662
  %v664 = vand.u32 %v147, 4294901760
  %v665 = vsub.f32 %v147, %v664
  %v666 = vand.u32 %v665, 4294901760
  %v667 = vsub.f32 %v665, %v666
  %v668 = vand.u32 %v667, 4294901760
  %669 = vmatprep.subr.mxu0 %v668
  %v670 = vand.u32 %v146, 4294901760
  %v671 = vsub.f32 %v146, %v670
  %v672 = vand.u32 %v671, 4294901760
  %v673 = vsub.f32 %v671, %v672
  %v674 = vand.u32 %v673, 4294901760
  %675 = vmatpush2.msra.mxu0 %v674
  %v676 = vand.u32 %v143, 4294901760
  %v677 = vsub.f32 %v143, %v676
  %v678 = vand.u32 %v677, 4294901760
  %v679 = vsub.f32 %v677, %v678
  %v680 = vand.u32 %v679, 4294901760
  %681 = vmatprep.subr.mxu0 %v680
  %v682 = vand.u32 %v142, 4294901760
  %v683 = vsub.f32 %v142, %v682
  %v684 = vand.u32 %v683, 4294901760
  %v685 = vsub.f32 %v683, %v684
  %v686 = vand.u32 %v685, 4294901760
  %687 = vmatpush2.msra.mxu0 %v686
  %v688 = vand.u32 %v139, 4294901760
  %v689 = vsub.f32 %v139, %v688
  %v690 = vand.u32 %v689, 4294901760
  %v691 = vsub.f32 %v689, %v690
  %v692 = vand.u32 %v691, 4294901760
  %693 = vmatprep.subr.mxu0 %v692
  %v694 = vand.u32 %v138, 4294901760
  %v695 = vsub.f32 %v138, %v694
  %v696 = vand.u32 %v695, 4294901760
  %v697 = vsub.f32 %v695, %v696
  %v698 = vand.u32 %v697, 4294901760
  %699 = vmatpush2.msra.mxu0 %v698
  %v700 = vand.u32 %v135, 4294901760
  %v701 = vsub.f32 %v135, %v700
  %v702 = vand.u32 %v701, 4294901760
  %v703 = vsub.f32 %v701, %v702
  %v704 = vand.u32 %v703, 4294901760
  %705 = vmatprep.subr.mxu0 %v704
  %v706 = vand.u32 %v134, 4294901760
  %v707 = vsub.f32 %v134, %v706
  %v708 = vand.u32 %v707, 4294901760
  %v709 = vsub.f32 %v707, %v708
  %v710 = vand.u32 %v709, 4294901760
  %711 = vmatpush2.msra.mxu0 %v710
  %v712 = vand.u32 %v131, 4294901760
  %v713 = vsub.f32 %v131, %v712
  %v714 = vand.u32 %v713, 4294901760
  %v715 = vsub.f32 %v713, %v714
  %v716 = vand.u32 %v715, 4294901760
  %717 = vmatprep.subr.mxu0 %v716
  %v718 = vand.u32 %v130, 4294901760
  %v719 = vsub.f32 %v130, %v718
  %v720 = vand.u32 %v719, 4294901760
  %v721 = vsub.f32 %v719, %v720
  %v722 = vand.u32 %v721, 4294901760
  %723 = vmatpush2.msra.mxu0 %v722
  %v724 = vand.u32 %v127, 4294901760
  %v725 = vsub.f32 %v127, %v724
  %v726 = vand.u32 %v725, 4294901760
  %v727 = vsub.f32 %v725, %v726
  %v728 = vand.u32 %v727, 4294901760
  %729 = vmatprep.subr.mxu0 %v728
  %v730 = vand.u32 %v126, 4294901760
  %v731 = vsub.f32 %v126, %v730
  %v732 = vand.u32 %v731, 4294901760
  %v733 = vsub.f32 %v731, %v732
  %v734 = vand.u32 %v733, 4294901760
  %735 = vmatpush2.msra.mxu0 %v734
  %v736 = vand.u32 %v123, 4294901760
  %v737 = vsub.f32 %v123, %v736
  %v738 = vand.u32 %v737, 4294901760
  %v739 = vsub.f32 %v737, %v738
  %v740 = vand.u32 %v739, 4294901760
  %741 = vmatprep.subr.mxu0 %v740
  %v742 = vand.u32 %v122, 4294901760
  %v743 = vsub.f32 %v122, %v742
  %v744 = vand.u32 %v743, 4294901760
  %v745 = vsub.f32 %v743, %v744
  %v746 = vand.u32 %v745, 4294901760
  %747 = vmatpush2.msra.mxu0 %v746
  %v748 = vand.u32 %v119, 4294901760
  %v749 = vsub.f32 %v119, %v748
  %v750 = vand.u32 %v749, 4294901760
  %v751 = vsub.f32 %v749, %v750
  %v752 = vand.u32 %v751, 4294901760
  %753 = vmatprep.subr.mxu0 %v752
  %v754 = vand.u32 %v118, 4294901760
  %v755 = vsub.f32 %v118, %v754
  %v756 = vand.u32 %v755, 4294901760
  %v757 = vsub.f32 %v755, %v756
  %v758 = vand.u32 %v757, 4294901760
  %759 = vmatpush2.msra.mxu0 %v758
  %v760 = vand.u32 %v115, 4294901760
  %v761 = vsub.f32 %v115, %v760
  %v762 = vand.u32 %v761, 4294901760
  %v763 = vsub.f32 %v761, %v762
  %v764 = vand.u32 %v763, 4294901760
  %765 = vmatprep.subr.mxu0 %v764
  %v766 = vand.u32 %v114, 4294901760
  %v767 = vsub.f32 %v114, %v766
  %v768 = vand.u32 %v767, 4294901760
  %v769 = vsub.f32 %v767, %v768
  %v770 = vand.u32 %v769, 4294901760
  %771 = vmatpush2.msra.mxu0 %v770
  %v772 = vand.u32 %v111, 4294901760
  %v773 = vsub.f32 %v111, %v772
  %v774 = vand.u32 %v773, 4294901760
  %v775 = vsub.f32 %v773, %v774
  %v776 = vand.u32 %v775, 4294901760
  %777 = vmatprep.subr.mxu0 %v776
  %v778 = vand.u32 %v110, 4294901760
  %v779 = vsub.f32 %v110, %v778
  %v780 = vand.u32 %v779, 4294901760
  %v781 = vsub.f32 %v779, %v780
  %v782 = vand.u32 %v781, 4294901760
  %783 = vmatpush2.msra.mxu0 %v782
  %v784 = vand.u32 %v107, 4294901760
  %v785 = vsub.f32 %v107, %v784
  %v786 = vand.u32 %v785, 4294901760
  %v787 = vsub.f32 %v785, %v786
  %v788 = vand.u32 %v787, 4294901760
  %789 = vmatprep.subr.mxu0 %v788
  %v790 = vand.u32 %v106, 4294901760
  %v791 = vsub.f32 %v106, %v790
  %v792 = vand.u32 %v791, 4294901760
  %v793 = vsub.f32 %v791, %v792
  %v794 = vand.u32 %v793, 4294901760
  %795 = vmatpush2.msra.mxu0 %v794
  %v796 = vand.u32 %v103, 4294901760
  %v797 = vsub.f32 %v103, %v796
  %v798 = vand.u32 %v797, 4294901760
  %v799 = vsub.f32 %v797, %v798
  %v800 = vand.u32 %v799, 4294901760
  %801 = vmatprep.subr.mxu0 %v800
  %v802 = vand.u32 %v102, 4294901760
  %v803 = vsub.f32 %v102, %v802
  %v804 = vand.u32 %v803, 4294901760
  %v805 = vsub.f32 %v803, %v804
  %v806 = vand.u32 %v805, 4294901760
  %807 = vmatpush2.msra.mxu0 %v806
  %v808 = vand.u32 %v27, 4294901760
  %809 = vmatprep.mubr.f32.mxu0 %v808
  %v810 = vand.u32 %v26, 4294901760
  %811 = vmatmul.mubr.f32.gmra.mxu0 %v810
  %v812 = vpop.f32.mrf.mxu0
  %v813 = vadd.f32 %v372, %v812
  %v814 = vpop.f32.mrf.mxu0
  %v815 = vadd.f32 %v374, %v814
  %v816 = vand.u32 %v30, 4294901760
  %817 = vmatprep.mubr.f32.mxu0 %v816
  %v818 = vand.u32 %v29, 4294901760
  %819 = vmatmul.mubr.f32.gmra.mxu0 %v818
  %v820 = vpop.f32.mrf.mxu0
  %v821 = vadd.f32 %v388, %v820
  %v822 = vpop.f32.mrf.mxu0
  %v823 = vadd.f32 %v390, %v822
  %v824 = vand.u32 %v33, 4294901760
  %825 = vmatprep.mubr.f32.mxu0 %v824
  %v826 = vand.u32 %v32, 4294901760
  %827 = vmatmul.mubr.f32.gmra.mxu0 %v826
  %v828 = vpop.f32.mrf.mxu0
  %v829 = vadd.f32 %v404, %v828
  %v830 = vpop.f32.mrf.mxu0
  %v831 = vadd.f32 %v406, %v830
  %v832 = vand.u32 %v36, 4294901760
  %833 = vmatprep.mubr.f32.mxu0 %v832
  %v834 = vand.u32 %v35, 4294901760
  %835 = vmatmul.mubr.f32.gmra.mxu0 %v834
  %v836 = vpop.f32.mrf.mxu0
  %v837 = vadd.f32 %v420, %v836
  %v838 = vpop.f32.mrf.mxu0
  %v839 = vadd.f32 %v422, %v838
  %840 = vdwg.mxu0
  %v841 = vand.u32 %v99, 4294901760
  %v842 = vsub.f32 %v99, %v841
  %843 = vmatprep.subr.mxu0 %v842
  %v844 = vand.u32 %v98, 4294901760
  %v845 = vsub.f32 %v98, %v844
  %846 = vmatpush1.msra.mxu0 %v845
  %v847 = vand.u32 %v95, 4294901760
  %v848 = vsub.f32 %v95, %v847
  %849 = vmatprep.subr.mxu0 %v848
  %v850 = vand.u32 %v94, 4294901760
  %v851 = vsub.f32 %v94, %v850
  %852 = vmatpush1.msra.mxu0 %v851
  %v853 = vand.u32 %v91, 4294901760
  %v854 = vsub.f32 %v91, %v853
  %855 = vmatprep.subr.mxu0 %v854
  %v856 = vand.u32 %v90, 4294901760
  %v857 = vsub.f32 %v90, %v856
  %858 = vmatpush1.msra.mxu0 %v857
  %v859 = vand.u32 %v87, 4294901760
  %v860 = vsub.f32 %v87, %v859
  %861 = vmatprep.subr.mxu0 %v860
  %v862 = vand.u32 %v86, 4294901760
  %v863 = vsub.f32 %v86, %v862
  %864 = vmatpush1.msra.mxu0 %v863
  %v865 = vand.u32 %v83, 4294901760
  %v866 = vsub.f32 %v83, %v865
  %867 = vmatprep.subr.mxu0 %v866
  %v868 = vand.u32 %v82, 4294901760
  %v869 = vsub.f32 %v82, %v868
  %870 = vmatpush1.msra.mxu0 %v869
  %v871 = vand.u32 %v79, 4294901760
  %v872 = vsub.f32 %v79, %v871
  %873 = vmatprep.subr.mxu0 %v872
  %v874 = vand.u32 %v78, 4294901760
  %v875 = vsub.f32 %v78, %v874
  %876 = vmatpush1.msra.mxu0 %v875
  %v877 = vand.u32 %v75, 4294901760
  %v878 = vsub.f32 %v75, %v877
  %879 = vmatprep.subr.mxu0 %v878
  %v880 = vand.u32 %v74, 4294901760
  %v881 = vsub.f32 %v74, %v880
  %882 = vmatpush1.msra.mxu0 %v881
  %v883 = vand.u32 %v71, 4294901760
  %v884 = vsub.f32 %v71, %v883
  %885 = vmatprep.subr.mxu0 %v884
  %v886 = vand.u32 %v70, 4294901760
  %v887 = vsub.f32 %v70, %v886
  %888 = vmatpush1.msra.mxu0 %v887
  %v889 = vand.u32 %v67, 4294901760
  %v890 = vsub.f32 %v67, %v889
  %891 = vmatprep.subr.mxu0 %v890
  %v892 = vand.u32 %v66, 4294901760
  %v893 = vsub.f32 %v66, %v892
  %894 = vmatpush1.msra.mxu0 %v893
  %v895 = vand.u32 %v63, 4294901760
  %v896 = vsub.f32 %v63, %v895
  %897 = vmatprep.subr.mxu0 %v896
  %v898 = vand.u32 %v62, 4294901760
  %v899 = vsub.f32 %v62, %v898
  %900 = vmatpush1.msra.mxu0 %v899
  %v901 = vand.u32 %v59, 4294901760
  %v902 = vsub.f32 %v59, %v901
  %903 = vmatprep.subr.mxu0 %v902
  %v904 = vand.u32 %v58, 4294901760
  %v905 = vsub.f32 %v58, %v904
  %906 = vmatpush1.msra.mxu0 %v905
  %v907 = vand.u32 %v55, 4294901760
  %v908 = vsub.f32 %v55, %v907
  %909 = vmatprep.subr.mxu0 %v908
  %v910 = vand.u32 %v54, 4294901760
  %v911 = vsub.f32 %v54, %v910
  %912 = vmatpush1.msra.mxu0 %v911
  %v913 = vand.u32 %v51, 4294901760
  %v914 = vsub.f32 %v51, %v913
  %915 = vmatprep.subr.mxu0 %v914
  %v916 = vand.u32 %v50, 4294901760
  %v917 = vsub.f32 %v50, %v916
  %918 = vmatpush1.msra.mxu0 %v917
  %v919 = vand.u32 %v47, 4294901760
  %v920 = vsub.f32 %v47, %v919
  %921 = vmatprep.subr.mxu0 %v920
  %v922 = vand.u32 %v46, 4294901760
  %v923 = vsub.f32 %v46, %v922
  %924 = vmatpush1.msra.mxu0 %v923
  %v925 = vand.u32 %v43, 4294901760
  %v926 = vsub.f32 %v43, %v925
  %927 = vmatprep.subr.mxu0 %v926
  %v928 = vand.u32 %v42, 4294901760
  %v929 = vsub.f32 %v42, %v928
  %930 = vmatpush1.msra.mxu0 %v929
  %v931 = vand.u32 %v39, 4294901760
  %v932 = vsub.f32 %v39, %v931
  %933 = vmatprep.subr.mxu0 %v932
  %v934 = vand.u32 %v38, 4294901760
  %v935 = vsub.f32 %v38, %v934
  %936 = vmatpush1.msra.mxu0 %v935
  %v937 = vand.u32 %v163, 4294901760
  %v938 = vsub.f32 %v163, %v937
  %939 = vmatprep.subr.mxu0 %v938
  %v940 = vand.u32 %v162, 4294901760
  %v941 = vsub.f32 %v162, %v940
  %942 = vmatpush2.msra.mxu0 %v941
  %v943 = vand.u32 %v159, 4294901760
  %v944 = vsub.f32 %v159, %v943
  %945 = vmatprep.subr.mxu0 %v944
  %v946 = vand.u32 %v158, 4294901760
  %v947 = vsub.f32 %v158, %v946
  %948 = vmatpush2.msra.mxu0 %v947
  %v949 = vand.u32 %v155, 4294901760
  %v950 = vsub.f32 %v155, %v949
  %951 = vmatprep.subr.mxu0 %v950
  %v952 = vand.u32 %v154, 4294901760
  %v953 = vsub.f32 %v154, %v952
  %954 = vmatpush2.msra.mxu0 %v953
  %v955 = vand.u32 %v151, 4294901760
  %v956 = vsub.f32 %v151, %v955
  %957 = vmatprep.subr.mxu0 %v956
  %v958 = vand.u32 %v150, 4294901760
  %v959 = vsub.f32 %v150, %v958
  %960 = vmatpush2.msra.mxu0 %v959
  %v961 = vand.u32 %v147, 4294901760
  %v962 = vsub.f32 %v147, %v961
  %963 = vmatprep.subr.mxu0 %v962
  %v964 = vand.u32 %v146, 4294901760
  %v965 = vsub.f32 %v146, %v964
  %966 = vmatpush2.msra.mxu0 %v965
  %v967 = vand.u32 %v143, 4294901760
  %v968 = vsub.f32 %v143, %v967
  %969 = vmatprep.subr.mxu0 %v968
  %v970 = vand.u32 %v142, 4294901760
  %v971 = vsub.f32 %v142, %v970
  %972 = vmatpush2.msra.mxu0 %v971
  %v973 = vand.u32 %v139, 4294901760
  %v974 = vsub.f32 %v139, %v973
  %975 = vmatprep.subr.mxu0 %v974
  %v976 = vand.u32 %v138, 4294901760
  %v977 = vsub.f32 %v138, %v976
  %978 = vmatpush2.msra.mxu0 %v977
  %v979 = vand.u32 %v135, 4294901760
  %v980 = vsub.f32 %v135, %v979
  %981 = vmatprep.subr.mxu0 %v980
  %v982 = vand.u32 %v134, 4294901760
  %v983 = vsub.f32 %v134, %v982
  %984 = vmatpush2.msra.mxu0 %v983
  %v985 = vand.u32 %v131, 4294901760
  %v986 = vsub.f32 %v131, %v985
  %987 = vmatprep.subr.mxu0 %v986
  %v988 = vand.u32 %v130, 4294901760
  %v989 = vsub.f32 %v130, %v988
  %990 = vmatpush2.msra.mxu0 %v989
  %v991 = vand.u32 %v127, 4294901760
  %v992 = vsub.f32 %v127, %v991
  %993 = vmatprep.subr.mxu0 %v992
  %v994 = vand.u32 %v126, 4294901760
  %v995 = vsub.f32 %v126, %v994
  %996 = vmatpush2.msra.mxu0 %v995
  %v997 = vand.u32 %v123, 4294901760
  %v998 = vsub.f32 %v123, %v997
  %999 = vmatprep.subr.mxu0 %v998
  %v1000 = vand.u32 %v122, 4294901760
  %v1001 = vsub.f32 %v122, %v1000
  %1002 = vmatpush2.msra.mxu0 %v1001
  %v1003 = vand.u32 %v119, 4294901760
  %v1004 = vsub.f32 %v119, %v1003
  %1005 = vmatprep.subr.mxu0 %v1004
  %v1006 = vand.u32 %v118, 4294901760
  %v1007 = vsub.f32 %v118, %v1006
  %1008 = vmatpush2.msra.mxu0 %v1007
  %v1009 = vand.u32 %v115, 4294901760
  %v1010 = vsub.f32 %v115, %v1009
  %1011 = vmatprep.subr.mxu0 %v1010
  %v1012 = vand.u32 %v114, 4294901760
  %v1013 = vsub.f32 %v114, %v1012
  %1014 = vmatpush2.msra.mxu0 %v1013
  %v1015 = vand.u32 %v111, 4294901760
  %v1016 = vsub.f32 %v111, %v1015
  %1017 = vmatprep.subr.mxu0 %v1016
  %v1018 = vand.u32 %v110, 4294901760
  %v1019 = vsub.f32 %v110, %v1018
  %1020 = vmatpush2.msra.mxu0 %v1019
  %v1021 = vand.u32 %v107, 4294901760
  %v1022 = vsub.f32 %v107, %v1021
  %1023 = vmatprep.subr.mxu0 %v1022
  %v1024 = vand.u32 %v106, 4294901760
  %v1025 = vsub.f32 %v106, %v1024
  %1026 = vmatpush2.msra.mxu0 %v1025
  %v1027 = vand.u32 %v103, 4294901760
  %v1028 = vsub.f32 %v103, %v1027
  %1029 = vmatprep.subr.mxu0 %v1028
  %v1030 = vand.u32 %v102, 4294901760
  %v1031 = vsub.f32 %v102, %v1030
  %1032 = vmatpush2.msra.mxu0 %v1031
  %v1033 = vand.u32 %v27, 4294901760
  %v1034 = vsub.f32 %v27, %v1033
  %1035 = vmatprep.mubr.f32.mxu0 %v1034
  %v1036 = vand.u32 %v26, 4294901760
  %v1037 = vsub.f32 %v26, %v1036
  %1038 = vmatmul.mubr.f32.gmra.mxu0 %v1037
  %v1039 = vpop.f32.mrf.mxu0
  %v1040 = vadd.f32 %v813, %v1039
  %v1041 = vpop.f32.mrf.mxu0
  %v1042 = vadd.f32 %v815, %v1041
  %v1043 = vand.u32 %v30, 4294901760
  %v1044 = vsub.f32 %v30, %v1043
  %1045 = vmatprep.mubr.f32.mxu0 %v1044
  %v1046 = vand.u32 %v29, 4294901760
  %v1047 = vsub.f32 %v29, %v1046
  %1048 = vmatmul.mubr.f32.gmra.mxu0 %v1047
  %v1049 = vpop.f32.mrf.mxu0
  %v1050 = vadd.f32 %v821, %v1049
  %v1051 = vpop.f32.mrf.mxu0
  %v1052 = vadd.f32 %v823, %v1051
  %v1053 = vand.u32 %v33, 4294901760
  %v1054 = vsub.f32 %v33, %v1053
  %1055 = vmatprep.mubr.f32.mxu0 %v1054
  %v1056 = vand.u32 %v32, 4294901760
  %v1057 = vsub.f32 %v32, %v1056
  %1058 = vmatmul.mubr.f32.gmra.mxu0 %v1057
  %v1059 = vpop.f32.mrf.mxu0
  %v1060 = vadd.f32 %v829, %v1059
  %v1061 = vpop.f32.mrf.mxu0
  %v1062 = vadd.f32 %v831, %v1061
  %v1063 = vand.u32 %v36, 4294901760
  %v1064 = vsub.f32 %v36, %v1063
  %1065 = vmatprep.mubr.f32.mxu0 %v1064
  %v1066 = vand.u32 %v35, 4294901760
  %v1067 = vsub.f32 %v35, %v1066
  %1068 = vmatmul.mubr.f32.gmra.mxu0 %v1067
  %v1069 = vpop.f32.mrf.mxu0
  %v1070 = vadd.f32 %v837, %v1069
  %v1071 = vpop.f32.mrf.mxu0
  %v1072 = vadd.f32 %v839, %v1071
  %1073 = vdwg.mxu0
  %v1074 = vand.u32 %v99, 4294901760
  %1075 = vmatprep.subr.mxu0 %v1074
  %v1076 = vand.u32 %v98, 4294901760
  %1077 = vmatpush1.msra.mxu0 %v1076
  %v1078 = vand.u32 %v95, 4294901760
  %1079 = vmatprep.subr.mxu0 %v1078
  %v1080 = vand.u32 %v94, 4294901760
  %1081 = vmatpush1.msra.mxu0 %v1080
  %v1082 = vand.u32 %v91, 4294901760
  %1083 = vmatprep.subr.mxu0 %v1082
  %v1084 = vand.u32 %v90, 4294901760
  %1085 = vmatpush1.msra.mxu0 %v1084
  %v1086 = vand.u32 %v87, 4294901760
  %1087 = vmatprep.subr.mxu0 %v1086
  %v1088 = vand.u32 %v86, 4294901760
  %1089 = vmatpush1.msra.mxu0 %v1088
  %v1090 = vand.u32 %v83, 4294901760
  %1091 = vmatprep.subr.mxu0 %v1090
  %v1092 = vand.u32 %v82, 4294901760
  %1093 = vmatpush1.msra.mxu0 %v1092
  %v1094 = vand.u32 %v79, 4294901760
  %1095 = vmatprep.subr.mxu0 %v1094
  %v1096 = vand.u32 %v78, 4294901760
  %1097 = vmatpush1.msra.mxu0 %v1096
  %v1098 = vand.u32 %v75, 4294901760
  %1099 = vmatprep.subr.mxu0 %v1098
  %v1100 = vand.u32 %v74, 4294901760
  %1101 = vmatpush1.msra.mxu0 %v1100
  %v1102 = vand.u32 %v71, 4294901760
  %1103 = vmatprep.subr.mxu0 %v1102
  %v1104 = vand.u32 %v70, 4294901760
  %1105 = vmatpush1.msra.mxu0 %v1104
  %v1106 = vand.u32 %v67, 4294901760
  %1107 = vmatprep.subr.mxu0 %v1106
  %v1108 = vand.u32 %v66, 4294901760
  %1109 = vmatpush1.msra.mxu0 %v1108
  %v1110 = vand.u32 %v63, 4294901760
  %1111 = vmatprep.subr.mxu0 %v1110
  %v1112 = vand.u32 %v62, 4294901760
  %1113 = vmatpush1.msra.mxu0 %v1112
  %v1114 = vand.u32 %v59, 4294901760
  %1115 = vmatprep.subr.mxu0 %v1114
  %v1116 = vand.u32 %v58, 4294901760
  %1117 = vmatpush1.msra.mxu0 %v1116
  %v1118 = vand.u32 %v55, 4294901760
  %1119 = vmatprep.subr.mxu0 %v1118
  %v1120 = vand.u32 %v54, 4294901760
  %1121 = vmatpush1.msra.mxu0 %v1120
  %v1122 = vand.u32 %v51, 4294901760
  %1123 = vmatprep.subr.mxu0 %v1122
  %v1124 = vand.u32 %v50, 4294901760
  %1125 = vmatpush1.msra.mxu0 %v1124
  %v1126 = vand.u32 %v47, 4294901760
  %1127 = vmatprep.subr.mxu0 %v1126
  %v1128 = vand.u32 %v46, 4294901760
  %1129 = vmatpush1.msra.mxu0 %v1128
  %v1130 = vand.u32 %v43, 4294901760
  %1131 = vmatprep.subr.mxu0 %v1130
  %v1132 = vand.u32 %v42, 4294901760
  %1133 = vmatpush1.msra.mxu0 %v1132
  %v1134 = vand.u32 %v39, 4294901760
  %1135 = vmatprep.subr.mxu0 %v1134
  %v1136 = vand.u32 %v38, 4294901760
  %1137 = vmatpush1.msra.mxu0 %v1136
  %v1138 = vand.u32 %v163, 4294901760
  %1139 = vmatprep.subr.mxu0 %v1138
  %v1140 = vand.u32 %v162, 4294901760
  %1141 = vmatpush2.msra.mxu0 %v1140
  %v1142 = vand.u32 %v159, 4294901760
  %1143 = vmatprep.subr.mxu0 %v1142
  %v1144 = vand.u32 %v158, 4294901760
  %1145 = vmatpush2.msra.mxu0 %v1144
  %v1146 = vand.u32 %v155, 4294901760
  %1147 = vmatprep.subr.mxu0 %v1146
  %v1148 = vand.u32 %v154, 4294901760
  %1149 = vmatpush2.msra.mxu0 %v1148
  %v1150 = vand.u32 %v151, 4294901760
  %1151 = vmatprep.subr.mxu0 %v1150
  %v1152 = vand.u32 %v150, 4294901760
  %1153 = vmatpush2.msra.mxu0 %v1152
  %v1154 = vand.u32 %v147, 4294901760
  %1155 = vmatprep.subr.mxu0 %v1154
  %v1156 = vand.u32 %v146, 4294901760
  %1157 = vmatpush2.msra.mxu0 %v1156
  %v1158 = vand.u32 %v143, 4294901760
  %1159 = vmatprep.subr.mxu0 %v1158
  %v1160 = vand.u32 %v142, 4294901760
  %1161 = vmatpush2.msra.mxu0 %v1160
  %v1162 = vand.u32 %v139, 4294901760
  %1163 = vmatprep.subr.mxu0 %v1162
  %v1164 = vand.u32 %v138, 4294901760
  %1165 = vmatpush2.msra.mxu0 %v1164
  %v1166 = vand.u32 %v135, 4294901760
  %1167 = vmatprep.subr.mxu0 %v1166
  %v1168 = vand.u32 %v134, 4294901760
  %1169 = vmatpush2.msra.mxu0 %v1168
  %v1170 = vand.u32 %v131, 4294901760
  %1171 = vmatprep.subr.mxu0 %v1170
  %v1172 = vand.u32 %v130, 4294901760
  %1173 = vmatpush2.msra.mxu0 %v1172
  %v1174 = vand.u32 %v127, 4294901760
  %1175 = vmatprep.subr.mxu0 %v1174
  %v1176 = vand.u32 %v126, 4294901760
  %1177 = vmatpush2.msra.mxu0 %v1176
  %v1178 = vand.u32 %v123, 4294901760
  %1179 = vmatprep.subr.mxu0 %v1178
  %v1180 = vand.u32 %v122, 4294901760
  %1181 = vmatpush2.msra.mxu0 %v1180
  %v1182 = vand.u32 %v119, 4294901760
  %1183 = vmatprep.subr.mxu0 %v1182
  %v1184 = vand.u32 %v118, 4294901760
  %1185 = vmatpush2.msra.mxu0 %v1184
  %v1186 = vand.u32 %v115, 4294901760
  %1187 = vmatprep.subr.mxu0 %v1186
  %v1188 = vand.u32 %v114, 4294901760
  %1189 = vmatpush2.msra.mxu0 %v1188
  %v1190 = vand.u32 %v111, 4294901760
  %1191 = vmatprep.subr.mxu0 %v1190
  %v1192 = vand.u32 %v110, 4294901760
  %1193 = vmatpush2.msra.mxu0 %v1192
  %v1194 = vand.u32 %v107, 4294901760
  %1195 = vmatprep.subr.mxu0 %v1194
  %v1196 = vand.u32 %v106, 4294901760
  %1197 = vmatpush2.msra.mxu0 %v1196
  %v1198 = vand.u32 %v103, 4294901760
  %1199 = vmatprep.subr.mxu0 %v1198
  %v1200 = vand.u32 %v102, 4294901760
  %1201 = vmatpush2.msra.mxu0 %v1200
  %v1202 = vand.u32 %v27, 4294901760
  %v1203 = vsub.f32 %v27, %v1202
  %v1204 = vand.u32 %v1203, 4294901760
  %1205 = vmatprep.mubr.f32.mxu0 %v1204
  %v1206 = vand.u32 %v26, 4294901760
  %v1207 = vsub.f32 %v26, %v1206
  %v1208 = vand.u32 %v1207, 4294901760
  %1209 = vmatmul.mubr.f32.gmra.mxu0 %v1208
  %v1210 = vpop.f32.mrf.mxu0
  %v1211 = vadd.f32 %v1040, %v1210
  %v1212 = vpop.f32.mrf.mxu0
  %v1213 = vadd.f32 %v1042, %v1212
  %v1214 = vand.u32 %v30, 4294901760
  %v1215 = vsub.f32 %v30, %v1214
  %v1216 = vand.u32 %v1215, 4294901760
  %1217 = vmatprep.mubr.f32.mxu0 %v1216
  %v1218 = vand.u32 %v29, 4294901760
  %v1219 = vsub.f32 %v29, %v1218
  %v1220 = vand.u32 %v1219, 4294901760
  %1221 = vmatmul.mubr.f32.gmra.mxu0 %v1220
  %v1222 = vpop.f32.mrf.mxu0
  %v1223 = vadd.f32 %v1050, %v1222
  %v1224 = vpop.f32.mrf.mxu0
  %v1225 = vadd.f32 %v1052, %v1224
  %v1226 = vand.u32 %v33, 4294901760
  %v1227 = vsub.f32 %v33, %v1226
  %v1228 = vand.u32 %v1227, 4294901760
  %1229 = vmatprep.mubr.f32.mxu0 %v1228
  %v1230 = vand.u32 %v32, 4294901760
  %v1231 = vsub.f32 %v32, %v1230
  %v1232 = vand.u32 %v1231, 4294901760
  %1233 = vmatmul.mubr.f32.gmra.mxu0 %v1232
  %v1234 = vpop.f32.mrf.mxu0
  %v1235 = vadd.f32 %v1060, %v1234
  %v1236 = vpop.f32.mrf.mxu0
  %v1237 = vadd.f32 %v1062, %v1236
  %v1238 = vand.u32 %v36, 4294901760
  %v1239 = vsub.f32 %v36, %v1238
  %v1240 = vand.u32 %v1239, 4294901760
  %1241 = vmatprep.mubr.f32.mxu0 %v1240
  %v1242 = vand.u32 %v35, 4294901760
  %v1243 = vsub.f32 %v35, %v1242
  %v1244 = vand.u32 %v1243, 4294901760
  %1245 = vmatmul.mubr.f32.gmra.mxu0 %v1244
  %v1246 = vpop.f32.mrf.mxu0
  %v1247 = vadd.f32 %v1070, %v1246
  %v1248 = vpop.f32.mrf.mxu0
  %v1249 = vadd.f32 %v1072, %v1248
  %1250 = vdwg.mxu0
  %v1251 = vand.u32 %v99, 4294901760
  %v1252 = vsub.f32 %v99, %v1251
  %v1253 = vand.u32 %v1252, 4294901760
  %1254 = vmatprep.subr.mxu0 %v1253
  %v1255 = vand.u32 %v98, 4294901760
  %v1256 = vsub.f32 %v98, %v1255
  %v1257 = vand.u32 %v1256, 4294901760
  %1258 = vmatpush1.msra.mxu0 %v1257
  %v1259 = vand.u32 %v95, 4294901760
  %v1260 = vsub.f32 %v95, %v1259
  %v1261 = vand.u32 %v1260, 4294901760
  %1262 = vmatprep.subr.mxu0 %v1261
  %v1263 = vand.u32 %v94, 4294901760
  %v1264 = vsub.f32 %v94, %v1263
  %v1265 = vand.u32 %v1264, 4294901760
  %1266 = vmatpush1.msra.mxu0 %v1265
  %v1267 = vand.u32 %v91, 4294901760
  %v1268 = vsub.f32 %v91, %v1267
  %v1269 = vand.u32 %v1268, 4294901760
  %1270 = vmatprep.subr.mxu0 %v1269
  %v1271 = vand.u32 %v90, 4294901760
  %v1272 = vsub.f32 %v90, %v1271
  %v1273 = vand.u32 %v1272, 4294901760
  %1274 = vmatpush1.msra.mxu0 %v1273
  %v1275 = vand.u32 %v87, 4294901760
  %v1276 = vsub.f32 %v87, %v1275
  %v1277 = vand.u32 %v1276, 4294901760
  %1278 = vmatprep.subr.mxu0 %v1277
  %v1279 = vand.u32 %v86, 4294901760
  %v1280 = vsub.f32 %v86, %v1279
  %v1281 = vand.u32 %v1280, 4294901760
  %1282 = vmatpush1.msra.mxu0 %v1281
  %v1283 = vand.u32 %v83, 4294901760
  %v1284 = vsub.f32 %v83, %v1283
  %v1285 = vand.u32 %v1284, 4294901760
  %1286 = vmatprep.subr.mxu0 %v1285
  %v1287 = vand.u32 %v82, 4294901760
  %v1288 = vsub.f32 %v82, %v1287
  %v1289 = vand.u32 %v1288, 4294901760
  %1290 = vmatpush1.msra.mxu0 %v1289
  %v1291 = vand.u32 %v79, 4294901760
  %v1292 = vsub.f32 %v79, %v1291
  %v1293 = vand.u32 %v1292, 4294901760
  %1294 = vmatprep.subr.mxu0 %v1293
  %v1295 = vand.u32 %v78, 4294901760
  %v1296 = vsub.f32 %v78, %v1295
  %v1297 = vand.u32 %v1296, 4294901760
  %1298 = vmatpush1.msra.mxu0 %v1297
  %v1299 = vand.u32 %v75, 4294901760
  %v1300 = vsub.f32 %v75, %v1299
  %v1301 = vand.u32 %v1300, 4294901760
  %1302 = vmatprep.subr.mxu0 %v1301
  %v1303 = vand.u32 %v74, 4294901760
  %v1304 = vsub.f32 %v74, %v1303
  %v1305 = vand.u32 %v1304, 4294901760
  %1306 = vmatpush1.msra.mxu0 %v1305
  %v1307 = vand.u32 %v71, 4294901760
  %v1308 = vsub.f32 %v71, %v1307
  %v1309 = vand.u32 %v1308, 4294901760
  %1310 = vmatprep.subr.mxu0 %v1309
  %v1311 = vand.u32 %v70, 4294901760
  %v1312 = vsub.f32 %v70, %v1311
  %v1313 = vand.u32 %v1312, 4294901760
  %1314 = vmatpush1.msra.mxu0 %v1313
  %v1315 = vand.u32 %v67, 4294901760
  %v1316 = vsub.f32 %v67, %v1315
  %v1317 = vand.u32 %v1316, 4294901760
  %1318 = vmatprep.subr.mxu0 %v1317
  %v1319 = vand.u32 %v66, 4294901760
  %v1320 = vsub.f32 %v66, %v1319
  %v1321 = vand.u32 %v1320, 4294901760
  %1322 = vmatpush1.msra.mxu0 %v1321
  %v1323 = vand.u32 %v63, 4294901760
  %v1324 = vsub.f32 %v63, %v1323
  %v1325 = vand.u32 %v1324, 4294901760
  %1326 = vmatprep.subr.mxu0 %v1325
  %v1327 = vand.u32 %v62, 4294901760
  %v1328 = vsub.f32 %v62, %v1327
  %v1329 = vand.u32 %v1328, 4294901760
  %1330 = vmatpush1.msra.mxu0 %v1329
  %v1331 = vand.u32 %v59, 4294901760
  %v1332 = vsub.f32 %v59, %v1331
  %v1333 = vand.u32 %v1332, 4294901760
  %1334 = vmatprep.subr.mxu0 %v1333
  %v1335 = vand.u32 %v58, 4294901760
  %v1336 = vsub.f32 %v58, %v1335
  %v1337 = vand.u32 %v1336, 4294901760
  %1338 = vmatpush1.msra.mxu0 %v1337
  %v1339 = vand.u32 %v55, 4294901760
  %v1340 = vsub.f32 %v55, %v1339
  %v1341 = vand.u32 %v1340, 4294901760
  %1342 = vmatprep.subr.mxu0 %v1341
  %v1343 = vand.u32 %v54, 4294901760
  %v1344 = vsub.f32 %v54, %v1343
  %v1345 = vand.u32 %v1344, 4294901760
  %1346 = vmatpush1.msra.mxu0 %v1345
  %v1347 = vand.u32 %v51, 4294901760
  %v1348 = vsub.f32 %v51, %v1347
  %v1349 = vand.u32 %v1348, 4294901760
  %1350 = vmatprep.subr.mxu0 %v1349
  %v1351 = vand.u32 %v50, 4294901760
  %v1352 = vsub.f32 %v50, %v1351
  %v1353 = vand.u32 %v1352, 4294901760
  %1354 = vmatpush1.msra.mxu0 %v1353
  %v1355 = vand.u32 %v47, 4294901760
  %v1356 = vsub.f32 %v47, %v1355
  %v1357 = vand.u32 %v1356, 4294901760
  %1358 = vmatprep.subr.mxu0 %v1357
  %v1359 = vand.u32 %v46, 4294901760
  %v1360 = vsub.f32 %v46, %v1359
  %v1361 = vand.u32 %v1360, 4294901760
  %1362 = vmatpush1.msra.mxu0 %v1361
  %v1363 = vand.u32 %v43, 4294901760
  %v1364 = vsub.f32 %v43, %v1363
  %v1365 = vand.u32 %v1364, 4294901760
  %1366 = vmatprep.subr.mxu0 %v1365
  %v1367 = vand.u32 %v42, 4294901760
  %v1368 = vsub.f32 %v42, %v1367
  %v1369 = vand.u32 %v1368, 4294901760
  %1370 = vmatpush1.msra.mxu0 %v1369
  %v1371 = vand.u32 %v39, 4294901760
  %v1372 = vsub.f32 %v39, %v1371
  %v1373 = vand.u32 %v1372, 4294901760
  %1374 = vmatprep.subr.mxu0 %v1373
  %v1375 = vand.u32 %v38, 4294901760
  %v1376 = vsub.f32 %v38, %v1375
  %v1377 = vand.u32 %v1376, 4294901760
  %1378 = vmatpush1.msra.mxu0 %v1377
  %v1379 = vand.u32 %v163, 4294901760
  %v1380 = vsub.f32 %v163, %v1379
  %v1381 = vand.u32 %v1380, 4294901760
  %1382 = vmatprep.subr.mxu0 %v1381
  %v1383 = vand.u32 %v162, 4294901760
  %v1384 = vsub.f32 %v162, %v1383
  %v1385 = vand.u32 %v1384, 4294901760
  %1386 = vmatpush2.msra.mxu0 %v1385
  %v1387 = vand.u32 %v159, 4294901760
  %v1388 = vsub.f32 %v159, %v1387
  %v1389 = vand.u32 %v1388, 4294901760
  %1390 = vmatprep.subr.mxu0 %v1389
  %v1391 = vand.u32 %v158, 4294901760
  %v1392 = vsub.f32 %v158, %v1391
  %v1393 = vand.u32 %v1392, 4294901760
  %1394 = vmatpush2.msra.mxu0 %v1393
  %v1395 = vand.u32 %v155, 4294901760
  %v1396 = vsub.f32 %v155, %v1395
  %v1397 = vand.u32 %v1396, 4294901760
  %1398 = vmatprep.subr.mxu0 %v1397
  %v1399 = vand.u32 %v154, 4294901760
  %v1400 = vsub.f32 %v154, %v1399
  %v1401 = vand.u32 %v1400, 4294901760
  %1402 = vmatpush2.msra.mxu0 %v1401
  %v1403 = vand.u32 %v151, 4294901760
  %v1404 = vsub.f32 %v151, %v1403
  %v1405 = vand.u32 %v1404, 4294901760
  %1406 = vmatprep.subr.mxu0 %v1405
  %v1407 = vand.u32 %v150, 4294901760
  %v1408 = vsub.f32 %v150, %v1407
  %v1409 = vand.u32 %v1408, 4294901760
  %1410 = vmatpush2.msra.mxu0 %v1409
  %v1411 = vand.u32 %v147, 4294901760
  %v1412 = vsub.f32 %v147, %v1411
  %v1413 = vand.u32 %v1412, 4294901760
  %1414 = vmatprep.subr.mxu0 %v1413
  %v1415 = vand.u32 %v146, 4294901760
  %v1416 = vsub.f32 %v146, %v1415
  %v1417 = vand.u32 %v1416, 4294901760
  %1418 = vmatpush2.msra.mxu0 %v1417
  %v1419 = vand.u32 %v143, 4294901760
  %v1420 = vsub.f32 %v143, %v1419
  %v1421 = vand.u32 %v1420, 4294901760
  %1422 = vmatprep.subr.mxu0 %v1421
  %v1423 = vand.u32 %v142, 4294901760
  %v1424 = vsub.f32 %v142, %v1423
  %v1425 = vand.u32 %v1424, 4294901760
  %1426 = vmatpush2.msra.mxu0 %v1425
  %v1427 = vand.u32 %v139, 4294901760
  %v1428 = vsub.f32 %v139, %v1427
  %v1429 = vand.u32 %v1428, 4294901760
  %1430 = vmatprep.subr.mxu0 %v1429
  %v1431 = vand.u32 %v138, 4294901760
  %v1432 = vsub.f32 %v138, %v1431
  %v1433 = vand.u32 %v1432, 4294901760
  %1434 = vmatpush2.msra.mxu0 %v1433
  %v1435 = vand.u32 %v135, 4294901760
  %v1436 = vsub.f32 %v135, %v1435
  %v1437 = vand.u32 %v1436, 4294901760
  %1438 = vmatprep.subr.mxu0 %v1437
  %v1439 = vand.u32 %v134, 4294901760
  %v1440 = vsub.f32 %v134, %v1439
  %v1441 = vand.u32 %v1440, 4294901760
  %1442 = vmatpush2.msra.mxu0 %v1441
  %v1443 = vand.u32 %v131, 4294901760
  %v1444 = vsub.f32 %v131, %v1443
  %v1445 = vand.u32 %v1444, 4294901760
  %1446 = vmatprep.subr.mxu0 %v1445
  %v1447 = vand.u32 %v130, 4294901760
  %v1448 = vsub.f32 %v130, %v1447
  %v1449 = vand.u32 %v1448, 4294901760
  %1450 = vmatpush2.msra.mxu0 %v1449
  %v1451 = vand.u32 %v127, 4294901760
  %v1452 = vsub.f32 %v127, %v1451
  %v1453 = vand.u32 %v1452, 4294901760
  %1454 = vmatprep.subr.mxu0 %v1453
  %v1455 = vand.u32 %v126, 4294901760
  %v1456 = vsub.f32 %v126, %v1455
  %v1457 = vand.u32 %v1456, 4294901760
  %1458 = vmatpush2.msra.mxu0 %v1457
  %v1459 = vand.u32 %v123, 4294901760
  %v1460 = vsub.f32 %v123, %v1459
  %v1461 = vand.u32 %v1460, 4294901760
  %1462 = vmatprep.subr.mxu0 %v1461
  %v1463 = vand.u32 %v122, 4294901760
  %v1464 = vsub.f32 %v122, %v1463
  %v1465 = vand.u32 %v1464, 4294901760
  %1466 = vmatpush2.msra.mxu0 %v1465
  %v1467 = vand.u32 %v119, 4294901760
  %v1468 = vsub.f32 %v119, %v1467
  %v1469 = vand.u32 %v1468, 4294901760
  %1470 = vmatprep.subr.mxu0 %v1469
  %v1471 = vand.u32 %v118, 4294901760
  %v1472 = vsub.f32 %v118, %v1471
  %v1473 = vand.u32 %v1472, 4294901760
  %1474 = vmatpush2.msra.mxu0 %v1473
  %v1475 = vand.u32 %v115, 4294901760
  %v1476 = vsub.f32 %v115, %v1475
  %v1477 = vand.u32 %v1476, 4294901760
  %1478 = vmatprep.subr.mxu0 %v1477
  %v1479 = vand.u32 %v114, 4294901760
  %v1480 = vsub.f32 %v114, %v1479
  %v1481 = vand.u32 %v1480, 4294901760
  %1482 = vmatpush2.msra.mxu0 %v1481
  %v1483 = vand.u32 %v111, 4294901760
  %v1484 = vsub.f32 %v111, %v1483
  %v1485 = vand.u32 %v1484, 4294901760
  %1486 = vmatprep.subr.mxu0 %v1485
  %v1487 = vand.u32 %v110, 4294901760
  %v1488 = vsub.f32 %v110, %v1487
  %v1489 = vand.u32 %v1488, 4294901760
  %1490 = vmatpush2.msra.mxu0 %v1489
  %v1491 = vand.u32 %v107, 4294901760
  %v1492 = vsub.f32 %v107, %v1491
  %v1493 = vand.u32 %v1492, 4294901760
  %1494 = vmatprep.subr.mxu0 %v1493
  %v1495 = vand.u32 %v106, 4294901760
  %v1496 = vsub.f32 %v106, %v1495
  %v1497 = vand.u32 %v1496, 4294901760
  %1498 = vmatpush2.msra.mxu0 %v1497
  %v1499 = vand.u32 %v103, 4294901760
  %v1500 = vsub.f32 %v103, %v1499
  %v1501 = vand.u32 %v1500, 4294901760
  %1502 = vmatprep.subr.mxu0 %v1501
  %v1503 = vand.u32 %v102, 4294901760
  %v1504 = vsub.f32 %v102, %v1503
  %v1505 = vand.u32 %v1504, 4294901760
  %1506 = vmatpush2.msra.mxu0 %v1505
  %v1507 = vand.u32 %v27, 4294901760
  %1508 = vmatprep.mubr.f32.mxu0 %v1507
  %v1509 = vand.u32 %v26, 4294901760
  %1510 = vmatmul.mubr.f32.gmra.mxu0 %v1509
  %v1511 = vpop.f32.mrf.mxu0
  %v1512 = vadd.f32 %v1211, %v1511
  %v1513 = vpop.f32.mrf.mxu0
  %v1514 = vadd.f32 %v1213, %v1513
  %v1515 = vand.u32 %v30, 4294901760
  %1516 = vmatprep.mubr.f32.mxu0 %v1515
  %v1517 = vand.u32 %v29, 4294901760
  %1518 = vmatmul.mubr.f32.gmra.mxu0 %v1517
  %v1519 = vpop.f32.mrf.mxu0
  %v1520 = vadd.f32 %v1223, %v1519
  %v1521 = vpop.f32.mrf.mxu0
  %v1522 = vadd.f32 %v1225, %v1521
  %v1523 = vand.u32 %v33, 4294901760
  %1524 = vmatprep.mubr.f32.mxu0 %v1523
  %v1525 = vand.u32 %v32, 4294901760
  %1526 = vmatmul.mubr.f32.gmra.mxu0 %v1525
  %v1527 = vpop.f32.mrf.mxu0
  %v1528 = vadd.f32 %v1235, %v1527
  %v1529 = vpop.f32.mrf.mxu0
  %v1530 = vadd.f32 %v1237, %v1529
  %v1531 = vand.u32 %v36, 4294901760
  %1532 = vmatprep.mubr.f32.mxu0 %v1531
  %v1533 = vand.u32 %v35, 4294901760
  %1534 = vmatmul.mubr.f32.gmra.mxu0 %v1533
  %v1535 = vpop.f32.mrf.mxu0
  %v1536 = vadd.f32 %v1247, %v1535
  %v1537 = vpop.f32.mrf.mxu0
  %v1538 = vadd.f32 %v1249, %v1537
  %1539 = vdwg.mxu0
  %v1540 = vand.u32 %v99, 4294901760
  %1541 = vmatprep.subr.mxu0 %v1540
  %v1542 = vand.u32 %v98, 4294901760
  %1543 = vmatpush1.msra.mxu0 %v1542
  %v1544 = vand.u32 %v95, 4294901760
  %1545 = vmatprep.subr.mxu0 %v1544
  %v1546 = vand.u32 %v94, 4294901760
  %1547 = vmatpush1.msra.mxu0 %v1546
  %v1548 = vand.u32 %v91, 4294901760
  %1549 = vmatprep.subr.mxu0 %v1548
  %v1550 = vand.u32 %v90, 4294901760
  %1551 = vmatpush1.msra.mxu0 %v1550
  %v1552 = vand.u32 %v87, 4294901760
  %1553 = vmatprep.subr.mxu0 %v1552
  %v1554 = vand.u32 %v86, 4294901760
  %1555 = vmatpush1.msra.mxu0 %v1554
  %v1556 = vand.u32 %v83, 4294901760
  %1557 = vmatprep.subr.mxu0 %v1556
  %v1558 = vand.u32 %v82, 4294901760
  %1559 = vmatpush1.msra.mxu0 %v1558
  %v1560 = vand.u32 %v79, 4294901760
  %1561 = vmatprep.subr.mxu0 %v1560
  %v1562 = vand.u32 %v78, 4294901760
  %1563 = vmatpush1.msra.mxu0 %v1562
  %v1564 = vand.u32 %v75, 4294901760
  %1565 = vmatprep.subr.mxu0 %v1564
  %v1566 = vand.u32 %v74, 4294901760
  %1567 = vmatpush1.msra.mxu0 %v1566
  %v1568 = vand.u32 %v71, 4294901760
  %1569 = vmatprep.subr.mxu0 %v1568
  %v1570 = vand.u32 %v70, 4294901760
  %1571 = vmatpush1.msra.mxu0 %v1570
  %v1572 = vand.u32 %v67, 4294901760
  %1573 = vmatprep.subr.mxu0 %v1572
  %v1574 = vand.u32 %v66, 4294901760
  %1575 = vmatpush1.msra.mxu0 %v1574
  %v1576 = vand.u32 %v63, 4294901760
  %1577 = vmatprep.subr.mxu0 %v1576
  %v1578 = vand.u32 %v62, 4294901760
  %1579 = vmatpush1.msra.mxu0 %v1578
  %v1580 = vand.u32 %v59, 4294901760
  %1581 = vmatprep.subr.mxu0 %v1580
  %v1582 = vand.u32 %v58, 4294901760
  %1583 = vmatpush1.msra.mxu0 %v1582
  %v1584 = vand.u32 %v55, 4294901760
  %1585 = vmatprep.subr.mxu0 %v1584
  %v1586 = vand.u32 %v54, 4294901760
  %1587 = vmatpush1.msra.mxu0 %v1586
  %v1588 = vand.u32 %v51, 4294901760
  %1589 = vmatprep.subr.mxu0 %v1588
  %v1590 = vand.u32 %v50, 4294901760
  %1591 = vmatpush1.msra.mxu0 %v1590
  %v1592 = vand.u32 %v47, 4294901760
  %1593 = vmatprep.subr.mxu0 %v1592
  %v1594 = vand.u32 %v46, 4294901760
  %1595 = vmatpush1.msra.mxu0 %v1594
  %v1596 = vand.u32 %v43, 4294901760
  %1597 = vmatprep.subr.mxu0 %v1596
  %v1598 = vand.u32 %v42, 4294901760
  %1599 = vmatpush1.msra.mxu0 %v1598
  %v1600 = vand.u32 %v39, 4294901760
  %1601 = vmatprep.subr.mxu0 %v1600
  %v1602 = vand.u32 %v38, 4294901760
  %1603 = vmatpush1.msra.mxu0 %v1602
  %v1604 = vand.u32 %v163, 4294901760
  %1605 = vmatprep.subr.mxu0 %v1604
  %v1606 = vand.u32 %v162, 4294901760
  %1607 = vmatpush2.msra.mxu0 %v1606
  %v1608 = vand.u32 %v159, 4294901760
  %1609 = vmatprep.subr.mxu0 %v1608
  %v1610 = vand.u32 %v158, 4294901760
  %1611 = vmatpush2.msra.mxu0 %v1610
  %v1612 = vand.u32 %v155, 4294901760
  %1613 = vmatprep.subr.mxu0 %v1612
  %v1614 = vand.u32 %v154, 4294901760
  %1615 = vmatpush2.msra.mxu0 %v1614
  %v1616 = vand.u32 %v151, 4294901760
  %1617 = vmatprep.subr.mxu0 %v1616
  %v1618 = vand.u32 %v150, 4294901760
  %1619 = vmatpush2.msra.mxu0 %v1618
  %v1620 = vand.u32 %v147, 4294901760
  %1621 = vmatprep.subr.mxu0 %v1620
  %v1622 = vand.u32 %v146, 4294901760
  %1623 = vmatpush2.msra.mxu0 %v1622
  %v1624 = vand.u32 %v143, 4294901760
  %1625 = vmatprep.subr.mxu0 %v1624
  %v1626 = vand.u32 %v142, 4294901760
  %1627 = vmatpush2.msra.mxu0 %v1626
  %v1628 = vand.u32 %v139, 4294901760
  %1629 = vmatprep.subr.mxu0 %v1628
  %v1630 = vand.u32 %v138, 4294901760
  %1631 = vmatpush2.msra.mxu0 %v1630
  %v1632 = vand.u32 %v135, 4294901760
  %1633 = vmatprep.subr.mxu0 %v1632
  %v1634 = vand.u32 %v134, 4294901760
  %1635 = vmatpush2.msra.mxu0 %v1634
  %v1636 = vand.u32 %v131, 4294901760
  %1637 = vmatprep.subr.mxu0 %v1636
  %v1638 = vand.u32 %v130, 4294901760
  %1639 = vmatpush2.msra.mxu0 %v1638
  %v1640 = vand.u32 %v127, 4294901760
  %1641 = vmatprep.subr.mxu0 %v1640
  %v1642 = vand.u32 %v126, 4294901760
  %1643 = vmatpush2.msra.mxu0 %v1642
  %v1644 = vand.u32 %v123, 4294901760
  %1645 = vmatprep.subr.mxu0 %v1644
  %v1646 = vand.u32 %v122, 4294901760
  %1647 = vmatpush2.msra.mxu0 %v1646
  %v1648 = vand.u32 %v119, 4294901760
  %1649 = vmatprep.subr.mxu0 %v1648
  %v1650 = vand.u32 %v118, 4294901760
  %1651 = vmatpush2.msra.mxu0 %v1650
  %v1652 = vand.u32 %v115, 4294901760
  %1653 = vmatprep.subr.mxu0 %v1652
  %v1654 = vand.u32 %v114, 4294901760
  %1655 = vmatpush2.msra.mxu0 %v1654
  %v1656 = vand.u32 %v111, 4294901760
  %1657 = vmatprep.subr.mxu0 %v1656
  %v1658 = vand.u32 %v110, 4294901760
  %1659 = vmatpush2.msra.mxu0 %v1658
  %v1660 = vand.u32 %v107, 4294901760
  %1661 = vmatprep.subr.mxu0 %v1660
  %v1662 = vand.u32 %v106, 4294901760
  %1663 = vmatpush2.msra.mxu0 %v1662
  %v1664 = vand.u32 %v103, 4294901760
  %1665 = vmatprep.subr.mxu0 %v1664
  %v1666 = vand.u32 %v102, 4294901760
  %1667 = vmatpush2.msra.mxu0 %v1666
  %v1668 = vand.u32 %v27, 4294901760
  %1669 = vmatprep.mubr.f32.mxu0 %v1668
  %v1670 = vand.u32 %v26, 4294901760
  %1671 = vmatmul.mubr.f32.gmra.mxu0 %v1670
  %v1672 = vpop.f32.mrf.mxu0
  %v1673 = vadd.f32 %v1512, %v1672
  %v1674 = vpop.f32.mrf.mxu0
  %v1675 = vadd.f32 %v1514, %v1674
  %v1676 = vand.u32 %v30, 4294901760
  %1677 = vmatprep.mubr.f32.mxu0 %v1676
  %v1678 = vand.u32 %v29, 4294901760
  %1679 = vmatmul.mubr.f32.gmra.mxu0 %v1678
  %v1680 = vpop.f32.mrf.mxu0
  %v1681 = vadd.f32 %v1520, %v1680
  %v1682 = vpop.f32.mrf.mxu0
  %v1683 = vadd.f32 %v1522, %v1682
  %v1684 = vand.u32 %v33, 4294901760
  %1685 = vmatprep.mubr.f32.mxu0 %v1684
  %v1686 = vand.u32 %v32, 4294901760
  %1687 = vmatmul.mubr.f32.gmra.mxu0 %v1686
  %v1688 = vpop.f32.mrf.mxu0
  %v1689 = vadd.f32 %v1528, %v1688
  %v1690 = vpop.f32.mrf.mxu0
  %v1691 = vadd.f32 %v1530, %v1690
  %v1692 = vand.u32 %v36, 4294901760
  %1693 = vmatprep.mubr.f32.mxu0 %v1692
  %v1694 = vand.u32 %v35, 4294901760
  %1695 = vmatmul.mubr.f32.gmra.mxu0 %v1694
  %v1696 = vpop.f32.mrf.mxu0
  %v1697 = vadd.f32 %v1536, %v1696
  %v1698 = vpop.f32.mrf.mxu0
  %v1699 = vadd.f32 %v1538, %v1698
  %1700 = vdwg.mxu0
  %1701 = vmatprep.subr.mxu0 0.0
  %1702 = vmatpush1.msra.mxu0 0.0
  %1703 = vmatprep.subr.mxu0 0.0
  %1704 = vmatpush1.msra.mxu0 0.0
  %1705 = vmatprep.subr.mxu0 0.0
  %1706 = vmatpush1.msra.mxu0 0.0
  %1707 = vmatprep.subr.mxu0 0.0
  %1708 = vmatpush1.msra.mxu0 0.0
  %1709 = vmatprep.subr.mxu0 0.0
  %1710 = vmatpush1.msra.mxu0 0.0
  %1711 = vmatprep.subr.mxu0 0.0
  %1712 = vmatpush1.msra.mxu0 0.0
  %1713 = vmatprep.subr.mxu0 0.0
  %1714 = vmatpush1.msra.mxu0 0.0
  %1715 = vmatprep.subr.mxu0 0.0
  %1716 = vmatpush1.msra.mxu0 0.0
  %1717 = vmatprep.subr.mxu0 0.0
  %1718 = vmatpush1.msra.mxu0 0.0
  %v1719 = vand.u32 %v191, 4294901760
  %1720 = vmatprep.subr.mxu0 %v1719
  %v1721 = vand.u32 %v190, 4294901760
  %1722 = vmatpush1.msra.mxu0 %v1721
  %v1723 = vand.u32 %v187, 4294901760
  %1724 = vmatprep.subr.mxu0 %v1723
  %v1725 = vand.u32 %v186, 4294901760
  %1726 = vmatpush1.msra.mxu0 %v1725
  %v1727 = vand.u32 %v183, 4294901760
  %1728 = vmatprep.subr.mxu0 %v1727
  %v1729 = vand.u32 %v182, 4294901760
  %1730 = vmatpush1.msra.mxu0 %v1729
  %v1731 = vand.u32 %v179, 4294901760
  %1732 = vmatprep.subr.mxu0 %v1731
  %v1733 = vand.u32 %v178, 4294901760
  %1734 = vmatpush1.msra.mxu0 %v1733
  %v1735 = vand.u32 %v175, 4294901760
  %1736 = vmatprep.subr.mxu0 %v1735
  %v1737 = vand.u32 %v174, 4294901760
  %1738 = vmatpush1.msra.mxu0 %v1737
  %v1739 = vand.u32 %v171, 4294901760
  %1740 = vmatprep.subr.mxu0 %v1739
  %v1741 = vand.u32 %v170, 4294901760
  %1742 = vmatpush1.msra.mxu0 %v1741
  %v1743 = vand.u32 %v167, 4294901760
  %1744 = vmatprep.subr.mxu0 %v1743
  %v1745 = vand.u32 %v166, 4294901760
  %1746 = vmatpush1.msra.mxu0 %v1745
  %1747 = vmatprep.subr.mxu0 0.0
  %1748 = vmatpush2.msra.mxu0 0.0
  %1749 = vmatprep.subr.mxu0 0.0
  %1750 = vmatpush2.msra.mxu0 0.0
  %1751 = vmatprep.subr.mxu0 0.0
  %1752 = vmatpush2.msra.mxu0 0.0
  %1753 = vmatprep.subr.mxu0 0.0
  %1754 = vmatpush2.msra.mxu0 0.0
  %1755 = vmatprep.subr.mxu0 0.0
  %1756 = vmatpush2.msra.mxu0 0.0
  %1757 = vmatprep.subr.mxu0 0.0
  %1758 = vmatpush2.msra.mxu0 0.0
  %1759 = vmatprep.subr.mxu0 0.0
  %1760 = vmatpush2.msra.mxu0 0.0
  %1761 = vmatprep.subr.mxu0 0.0
  %1762 = vmatpush2.msra.mxu0 0.0
  %1763 = vmatprep.subr.mxu0 0.0
  %1764 = vmatpush2.msra.mxu0 0.0
  %1765 = vmatprep.subr.mxu0 0.0
  %1766 = vmatpush2.msra.mxu0 0.0
  %1767 = vmatprep.subr.mxu0 0.0
  %1768 = vmatpush2.msra.mxu0 0.0
  %1769 = vmatprep.subr.mxu0 0.0
  %1770 = vmatpush2.msra.mxu0 0.0
  %1771 = vmatprep.subr.mxu0 0.0
  %1772 = vmatpush2.msra.mxu0 0.0
  %1773 = vmatprep.subr.mxu0 0.0
  %1774 = vmatpush2.msra.mxu0 0.0
  %1775 = vmatprep.subr.mxu0 0.0
  %1776 = vmatpush2.msra.mxu0 0.0
  %1777 = vmatprep.subr.mxu0 0.0
  %1778 = vmatpush2.msra.mxu0 0.0
  %1779 = vmatprep.mubr.f32.mxu0 0.0
  %v1780 = vand.u32 %v220, 4294901760
  %v1781 = vsub.f32 %v220, %v1780
  %v1782 = vand.u32 %v1781, 4294901760
  %v1783 = vsub.f32 %v1781, %v1782
  %v1784 = vand.u32 %v1783, 4294901760
  %1785 = vmatmul.mubr.f32.gmra.mxu0 %v1784
  %v1786 = vpop.f32.mrf.mxu0
  %v1787 = vadd.f32 %v1673, %v1786
  %v1788 = vpop.f32.mrf.mxu0
  %v1789 = vadd.f32 %v1675, %v1788
  %1790 = vmatprep.mubr.f32.mxu0 0.0
  %v1791 = vand.u32 %v223, 4294901760
  %v1792 = vsub.f32 %v223, %v1791
  %v1793 = vand.u32 %v1792, 4294901760
  %v1794 = vsub.f32 %v1792, %v1793
  %v1795 = vand.u32 %v1794, 4294901760
  %1796 = vmatmul.mubr.f32.gmra.mxu0 %v1795
  %v1797 = vpop.f32.mrf.mxu0
  %v1798 = vadd.f32 %v1681, %v1797
  %v1799 = vpop.f32.mrf.mxu0
  %v1800 = vadd.f32 %v1683, %v1799
  %1801 = vmatprep.mubr.f32.mxu0 0.0
  %v1802 = vand.u32 %v226, 4294901760
  %v1803 = vsub.f32 %v226, %v1802
  %v1804 = vand.u32 %v1803, 4294901760
  %v1805 = vsub.f32 %v1803, %v1804
  %v1806 = vand.u32 %v1805, 4294901760
  %1807 = vmatmul.mubr.f32.gmra.mxu0 %v1806
  %v1808 = vpop.f32.mrf.mxu0
  %v1809 = vadd.f32 %v1689, %v1808
  %v1810 = vpop.f32.mrf.mxu0
  %v1811 = vadd.f32 %v1691, %v1810
  %1812 = vmatprep.mubr.f32.mxu0 0.0
  %v1813 = vand.u32 %v229, 4294901760
  %v1814 = vsub.f32 %v229, %v1813
  %v1815 = vand.u32 %v1814, 4294901760
  %v1816 = vsub.f32 %v1814, %v1815
  %v1817 = vand.u32 %v1816, 4294901760
  %1818 = vmatmul.mubr.f32.gmra.mxu0 %v1817
  %v1819 = vpop.f32.mrf.mxu0
  %v1820 = vadd.f32 %v1697, %v1819
  %v1821 = vpop.f32.mrf.mxu0
  %v1822 = vadd.f32 %v1699, %v1821
  %1823 = vdwg.mxu0
  %1824 = vmatprep.subr.mxu0 0.0
  %1825 = vmatpush1.msra.mxu0 0.0
  %1826 = vmatprep.subr.mxu0 0.0
  %1827 = vmatpush1.msra.mxu0 0.0
  %1828 = vmatprep.subr.mxu0 0.0
  %1829 = vmatpush1.msra.mxu0 0.0
  %1830 = vmatprep.subr.mxu0 0.0
  %1831 = vmatpush1.msra.mxu0 0.0
  %1832 = vmatprep.subr.mxu0 0.0
  %1833 = vmatpush1.msra.mxu0 0.0
  %1834 = vmatprep.subr.mxu0 0.0
  %1835 = vmatpush1.msra.mxu0 0.0
  %1836 = vmatprep.subr.mxu0 0.0
  %1837 = vmatpush1.msra.mxu0 0.0
  %1838 = vmatprep.subr.mxu0 0.0
  %1839 = vmatpush1.msra.mxu0 0.0
  %1840 = vmatprep.subr.mxu0 0.0
  %1841 = vmatpush1.msra.mxu0 0.0
  %v1842 = vand.u32 %v191, 4294901760
  %v1843 = vsub.f32 %v191, %v1842
  %v1844 = vand.u32 %v1843, 4294901760
  %v1845 = vsub.f32 %v1843, %v1844
  %v1846 = vand.u32 %v1845, 4294901760
  %1847 = vmatprep.subr.mxu0 %v1846
  %v1848 = vand.u32 %v190, 4294901760
  %v1849 = vsub.f32 %v190, %v1848
  %v1850 = vand.u32 %v1849, 4294901760
  %v1851 = vsub.f32 %v1849, %v1850
  %v1852 = vand.u32 %v1851, 4294901760
  %1853 = vmatpush1.msra.mxu0 %v1852
  %v1854 = vand.u32 %v187, 4294901760
  %v1855 = vsub.f32 %v187, %v1854
  %v1856 = vand.u32 %v1855, 4294901760
  %v1857 = vsub.f32 %v1855, %v1856
  %v1858 = vand.u32 %v1857, 4294901760
  %1859 = vmatprep.subr.mxu0 %v1858
  %v1860 = vand.u32 %v186, 4294901760
  %v1861 = vsub.f32 %v186, %v1860
  %v1862 = vand.u32 %v1861, 4294901760
  %v1863 = vsub.f32 %v1861, %v1862
  %v1864 = vand.u32 %v1863, 4294901760
  %1865 = vmatpush1.msra.mxu0 %v1864
  %v1866 = vand.u32 %v183, 4294901760
  %v1867 = vsub.f32 %v183, %v1866
  %v1868 = vand.u32 %v1867, 4294901760
  %v1869 = vsub.f32 %v1867, %v1868
  %v1870 = vand.u32 %v1869, 4294901760
  %1871 = vmatprep.subr.mxu0 %v1870
  %v1872 = vand.u32 %v182, 4294901760
  %v1873 = vsub.f32 %v182, %v1872
  %v1874 = vand.u32 %v1873, 4294901760
  %v1875 = vsub.f32 %v1873, %v1874
  %v1876 = vand.u32 %v1875, 4294901760
  %1877 = vmatpush1.msra.mxu0 %v1876
  %v1878 = vand.u32 %v179, 4294901760
  %v1879 = vsub.f32 %v179, %v1878
  %v1880 = vand.u32 %v1879, 4294901760
  %v1881 = vsub.f32 %v1879, %v1880
  %v1882 = vand.u32 %v1881, 4294901760
  %1883 = vmatprep.subr.mxu0 %v1882
  %v1884 = vand.u32 %v178, 4294901760
  %v1885 = vsub.f32 %v178, %v1884
  %v1886 = vand.u32 %v1885, 4294901760
  %v1887 = vsub.f32 %v1885, %v1886
  %v1888 = vand.u32 %v1887, 4294901760
  %1889 = vmatpush1.msra.mxu0 %v1888
  %v1890 = vand.u32 %v175, 4294901760
  %v1891 = vsub.f32 %v175, %v1890
  %v1892 = vand.u32 %v1891, 4294901760
  %v1893 = vsub.f32 %v1891, %v1892
  %v1894 = vand.u32 %v1893, 4294901760
  %1895 = vmatprep.subr.mxu0 %v1894
  %v1896 = vand.u32 %v174, 4294901760
  %v1897 = vsub.f32 %v174, %v1896
  %v1898 = vand.u32 %v1897, 4294901760
  %v1899 = vsub.f32 %v1897, %v1898
  %v1900 = vand.u32 %v1899, 4294901760
  %1901 = vmatpush1.msra.mxu0 %v1900
  %v1902 = vand.u32 %v171, 4294901760
  %v1903 = vsub.f32 %v171, %v1902
  %v1904 = vand.u32 %v1903, 4294901760
  %v1905 = vsub.f32 %v1903, %v1904
  %v1906 = vand.u32 %v1905, 4294901760
  %1907 = vmatprep.subr.mxu0 %v1906
  %v1908 = vand.u32 %v170, 4294901760
  %v1909 = vsub.f32 %v170, %v1908
  %v1910 = vand.u32 %v1909, 4294901760
  %v1911 = vsub.f32 %v1909, %v1910
  %v1912 = vand.u32 %v1911, 4294901760
  %1913 = vmatpush1.msra.mxu0 %v1912
  %v1914 = vand.u32 %v167, 4294901760
  %v1915 = vsub.f32 %v167, %v1914
  %v1916 = vand.u32 %v1915, 4294901760
  %v1917 = vsub.f32 %v1915, %v1916
  %v1918 = vand.u32 %v1917, 4294901760
  %1919 = vmatprep.subr.mxu0 %v1918
  %v1920 = vand.u32 %v166, 4294901760
  %v1921 = vsub.f32 %v166, %v1920
  %v1922 = vand.u32 %v1921, 4294901760
  %v1923 = vsub.f32 %v1921, %v1922
  %v1924 = vand.u32 %v1923, 4294901760
  %1925 = vmatpush1.msra.mxu0 %v1924
  %1926 = vmatprep.subr.mxu0 0.0
  %1927 = vmatpush2.msra.mxu0 0.0
  %1928 = vmatprep.subr.mxu0 0.0
  %1929 = vmatpush2.msra.mxu0 0.0
  %1930 = vmatprep.subr.mxu0 0.0
  %1931 = vmatpush2.msra.mxu0 0.0
  %1932 = vmatprep.subr.mxu0 0.0
  %1933 = vmatpush2.msra.mxu0 0.0
  %1934 = vmatprep.subr.mxu0 0.0
  %1935 = vmatpush2.msra.mxu0 0.0
  %1936 = vmatprep.subr.mxu0 0.0
  %1937 = vmatpush2.msra.mxu0 0.0
  %1938 = vmatprep.subr.mxu0 0.0
  %1939 = vmatpush2.msra.mxu0 0.0
  %1940 = vmatprep.subr.mxu0 0.0
  %1941 = vmatpush2.msra.mxu0 0.0
  %1942 = vmatprep.subr.mxu0 0.0
  %1943 = vmatpush2.msra.mxu0 0.0
  %1944 = vmatprep.subr.mxu0 0.0
  %1945 = vmatpush2.msra.mxu0 0.0
  %1946 = vmatprep.subr.mxu0 0.0
  %1947 = vmatpush2.msra.mxu0 0.0
  %1948 = vmatprep.subr.mxu0 0.0
  %1949 = vmatpush2.msra.mxu0 0.0
  %1950 = vmatprep.subr.mxu0 0.0
  %1951 = vmatpush2.msra.mxu0 0.0
  %1952 = vmatprep.subr.mxu0 0.0
  %1953 = vmatpush2.msra.mxu0 0.0
  %1954 = vmatprep.subr.mxu0 0.0
  %1955 = vmatpush2.msra.mxu0 0.0
  %1956 = vmatprep.subr.mxu0 0.0
  %1957 = vmatpush2.msra.mxu0 0.0
  %1958 = vmatprep.mubr.f32.mxu0 0.0
  %v1959 = vand.u32 %v220, 4294901760
  %1960 = vmatmul.mubr.f32.gmra.mxu0 %v1959
  %v1961 = vpop.f32.mrf.mxu0
  %v1962 = vadd.f32 %v1787, %v1961
  %v1963 = vpop.f32.mrf.mxu0
  %v1964 = vadd.f32 %v1789, %v1963
  %1965 = vmatprep.mubr.f32.mxu0 0.0
  %v1966 = vand.u32 %v223, 4294901760
  %1967 = vmatmul.mubr.f32.gmra.mxu0 %v1966
  %v1968 = vpop.f32.mrf.mxu0
  %v1969 = vadd.f32 %v1798, %v1968
  %v1970 = vpop.f32.mrf.mxu0
  %v1971 = vadd.f32 %v1800, %v1970
  %1972 = vmatprep.mubr.f32.mxu0 0.0
  %v1973 = vand.u32 %v226, 4294901760
  %1974 = vmatmul.mubr.f32.gmra.mxu0 %v1973
  %v1975 = vpop.f32.mrf.mxu0
  %v1976 = vadd.f32 %v1809, %v1975
  %v1977 = vpop.f32.mrf.mxu0
  %v1978 = vadd.f32 %v1811, %v1977
  %1979 = vmatprep.mubr.f32.mxu0 0.0
  %v1980 = vand.u32 %v229, 4294901760
  %1981 = vmatmul.mubr.f32.gmra.mxu0 %v1980
  %v1982 = vpop.f32.mrf.mxu0
  %v1983 = vadd.f32 %v1820, %v1982
  %v1984 = vpop.f32.mrf.mxu0
  %v1985 = vadd.f32 %v1822, %v1984
  %1986 = vdwg.mxu0
  %1987 = vmatprep.subr.mxu0 0.0
  %1988 = vmatpush1.msra.mxu0 0.0
  %1989 = vmatprep.subr.mxu0 0.0
  %1990 = vmatpush1.msra.mxu0 0.0
  %1991 = vmatprep.subr.mxu0 0.0
  %1992 = vmatpush1.msra.mxu0 0.0
  %1993 = vmatprep.subr.mxu0 0.0
  %1994 = vmatpush1.msra.mxu0 0.0
  %1995 = vmatprep.subr.mxu0 0.0
  %1996 = vmatpush1.msra.mxu0 0.0
  %1997 = vmatprep.subr.mxu0 0.0
  %1998 = vmatpush1.msra.mxu0 0.0
  %1999 = vmatprep.subr.mxu0 0.0
  %2000 = vmatpush1.msra.mxu0 0.0
  %2001 = vmatprep.subr.mxu0 0.0
  %2002 = vmatpush1.msra.mxu0 0.0
  %2003 = vmatprep.subr.mxu0 0.0
  %2004 = vmatpush1.msra.mxu0 0.0
  %v2005 = vand.u32 %v191, 4294901760
  %v2006 = vsub.f32 %v191, %v2005
  %2007 = vmatprep.subr.mxu0 %v2006
  %v2008 = vand.u32 %v190, 4294901760
  %v2009 = vsub.f32 %v190, %v2008
  %2010 = vmatpush1.msra.mxu0 %v2009
  %v2011 = vand.u32 %v187, 4294901760
  %v2012 = vsub.f32 %v187, %v2011
  %2013 = vmatprep.subr.mxu0 %v2012
  %v2014 = vand.u32 %v186, 4294901760
  %v2015 = vsub.f32 %v186, %v2014
  %2016 = vmatpush1.msra.mxu0 %v2015
  %v2017 = vand.u32 %v183, 4294901760
  %v2018 = vsub.f32 %v183, %v2017
  %2019 = vmatprep.subr.mxu0 %v2018
  %v2020 = vand.u32 %v182, 4294901760
  %v2021 = vsub.f32 %v182, %v2020
  %2022 = vmatpush1.msra.mxu0 %v2021
  %v2023 = vand.u32 %v179, 4294901760
  %v2024 = vsub.f32 %v179, %v2023
  %2025 = vmatprep.subr.mxu0 %v2024
  %v2026 = vand.u32 %v178, 4294901760
  %v2027 = vsub.f32 %v178, %v2026
  %2028 = vmatpush1.msra.mxu0 %v2027
  %v2029 = vand.u32 %v175, 4294901760
  %v2030 = vsub.f32 %v175, %v2029
  %2031 = vmatprep.subr.mxu0 %v2030
  %v2032 = vand.u32 %v174, 4294901760
  %v2033 = vsub.f32 %v174, %v2032
  %2034 = vmatpush1.msra.mxu0 %v2033
  %v2035 = vand.u32 %v171, 4294901760
  %v2036 = vsub.f32 %v171, %v2035
  %2037 = vmatprep.subr.mxu0 %v2036
  %v2038 = vand.u32 %v170, 4294901760
  %v2039 = vsub.f32 %v170, %v2038
  %2040 = vmatpush1.msra.mxu0 %v2039
  %v2041 = vand.u32 %v167, 4294901760
  %v2042 = vsub.f32 %v167, %v2041
  %2043 = vmatprep.subr.mxu0 %v2042
  %v2044 = vand.u32 %v166, 4294901760
  %v2045 = vsub.f32 %v166, %v2044
  %2046 = vmatpush1.msra.mxu0 %v2045
  %2047 = vmatprep.subr.mxu0 0.0
  %2048 = vmatpush2.msra.mxu0 0.0
  %2049 = vmatprep.subr.mxu0 0.0
  %2050 = vmatpush2.msra.mxu0 0.0
  %2051 = vmatprep.subr.mxu0 0.0
  %2052 = vmatpush2.msra.mxu0 0.0
  %2053 = vmatprep.subr.mxu0 0.0
  %2054 = vmatpush2.msra.mxu0 0.0
  %2055 = vmatprep.subr.mxu0 0.0
  %2056 = vmatpush2.msra.mxu0 0.0
  %2057 = vmatprep.subr.mxu0 0.0
  %2058 = vmatpush2.msra.mxu0 0.0
  %2059 = vmatprep.subr.mxu0 0.0
  %2060 = vmatpush2.msra.mxu0 0.0
  %2061 = vmatprep.subr.mxu0 0.0
  %2062 = vmatpush2.msra.mxu0 0.0
  %2063 = vmatprep.subr.mxu0 0.0
  %2064 = vmatpush2.msra.mxu0 0.0
  %2065 = vmatprep.subr.mxu0 0.0
  %2066 = vmatpush2.msra.mxu0 0.0
  %2067 = vmatprep.subr.mxu0 0.0
  %2068 = vmatpush2.msra.mxu0 0.0
  %2069 = vmatprep.subr.mxu0 0.0
  %2070 = vmatpush2.msra.mxu0 0.0
  %2071 = vmatprep.subr.mxu0 0.0
  %2072 = vmatpush2.msra.mxu0 0.0
  %2073 = vmatprep.subr.mxu0 0.0
  %2074 = vmatpush2.msra.mxu0 0.0
  %2075 = vmatprep.subr.mxu0 0.0
  %2076 = vmatpush2.msra.mxu0 0.0
  %2077 = vmatprep.subr.mxu0 0.0
  %2078 = vmatpush2.msra.mxu0 0.0
  %2079 = vmatprep.mubr.f32.mxu0 0.0
  %v2080 = vand.u32 %v220, 4294901760
  %v2081 = vsub.f32 %v220, %v2080
  %2082 = vmatmul.mubr.f32.gmra.mxu0 %v2081
  %v2083 = vpop.f32.mrf.mxu0
  %v2084 = vadd.f32 %v1962, %v2083
  %v2085 = vpop.f32.mrf.mxu0
  %v2086 = vadd.f32 %v1964, %v2085
  %2087 = vmatprep.mubr.f32.mxu0 0.0
  %v2088 = vand.u32 %v223, 4294901760
  %v2089 = vsub.f32 %v223, %v2088
  %2090 = vmatmul.mubr.f32.gmra.mxu0 %v2089
  %v2091 = vpop.f32.mrf.mxu0
  %v2092 = vadd.f32 %v1969, %v2091
  %v2093 = vpop.f32.mrf.mxu0
  %v2094 = vadd.f32 %v1971, %v2093
  %2095 = vmatprep.mubr.f32.mxu0 0.0
  %v2096 = vand.u32 %v226, 4294901760
  %v2097 = vsub.f32 %v226, %v2096
  %2098 = vmatmul.mubr.f32.gmra.mxu0 %v2097
  %v2099 = vpop.f32.mrf.mxu0
  %v2100 = vadd.f32 %v1976, %v2099
  %v2101 = vpop.f32.mrf.mxu0
  %v2102 = vadd.f32 %v1978, %v2101
  %2103 = vmatprep.mubr.f32.mxu0 0.0
  %v2104 = vand.u32 %v229, 4294901760
  %v2105 = vsub.f32 %v229, %v2104
  %2106 = vmatmul.mubr.f32.gmra.mxu0 %v2105
  %v2107 = vpop.f32.mrf.mxu0
  %v2108 = vadd.f32 %v1983, %v2107
  %v2109 = vpop.f32.mrf.mxu0
  %v2110 = vadd.f32 %v1985, %v2109
  %2111 = vdwg.mxu0
  %2112 = vmatprep.subr.mxu0 0.0
  %2113 = vmatpush1.msra.mxu0 0.0
  %2114 = vmatprep.subr.mxu0 0.0
  %2115 = vmatpush1.msra.mxu0 0.0
  %2116 = vmatprep.subr.mxu0 0.0
  %2117 = vmatpush1.msra.mxu0 0.0
  %2118 = vmatprep.subr.mxu0 0.0
  %2119 = vmatpush1.msra.mxu0 0.0
  %2120 = vmatprep.subr.mxu0 0.0
  %2121 = vmatpush1.msra.mxu0 0.0
  %2122 = vmatprep.subr.mxu0 0.0
  %2123 = vmatpush1.msra.mxu0 0.0
  %2124 = vmatprep.subr.mxu0 0.0
  %2125 = vmatpush1.msra.mxu0 0.0
  %2126 = vmatprep.subr.mxu0 0.0
  %2127 = vmatpush1.msra.mxu0 0.0
  %2128 = vmatprep.subr.mxu0 0.0
  %2129 = vmatpush1.msra.mxu0 0.0
  %v2130 = vand.u32 %v191, 4294901760
  %2131 = vmatprep.subr.mxu0 %v2130
  %v2132 = vand.u32 %v190, 4294901760
  %2133 = vmatpush1.msra.mxu0 %v2132
  %v2134 = vand.u32 %v187, 4294901760
  %2135 = vmatprep.subr.mxu0 %v2134
  %v2136 = vand.u32 %v186, 4294901760
  %2137 = vmatpush1.msra.mxu0 %v2136
  %v2138 = vand.u32 %v183, 4294901760
  %2139 = vmatprep.subr.mxu0 %v2138
  %v2140 = vand.u32 %v182, 4294901760
  %2141 = vmatpush1.msra.mxu0 %v2140
  %v2142 = vand.u32 %v179, 4294901760
  %2143 = vmatprep.subr.mxu0 %v2142
  %v2144 = vand.u32 %v178, 4294901760
  %2145 = vmatpush1.msra.mxu0 %v2144
  %v2146 = vand.u32 %v175, 4294901760
  %2147 = vmatprep.subr.mxu0 %v2146
  %v2148 = vand.u32 %v174, 4294901760
  %2149 = vmatpush1.msra.mxu0 %v2148
  %v2150 = vand.u32 %v171, 4294901760
  %2151 = vmatprep.subr.mxu0 %v2150
  %v2152 = vand.u32 %v170, 4294901760
  %2153 = vmatpush1.msra.mxu0 %v2152
  %v2154 = vand.u32 %v167, 4294901760
  %2155 = vmatprep.subr.mxu0 %v2154
  %v2156 = vand.u32 %v166, 4294901760
  %2157 = vmatpush1.msra.mxu0 %v2156
  %2158 = vmatprep.subr.mxu0 0.0
  %2159 = vmatpush2.msra.mxu0 0.0
  %2160 = vmatprep.subr.mxu0 0.0
  %2161 = vmatpush2.msra.mxu0 0.0
  %2162 = vmatprep.subr.mxu0 0.0
  %2163 = vmatpush2.msra.mxu0 0.0
  %2164 = vmatprep.subr.mxu0 0.0
  %2165 = vmatpush2.msra.mxu0 0.0
  %2166 = vmatprep.subr.mxu0 0.0
  %2167 = vmatpush2.msra.mxu0 0.0
  %2168 = vmatprep.subr.mxu0 0.0
  %2169 = vmatpush2.msra.mxu0 0.0
  %2170 = vmatprep.subr.mxu0 0.0
  %2171 = vmatpush2.msra.mxu0 0.0
  %2172 = vmatprep.subr.mxu0 0.0
  %2173 = vmatpush2.msra.mxu0 0.0
  %2174 = vmatprep.subr.mxu0 0.0
  %2175 = vmatpush2.msra.mxu0 0.0
  %2176 = vmatprep.subr.mxu0 0.0
  %2177 = vmatpush2.msra.mxu0 0.0
  %2178 = vmatprep.subr.mxu0 0.0
  %2179 = vmatpush2.msra.mxu0 0.0
  %2180 = vmatprep.subr.mxu0 0.0
  %2181 = vmatpush2.msra.mxu0 0.0
  %2182 = vmatprep.subr.mxu0 0.0
  %2183 = vmatpush2.msra.mxu0 0.0
  %2184 = vmatprep.subr.mxu0 0.0
  %2185 = vmatpush2.msra.mxu0 0.0
  %2186 = vmatprep.subr.mxu0 0.0
  %2187 = vmatpush2.msra.mxu0 0.0
  %2188 = vmatprep.subr.mxu0 0.0
  %2189 = vmatpush2.msra.mxu0 0.0
  %2190 = vmatprep.mubr.f32.mxu0 0.0
  %v2191 = vand.u32 %v220, 4294901760
  %v2192 = vsub.f32 %v220, %v2191
  %v2193 = vand.u32 %v2192, 4294901760
  %2194 = vmatmul.mubr.f32.gmra.mxu0 %v2193
  %v2195 = vpop.f32.mrf.mxu0
  %v2196 = vadd.f32 %v2084, %v2195
  %v2197 = vpop.f32.mrf.mxu0
  %v2198 = vadd.f32 %v2086, %v2197
  %2199 = vmatprep.mubr.f32.mxu0 0.0
  %v2200 = vand.u32 %v223, 4294901760
  %v2201 = vsub.f32 %v223, %v2200
  %v2202 = vand.u32 %v2201, 4294901760
  %2203 = vmatmul.mubr.f32.gmra.mxu0 %v2202
  %v2204 = vpop.f32.mrf.mxu0
  %v2205 = vadd.f32 %v2092, %v2204
  %v2206 = vpop.f32.mrf.mxu0
  %v2207 = vadd.f32 %v2094, %v2206
  %2208 = vmatprep.mubr.f32.mxu0 0.0
  %v2209 = vand.u32 %v226, 4294901760
  %v2210 = vsub.f32 %v226, %v2209
  %v2211 = vand.u32 %v2210, 4294901760
  %2212 = vmatmul.mubr.f32.gmra.mxu0 %v2211
  %v2213 = vpop.f32.mrf.mxu0
  %v2214 = vadd.f32 %v2100, %v2213
  %v2215 = vpop.f32.mrf.mxu0
  %v2216 = vadd.f32 %v2102, %v2215
  %2217 = vmatprep.mubr.f32.mxu0 0.0
  %v2218 = vand.u32 %v229, 4294901760
  %v2219 = vsub.f32 %v229, %v2218
  %v2220 = vand.u32 %v2219, 4294901760
  %2221 = vmatmul.mubr.f32.gmra.mxu0 %v2220
  %v2222 = vpop.f32.mrf.mxu0
  %v2223 = vadd.f32 %v2108, %v2222
  %v2224 = vpop.f32.mrf.mxu0
  %v2225 = vadd.f32 %v2110, %v2224
  %2226 = vdwg.mxu0
  %2227 = vmatprep.subr.mxu0 0.0
  %2228 = vmatpush1.msra.mxu0 0.0
  %2229 = vmatprep.subr.mxu0 0.0
  %2230 = vmatpush1.msra.mxu0 0.0
  %2231 = vmatprep.subr.mxu0 0.0
  %2232 = vmatpush1.msra.mxu0 0.0
  %2233 = vmatprep.subr.mxu0 0.0
  %2234 = vmatpush1.msra.mxu0 0.0
  %2235 = vmatprep.subr.mxu0 0.0
  %2236 = vmatpush1.msra.mxu0 0.0
  %2237 = vmatprep.subr.mxu0 0.0
  %2238 = vmatpush1.msra.mxu0 0.0
  %2239 = vmatprep.subr.mxu0 0.0
  %2240 = vmatpush1.msra.mxu0 0.0
  %2241 = vmatprep.subr.mxu0 0.0
  %2242 = vmatpush1.msra.mxu0 0.0
  %2243 = vmatprep.subr.mxu0 0.0
  %2244 = vmatpush1.msra.mxu0 0.0
  %v2245 = vand.u32 %v191, 4294901760
  %v2246 = vsub.f32 %v191, %v2245
  %v2247 = vand.u32 %v2246, 4294901760
  %2248 = vmatprep.subr.mxu0 %v2247
  %v2249 = vand.u32 %v190, 4294901760
  %v2250 = vsub.f32 %v190, %v2249
  %v2251 = vand.u32 %v2250, 4294901760
  %2252 = vmatpush1.msra.mxu0 %v2251
  %v2253 = vand.u32 %v187, 4294901760
  %v2254 = vsub.f32 %v187, %v2253
  %v2255 = vand.u32 %v2254, 4294901760
  %2256 = vmatprep.subr.mxu0 %v2255
  %v2257 = vand.u32 %v186, 4294901760
  %v2258 = vsub.f32 %v186, %v2257
  %v2259 = vand.u32 %v2258, 4294901760
  %2260 = vmatpush1.msra.mxu0 %v2259
  %v2261 = vand.u32 %v183, 4294901760
  %v2262 = vsub.f32 %v183, %v2261
  %v2263 = vand.u32 %v2262, 4294901760
  %2264 = vmatprep.subr.mxu0 %v2263
  %v2265 = vand.u32 %v182, 4294901760
  %v2266 = vsub.f32 %v182, %v2265
  %v2267 = vand.u32 %v2266, 4294901760
  %2268 = vmatpush1.msra.mxu0 %v2267
  %v2269 = vand.u32 %v179, 4294901760
  %v2270 = vsub.f32 %v179, %v2269
  %v2271 = vand.u32 %v2270, 4294901760
  %2272 = vmatprep.subr.mxu0 %v2271
  %v2273 = vand.u32 %v178, 4294901760
  %v2274 = vsub.f32 %v178, %v2273
  %v2275 = vand.u32 %v2274, 4294901760
  %2276 = vmatpush1.msra.mxu0 %v2275
  %v2277 = vand.u32 %v175, 4294901760
  %v2278 = vsub.f32 %v175, %v2277
  %v2279 = vand.u32 %v2278, 4294901760
  %2280 = vmatprep.subr.mxu0 %v2279
  %v2281 = vand.u32 %v174, 4294901760
  %v2282 = vsub.f32 %v174, %v2281
  %v2283 = vand.u32 %v2282, 4294901760
  %2284 = vmatpush1.msra.mxu0 %v2283
  %v2285 = vand.u32 %v171, 4294901760
  %v2286 = vsub.f32 %v171, %v2285
  %v2287 = vand.u32 %v2286, 4294901760
  %2288 = vmatprep.subr.mxu0 %v2287
  %v2289 = vand.u32 %v170, 4294901760
  %v2290 = vsub.f32 %v170, %v2289
  %v2291 = vand.u32 %v2290, 4294901760
  %2292 = vmatpush1.msra.mxu0 %v2291
  %v2293 = vand.u32 %v167, 4294901760
  %v2294 = vsub.f32 %v167, %v2293
  %v2295 = vand.u32 %v2294, 4294901760
  %2296 = vmatprep.subr.mxu0 %v2295
  %v2297 = vand.u32 %v166, 4294901760
  %v2298 = vsub.f32 %v166, %v2297
  %v2299 = vand.u32 %v2298, 4294901760
  %2300 = vmatpush1.msra.mxu0 %v2299
  %2301 = vmatprep.subr.mxu0 0.0
  %2302 = vmatpush2.msra.mxu0 0.0
  %2303 = vmatprep.subr.mxu0 0.0
  %2304 = vmatpush2.msra.mxu0 0.0
  %2305 = vmatprep.subr.mxu0 0.0
  %2306 = vmatpush2.msra.mxu0 0.0
  %2307 = vmatprep.subr.mxu0 0.0
  %2308 = vmatpush2.msra.mxu0 0.0
  %2309 = vmatprep.subr.mxu0 0.0
  %2310 = vmatpush2.msra.mxu0 0.0
  %2311 = vmatprep.subr.mxu0 0.0
  %2312 = vmatpush2.msra.mxu0 0.0
  %2313 = vmatprep.subr.mxu0 0.0
  %2314 = vmatpush2.msra.mxu0 0.0
  %2315 = vmatprep.subr.mxu0 0.0
  %2316 = vmatpush2.msra.mxu0 0.0
  %2317 = vmatprep.subr.mxu0 0.0
  %2318 = vmatpush2.msra.mxu0 0.0
  %2319 = vmatprep.subr.mxu0 0.0
  %2320 = vmatpush2.msra.mxu0 0.0
  %2321 = vmatprep.subr.mxu0 0.0
  %2322 = vmatpush2.msra.mxu0 0.0
  %2323 = vmatprep.subr.mxu0 0.0
  %2324 = vmatpush2.msra.mxu0 0.0
  %2325 = vmatprep.subr.mxu0 0.0
  %2326 = vmatpush2.msra.mxu0 0.0
  %2327 = vmatprep.subr.mxu0 0.0
  %2328 = vmatpush2.msra.mxu0 0.0
  %2329 = vmatprep.subr.mxu0 0.0
  %2330 = vmatpush2.msra.mxu0 0.0
  %2331 = vmatprep.subr.mxu0 0.0
  %2332 = vmatpush2.msra.mxu0 0.0
  %2333 = vmatprep.mubr.f32.mxu0 0.0
  %v2334 = vand.u32 %v220, 4294901760
  %2335 = vmatmul.mubr.f32.gmra.mxu0 %v2334
  %v2336 = vpop.f32.mrf.mxu0
  %v2337 = vadd.f32 %v2196, %v2336
  %v2338 = vpop.f32.mrf.mxu0
  %v2339 = vadd.f32 %v2198, %v2338
  %2340 = vmatprep.mubr.f32.mxu0 0.0
  %v2341 = vand.u32 %v223, 4294901760
  %2342 = vmatmul.mubr.f32.gmra.mxu0 %v2341
  %v2343 = vpop.f32.mrf.mxu0
  %v2344 = vadd.f32 %v2205, %v2343
  %v2345 = vpop.f32.mrf.mxu0
  %v2346 = vadd.f32 %v2207, %v2345
  %2347 = vmatprep.mubr.f32.mxu0 0.0
  %v2348 = vand.u32 %v226, 4294901760
  %2349 = vmatmul.mubr.f32.gmra.mxu0 %v2348
  %v2350 = vpop.f32.mrf.mxu0
  %v2351 = vadd.f32 %v2214, %v2350
  %v2352 = vpop.f32.mrf.mxu0
  %v2353 = vadd.f32 %v2216, %v2352
  %2354 = vmatprep.mubr.f32.mxu0 0.0
  %v2355 = vand.u32 %v229, 4294901760
  %2356 = vmatmul.mubr.f32.gmra.mxu0 %v2355
  %v2357 = vpop.f32.mrf.mxu0
  %v2358 = vadd.f32 %v2223, %v2357
  %v2359 = vpop.f32.mrf.mxu0
  %v2360 = vadd.f32 %v2225, %v2359
  %2361 = vdwg.mxu0
  %2362 = vmatprep.subr.mxu0 0.0
  %2363 = vmatpush1.msra.mxu0 0.0
  %2364 = vmatprep.subr.mxu0 0.0
  %2365 = vmatpush1.msra.mxu0 0.0
  %2366 = vmatprep.subr.mxu0 0.0
  %2367 = vmatpush1.msra.mxu0 0.0
  %2368 = vmatprep.subr.mxu0 0.0
  %2369 = vmatpush1.msra.mxu0 0.0
  %2370 = vmatprep.subr.mxu0 0.0
  %2371 = vmatpush1.msra.mxu0 0.0
  %2372 = vmatprep.subr.mxu0 0.0
  %2373 = vmatpush1.msra.mxu0 0.0
  %2374 = vmatprep.subr.mxu0 0.0
  %2375 = vmatpush1.msra.mxu0 0.0
  %2376 = vmatprep.subr.mxu0 0.0
  %2377 = vmatpush1.msra.mxu0 0.0
  %2378 = vmatprep.subr.mxu0 0.0
  %2379 = vmatpush1.msra.mxu0 0.0
  %v2380 = vand.u32 %v191, 4294901760
  %2381 = vmatprep.subr.mxu0 %v2380
  %v2382 = vand.u32 %v190, 4294901760
  %2383 = vmatpush1.msra.mxu0 %v2382
  %v2384 = vand.u32 %v187, 4294901760
  %2385 = vmatprep.subr.mxu0 %v2384
  %v2386 = vand.u32 %v186, 4294901760
  %2387 = vmatpush1.msra.mxu0 %v2386
  %v2388 = vand.u32 %v183, 4294901760
  %2389 = vmatprep.subr.mxu0 %v2388
  %v2390 = vand.u32 %v182, 4294901760
  %2391 = vmatpush1.msra.mxu0 %v2390
  %v2392 = vand.u32 %v179, 4294901760
  %2393 = vmatprep.subr.mxu0 %v2392
  %v2394 = vand.u32 %v178, 4294901760
  %2395 = vmatpush1.msra.mxu0 %v2394
  %v2396 = vand.u32 %v175, 4294901760
  %2397 = vmatprep.subr.mxu0 %v2396
  %v2398 = vand.u32 %v174, 4294901760
  %2399 = vmatpush1.msra.mxu0 %v2398
  %v2400 = vand.u32 %v171, 4294901760
  %2401 = vmatprep.subr.mxu0 %v2400
  %v2402 = vand.u32 %v170, 4294901760
  %2403 = vmatpush1.msra.mxu0 %v2402
  %v2404 = vand.u32 %v167, 4294901760
  %2405 = vmatprep.subr.mxu0 %v2404
  %v2406 = vand.u32 %v166, 4294901760
  %2407 = vmatpush1.msra.mxu0 %v2406
  %2408 = vmatprep.subr.mxu0 0.0
  %2409 = vmatpush2.msra.mxu0 0.0
  %2410 = vmatprep.subr.mxu0 0.0
  %2411 = vmatpush2.msra.mxu0 0.0
  %2412 = vmatprep.subr.mxu0 0.0
  %2413 = vmatpush2.msra.mxu0 0.0
  %2414 = vmatprep.subr.mxu0 0.0
  %2415 = vmatpush2.msra.mxu0 0.0
  %2416 = vmatprep.subr.mxu0 0.0
  %2417 = vmatpush2.msra.mxu0 0.0
  %2418 = vmatprep.subr.mxu0 0.0
  %2419 = vmatpush2.msra.mxu0 0.0
  %2420 = vmatprep.subr.mxu0 0.0
  %2421 = vmatpush2.msra.mxu0 0.0
  %2422 = vmatprep.subr.mxu0 0.0
  %2423 = vmatpush2.msra.mxu0 0.0
  %2424 = vmatprep.subr.mxu0 0.0
  %2425 = vmatpush2.msra.mxu0 0.0
  %2426 = vmatprep.subr.mxu0 0.0
  %2427 = vmatpush2.msra.mxu0 0.0
  %2428 = vmatprep.subr.mxu0 0.0
  %2429 = vmatpush2.msra.mxu0 0.0
  %2430 = vmatprep.subr.mxu0 0.0
  %2431 = vmatpush2.msra.mxu0 0.0
  %2432 = vmatprep.subr.mxu0 0.0
  %2433 = vmatpush2.msra.mxu0 0.0
  %2434 = vmatprep.subr.mxu0 0.0
  %2435 = vmatpush2.msra.mxu0 0.0
  %2436 = vmatprep.subr.mxu0 0.0
  %2437 = vmatpush2.msra.mxu0 0.0
  %2438 = vmatprep.subr.mxu0 0.0
  %2439 = vmatpush2.msra.mxu0 0.0
  %2440 = vmatprep.mubr.f32.mxu0 0.0
  %v2441 = vand.u32 %v220, 4294901760
  %2442 = vmatmul.mubr.f32.gmra.mxu0 %v2441
  %v2443 = vpop.f32.mrf.mxu0
  %v2444 = vadd.f32 %v2337, %v2443
  %v2445 = vpop.f32.mrf.mxu0
  %v2446 = vadd.f32 %v2339, %v2445
  %2447 = vmatprep.mubr.f32.mxu0 0.0
  %v2448 = vand.u32 %v223, 4294901760
  %2449 = vmatmul.mubr.f32.gmra.mxu0 %v2448
  %v2450 = vpop.f32.mrf.mxu0
  %v2451 = vadd.f32 %v2344, %v2450
  %v2452 = vpop.f32.mrf.mxu0
  %v2453 = vadd.f32 %v2346, %v2452
  %2454 = vmatprep.mubr.f32.mxu0 0.0
  %v2455 = vand.u32 %v226, 4294901760
  %2456 = vmatmul.mubr.f32.gmra.mxu0 %v2455
  %v2457 = vpop.f32.mrf.mxu0
  %v2458 = vadd.f32 %v2351, %v2457
  %v2459 = vpop.f32.mrf.mxu0
  %v2460 = vadd.f32 %v2353, %v2459
  %2461 = vmatprep.mubr.f32.mxu0 0.0
  %v2462 = vand.u32 %v229, 4294901760
  %2463 = vmatmul.mubr.f32.gmra.mxu0 %v2462
  %v2464 = vpop.f32.mrf.mxu0
  %v2465 = vadd.f32 %v2358, %v2464
  %v2466 = vpop.f32.mrf.mxu0
  %v2467 = vadd.f32 %v2360, %v2466
  %2468 = vdwg.mxu0
  %v2469 = vand.u32 %v101, 4294901760
  %2470 = vmatprep.subr.mxu0 %v2469
  %v2471 = vand.u32 %v100, 4294901760
  %2472 = vmatpush1.msra.mxu0 %v2471
  %v2473 = vand.u32 %v97, 4294901760
  %2474 = vmatprep.subr.mxu0 %v2473
  %v2475 = vand.u32 %v96, 4294901760
  %2476 = vmatpush1.msra.mxu0 %v2475
  %v2477 = vand.u32 %v93, 4294901760
  %2478 = vmatprep.subr.mxu0 %v2477
  %v2479 = vand.u32 %v92, 4294901760
  %2480 = vmatpush1.msra.mxu0 %v2479
  %v2481 = vand.u32 %v89, 4294901760
  %2482 = vmatprep.subr.mxu0 %v2481
  %v2483 = vand.u32 %v88, 4294901760
  %2484 = vmatpush1.msra.mxu0 %v2483
  %v2485 = vand.u32 %v85, 4294901760
  %2486 = vmatprep.subr.mxu0 %v2485
  %v2487 = vand.u32 %v84, 4294901760
  %2488 = vmatpush1.msra.mxu0 %v2487
  %v2489 = vand.u32 %v81, 4294901760
  %2490 = vmatprep.subr.mxu0 %v2489
  %v2491 = vand.u32 %v80, 4294901760
  %2492 = vmatpush1.msra.mxu0 %v2491
  %v2493 = vand.u32 %v77, 4294901760
  %2494 = vmatprep.subr.mxu0 %v2493
  %v2495 = vand.u32 %v76, 4294901760
  %2496 = vmatpush1.msra.mxu0 %v2495
  %v2497 = vand.u32 %v73, 4294901760
  %2498 = vmatprep.subr.mxu0 %v2497
  %v2499 = vand.u32 %v72, 4294901760
  %2500 = vmatpush1.msra.mxu0 %v2499
  %v2501 = vand.u32 %v69, 4294901760
  %2502 = vmatprep.subr.mxu0 %v2501
  %v2503 = vand.u32 %v68, 4294901760
  %2504 = vmatpush1.msra.mxu0 %v2503
  %v2505 = vand.u32 %v65, 4294901760
  %2506 = vmatprep.subr.mxu0 %v2505
  %v2507 = vand.u32 %v64, 4294901760
  %2508 = vmatpush1.msra.mxu0 %v2507
  %v2509 = vand.u32 %v61, 4294901760
  %2510 = vmatprep.subr.mxu0 %v2509
  %v2511 = vand.u32 %v60, 4294901760
  %2512 = vmatpush1.msra.mxu0 %v2511
  %v2513 = vand.u32 %v57, 4294901760
  %2514 = vmatprep.subr.mxu0 %v2513
  %v2515 = vand.u32 %v56, 4294901760
  %2516 = vmatpush1.msra.mxu0 %v2515
  %v2517 = vand.u32 %v53, 4294901760
  %2518 = vmatprep.subr.mxu0 %v2517
  %v2519 = vand.u32 %v52, 4294901760
  %2520 = vmatpush1.msra.mxu0 %v2519
  %v2521 = vand.u32 %v49, 4294901760
  %2522 = vmatprep.subr.mxu0 %v2521
  %v2523 = vand.u32 %v48, 4294901760
  %2524 = vmatpush1.msra.mxu0 %v2523
  %v2525 = vand.u32 %v45, 4294901760
  %2526 = vmatprep.subr.mxu0 %v2525
  %v2527 = vand.u32 %v44, 4294901760
  %2528 = vmatpush1.msra.mxu0 %v2527
  %v2529 = vand.u32 %v41, 4294901760
  %2530 = vmatprep.subr.mxu0 %v2529
  %v2531 = vand.u32 %v40, 4294901760
  %2532 = vmatpush1.msra.mxu0 %v2531
  %v2533 = vand.u32 %v165, 4294901760
  %2534 = vmatprep.subr.mxu0 %v2533
  %v2535 = vand.u32 %v164, 4294901760
  %2536 = vmatpush2.msra.mxu0 %v2535
  %v2537 = vand.u32 %v161, 4294901760
  %2538 = vmatprep.subr.mxu0 %v2537
  %v2539 = vand.u32 %v160, 4294901760
  %2540 = vmatpush2.msra.mxu0 %v2539
  %v2541 = vand.u32 %v157, 4294901760
  %2542 = vmatprep.subr.mxu0 %v2541
  %v2543 = vand.u32 %v156, 4294901760
  %2544 = vmatpush2.msra.mxu0 %v2543
  %v2545 = vand.u32 %v153, 4294901760
  %2546 = vmatprep.subr.mxu0 %v2545
  %v2547 = vand.u32 %v152, 4294901760
  %2548 = vmatpush2.msra.mxu0 %v2547
  %v2549 = vand.u32 %v149, 4294901760
  %2550 = vmatprep.subr.mxu0 %v2549
  %v2551 = vand.u32 %v148, 4294901760
  %2552 = vmatpush2.msra.mxu0 %v2551
  %v2553 = vand.u32 %v145, 4294901760
  %2554 = vmatprep.subr.mxu0 %v2553
  %v2555 = vand.u32 %v144, 4294901760
  %2556 = vmatpush2.msra.mxu0 %v2555
  %v2557 = vand.u32 %v141, 4294901760
  %2558 = vmatprep.subr.mxu0 %v2557
  %v2559 = vand.u32 %v140, 4294901760
  %2560 = vmatpush2.msra.mxu0 %v2559
  %v2561 = vand.u32 %v137, 4294901760
  %2562 = vmatprep.subr.mxu0 %v2561
  %v2563 = vand.u32 %v136, 4294901760
  %2564 = vmatpush2.msra.mxu0 %v2563
  %v2565 = vand.u32 %v133, 4294901760
  %2566 = vmatprep.subr.mxu0 %v2565
  %v2567 = vand.u32 %v132, 4294901760
  %2568 = vmatpush2.msra.mxu0 %v2567
  %v2569 = vand.u32 %v129, 4294901760
  %2570 = vmatprep.subr.mxu0 %v2569
  %v2571 = vand.u32 %v128, 4294901760
  %2572 = vmatpush2.msra.mxu0 %v2571
  %v2573 = vand.u32 %v125, 4294901760
  %2574 = vmatprep.subr.mxu0 %v2573
  %v2575 = vand.u32 %v124, 4294901760
  %2576 = vmatpush2.msra.mxu0 %v2575
  %v2577 = vand.u32 %v121, 4294901760
  %2578 = vmatprep.subr.mxu0 %v2577
  %v2579 = vand.u32 %v120, 4294901760
  %2580 = vmatpush2.msra.mxu0 %v2579
  %v2581 = vand.u32 %v117, 4294901760
  %2582 = vmatprep.subr.mxu0 %v2581
  %v2583 = vand.u32 %v116, 4294901760
  %2584 = vmatpush2.msra.mxu0 %v2583
  %v2585 = vand.u32 %v113, 4294901760
  %2586 = vmatprep.subr.mxu0 %v2585
  %v2587 = vand.u32 %v112, 4294901760
  %2588 = vmatpush2.msra.mxu0 %v2587
  %v2589 = vand.u32 %v109, 4294901760
  %2590 = vmatprep.subr.mxu0 %v2589
  %v2591 = vand.u32 %v108, 4294901760
  %2592 = vmatpush2.msra.mxu0 %v2591
  %v2593 = vand.u32 %v105, 4294901760
  %2594 = vmatprep.subr.mxu0 %v2593
  %v2595 = vand.u32 %v104, 4294901760
  %2596 = vmatpush2.msra.mxu0 %v2595
  %v2597 = vand.u32 %v27, 4294901760
  %v2598 = vsub.f32 %v27, %v2597
  %v2599 = vand.u32 %v2598, 4294901760
  %v2600 = vsub.f32 %v2598, %v2599
  %v2601 = vand.u32 %v2600, 4294901760
  %2602 = vmatprep.mubr.f32.mxu0 %v2601
  %v2603 = vand.u32 %v26, 4294901760
  %v2604 = vsub.f32 %v26, %v2603
  %v2605 = vand.u32 %v2604, 4294901760
  %v2606 = vsub.f32 %v2604, %v2605
  %v2607 = vand.u32 %v2606, 4294901760
  %2608 = vmatmul.mubr.f32.gmra.mxu0 %v2607
  %v2609 = vpop.f32.mrf.mxu0
  %v2610 = vadd.f32 %v201, %v2609
  %v2611 = vpop.f32.mrf.mxu0
  %v2612 = vadd.f32 %v201, %v2611
  %v2613 = vand.u32 %v30, 4294901760
  %v2614 = vsub.f32 %v30, %v2613
  %v2615 = vand.u32 %v2614, 4294901760
  %v2616 = vsub.f32 %v2614, %v2615
  %v2617 = vand.u32 %v2616, 4294901760
  %2618 = vmatprep.mubr.f32.mxu0 %v2617
  %v2619 = vand.u32 %v29, 4294901760
  %v2620 = vsub.f32 %v29, %v2619
  %v2621 = vand.u32 %v2620, 4294901760
  %v2622 = vsub.f32 %v2620, %v2621
  %v2623 = vand.u32 %v2622, 4294901760
  %2624 = vmatmul.mubr.f32.gmra.mxu0 %v2623
  %v2625 = vpop.f32.mrf.mxu0
  %v2626 = vadd.f32 %v206, %v2625
  %v2627 = vpop.f32.mrf.mxu0
  %v2628 = vadd.f32 %v206, %v2627
  %v2629 = vand.u32 %v33, 4294901760
  %v2630 = vsub.f32 %v33, %v2629
  %v2631 = vand.u32 %v2630, 4294901760
  %v2632 = vsub.f32 %v2630, %v2631
  %v2633 = vand.u32 %v2632, 4294901760
  %2634 = vmatprep.mubr.f32.mxu0 %v2633
  %v2635 = vand.u32 %v32, 4294901760
  %v2636 = vsub.f32 %v32, %v2635
  %v2637 = vand.u32 %v2636, 4294901760
  %v2638 = vsub.f32 %v2636, %v2637
  %v2639 = vand.u32 %v2638, 4294901760
  %2640 = vmatmul.mubr.f32.gmra.mxu0 %v2639
  %v2641 = vpop.f32.mrf.mxu0
  %v2642 = vadd.f32 %v211, %v2641
  %v2643 = vpop.f32.mrf.mxu0
  %v2644 = vadd.f32 %v211, %v2643
  %v2645 = vand.u32 %v36, 4294901760
  %v2646 = vsub.f32 %v36, %v2645
  %v2647 = vand.u32 %v2646, 4294901760
  %v2648 = vsub.f32 %v2646, %v2647
  %v2649 = vand.u32 %v2648, 4294901760
  %2650 = vmatprep.mubr.f32.mxu0 %v2649
  %v2651 = vand.u32 %v35, 4294901760
  %v2652 = vsub.f32 %v35, %v2651
  %v2653 = vand.u32 %v2652, 4294901760
  %v2654 = vsub.f32 %v2652, %v2653
  %v2655 = vand.u32 %v2654, 4294901760
  %2656 = vmatmul.mubr.f32.gmra.mxu0 %v2655
  %v2657 = vpop.f32.mrf.mxu0
  %v2658 = vadd.f32 %v216, %v2657
  %v2659 = vpop.f32.mrf.mxu0
  %v2660 = vadd.f32 %v216, %v2659
  %2661 = vdwg.mxu0
  %v2662 = vand.u32 %v101, 4294901760
  %v2663 = vsub.f32 %v101, %v2662
  %v2664 = vand.u32 %v2663, 4294901760
  %v2665 = vsub.f32 %v2663, %v2664
  %v2666 = vand.u32 %v2665, 4294901760
  %2667 = vmatprep.subr.mxu0 %v2666
  %v2668 = vand.u32 %v100, 4294901760
  %v2669 = vsub.f32 %v100, %v2668
  %v2670 = vand.u32 %v2669, 4294901760
  %v2671 = vsub.f32 %v2669, %v2670
  %v2672 = vand.u32 %v2671, 4294901760
  %2673 = vmatpush1.msra.mxu0 %v2672
  %v2674 = vand.u32 %v97, 4294901760
  %v2675 = vsub.f32 %v97, %v2674
  %v2676 = vand.u32 %v2675, 4294901760
  %v2677 = vsub.f32 %v2675, %v2676
  %v2678 = vand.u32 %v2677, 4294901760
  %2679 = vmatprep.subr.mxu0 %v2678
  %v2680 = vand.u32 %v96, 4294901760
  %v2681 = vsub.f32 %v96, %v2680
  %v2682 = vand.u32 %v2681, 4294901760
  %v2683 = vsub.f32 %v2681, %v2682
  %v2684 = vand.u32 %v2683, 4294901760
  %2685 = vmatpush1.msra.mxu0 %v2684
  %v2686 = vand.u32 %v93, 4294901760
  %v2687 = vsub.f32 %v93, %v2686
  %v2688 = vand.u32 %v2687, 4294901760
  %v2689 = vsub.f32 %v2687, %v2688
  %v2690 = vand.u32 %v2689, 4294901760
  %2691 = vmatprep.subr.mxu0 %v2690
  %v2692 = vand.u32 %v92, 4294901760
  %v2693 = vsub.f32 %v92, %v2692
  %v2694 = vand.u32 %v2693, 4294901760
  %v2695 = vsub.f32 %v2693, %v2694
  %v2696 = vand.u32 %v2695, 4294901760
  %2697 = vmatpush1.msra.mxu0 %v2696
  %v2698 = vand.u32 %v89, 4294901760
  %v2699 = vsub.f32 %v89, %v2698
  %v2700 = vand.u32 %v2699, 4294901760
  %v2701 = vsub.f32 %v2699, %v2700
  %v2702 = vand.u32 %v2701, 4294901760
  %2703 = vmatprep.subr.mxu0 %v2702
  %v2704 = vand.u32 %v88, 4294901760
  %v2705 = vsub.f32 %v88, %v2704
  %v2706 = vand.u32 %v2705, 4294901760
  %v2707 = vsub.f32 %v2705, %v2706
  %v2708 = vand.u32 %v2707, 4294901760
  %2709 = vmatpush1.msra.mxu0 %v2708
  %v2710 = vand.u32 %v85, 4294901760
  %v2711 = vsub.f32 %v85, %v2710
  %v2712 = vand.u32 %v2711, 4294901760
  %v2713 = vsub.f32 %v2711, %v2712
  %v2714 = vand.u32 %v2713, 4294901760
  %2715 = vmatprep.subr.mxu0 %v2714
  %v2716 = vand.u32 %v84, 4294901760
  %v2717 = vsub.f32 %v84, %v2716
  %v2718 = vand.u32 %v2717, 4294901760
  %v2719 = vsub.f32 %v2717, %v2718
  %v2720 = vand.u32 %v2719, 4294901760
  %2721 = vmatpush1.msra.mxu0 %v2720
  %v2722 = vand.u32 %v81, 4294901760
  %v2723 = vsub.f32 %v81, %v2722
  %v2724 = vand.u32 %v2723, 4294901760
  %v2725 = vsub.f32 %v2723, %v2724
  %v2726 = vand.u32 %v2725, 4294901760
  %2727 = vmatprep.subr.mxu0 %v2726
  %v2728 = vand.u32 %v80, 4294901760
  %v2729 = vsub.f32 %v80, %v2728
  %v2730 = vand.u32 %v2729, 4294901760
  %v2731 = vsub.f32 %v2729, %v2730
  %v2732 = vand.u32 %v2731, 4294901760
  %2733 = vmatpush1.msra.mxu0 %v2732
  %v2734 = vand.u32 %v77, 4294901760
  %v2735 = vsub.f32 %v77, %v2734
  %v2736 = vand.u32 %v2735, 4294901760
  %v2737 = vsub.f32 %v2735, %v2736
  %v2738 = vand.u32 %v2737, 4294901760
  %2739 = vmatprep.subr.mxu0 %v2738
  %v2740 = vand.u32 %v76, 4294901760
  %v2741 = vsub.f32 %v76, %v2740
  %v2742 = vand.u32 %v2741, 4294901760
  %v2743 = vsub.f32 %v2741, %v2742
  %v2744 = vand.u32 %v2743, 4294901760
  %2745 = vmatpush1.msra.mxu0 %v2744
  %v2746 = vand.u32 %v73, 4294901760
  %v2747 = vsub.f32 %v73, %v2746
  %v2748 = vand.u32 %v2747, 4294901760
  %v2749 = vsub.f32 %v2747, %v2748
  %v2750 = vand.u32 %v2749, 4294901760
  %2751 = vmatprep.subr.mxu0 %v2750
  %v2752 = vand.u32 %v72, 4294901760
  %v2753 = vsub.f32 %v72, %v2752
  %v2754 = vand.u32 %v2753, 4294901760
  %v2755 = vsub.f32 %v2753, %v2754
  %v2756 = vand.u32 %v2755, 4294901760
  %2757 = vmatpush1.msra.mxu0 %v2756
  %v2758 = vand.u32 %v69, 4294901760
  %v2759 = vsub.f32 %v69, %v2758
  %v2760 = vand.u32 %v2759, 4294901760
  %v2761 = vsub.f32 %v2759, %v2760
  %v2762 = vand.u32 %v2761, 4294901760
  %2763 = vmatprep.subr.mxu0 %v2762
  %v2764 = vand.u32 %v68, 4294901760
  %v2765 = vsub.f32 %v68, %v2764
  %v2766 = vand.u32 %v2765, 4294901760
  %v2767 = vsub.f32 %v2765, %v2766
  %v2768 = vand.u32 %v2767, 4294901760
  %2769 = vmatpush1.msra.mxu0 %v2768
  %v2770 = vand.u32 %v65, 4294901760
  %v2771 = vsub.f32 %v65, %v2770
  %v2772 = vand.u32 %v2771, 4294901760
  %v2773 = vsub.f32 %v2771, %v2772
  %v2774 = vand.u32 %v2773, 4294901760
  %2775 = vmatprep.subr.mxu0 %v2774
  %v2776 = vand.u32 %v64, 4294901760
  %v2777 = vsub.f32 %v64, %v2776
  %v2778 = vand.u32 %v2777, 4294901760
  %v2779 = vsub.f32 %v2777, %v2778
  %v2780 = vand.u32 %v2779, 4294901760
  %2781 = vmatpush1.msra.mxu0 %v2780
  %v2782 = vand.u32 %v61, 4294901760
  %v2783 = vsub.f32 %v61, %v2782
  %v2784 = vand.u32 %v2783, 4294901760
  %v2785 = vsub.f32 %v2783, %v2784
  %v2786 = vand.u32 %v2785, 4294901760
  %2787 = vmatprep.subr.mxu0 %v2786
  %v2788 = vand.u32 %v60, 4294901760
  %v2789 = vsub.f32 %v60, %v2788
  %v2790 = vand.u32 %v2789, 4294901760
  %v2791 = vsub.f32 %v2789, %v2790
  %v2792 = vand.u32 %v2791, 4294901760
  %2793 = vmatpush1.msra.mxu0 %v2792
  %v2794 = vand.u32 %v57, 4294901760
  %v2795 = vsub.f32 %v57, %v2794
  %v2796 = vand.u32 %v2795, 4294901760
  %v2797 = vsub.f32 %v2795, %v2796
  %v2798 = vand.u32 %v2797, 4294901760
  %2799 = vmatprep.subr.mxu0 %v2798
  %v2800 = vand.u32 %v56, 4294901760
  %v2801 = vsub.f32 %v56, %v2800
  %v2802 = vand.u32 %v2801, 4294901760
  %v2803 = vsub.f32 %v2801, %v2802
  %v2804 = vand.u32 %v2803, 4294901760
  %2805 = vmatpush1.msra.mxu0 %v2804
  %v2806 = vand.u32 %v53, 4294901760
  %v2807 = vsub.f32 %v53, %v2806
  %v2808 = vand.u32 %v2807, 4294901760
  %v2809 = vsub.f32 %v2807, %v2808
  %v2810 = vand.u32 %v2809, 4294901760
  %2811 = vmatprep.subr.mxu0 %v2810
  %v2812 = vand.u32 %v52, 4294901760
  %v2813 = vsub.f32 %v52, %v2812
  %v2814 = vand.u32 %v2813, 4294901760
  %v2815 = vsub.f32 %v2813, %v2814
  %v2816 = vand.u32 %v2815, 4294901760
  %2817 = vmatpush1.msra.mxu0 %v2816
  %v2818 = vand.u32 %v49, 4294901760
  %v2819 = vsub.f32 %v49, %v2818
  %v2820 = vand.u32 %v2819, 4294901760
  %v2821 = vsub.f32 %v2819, %v2820
  %v2822 = vand.u32 %v2821, 4294901760
  %2823 = vmatprep.subr.mxu0 %v2822
  %v2824 = vand.u32 %v48, 4294901760
  %v2825 = vsub.f32 %v48, %v2824
  %v2826 = vand.u32 %v2825, 4294901760
  %v2827 = vsub.f32 %v2825, %v2826
  %v2828 = vand.u32 %v2827, 4294901760
  %2829 = vmatpush1.msra.mxu0 %v2828
  %v2830 = vand.u32 %v45, 4294901760
  %v2831 = vsub.f32 %v45, %v2830
  %v2832 = vand.u32 %v2831, 4294901760
  %v2833 = vsub.f32 %v2831, %v2832
  %v2834 = vand.u32 %v2833, 4294901760
  %2835 = vmatprep.subr.mxu0 %v2834
  %v2836 = vand.u32 %v44, 4294901760
  %v2837 = vsub.f32 %v44, %v2836
  %v2838 = vand.u32 %v2837, 4294901760
  %v2839 = vsub.f32 %v2837, %v2838
  %v2840 = vand.u32 %v2839, 4294901760
  %2841 = vmatpush1.msra.mxu0 %v2840
  %v2842 = vand.u32 %v41, 4294901760
  %v2843 = vsub.f32 %v41, %v2842
  %v2844 = vand.u32 %v2843, 4294901760
  %v2845 = vsub.f32 %v2843, %v2844
  %v2846 = vand.u32 %v2845, 4294901760
  %2847 = vmatprep.subr.mxu0 %v2846
  %v2848 = vand.u32 %v40, 4294901760
  %v2849 = vsub.f32 %v40, %v2848
  %v2850 = vand.u32 %v2849, 4294901760
  %v2851 = vsub.f32 %v2849, %v2850
  %v2852 = vand.u32 %v2851, 4294901760
  %2853 = vmatpush1.msra.mxu0 %v2852
  %v2854 = vand.u32 %v165, 4294901760
  %v2855 = vsub.f32 %v165, %v2854
  %v2856 = vand.u32 %v2855, 4294901760
  %v2857 = vsub.f32 %v2855, %v2856
  %v2858 = vand.u32 %v2857, 4294901760
  %2859 = vmatprep.subr.mxu0 %v2858
  %v2860 = vand.u32 %v164, 4294901760
  %v2861 = vsub.f32 %v164, %v2860
  %v2862 = vand.u32 %v2861, 4294901760
  %v2863 = vsub.f32 %v2861, %v2862
  %v2864 = vand.u32 %v2863, 4294901760
  %2865 = vmatpush2.msra.mxu0 %v2864
  %v2866 = vand.u32 %v161, 4294901760
  %v2867 = vsub.f32 %v161, %v2866
  %v2868 = vand.u32 %v2867, 4294901760
  %v2869 = vsub.f32 %v2867, %v2868
  %v2870 = vand.u32 %v2869, 4294901760
  %2871 = vmatprep.subr.mxu0 %v2870
  %v2872 = vand.u32 %v160, 4294901760
  %v2873 = vsub.f32 %v160, %v2872
  %v2874 = vand.u32 %v2873, 4294901760
  %v2875 = vsub.f32 %v2873, %v2874
  %v2876 = vand.u32 %v2875, 4294901760
  %2877 = vmatpush2.msra.mxu0 %v2876
  %v2878 = vand.u32 %v157, 4294901760
  %v2879 = vsub.f32 %v157, %v2878
  %v2880 = vand.u32 %v2879, 4294901760
  %v2881 = vsub.f32 %v2879, %v2880
  %v2882 = vand.u32 %v2881, 4294901760
  %2883 = vmatprep.subr.mxu0 %v2882
  %v2884 = vand.u32 %v156, 4294901760
  %v2885 = vsub.f32 %v156, %v2884
  %v2886 = vand.u32 %v2885, 4294901760
  %v2887 = vsub.f32 %v2885, %v2886
  %v2888 = vand.u32 %v2887, 4294901760
  %2889 = vmatpush2.msra.mxu0 %v2888
  %v2890 = vand.u32 %v153, 4294901760
  %v2891 = vsub.f32 %v153, %v2890
  %v2892 = vand.u32 %v2891, 4294901760
  %v2893 = vsub.f32 %v2891, %v2892
  %v2894 = vand.u32 %v2893, 4294901760
  %2895 = vmatprep.subr.mxu0 %v2894
  %v2896 = vand.u32 %v152, 4294901760
  %v2897 = vsub.f32 %v152, %v2896
  %v2898 = vand.u32 %v2897, 4294901760
  %v2899 = vsub.f32 %v2897, %v2898
  %v2900 = vand.u32 %v2899, 4294901760
  %2901 = vmatpush2.msra.mxu0 %v2900
  %v2902 = vand.u32 %v149, 4294901760
  %v2903 = vsub.f32 %v149, %v2902
  %v2904 = vand.u32 %v2903, 4294901760
  %v2905 = vsub.f32 %v2903, %v2904
  %v2906 = vand.u32 %v2905, 4294901760
  %2907 = vmatprep.subr.mxu0 %v2906
  %v2908 = vand.u32 %v148, 4294901760
  %v2909 = vsub.f32 %v148, %v2908
  %v2910 = vand.u32 %v2909, 4294901760
  %v2911 = vsub.f32 %v2909, %v2910
  %v2912 = vand.u32 %v2911, 4294901760
  %2913 = vmatpush2.msra.mxu0 %v2912
  %v2914 = vand.u32 %v145, 4294901760
  %v2915 = vsub.f32 %v145, %v2914
  %v2916 = vand.u32 %v2915, 4294901760
  %v2917 = vsub.f32 %v2915, %v2916
  %v2918 = vand.u32 %v2917, 4294901760
  %2919 = vmatprep.subr.mxu0 %v2918
  %v2920 = vand.u32 %v144, 4294901760
  %v2921 = vsub.f32 %v144, %v2920
  %v2922 = vand.u32 %v2921, 4294901760
  %v2923 = vsub.f32 %v2921, %v2922
  %v2924 = vand.u32 %v2923, 4294901760
  %2925 = vmatpush2.msra.mxu0 %v2924
  %v2926 = vand.u32 %v141, 4294901760
  %v2927 = vsub.f32 %v141, %v2926
  %v2928 = vand.u32 %v2927, 4294901760
  %v2929 = vsub.f32 %v2927, %v2928
  %v2930 = vand.u32 %v2929, 4294901760
  %2931 = vmatprep.subr.mxu0 %v2930
  %v2932 = vand.u32 %v140, 4294901760
  %v2933 = vsub.f32 %v140, %v2932
  %v2934 = vand.u32 %v2933, 4294901760
  %v2935 = vsub.f32 %v2933, %v2934
  %v2936 = vand.u32 %v2935, 4294901760
  %2937 = vmatpush2.msra.mxu0 %v2936
  %v2938 = vand.u32 %v137, 4294901760
  %v2939 = vsub.f32 %v137, %v2938
  %v2940 = vand.u32 %v2939, 4294901760
  %v2941 = vsub.f32 %v2939, %v2940
  %v2942 = vand.u32 %v2941, 4294901760
  %2943 = vmatprep.subr.mxu0 %v2942
  %v2944 = vand.u32 %v136, 4294901760
  %v2945 = vsub.f32 %v136, %v2944
  %v2946 = vand.u32 %v2945, 4294901760
  %v2947 = vsub.f32 %v2945, %v2946
  %v2948 = vand.u32 %v2947, 4294901760
  %2949 = vmatpush2.msra.mxu0 %v2948
  %v2950 = vand.u32 %v133, 4294901760
  %v2951 = vsub.f32 %v133, %v2950
  %v2952 = vand.u32 %v2951, 4294901760
  %v2953 = vsub.f32 %v2951, %v2952
  %v2954 = vand.u32 %v2953, 4294901760
  %2955 = vmatprep.subr.mxu0 %v2954
  %v2956 = vand.u32 %v132, 4294901760
  %v2957 = vsub.f32 %v132, %v2956
  %v2958 = vand.u32 %v2957, 4294901760
  %v2959 = vsub.f32 %v2957, %v2958
  %v2960 = vand.u32 %v2959, 4294901760
  %2961 = vmatpush2.msra.mxu0 %v2960
  %v2962 = vand.u32 %v129, 4294901760
  %v2963 = vsub.f32 %v129, %v2962
  %v2964 = vand.u32 %v2963, 4294901760
  %v2965 = vsub.f32 %v2963, %v2964
  %v2966 = vand.u32 %v2965, 4294901760
  %2967 = vmatprep.subr.mxu0 %v2966
  %v2968 = vand.u32 %v128, 4294901760
  %v2969 = vsub.f32 %v128, %v2968
  %v2970 = vand.u32 %v2969, 4294901760
  %v2971 = vsub.f32 %v2969, %v2970
  %v2972 = vand.u32 %v2971, 4294901760
  %2973 = vmatpush2.msra.mxu0 %v2972
  %v2974 = vand.u32 %v125, 4294901760
  %v2975 = vsub.f32 %v125, %v2974
  %v2976 = vand.u32 %v2975, 4294901760
  %v2977 = vsub.f32 %v2975, %v2976
  %v2978 = vand.u32 %v2977, 4294901760
  %2979 = vmatprep.subr.mxu0 %v2978
  %v2980 = vand.u32 %v124, 4294901760
  %v2981 = vsub.f32 %v124, %v2980
  %v2982 = vand.u32 %v2981, 4294901760
  %v2983 = vsub.f32 %v2981, %v2982
  %v2984 = vand.u32 %v2983, 4294901760
  %2985 = vmatpush2.msra.mxu0 %v2984
  %v2986 = vand.u32 %v121, 4294901760
  %v2987 = vsub.f32 %v121, %v2986
  %v2988 = vand.u32 %v2987, 4294901760
  %v2989 = vsub.f32 %v2987, %v2988
  %v2990 = vand.u32 %v2989, 4294901760
  %2991 = vmatprep.subr.mxu0 %v2990
  %v2992 = vand.u32 %v120, 4294901760
  %v2993 = vsub.f32 %v120, %v2992
  %v2994 = vand.u32 %v2993, 4294901760
  %v2995 = vsub.f32 %v2993, %v2994
  %v2996 = vand.u32 %v2995, 4294901760
  %2997 = vmatpush2.msra.mxu0 %v2996
  %v2998 = vand.u32 %v117, 4294901760
  %v2999 = vsub.f32 %v117, %v2998
  %v3000 = vand.u32 %v2999, 4294901760
  %v3001 = vsub.f32 %v2999, %v3000
  %v3002 = vand.u32 %v3001, 4294901760
  %3003 = vmatprep.subr.mxu0 %v3002
  %v3004 = vand.u32 %v116, 4294901760
  %v3005 = vsub.f32 %v116, %v3004
  %v3006 = vand.u32 %v3005, 4294901760
  %v3007 = vsub.f32 %v3005, %v3006
  %v3008 = vand.u32 %v3007, 4294901760
  %3009 = vmatpush2.msra.mxu0 %v3008
  %v3010 = vand.u32 %v113, 4294901760
  %v3011 = vsub.f32 %v113, %v3010
  %v3012 = vand.u32 %v3011, 4294901760
  %v3013 = vsub.f32 %v3011, %v3012
  %v3014 = vand.u32 %v3013, 4294901760
  %3015 = vmatprep.subr.mxu0 %v3014
  %v3016 = vand.u32 %v112, 4294901760
  %v3017 = vsub.f32 %v112, %v3016
  %v3018 = vand.u32 %v3017, 4294901760
  %v3019 = vsub.f32 %v3017, %v3018
  %v3020 = vand.u32 %v3019, 4294901760
  %3021 = vmatpush2.msra.mxu0 %v3020
  %v3022 = vand.u32 %v109, 4294901760
  %v3023 = vsub.f32 %v109, %v3022
  %v3024 = vand.u32 %v3023, 4294901760
  %v3025 = vsub.f32 %v3023, %v3024
  %v3026 = vand.u32 %v3025, 4294901760
  %3027 = vmatprep.subr.mxu0 %v3026
  %v3028 = vand.u32 %v108, 4294901760
  %v3029 = vsub.f32 %v108, %v3028
  %v3030 = vand.u32 %v3029, 4294901760
  %v3031 = vsub.f32 %v3029, %v3030
  %v3032 = vand.u32 %v3031, 4294901760
  %3033 = vmatpush2.msra.mxu0 %v3032
  %v3034 = vand.u32 %v105, 4294901760
  %v3035 = vsub.f32 %v105, %v3034
  %v3036 = vand.u32 %v3035, 4294901760
  %v3037 = vsub.f32 %v3035, %v3036
  %v3038 = vand.u32 %v3037, 4294901760
  %3039 = vmatprep.subr.mxu0 %v3038
  %v3040 = vand.u32 %v104, 4294901760
  %v3041 = vsub.f32 %v104, %v3040
  %v3042 = vand.u32 %v3041, 4294901760
  %v3043 = vsub.f32 %v3041, %v3042
  %v3044 = vand.u32 %v3043, 4294901760
  %3045 = vmatpush2.msra.mxu0 %v3044
  %v3046 = vand.u32 %v27, 4294901760
  %3047 = vmatprep.mubr.f32.mxu0 %v3046
  %v3048 = vand.u32 %v26, 4294901760
  %3049 = vmatmul.mubr.f32.gmra.mxu0 %v3048
  %v3050 = vpop.f32.mrf.mxu0
  %v3051 = vadd.f32 %v2610, %v3050
  %v3052 = vpop.f32.mrf.mxu0
  %v3053 = vadd.f32 %v2612, %v3052
  %v3054 = vand.u32 %v30, 4294901760
  %3055 = vmatprep.mubr.f32.mxu0 %v3054
  %v3056 = vand.u32 %v29, 4294901760
  %3057 = vmatmul.mubr.f32.gmra.mxu0 %v3056
  %v3058 = vpop.f32.mrf.mxu0
  %v3059 = vadd.f32 %v2626, %v3058
  %v3060 = vpop.f32.mrf.mxu0
  %v3061 = vadd.f32 %v2628, %v3060
  %v3062 = vand.u32 %v33, 4294901760
  %3063 = vmatprep.mubr.f32.mxu0 %v3062
  %v3064 = vand.u32 %v32, 4294901760
  %3065 = vmatmul.mubr.f32.gmra.mxu0 %v3064
  %v3066 = vpop.f32.mrf.mxu0
  %v3067 = vadd.f32 %v2642, %v3066
  %v3068 = vpop.f32.mrf.mxu0
  %v3069 = vadd.f32 %v2644, %v3068
  %v3070 = vand.u32 %v36, 4294901760
  %3071 = vmatprep.mubr.f32.mxu0 %v3070
  %v3072 = vand.u32 %v35, 4294901760
  %3073 = vmatmul.mubr.f32.gmra.mxu0 %v3072
  %v3074 = vpop.f32.mrf.mxu0
  %v3075 = vadd.f32 %v2658, %v3074
  %v3076 = vpop.f32.mrf.mxu0
  %v3077 = vadd.f32 %v2660, %v3076
  %3078 = vdwg.mxu0
  %v3079 = vand.u32 %v101, 4294901760
  %v3080 = vsub.f32 %v101, %v3079
  %3081 = vmatprep.subr.mxu0 %v3080
  %v3082 = vand.u32 %v100, 4294901760
  %v3083 = vsub.f32 %v100, %v3082
  %3084 = vmatpush1.msra.mxu0 %v3083
  %v3085 = vand.u32 %v97, 4294901760
  %v3086 = vsub.f32 %v97, %v3085
  %3087 = vmatprep.subr.mxu0 %v3086
  %v3088 = vand.u32 %v96, 4294901760
  %v3089 = vsub.f32 %v96, %v3088
  %3090 = vmatpush1.msra.mxu0 %v3089
  %v3091 = vand.u32 %v93, 4294901760
  %v3092 = vsub.f32 %v93, %v3091
  %3093 = vmatprep.subr.mxu0 %v3092
  %v3094 = vand.u32 %v92, 4294901760
  %v3095 = vsub.f32 %v92, %v3094
  %3096 = vmatpush1.msra.mxu0 %v3095
  %v3097 = vand.u32 %v89, 4294901760
  %v3098 = vsub.f32 %v89, %v3097
  %3099 = vmatprep.subr.mxu0 %v3098
  %v3100 = vand.u32 %v88, 4294901760
  %v3101 = vsub.f32 %v88, %v3100
  %3102 = vmatpush1.msra.mxu0 %v3101
  %v3103 = vand.u32 %v85, 4294901760
  %v3104 = vsub.f32 %v85, %v3103
  %3105 = vmatprep.subr.mxu0 %v3104
  %v3106 = vand.u32 %v84, 4294901760
  %v3107 = vsub.f32 %v84, %v3106
  %3108 = vmatpush1.msra.mxu0 %v3107
  %v3109 = vand.u32 %v81, 4294901760
  %v3110 = vsub.f32 %v81, %v3109
  %3111 = vmatprep.subr.mxu0 %v3110
  %v3112 = vand.u32 %v80, 4294901760
  %v3113 = vsub.f32 %v80, %v3112
  %3114 = vmatpush1.msra.mxu0 %v3113
  %v3115 = vand.u32 %v77, 4294901760
  %v3116 = vsub.f32 %v77, %v3115
  %3117 = vmatprep.subr.mxu0 %v3116
  %v3118 = vand.u32 %v76, 4294901760
  %v3119 = vsub.f32 %v76, %v3118
  %3120 = vmatpush1.msra.mxu0 %v3119
  %v3121 = vand.u32 %v73, 4294901760
  %v3122 = vsub.f32 %v73, %v3121
  %3123 = vmatprep.subr.mxu0 %v3122
  %v3124 = vand.u32 %v72, 4294901760
  %v3125 = vsub.f32 %v72, %v3124
  %3126 = vmatpush1.msra.mxu0 %v3125
  %v3127 = vand.u32 %v69, 4294901760
  %v3128 = vsub.f32 %v69, %v3127
  %3129 = vmatprep.subr.mxu0 %v3128
  %v3130 = vand.u32 %v68, 4294901760
  %v3131 = vsub.f32 %v68, %v3130
  %3132 = vmatpush1.msra.mxu0 %v3131
  %v3133 = vand.u32 %v65, 4294901760
  %v3134 = vsub.f32 %v65, %v3133
  %3135 = vmatprep.subr.mxu0 %v3134
  %v3136 = vand.u32 %v64, 4294901760
  %v3137 = vsub.f32 %v64, %v3136
  %3138 = vmatpush1.msra.mxu0 %v3137
  %v3139 = vand.u32 %v61, 4294901760
  %v3140 = vsub.f32 %v61, %v3139
  %3141 = vmatprep.subr.mxu0 %v3140
  %v3142 = vand.u32 %v60, 4294901760
  %v3143 = vsub.f32 %v60, %v3142
  %3144 = vmatpush1.msra.mxu0 %v3143
  %v3145 = vand.u32 %v57, 4294901760
  %v3146 = vsub.f32 %v57, %v3145
  %3147 = vmatprep.subr.mxu0 %v3146
  %v3148 = vand.u32 %v56, 4294901760
  %v3149 = vsub.f32 %v56, %v3148
  %3150 = vmatpush1.msra.mxu0 %v3149
  %v3151 = vand.u32 %v53, 4294901760
  %v3152 = vsub.f32 %v53, %v3151
  %3153 = vmatprep.subr.mxu0 %v3152
  %v3154 = vand.u32 %v52, 4294901760
  %v3155 = vsub.f32 %v52, %v3154
  %3156 = vmatpush1.msra.mxu0 %v3155
  %v3157 = vand.u32 %v49, 4294901760
  %v3158 = vsub.f32 %v49, %v3157
  %3159 = vmatprep.subr.mxu0 %v3158
  %v3160 = vand.u32 %v48, 4294901760
  %v3161 = vsub.f32 %v48, %v3160
  %3162 = vmatpush1.msra.mxu0 %v3161
  %v3163 = vand.u32 %v45, 4294901760
  %v3164 = vsub.f32 %v45, %v3163
  %3165 = vmatprep.subr.mxu0 %v3164
  %v3166 = vand.u32 %v44, 4294901760
  %v3167 = vsub.f32 %v44, %v3166
  %3168 = vmatpush1.msra.mxu0 %v3167
  %v3169 = vand.u32 %v41, 4294901760
  %v3170 = vsub.f32 %v41, %v3169
  %3171 = vmatprep.subr.mxu0 %v3170
  %v3172 = vand.u32 %v40, 4294901760
  %v3173 = vsub.f32 %v40, %v3172
  %3174 = vmatpush1.msra.mxu0 %v3173
  %v3175 = vand.u32 %v165, 4294901760
  %v3176 = vsub.f32 %v165, %v3175
  %3177 = vmatprep.subr.mxu0 %v3176
  %v3178 = vand.u32 %v164, 4294901760
  %v3179 = vsub.f32 %v164, %v3178
  %3180 = vmatpush2.msra.mxu0 %v3179
  %v3181 = vand.u32 %v161, 4294901760
  %v3182 = vsub.f32 %v161, %v3181
  %3183 = vmatprep.subr.mxu0 %v3182
  %v3184 = vand.u32 %v160, 4294901760
  %v3185 = vsub.f32 %v160, %v3184
  %3186 = vmatpush2.msra.mxu0 %v3185
  %v3187 = vand.u32 %v157, 4294901760
  %v3188 = vsub.f32 %v157, %v3187
  %3189 = vmatprep.subr.mxu0 %v3188
  %v3190 = vand.u32 %v156, 4294901760
  %v3191 = vsub.f32 %v156, %v3190
  %3192 = vmatpush2.msra.mxu0 %v3191
  %v3193 = vand.u32 %v153, 4294901760
  %v3194 = vsub.f32 %v153, %v3193
  %3195 = vmatprep.subr.mxu0 %v3194
  %v3196 = vand.u32 %v152, 4294901760
  %v3197 = vsub.f32 %v152, %v3196
  %3198 = vmatpush2.msra.mxu0 %v3197
  %v3199 = vand.u32 %v149, 4294901760
  %v3200 = vsub.f32 %v149, %v3199
  %3201 = vmatprep.subr.mxu0 %v3200
  %v3202 = vand.u32 %v148, 4294901760
  %v3203 = vsub.f32 %v148, %v3202
  %3204 = vmatpush2.msra.mxu0 %v3203
  %v3205 = vand.u32 %v145, 4294901760
  %v3206 = vsub.f32 %v145, %v3205
  %3207 = vmatprep.subr.mxu0 %v3206
  %v3208 = vand.u32 %v144, 4294901760
  %v3209 = vsub.f32 %v144, %v3208
  %3210 = vmatpush2.msra.mxu0 %v3209
  %v3211 = vand.u32 %v141, 4294901760
  %v3212 = vsub.f32 %v141, %v3211
  %3213 = vmatprep.subr.mxu0 %v3212
  %v3214 = vand.u32 %v140, 4294901760
  %v3215 = vsub.f32 %v140, %v3214
  %3216 = vmatpush2.msra.mxu0 %v3215
  %v3217 = vand.u32 %v137, 4294901760
  %v3218 = vsub.f32 %v137, %v3217
  %3219 = vmatprep.subr.mxu0 %v3218
  %v3220 = vand.u32 %v136, 4294901760
  %v3221 = vsub.f32 %v136, %v3220
  %3222 = vmatpush2.msra.mxu0 %v3221
  %v3223 = vand.u32 %v133, 4294901760
  %v3224 = vsub.f32 %v133, %v3223
  %3225 = vmatprep.subr.mxu0 %v3224
  %v3226 = vand.u32 %v132, 4294901760
  %v3227 = vsub.f32 %v132, %v3226
  %3228 = vmatpush2.msra.mxu0 %v3227
  %v3229 = vand.u32 %v129, 4294901760
  %v3230 = vsub.f32 %v129, %v3229
  %3231 = vmatprep.subr.mxu0 %v3230
  %v3232 = vand.u32 %v128, 4294901760
  %v3233 = vsub.f32 %v128, %v3232
  %3234 = vmatpush2.msra.mxu0 %v3233
  %v3235 = vand.u32 %v125, 4294901760
  %v3236 = vsub.f32 %v125, %v3235
  %3237 = vmatprep.subr.mxu0 %v3236
  %v3238 = vand.u32 %v124, 4294901760
  %v3239 = vsub.f32 %v124, %v3238
  %3240 = vmatpush2.msra.mxu0 %v3239
  %v3241 = vand.u32 %v121, 4294901760
  %v3242 = vsub.f32 %v121, %v3241
  %3243 = vmatprep.subr.mxu0 %v3242
  %v3244 = vand.u32 %v120, 4294901760
  %v3245 = vsub.f32 %v120, %v3244
  %3246 = vmatpush2.msra.mxu0 %v3245
  %v3247 = vand.u32 %v117, 4294901760
  %v3248 = vsub.f32 %v117, %v3247
  %3249 = vmatprep.subr.mxu0 %v3248
  %v3250 = vand.u32 %v116, 4294901760
  %v3251 = vsub.f32 %v116, %v3250
  %3252 = vmatpush2.msra.mxu0 %v3251
  %v3253 = vand.u32 %v113, 4294901760
  %v3254 = vsub.f32 %v113, %v3253
  %3255 = vmatprep.subr.mxu0 %v3254
  %v3256 = vand.u32 %v112, 4294901760
  %v3257 = vsub.f32 %v112, %v3256
  %3258 = vmatpush2.msra.mxu0 %v3257
  %v3259 = vand.u32 %v109, 4294901760
  %v3260 = vsub.f32 %v109, %v3259
  %3261 = vmatprep.subr.mxu0 %v3260
  %v3262 = vand.u32 %v108, 4294901760
  %v3263 = vsub.f32 %v108, %v3262
  %3264 = vmatpush2.msra.mxu0 %v3263
  %v3265 = vand.u32 %v105, 4294901760
  %v3266 = vsub.f32 %v105, %v3265
  %3267 = vmatprep.subr.mxu0 %v3266
  %v3268 = vand.u32 %v104, 4294901760
  %v3269 = vsub.f32 %v104, %v3268
  %3270 = vmatpush2.msra.mxu0 %v3269
  %v3271 = vand.u32 %v27, 4294901760
  %v3272 = vsub.f32 %v27, %v3271
  %3273 = vmatprep.mubr.f32.mxu0 %v3272
  %v3274 = vand.u32 %v26, 4294901760
  %v3275 = vsub.f32 %v26, %v3274
  %3276 = vmatmul.mubr.f32.gmra.mxu0 %v3275
  %v3277 = vpop.f32.mrf.mxu0
  %v3278 = vadd.f32 %v3051, %v3277
  %v3279 = vpop.f32.mrf.mxu0
  %v3280 = vadd.f32 %v3053, %v3279
  %v3281 = vand.u32 %v30, 4294901760
  %v3282 = vsub.f32 %v30, %v3281
  %3283 = vmatprep.mubr.f32.mxu0 %v3282
  %v3284 = vand.u32 %v29, 4294901760
  %v3285 = vsub.f32 %v29, %v3284
  %3286 = vmatmul.mubr.f32.gmra.mxu0 %v3285
  %v3287 = vpop.f32.mrf.mxu0
  %v3288 = vadd.f32 %v3059, %v3287
  %v3289 = vpop.f32.mrf.mxu0
  %v3290 = vadd.f32 %v3061, %v3289
  %v3291 = vand.u32 %v33, 4294901760
  %v3292 = vsub.f32 %v33, %v3291
  %3293 = vmatprep.mubr.f32.mxu0 %v3292
  %v3294 = vand.u32 %v32, 4294901760
  %v3295 = vsub.f32 %v32, %v3294
  %3296 = vmatmul.mubr.f32.gmra.mxu0 %v3295
  %v3297 = vpop.f32.mrf.mxu0
  %v3298 = vadd.f32 %v3067, %v3297
  %v3299 = vpop.f32.mrf.mxu0
  %v3300 = vadd.f32 %v3069, %v3299
  %v3301 = vand.u32 %v36, 4294901760
  %v3302 = vsub.f32 %v36, %v3301
  %3303 = vmatprep.mubr.f32.mxu0 %v3302
  %v3304 = vand.u32 %v35, 4294901760
  %v3305 = vsub.f32 %v35, %v3304
  %3306 = vmatmul.mubr.f32.gmra.mxu0 %v3305
  %v3307 = vpop.f32.mrf.mxu0
  %v3308 = vadd.f32 %v3075, %v3307
  %v3309 = vpop.f32.mrf.mxu0
  %v3310 = vadd.f32 %v3077, %v3309
  %3311 = vdwg.mxu0
  %v3312 = vand.u32 %v101, 4294901760
  %3313 = vmatprep.subr.mxu0 %v3312
  %v3314 = vand.u32 %v100, 4294901760
  %3315 = vmatpush1.msra.mxu0 %v3314
  %v3316 = vand.u32 %v97, 4294901760
  %3317 = vmatprep.subr.mxu0 %v3316
  %v3318 = vand.u32 %v96, 4294901760
  %3319 = vmatpush1.msra.mxu0 %v3318
  %v3320 = vand.u32 %v93, 4294901760
  %3321 = vmatprep.subr.mxu0 %v3320
  %v3322 = vand.u32 %v92, 4294901760
  %3323 = vmatpush1.msra.mxu0 %v3322
  %v3324 = vand.u32 %v89, 4294901760
  %3325 = vmatprep.subr.mxu0 %v3324
  %v3326 = vand.u32 %v88, 4294901760
  %3327 = vmatpush1.msra.mxu0 %v3326
  %v3328 = vand.u32 %v85, 4294901760
  %3329 = vmatprep.subr.mxu0 %v3328
  %v3330 = vand.u32 %v84, 4294901760
  %3331 = vmatpush1.msra.mxu0 %v3330
  %v3332 = vand.u32 %v81, 4294901760
  %3333 = vmatprep.subr.mxu0 %v3332
  %v3334 = vand.u32 %v80, 4294901760
  %3335 = vmatpush1.msra.mxu0 %v3334
  %v3336 = vand.u32 %v77, 4294901760
  %3337 = vmatprep.subr.mxu0 %v3336
  %v3338 = vand.u32 %v76, 4294901760
  %3339 = vmatpush1.msra.mxu0 %v3338
  %v3340 = vand.u32 %v73, 4294901760
  %3341 = vmatprep.subr.mxu0 %v3340
  %v3342 = vand.u32 %v72, 4294901760
  %3343 = vmatpush1.msra.mxu0 %v3342
  %v3344 = vand.u32 %v69, 4294901760
  %3345 = vmatprep.subr.mxu0 %v3344
  %v3346 = vand.u32 %v68, 4294901760
  %3347 = vmatpush1.msra.mxu0 %v3346
  %v3348 = vand.u32 %v65, 4294901760
  %3349 = vmatprep.subr.mxu0 %v3348
  %v3350 = vand.u32 %v64, 4294901760
  %3351 = vmatpush1.msra.mxu0 %v3350
  %v3352 = vand.u32 %v61, 4294901760
  %3353 = vmatprep.subr.mxu0 %v3352
  %v3354 = vand.u32 %v60, 4294901760
  %3355 = vmatpush1.msra.mxu0 %v3354
  %v3356 = vand.u32 %v57, 4294901760
  %3357 = vmatprep.subr.mxu0 %v3356
  %v3358 = vand.u32 %v56, 4294901760
  %3359 = vmatpush1.msra.mxu0 %v3358
  %v3360 = vand.u32 %v53, 4294901760
  %3361 = vmatprep.subr.mxu0 %v3360
  %v3362 = vand.u32 %v52, 4294901760
  %3363 = vmatpush1.msra.mxu0 %v3362
  %v3364 = vand.u32 %v49, 4294901760
  %3365 = vmatprep.subr.mxu0 %v3364
  %v3366 = vand.u32 %v48, 4294901760
  %3367 = vmatpush1.msra.mxu0 %v3366
  %v3368 = vand.u32 %v45, 4294901760
  %3369 = vmatprep.subr.mxu0 %v3368
  %v3370 = vand.u32 %v44, 4294901760
  %3371 = vmatpush1.msra.mxu0 %v3370
  %v3372 = vand.u32 %v41, 4294901760
  %3373 = vmatprep.subr.mxu0 %v3372
  %v3374 = vand.u32 %v40, 4294901760
  %3375 = vmatpush1.msra.mxu0 %v3374
  %v3376 = vand.u32 %v165, 4294901760
  %3377 = vmatprep.subr.mxu0 %v3376
  %v3378 = vand.u32 %v164, 4294901760
  %3379 = vmatpush2.msra.mxu0 %v3378
  %v3380 = vand.u32 %v161, 4294901760
  %3381 = vmatprep.subr.mxu0 %v3380
  %v3382 = vand.u32 %v160, 4294901760
  %3383 = vmatpush2.msra.mxu0 %v3382
  %v3384 = vand.u32 %v157, 4294901760
  %3385 = vmatprep.subr.mxu0 %v3384
  %v3386 = vand.u32 %v156, 4294901760
  %3387 = vmatpush2.msra.mxu0 %v3386
  %v3388 = vand.u32 %v153, 4294901760
  %3389 = vmatprep.subr.mxu0 %v3388
  %v3390 = vand.u32 %v152, 4294901760
  %3391 = vmatpush2.msra.mxu0 %v3390
  %v3392 = vand.u32 %v149, 4294901760
  %3393 = vmatprep.subr.mxu0 %v3392
  %v3394 = vand.u32 %v148, 4294901760
  %3395 = vmatpush2.msra.mxu0 %v3394
  %v3396 = vand.u32 %v145, 4294901760
  %3397 = vmatprep.subr.mxu0 %v3396
  %v3398 = vand.u32 %v144, 4294901760
  %3399 = vmatpush2.msra.mxu0 %v3398
  %v3400 = vand.u32 %v141, 4294901760
  %3401 = vmatprep.subr.mxu0 %v3400
  %v3402 = vand.u32 %v140, 4294901760
  %3403 = vmatpush2.msra.mxu0 %v3402
  %v3404 = vand.u32 %v137, 4294901760
  %3405 = vmatprep.subr.mxu0 %v3404
  %v3406 = vand.u32 %v136, 4294901760
  %3407 = vmatpush2.msra.mxu0 %v3406
  %v3408 = vand.u32 %v133, 4294901760
  %3409 = vmatprep.subr.mxu0 %v3408
  %v3410 = vand.u32 %v132, 4294901760
  %3411 = vmatpush2.msra.mxu0 %v3410
  %v3412 = vand.u32 %v129, 4294901760
  %3413 = vmatprep.subr.mxu0 %v3412
  %v3414 = vand.u32 %v128, 4294901760
  %3415 = vmatpush2.msra.mxu0 %v3414
  %v3416 = vand.u32 %v125, 4294901760
  %3417 = vmatprep.subr.mxu0 %v3416
  %v3418 = vand.u32 %v124, 4294901760
  %3419 = vmatpush2.msra.mxu0 %v3418
  %v3420 = vand.u32 %v121, 4294901760
  %3421 = vmatprep.subr.mxu0 %v3420
  %v3422 = vand.u32 %v120, 4294901760
  %3423 = vmatpush2.msra.mxu0 %v3422
  %v3424 = vand.u32 %v117, 4294901760
  %3425 = vmatprep.subr.mxu0 %v3424
  %v3426 = vand.u32 %v116, 4294901760
  %3427 = vmatpush2.msra.mxu0 %v3426
  %v3428 = vand.u32 %v113, 4294901760
  %3429 = vmatprep.subr.mxu0 %v3428
  %v3430 = vand.u32 %v112, 4294901760
  %3431 = vmatpush2.msra.mxu0 %v3430
  %v3432 = vand.u32 %v109, 4294901760
  %3433 = vmatprep.subr.mxu0 %v3432
  %v3434 = vand.u32 %v108, 4294901760
  %3435 = vmatpush2.msra.mxu0 %v3434
  %v3436 = vand.u32 %v105, 4294901760
  %3437 = vmatprep.subr.mxu0 %v3436
  %v3438 = vand.u32 %v104, 4294901760
  %3439 = vmatpush2.msra.mxu0 %v3438
  %v3440 = vand.u32 %v27, 4294901760
  %v3441 = vsub.f32 %v27, %v3440
  %v3442 = vand.u32 %v3441, 4294901760
  %3443 = vmatprep.mubr.f32.mxu0 %v3442
  %v3444 = vand.u32 %v26, 4294901760
  %v3445 = vsub.f32 %v26, %v3444
  %v3446 = vand.u32 %v3445, 4294901760
  %3447 = vmatmul.mubr.f32.gmra.mxu0 %v3446
  %v3448 = vpop.f32.mrf.mxu0
  %v3449 = vadd.f32 %v3278, %v3448
  %v3450 = vpop.f32.mrf.mxu0
  %v3451 = vadd.f32 %v3280, %v3450
  %v3452 = vand.u32 %v30, 4294901760
  %v3453 = vsub.f32 %v30, %v3452
  %v3454 = vand.u32 %v3453, 4294901760
  %3455 = vmatprep.mubr.f32.mxu0 %v3454
  %v3456 = vand.u32 %v29, 4294901760
  %v3457 = vsub.f32 %v29, %v3456
  %v3458 = vand.u32 %v3457, 4294901760
  %3459 = vmatmul.mubr.f32.gmra.mxu0 %v3458
  %v3460 = vpop.f32.mrf.mxu0
  %v3461 = vadd.f32 %v3288, %v3460
  %v3462 = vpop.f32.mrf.mxu0
  %v3463 = vadd.f32 %v3290, %v3462
  %v3464 = vand.u32 %v33, 4294901760
  %v3465 = vsub.f32 %v33, %v3464
  %v3466 = vand.u32 %v3465, 4294901760
  %3467 = vmatprep.mubr.f32.mxu0 %v3466
  %v3468 = vand.u32 %v32, 4294901760
  %v3469 = vsub.f32 %v32, %v3468
  %v3470 = vand.u32 %v3469, 4294901760
  %3471 = vmatmul.mubr.f32.gmra.mxu0 %v3470
  %v3472 = vpop.f32.mrf.mxu0
  %v3473 = vadd.f32 %v3298, %v3472
  %v3474 = vpop.f32.mrf.mxu0
  %v3475 = vadd.f32 %v3300, %v3474
  %v3476 = vand.u32 %v36, 4294901760
  %v3477 = vsub.f32 %v36, %v3476
  %v3478 = vand.u32 %v3477, 4294901760
  %3479 = vmatprep.mubr.f32.mxu0 %v3478
  %v3480 = vand.u32 %v35, 4294901760
  %v3481 = vsub.f32 %v35, %v3480
  %v3482 = vand.u32 %v3481, 4294901760
  %3483 = vmatmul.mubr.f32.gmra.mxu0 %v3482
  %v3484 = vpop.f32.mrf.mxu0
  %v3485 = vadd.f32 %v3308, %v3484
  %v3486 = vpop.f32.mrf.mxu0
  %v3487 = vadd.f32 %v3310, %v3486
  %3488 = vdwg.mxu0
  %v3489 = vand.u32 %v101, 4294901760
  %v3490 = vsub.f32 %v101, %v3489
  %v3491 = vand.u32 %v3490, 4294901760
  %3492 = vmatprep.subr.mxu0 %v3491
  %v3493 = vand.u32 %v100, 4294901760
  %v3494 = vsub.f32 %v100, %v3493
  %v3495 = vand.u32 %v3494, 4294901760
  %3496 = vmatpush1.msra.mxu0 %v3495
  %v3497 = vand.u32 %v97, 4294901760
  %v3498 = vsub.f32 %v97, %v3497
  %v3499 = vand.u32 %v3498, 4294901760
  %3500 = vmatprep.subr.mxu0 %v3499
  %v3501 = vand.u32 %v96, 4294901760
  %v3502 = vsub.f32 %v96, %v3501
  %v3503 = vand.u32 %v3502, 4294901760
  %3504 = vmatpush1.msra.mxu0 %v3503
  %v3505 = vand.u32 %v93, 4294901760
  %v3506 = vsub.f32 %v93, %v3505
  %v3507 = vand.u32 %v3506, 4294901760
  %3508 = vmatprep.subr.mxu0 %v3507
  %v3509 = vand.u32 %v92, 4294901760
  %v3510 = vsub.f32 %v92, %v3509
  %v3511 = vand.u32 %v3510, 4294901760
  %3512 = vmatpush1.msra.mxu0 %v3511
  %v3513 = vand.u32 %v89, 4294901760
  %v3514 = vsub.f32 %v89, %v3513
  %v3515 = vand.u32 %v3514, 4294901760
  %3516 = vmatprep.subr.mxu0 %v3515
  %v3517 = vand.u32 %v88, 4294901760
  %v3518 = vsub.f32 %v88, %v3517
  %v3519 = vand.u32 %v3518, 4294901760
  %3520 = vmatpush1.msra.mxu0 %v3519
  %v3521 = vand.u32 %v85, 4294901760
  %v3522 = vsub.f32 %v85, %v3521
  %v3523 = vand.u32 %v3522, 4294901760
  %3524 = vmatprep.subr.mxu0 %v3523
  %v3525 = vand.u32 %v84, 4294901760
  %v3526 = vsub.f32 %v84, %v3525
  %v3527 = vand.u32 %v3526, 4294901760
  %3528 = vmatpush1.msra.mxu0 %v3527
  %v3529 = vand.u32 %v81, 4294901760
  %v3530 = vsub.f32 %v81, %v3529
  %v3531 = vand.u32 %v3530, 4294901760
  %3532 = vmatprep.subr.mxu0 %v3531
  %v3533 = vand.u32 %v80, 4294901760
  %v3534 = vsub.f32 %v80, %v3533
  %v3535 = vand.u32 %v3534, 4294901760
  %3536 = vmatpush1.msra.mxu0 %v3535
  %v3537 = vand.u32 %v77, 4294901760
  %v3538 = vsub.f32 %v77, %v3537
  %v3539 = vand.u32 %v3538, 4294901760
  %3540 = vmatprep.subr.mxu0 %v3539
  %v3541 = vand.u32 %v76, 4294901760
  %v3542 = vsub.f32 %v76, %v3541
  %v3543 = vand.u32 %v3542, 4294901760
  %3544 = vmatpush1.msra.mxu0 %v3543
  %v3545 = vand.u32 %v73, 4294901760
  %v3546 = vsub.f32 %v73, %v3545
  %v3547 = vand.u32 %v3546, 4294901760
  %3548 = vmatprep.subr.mxu0 %v3547
  %v3549 = vand.u32 %v72, 4294901760
  %v3550 = vsub.f32 %v72, %v3549
  %v3551 = vand.u32 %v3550, 4294901760
  %3552 = vmatpush1.msra.mxu0 %v3551
  %v3553 = vand.u32 %v69, 4294901760
  %v3554 = vsub.f32 %v69, %v3553
  %v3555 = vand.u32 %v3554, 4294901760
  %3556 = vmatprep.subr.mxu0 %v3555
  %v3557 = vand.u32 %v68, 4294901760
  %v3558 = vsub.f32 %v68, %v3557
  %v3559 = vand.u32 %v3558, 4294901760
  %3560 = vmatpush1.msra.mxu0 %v3559
  %v3561 = vand.u32 %v65, 4294901760
  %v3562 = vsub.f32 %v65, %v3561
  %v3563 = vand.u32 %v3562, 4294901760
  %3564 = vmatprep.subr.mxu0 %v3563
  %v3565 = vand.u32 %v64, 4294901760
  %v3566 = vsub.f32 %v64, %v3565
  %v3567 = vand.u32 %v3566, 4294901760
  %3568 = vmatpush1.msra.mxu0 %v3567
  %v3569 = vand.u32 %v61, 4294901760
  %v3570 = vsub.f32 %v61, %v3569
  %v3571 = vand.u32 %v3570, 4294901760
  %3572 = vmatprep.subr.mxu0 %v3571
  %v3573 = vand.u32 %v60, 4294901760
  %v3574 = vsub.f32 %v60, %v3573
  %v3575 = vand.u32 %v3574, 4294901760
  %3576 = vmatpush1.msra.mxu0 %v3575
  %v3577 = vand.u32 %v57, 4294901760
  %v3578 = vsub.f32 %v57, %v3577
  %v3579 = vand.u32 %v3578, 4294901760
  %3580 = vmatprep.subr.mxu0 %v3579
  %v3581 = vand.u32 %v56, 4294901760
  %v3582 = vsub.f32 %v56, %v3581
  %v3583 = vand.u32 %v3582, 4294901760
  %3584 = vmatpush1.msra.mxu0 %v3583
  %v3585 = vand.u32 %v53, 4294901760
  %v3586 = vsub.f32 %v53, %v3585
  %v3587 = vand.u32 %v3586, 4294901760
  %3588 = vmatprep.subr.mxu0 %v3587
  %v3589 = vand.u32 %v52, 4294901760
  %v3590 = vsub.f32 %v52, %v3589
  %v3591 = vand.u32 %v3590, 4294901760
  %3592 = vmatpush1.msra.mxu0 %v3591
  %v3593 = vand.u32 %v49, 4294901760
  %v3594 = vsub.f32 %v49, %v3593
  %v3595 = vand.u32 %v3594, 4294901760
  %3596 = vmatprep.subr.mxu0 %v3595
  %v3597 = vand.u32 %v48, 4294901760
  %v3598 = vsub.f32 %v48, %v3597
  %v3599 = vand.u32 %v3598, 4294901760
  %3600 = vmatpush1.msra.mxu0 %v3599
  %v3601 = vand.u32 %v45, 4294901760
  %v3602 = vsub.f32 %v45, %v3601
  %v3603 = vand.u32 %v3602, 4294901760
  %3604 = vmatprep.subr.mxu0 %v3603
  %v3605 = vand.u32 %v44, 4294901760
  %v3606 = vsub.f32 %v44, %v3605
  %v3607 = vand.u32 %v3606, 4294901760
  %3608 = vmatpush1.msra.mxu0 %v3607
  %v3609 = vand.u32 %v41, 4294901760
  %v3610 = vsub.f32 %v41, %v3609
  %v3611 = vand.u32 %v3610, 4294901760
  %3612 = vmatprep.subr.mxu0 %v3611
  %v3613 = vand.u32 %v40, 4294901760
  %v3614 = vsub.f32 %v40, %v3613
  %v3615 = vand.u32 %v3614, 4294901760
  %3616 = vmatpush1.msra.mxu0 %v3615
  %v3617 = vand.u32 %v165, 4294901760
  %v3618 = vsub.f32 %v165, %v3617
  %v3619 = vand.u32 %v3618, 4294901760
  %3620 = vmatprep.subr.mxu0 %v3619
  %v3621 = vand.u32 %v164, 4294901760
  %v3622 = vsub.f32 %v164, %v3621
  %v3623 = vand.u32 %v3622, 4294901760
  %3624 = vmatpush2.msra.mxu0 %v3623
  %v3625 = vand.u32 %v161, 4294901760
  %v3626 = vsub.f32 %v161, %v3625
  %v3627 = vand.u32 %v3626, 4294901760
  %3628 = vmatprep.subr.mxu0 %v3627
  %v3629 = vand.u32 %v160, 4294901760
  %v3630 = vsub.f32 %v160, %v3629
  %v3631 = vand.u32 %v3630, 4294901760
  %3632 = vmatpush2.msra.mxu0 %v3631
  %v3633 = vand.u32 %v157, 4294901760
  %v3634 = vsub.f32 %v157, %v3633
  %v3635 = vand.u32 %v3634, 4294901760
  %3636 = vmatprep.subr.mxu0 %v3635
  %v3637 = vand.u32 %v156, 4294901760
  %v3638 = vsub.f32 %v156, %v3637
  %v3639 = vand.u32 %v3638, 4294901760
  %3640 = vmatpush2.msra.mxu0 %v3639
  %v3641 = vand.u32 %v153, 4294901760
  %v3642 = vsub.f32 %v153, %v3641
  %v3643 = vand.u32 %v3642, 4294901760
  %3644 = vmatprep.subr.mxu0 %v3643
  %v3645 = vand.u32 %v152, 4294901760
  %v3646 = vsub.f32 %v152, %v3645
  %v3647 = vand.u32 %v3646, 4294901760
  %3648 = vmatpush2.msra.mxu0 %v3647
  %v3649 = vand.u32 %v149, 4294901760
  %v3650 = vsub.f32 %v149, %v3649
  %v3651 = vand.u32 %v3650, 4294901760
  %3652 = vmatprep.subr.mxu0 %v3651
  %v3653 = vand.u32 %v148, 4294901760
  %v3654 = vsub.f32 %v148, %v3653
  %v3655 = vand.u32 %v3654, 4294901760
  %3656 = vmatpush2.msra.mxu0 %v3655
  %v3657 = vand.u32 %v145, 4294901760
  %v3658 = vsub.f32 %v145, %v3657
  %v3659 = vand.u32 %v3658, 4294901760
  %3660 = vmatprep.subr.mxu0 %v3659
  %v3661 = vand.u32 %v144, 4294901760
  %v3662 = vsub.f32 %v144, %v3661
  %v3663 = vand.u32 %v3662, 4294901760
  %3664 = vmatpush2.msra.mxu0 %v3663
  %v3665 = vand.u32 %v141, 4294901760
  %v3666 = vsub.f32 %v141, %v3665
  %v3667 = vand.u32 %v3666, 4294901760
  %3668 = vmatprep.subr.mxu0 %v3667
  %v3669 = vand.u32 %v140, 4294901760
  %v3670 = vsub.f32 %v140, %v3669
  %v3671 = vand.u32 %v3670, 4294901760
  %3672 = vmatpush2.msra.mxu0 %v3671
  %v3673 = vand.u32 %v137, 4294901760
  %v3674 = vsub.f32 %v137, %v3673
  %v3675 = vand.u32 %v3674, 4294901760
  %3676 = vmatprep.subr.mxu0 %v3675
  %v3677 = vand.u32 %v136, 4294901760
  %v3678 = vsub.f32 %v136, %v3677
  %v3679 = vand.u32 %v3678, 4294901760
  %3680 = vmatpush2.msra.mxu0 %v3679
  %v3681 = vand.u32 %v133, 4294901760
  %v3682 = vsub.f32 %v133, %v3681
  %v3683 = vand.u32 %v3682, 4294901760
  %3684 = vmatprep.subr.mxu0 %v3683
  %v3685 = vand.u32 %v132, 4294901760
  %v3686 = vsub.f32 %v132, %v3685
  %v3687 = vand.u32 %v3686, 4294901760
  %3688 = vmatpush2.msra.mxu0 %v3687
  %v3689 = vand.u32 %v129, 4294901760
  %v3690 = vsub.f32 %v129, %v3689
  %v3691 = vand.u32 %v3690, 4294901760
  %3692 = vmatprep.subr.mxu0 %v3691
  %v3693 = vand.u32 %v128, 4294901760
  %v3694 = vsub.f32 %v128, %v3693
  %v3695 = vand.u32 %v3694, 4294901760
  %3696 = vmatpush2.msra.mxu0 %v3695
  %v3697 = vand.u32 %v125, 4294901760
  %v3698 = vsub.f32 %v125, %v3697
  %v3699 = vand.u32 %v3698, 4294901760
  %3700 = vmatprep.subr.mxu0 %v3699
  %v3701 = vand.u32 %v124, 4294901760
  %v3702 = vsub.f32 %v124, %v3701
  %v3703 = vand.u32 %v3702, 4294901760
  %3704 = vmatpush2.msra.mxu0 %v3703
  %v3705 = vand.u32 %v121, 4294901760
  %v3706 = vsub.f32 %v121, %v3705
  %v3707 = vand.u32 %v3706, 4294901760
  %3708 = vmatprep.subr.mxu0 %v3707
  %v3709 = vand.u32 %v120, 4294901760
  %v3710 = vsub.f32 %v120, %v3709
  %v3711 = vand.u32 %v3710, 4294901760
  %3712 = vmatpush2.msra.mxu0 %v3711
  %v3713 = vand.u32 %v117, 4294901760
  %v3714 = vsub.f32 %v117, %v3713
  %v3715 = vand.u32 %v3714, 4294901760
  %3716 = vmatprep.subr.mxu0 %v3715
  %v3717 = vand.u32 %v116, 4294901760
  %v3718 = vsub.f32 %v116, %v3717
  %v3719 = vand.u32 %v3718, 4294901760
  %3720 = vmatpush2.msra.mxu0 %v3719
  %v3721 = vand.u32 %v113, 4294901760
  %v3722 = vsub.f32 %v113, %v3721
  %v3723 = vand.u32 %v3722, 4294901760
  %3724 = vmatprep.subr.mxu0 %v3723
  %v3725 = vand.u32 %v112, 4294901760
  %v3726 = vsub.f32 %v112, %v3725
  %v3727 = vand.u32 %v3726, 4294901760
  %3728 = vmatpush2.msra.mxu0 %v3727
  %v3729 = vand.u32 %v109, 4294901760
  %v3730 = vsub.f32 %v109, %v3729
  %v3731 = vand.u32 %v3730, 4294901760
  %3732 = vmatprep.subr.mxu0 %v3731
  %v3733 = vand.u32 %v108, 4294901760
  %v3734 = vsub.f32 %v108, %v3733
  %v3735 = vand.u32 %v3734, 4294901760
  %3736 = vmatpush2.msra.mxu0 %v3735
  %v3737 = vand.u32 %v105, 4294901760
  %v3738 = vsub.f32 %v105, %v3737
  %v3739 = vand.u32 %v3738, 4294901760
  %3740 = vmatprep.subr.mxu0 %v3739
  %v3741 = vand.u32 %v104, 4294901760
  %v3742 = vsub.f32 %v104, %v3741
  %v3743 = vand.u32 %v3742, 4294901760
  %3744 = vmatpush2.msra.mxu0 %v3743
  %v3745 = vand.u32 %v27, 4294901760
  %3746 = vmatprep.mubr.f32.mxu0 %v3745
  %v3747 = vand.u32 %v26, 4294901760
  %3748 = vmatmul.mubr.f32.gmra.mxu0 %v3747
  %v3749 = vpop.f32.mrf.mxu0
  %v3750 = vadd.f32 %v3449, %v3749
  %v3751 = vpop.f32.mrf.mxu0
  %v3752 = vadd.f32 %v3451, %v3751
  %v3753 = vand.u32 %v30, 4294901760
  %3754 = vmatprep.mubr.f32.mxu0 %v3753
  %v3755 = vand.u32 %v29, 4294901760
  %3756 = vmatmul.mubr.f32.gmra.mxu0 %v3755
  %v3757 = vpop.f32.mrf.mxu0
  %v3758 = vadd.f32 %v3461, %v3757
  %v3759 = vpop.f32.mrf.mxu0
  %v3760 = vadd.f32 %v3463, %v3759
  %v3761 = vand.u32 %v33, 4294901760
  %3762 = vmatprep.mubr.f32.mxu0 %v3761
  %v3763 = vand.u32 %v32, 4294901760
  %3764 = vmatmul.mubr.f32.gmra.mxu0 %v3763
  %v3765 = vpop.f32.mrf.mxu0
  %v3766 = vadd.f32 %v3473, %v3765
  %v3767 = vpop.f32.mrf.mxu0
  %v3768 = vadd.f32 %v3475, %v3767
  %v3769 = vand.u32 %v36, 4294901760
  %3770 = vmatprep.mubr.f32.mxu0 %v3769
  %v3771 = vand.u32 %v35, 4294901760
  %3772 = vmatmul.mubr.f32.gmra.mxu0 %v3771
  %v3773 = vpop.f32.mrf.mxu0
  %v3774 = vadd.f32 %v3485, %v3773
  %v3775 = vpop.f32.mrf.mxu0
  %v3776 = vadd.f32 %v3487, %v3775
  %3777 = vdwg.mxu0
  %v3778 = vand.u32 %v101, 4294901760
  %3779 = vmatprep.subr.mxu0 %v3778
  %v3780 = vand.u32 %v100, 4294901760
  %3781 = vmatpush1.msra.mxu0 %v3780
  %v3782 = vand.u32 %v97, 4294901760
  %3783 = vmatprep.subr.mxu0 %v3782
  %v3784 = vand.u32 %v96, 4294901760
  %3785 = vmatpush1.msra.mxu0 %v3784
  %v3786 = vand.u32 %v93, 4294901760
  %3787 = vmatprep.subr.mxu0 %v3786
  %v3788 = vand.u32 %v92, 4294901760
  %3789 = vmatpush1.msra.mxu0 %v3788
  %v3790 = vand.u32 %v89, 4294901760
  %3791 = vmatprep.subr.mxu0 %v3790
  %v3792 = vand.u32 %v88, 4294901760
  %3793 = vmatpush1.msra.mxu0 %v3792
  %v3794 = vand.u32 %v85, 4294901760
  %3795 = vmatprep.subr.mxu0 %v3794
  %v3796 = vand.u32 %v84, 4294901760
  %3797 = vmatpush1.msra.mxu0 %v3796
  %v3798 = vand.u32 %v81, 4294901760
  %3799 = vmatprep.subr.mxu0 %v3798
  %v3800 = vand.u32 %v80, 4294901760
  %3801 = vmatpush1.msra.mxu0 %v3800
  %v3802 = vand.u32 %v77, 4294901760
  %3803 = vmatprep.subr.mxu0 %v3802
  %v3804 = vand.u32 %v76, 4294901760
  %3805 = vmatpush1.msra.mxu0 %v3804
  %v3806 = vand.u32 %v73, 4294901760
  %3807 = vmatprep.subr.mxu0 %v3806
  %v3808 = vand.u32 %v72, 4294901760
  %3809 = vmatpush1.msra.mxu0 %v3808
  %v3810 = vand.u32 %v69, 4294901760
  %3811 = vmatprep.subr.mxu0 %v3810
  %v3812 = vand.u32 %v68, 4294901760
  %3813 = vmatpush1.msra.mxu0 %v3812
  %v3814 = vand.u32 %v65, 4294901760
  %3815 = vmatprep.subr.mxu0 %v3814
  %v3816 = vand.u32 %v64, 4294901760
  %3817 = vmatpush1.msra.mxu0 %v3816
  %v3818 = vand.u32 %v61, 4294901760
  %3819 = vmatprep.subr.mxu0 %v3818
  %v3820 = vand.u32 %v60, 4294901760
  %3821 = vmatpush1.msra.mxu0 %v3820
  %v3822 = vand.u32 %v57, 4294901760
  %3823 = vmatprep.subr.mxu0 %v3822
  %v3824 = vand.u32 %v56, 4294901760
  %3825 = vmatpush1.msra.mxu0 %v3824
  %v3826 = vand.u32 %v53, 4294901760
  %3827 = vmatprep.subr.mxu0 %v3826
  %v3828 = vand.u32 %v52, 4294901760
  %3829 = vmatpush1.msra.mxu0 %v3828
  %v3830 = vand.u32 %v49, 4294901760
  %3831 = vmatprep.subr.mxu0 %v3830
  %v3832 = vand.u32 %v48, 4294901760
  %3833 = vmatpush1.msra.mxu0 %v3832
  %v3834 = vand.u32 %v45, 4294901760
  %3835 = vmatprep.subr.mxu0 %v3834
  %v3836 = vand.u32 %v44, 4294901760
  %3837 = vmatpush1.msra.mxu0 %v3836
  %v3838 = vand.u32 %v41, 4294901760
  %3839 = vmatprep.subr.mxu0 %v3838
  %v3840 = vand.u32 %v40, 4294901760
  %3841 = vmatpush1.msra.mxu0 %v3840
  %v3842 = vand.u32 %v165, 4294901760
  %3843 = vmatprep.subr.mxu0 %v3842
  %v3844 = vand.u32 %v164, 4294901760
  %3845 = vmatpush2.msra.mxu0 %v3844
  %v3846 = vand.u32 %v161, 4294901760
  %3847 = vmatprep.subr.mxu0 %v3846
  %v3848 = vand.u32 %v160, 4294901760
  %3849 = vmatpush2.msra.mxu0 %v3848
  %v3850 = vand.u32 %v157, 4294901760
  %3851 = vmatprep.subr.mxu0 %v3850
  %v3852 = vand.u32 %v156, 4294901760
  %3853 = vmatpush2.msra.mxu0 %v3852
  %v3854 = vand.u32 %v153, 4294901760
  %3855 = vmatprep.subr.mxu0 %v3854
  %v3856 = vand.u32 %v152, 4294901760
  %3857 = vmatpush2.msra.mxu0 %v3856
  %v3858 = vand.u32 %v149, 4294901760
  %3859 = vmatprep.subr.mxu0 %v3858
  %v3860 = vand.u32 %v148, 4294901760
  %3861 = vmatpush2.msra.mxu0 %v3860
  %v3862 = vand.u32 %v145, 4294901760
  %3863 = vmatprep.subr.mxu0 %v3862
  %v3864 = vand.u32 %v144, 4294901760
  %3865 = vmatpush2.msra.mxu0 %v3864
  %v3866 = vand.u32 %v141, 4294901760
  %3867 = vmatprep.subr.mxu0 %v3866
  %v3868 = vand.u32 %v140, 4294901760
  %3869 = vmatpush2.msra.mxu0 %v3868
  %v3870 = vand.u32 %v137, 4294901760
  %3871 = vmatprep.subr.mxu0 %v3870
  %v3872 = vand.u32 %v136, 4294901760
  %3873 = vmatpush2.msra.mxu0 %v3872
  %v3874 = vand.u32 %v133, 4294901760
  %3875 = vmatprep.subr.mxu0 %v3874
  %v3876 = vand.u32 %v132, 4294901760
  %3877 = vmatpush2.msra.mxu0 %v3876
  %v3878 = vand.u32 %v129, 4294901760
  %3879 = vmatprep.subr.mxu0 %v3878
  %v3880 = vand.u32 %v128, 4294901760
  %3881 = vmatpush2.msra.mxu0 %v3880
  %v3882 = vand.u32 %v125, 4294901760
  %3883 = vmatprep.subr.mxu0 %v3882
  %v3884 = vand.u32 %v124, 4294901760
  %3885 = vmatpush2.msra.mxu0 %v3884
  %v3886 = vand.u32 %v121, 4294901760
  %3887 = vmatprep.subr.mxu0 %v3886
  %v3888 = vand.u32 %v120, 4294901760
  %3889 = vmatpush2.msra.mxu0 %v3888
  %v3890 = vand.u32 %v117, 4294901760
  %3891 = vmatprep.subr.mxu0 %v3890
  %v3892 = vand.u32 %v116, 4294901760
  %3893 = vmatpush2.msra.mxu0 %v3892
  %v3894 = vand.u32 %v113, 4294901760
  %3895 = vmatprep.subr.mxu0 %v3894
  %v3896 = vand.u32 %v112, 4294901760
  %3897 = vmatpush2.msra.mxu0 %v3896
  %v3898 = vand.u32 %v109, 4294901760
  %3899 = vmatprep.subr.mxu0 %v3898
  %v3900 = vand.u32 %v108, 4294901760
  %3901 = vmatpush2.msra.mxu0 %v3900
  %v3902 = vand.u32 %v105, 4294901760
  %3903 = vmatprep.subr.mxu0 %v3902
  %v3904 = vand.u32 %v104, 4294901760
  %3905 = vmatpush2.msra.mxu0 %v3904
  %v3906 = vand.u32 %v27, 4294901760
  %3907 = vmatprep.mubr.f32.mxu0 %v3906
  %v3908 = vand.u32 %v26, 4294901760
  %3909 = vmatmul.mubr.f32.gmra.mxu0 %v3908
  %v3910 = vpop.f32.mrf.mxu0
  %v3911 = vadd.f32 %v3750, %v3910
  %v3912 = vpop.f32.mrf.mxu0
  %v3913 = vadd.f32 %v3752, %v3912
  %v3914 = vand.u32 %v30, 4294901760
  %3915 = vmatprep.mubr.f32.mxu0 %v3914
  %v3916 = vand.u32 %v29, 4294901760
  %3917 = vmatmul.mubr.f32.gmra.mxu0 %v3916
  %v3918 = vpop.f32.mrf.mxu0
  %v3919 = vadd.f32 %v3758, %v3918
  %v3920 = vpop.f32.mrf.mxu0
  %v3921 = vadd.f32 %v3760, %v3920
  %v3922 = vand.u32 %v33, 4294901760
  %3923 = vmatprep.mubr.f32.mxu0 %v3922
  %v3924 = vand.u32 %v32, 4294901760
  %3925 = vmatmul.mubr.f32.gmra.mxu0 %v3924
  %v3926 = vpop.f32.mrf.mxu0
  %v3927 = vadd.f32 %v3766, %v3926
  %v3928 = vpop.f32.mrf.mxu0
  %v3929 = vadd.f32 %v3768, %v3928
  %v3930 = vand.u32 %v36, 4294901760
  %3931 = vmatprep.mubr.f32.mxu0 %v3930
  %v3932 = vand.u32 %v35, 4294901760
  %3933 = vmatmul.mubr.f32.gmra.mxu0 %v3932
  %v3934 = vpop.f32.mrf.mxu0
  %v3935 = vadd.f32 %v3774, %v3934
  %v3936 = vpop.f32.mrf.mxu0
  %v3937 = vadd.f32 %v3776, %v3936
  %3938 = vdwg.mxu0
  %3939 = vmatprep.subr.mxu0 0.0
  %3940 = vmatpush1.msra.mxu0 0.0
  %3941 = vmatprep.subr.mxu0 0.0
  %3942 = vmatpush1.msra.mxu0 0.0
  %3943 = vmatprep.subr.mxu0 0.0
  %3944 = vmatpush1.msra.mxu0 0.0
  %3945 = vmatprep.subr.mxu0 0.0
  %3946 = vmatpush1.msra.mxu0 0.0
  %3947 = vmatprep.subr.mxu0 0.0
  %3948 = vmatpush1.msra.mxu0 0.0
  %3949 = vmatprep.subr.mxu0 0.0
  %3950 = vmatpush1.msra.mxu0 0.0
  %3951 = vmatprep.subr.mxu0 0.0
  %3952 = vmatpush1.msra.mxu0 0.0
  %3953 = vmatprep.subr.mxu0 0.0
  %3954 = vmatpush1.msra.mxu0 0.0
  %3955 = vmatprep.subr.mxu0 0.0
  %3956 = vmatpush1.msra.mxu0 0.0
  %v3957 = vand.u32 %v193, 4294901760
  %3958 = vmatprep.subr.mxu0 %v3957
  %v3959 = vand.u32 %v192, 4294901760
  %3960 = vmatpush1.msra.mxu0 %v3959
  %v3961 = vand.u32 %v189, 4294901760
  %3962 = vmatprep.subr.mxu0 %v3961
  %v3963 = vand.u32 %v188, 4294901760
  %3964 = vmatpush1.msra.mxu0 %v3963
  %v3965 = vand.u32 %v185, 4294901760
  %3966 = vmatprep.subr.mxu0 %v3965
  %v3967 = vand.u32 %v184, 4294901760
  %3968 = vmatpush1.msra.mxu0 %v3967
  %v3969 = vand.u32 %v181, 4294901760
  %3970 = vmatprep.subr.mxu0 %v3969
  %v3971 = vand.u32 %v180, 4294901760
  %3972 = vmatpush1.msra.mxu0 %v3971
  %v3973 = vand.u32 %v177, 4294901760
  %3974 = vmatprep.subr.mxu0 %v3973
  %v3975 = vand.u32 %v176, 4294901760
  %3976 = vmatpush1.msra.mxu0 %v3975
  %v3977 = vand.u32 %v173, 4294901760
  %3978 = vmatprep.subr.mxu0 %v3977
  %v3979 = vand.u32 %v172, 4294901760
  %3980 = vmatpush1.msra.mxu0 %v3979
  %v3981 = vand.u32 %v169, 4294901760
  %3982 = vmatprep.subr.mxu0 %v3981
  %v3983 = vand.u32 %v168, 4294901760
  %3984 = vmatpush1.msra.mxu0 %v3983
  %3985 = vmatprep.subr.mxu0 0.0
  %3986 = vmatpush2.msra.mxu0 0.0
  %3987 = vmatprep.subr.mxu0 0.0
  %3988 = vmatpush2.msra.mxu0 0.0
  %3989 = vmatprep.subr.mxu0 0.0
  %3990 = vmatpush2.msra.mxu0 0.0
  %3991 = vmatprep.subr.mxu0 0.0
  %3992 = vmatpush2.msra.mxu0 0.0
  %3993 = vmatprep.subr.mxu0 0.0
  %3994 = vmatpush2.msra.mxu0 0.0
  %3995 = vmatprep.subr.mxu0 0.0
  %3996 = vmatpush2.msra.mxu0 0.0
  %3997 = vmatprep.subr.mxu0 0.0
  %3998 = vmatpush2.msra.mxu0 0.0
  %3999 = vmatprep.subr.mxu0 0.0
  %4000 = vmatpush2.msra.mxu0 0.0
  %4001 = vmatprep.subr.mxu0 0.0
  %4002 = vmatpush2.msra.mxu0 0.0
  %4003 = vmatprep.subr.mxu0 0.0
  %4004 = vmatpush2.msra.mxu0 0.0
  %4005 = vmatprep.subr.mxu0 0.0
  %4006 = vmatpush2.msra.mxu0 0.0
  %4007 = vmatprep.subr.mxu0 0.0
  %4008 = vmatpush2.msra.mxu0 0.0
  %4009 = vmatprep.subr.mxu0 0.0
  %4010 = vmatpush2.msra.mxu0 0.0
  %4011 = vmatprep.subr.mxu0 0.0
  %4012 = vmatpush2.msra.mxu0 0.0
  %4013 = vmatprep.subr.mxu0 0.0
  %4014 = vmatpush2.msra.mxu0 0.0
  %4015 = vmatprep.subr.mxu0 0.0
  %4016 = vmatpush2.msra.mxu0 0.0
  %4017 = vmatprep.mubr.f32.mxu0 0.0
  %v4018 = vand.u32 %v220, 4294901760
  %v4019 = vsub.f32 %v220, %v4018
  %v4020 = vand.u32 %v4019, 4294901760
  %v4021 = vsub.f32 %v4019, %v4020
  %v4022 = vand.u32 %v4021, 4294901760
  %4023 = vmatmul.mubr.f32.gmra.mxu0 %v4022
  %v4024 = vpop.f32.mrf.mxu0
  %v4025 = vadd.f32 %v3911, %v4024
  %v4026 = vpop.f32.mrf.mxu0
  %v4027 = vadd.f32 %v3913, %v4026
  %4028 = vmatprep.mubr.f32.mxu0 0.0
  %v4029 = vand.u32 %v223, 4294901760
  %v4030 = vsub.f32 %v223, %v4029
  %v4031 = vand.u32 %v4030, 4294901760
  %v4032 = vsub.f32 %v4030, %v4031
  %v4033 = vand.u32 %v4032, 4294901760
  %4034 = vmatmul.mubr.f32.gmra.mxu0 %v4033
  %v4035 = vpop.f32.mrf.mxu0
  %v4036 = vadd.f32 %v3919, %v4035
  %v4037 = vpop.f32.mrf.mxu0
  %v4038 = vadd.f32 %v3921, %v4037
  %4039 = vmatprep.mubr.f32.mxu0 0.0
  %v4040 = vand.u32 %v226, 4294901760
  %v4041 = vsub.f32 %v226, %v4040
  %v4042 = vand.u32 %v4041, 4294901760
  %v4043 = vsub.f32 %v4041, %v4042
  %v4044 = vand.u32 %v4043, 4294901760
  %4045 = vmatmul.mubr.f32.gmra.mxu0 %v4044
  %v4046 = vpop.f32.mrf.mxu0
  %v4047 = vadd.f32 %v3927, %v4046
  %v4048 = vpop.f32.mrf.mxu0
  %v4049 = vadd.f32 %v3929, %v4048
  %4050 = vmatprep.mubr.f32.mxu0 0.0
  %v4051 = vand.u32 %v229, 4294901760
  %v4052 = vsub.f32 %v229, %v4051
  %v4053 = vand.u32 %v4052, 4294901760
  %v4054 = vsub.f32 %v4052, %v4053
  %v4055 = vand.u32 %v4054, 4294901760
  %4056 = vmatmul.mubr.f32.gmra.mxu0 %v4055
  %v4057 = vpop.f32.mrf.mxu0
  %v4058 = vadd.f32 %v3935, %v4057
  %v4059 = vpop.f32.mrf.mxu0
  %v4060 = vadd.f32 %v3937, %v4059
  %4061 = vdwg.mxu0
  %4062 = vmatprep.subr.mxu0 0.0
  %4063 = vmatpush1.msra.mxu0 0.0
  %4064 = vmatprep.subr.mxu0 0.0
  %4065 = vmatpush1.msra.mxu0 0.0
  %4066 = vmatprep.subr.mxu0 0.0
  %4067 = vmatpush1.msra.mxu0 0.0
  %4068 = vmatprep.subr.mxu0 0.0
  %4069 = vmatpush1.msra.mxu0 0.0
  %4070 = vmatprep.subr.mxu0 0.0
  %4071 = vmatpush1.msra.mxu0 0.0
  %4072 = vmatprep.subr.mxu0 0.0
  %4073 = vmatpush1.msra.mxu0 0.0
  %4074 = vmatprep.subr.mxu0 0.0
  %4075 = vmatpush1.msra.mxu0 0.0
  %4076 = vmatprep.subr.mxu0 0.0
  %4077 = vmatpush1.msra.mxu0 0.0
  %4078 = vmatprep.subr.mxu0 0.0
  %4079 = vmatpush1.msra.mxu0 0.0
  %v4080 = vand.u32 %v193, 4294901760
  %v4081 = vsub.f32 %v193, %v4080
  %v4082 = vand.u32 %v4081, 4294901760
  %v4083 = vsub.f32 %v4081, %v4082
  %v4084 = vand.u32 %v4083, 4294901760
  %4085 = vmatprep.subr.mxu0 %v4084
  %v4086 = vand.u32 %v192, 4294901760
  %v4087 = vsub.f32 %v192, %v4086
  %v4088 = vand.u32 %v4087, 4294901760
  %v4089 = vsub.f32 %v4087, %v4088
  %v4090 = vand.u32 %v4089, 4294901760
  %4091 = vmatpush1.msra.mxu0 %v4090
  %v4092 = vand.u32 %v189, 4294901760
  %v4093 = vsub.f32 %v189, %v4092
  %v4094 = vand.u32 %v4093, 4294901760
  %v4095 = vsub.f32 %v4093, %v4094
  %v4096 = vand.u32 %v4095, 4294901760
  %4097 = vmatprep.subr.mxu0 %v4096
  %v4098 = vand.u32 %v188, 4294901760
  %v4099 = vsub.f32 %v188, %v4098
  %v4100 = vand.u32 %v4099, 4294901760
  %v4101 = vsub.f32 %v4099, %v4100
  %v4102 = vand.u32 %v4101, 4294901760
  %4103 = vmatpush1.msra.mxu0 %v4102
  %v4104 = vand.u32 %v185, 4294901760
  %v4105 = vsub.f32 %v185, %v4104
  %v4106 = vand.u32 %v4105, 4294901760
  %v4107 = vsub.f32 %v4105, %v4106
  %v4108 = vand.u32 %v4107, 4294901760
  %4109 = vmatprep.subr.mxu0 %v4108
  %v4110 = vand.u32 %v184, 4294901760
  %v4111 = vsub.f32 %v184, %v4110
  %v4112 = vand.u32 %v4111, 4294901760
  %v4113 = vsub.f32 %v4111, %v4112
  %v4114 = vand.u32 %v4113, 4294901760
  %4115 = vmatpush1.msra.mxu0 %v4114
  %v4116 = vand.u32 %v181, 4294901760
  %v4117 = vsub.f32 %v181, %v4116
  %v4118 = vand.u32 %v4117, 4294901760
  %v4119 = vsub.f32 %v4117, %v4118
  %v4120 = vand.u32 %v4119, 4294901760
  %4121 = vmatprep.subr.mxu0 %v4120
  %v4122 = vand.u32 %v180, 4294901760
  %v4123 = vsub.f32 %v180, %v4122
  %v4124 = vand.u32 %v4123, 4294901760
  %v4125 = vsub.f32 %v4123, %v4124
  %v4126 = vand.u32 %v4125, 4294901760
  %4127 = vmatpush1.msra.mxu0 %v4126
  %v4128 = vand.u32 %v177, 4294901760
  %v4129 = vsub.f32 %v177, %v4128
  %v4130 = vand.u32 %v4129, 4294901760
  %v4131 = vsub.f32 %v4129, %v4130
  %v4132 = vand.u32 %v4131, 4294901760
  %4133 = vmatprep.subr.mxu0 %v4132
  %v4134 = vand.u32 %v176, 4294901760
  %v4135 = vsub.f32 %v176, %v4134
  %v4136 = vand.u32 %v4135, 4294901760
  %v4137 = vsub.f32 %v4135, %v4136
  %v4138 = vand.u32 %v4137, 4294901760
  %4139 = vmatpush1.msra.mxu0 %v4138
  %v4140 = vand.u32 %v173, 4294901760
  %v4141 = vsub.f32 %v173, %v4140
  %v4142 = vand.u32 %v4141, 4294901760
  %v4143 = vsub.f32 %v4141, %v4142
  %v4144 = vand.u32 %v4143, 4294901760
  %4145 = vmatprep.subr.mxu0 %v4144
  %v4146 = vand.u32 %v172, 4294901760
  %v4147 = vsub.f32 %v172, %v4146
  %v4148 = vand.u32 %v4147, 4294901760
  %v4149 = vsub.f32 %v4147, %v4148
  %v4150 = vand.u32 %v4149, 4294901760
  %4151 = vmatpush1.msra.mxu0 %v4150
  %v4152 = vand.u32 %v169, 4294901760
  %v4153 = vsub.f32 %v169, %v4152
  %v4154 = vand.u32 %v4153, 4294901760
  %v4155 = vsub.f32 %v4153, %v4154
  %v4156 = vand.u32 %v4155, 4294901760
  %4157 = vmatprep.subr.mxu0 %v4156
  %v4158 = vand.u32 %v168, 4294901760
  %v4159 = vsub.f32 %v168, %v4158
  %v4160 = vand.u32 %v4159, 4294901760
  %v4161 = vsub.f32 %v4159, %v4160
  %v4162 = vand.u32 %v4161, 4294901760
  %4163 = vmatpush1.msra.mxu0 %v4162
  %4164 = vmatprep.subr.mxu0 0.0
  %4165 = vmatpush2.msra.mxu0 0.0
  %4166 = vmatprep.subr.mxu0 0.0
  %4167 = vmatpush2.msra.mxu0 0.0
  %4168 = vmatprep.subr.mxu0 0.0
  %4169 = vmatpush2.msra.mxu0 0.0
  %4170 = vmatprep.subr.mxu0 0.0
  %4171 = vmatpush2.msra.mxu0 0.0
  %4172 = vmatprep.subr.mxu0 0.0
  %4173 = vmatpush2.msra.mxu0 0.0
  %4174 = vmatprep.subr.mxu0 0.0
  %4175 = vmatpush2.msra.mxu0 0.0
  %4176 = vmatprep.subr.mxu0 0.0
  %4177 = vmatpush2.msra.mxu0 0.0
  %4178 = vmatprep.subr.mxu0 0.0
  %4179 = vmatpush2.msra.mxu0 0.0
  %4180 = vmatprep.subr.mxu0 0.0
  %4181 = vmatpush2.msra.mxu0 0.0
  %4182 = vmatprep.subr.mxu0 0.0
  %4183 = vmatpush2.msra.mxu0 0.0
  %4184 = vmatprep.subr.mxu0 0.0
  %4185 = vmatpush2.msra.mxu0 0.0
  %4186 = vmatprep.subr.mxu0 0.0
  %4187 = vmatpush2.msra.mxu0 0.0
  %4188 = vmatprep.subr.mxu0 0.0
  %4189 = vmatpush2.msra.mxu0 0.0
  %4190 = vmatprep.subr.mxu0 0.0
  %4191 = vmatpush2.msra.mxu0 0.0
  %4192 = vmatprep.subr.mxu0 0.0
  %4193 = vmatpush2.msra.mxu0 0.0
  %4194 = vmatprep.subr.mxu0 0.0
  %4195 = vmatpush2.msra.mxu0 0.0
  %4196 = vmatprep.mubr.f32.mxu0 0.0
  %v4197 = vand.u32 %v220, 4294901760
  %4198 = vmatmul.mubr.f32.gmra.mxu0 %v4197
  %v4199 = vpop.f32.mrf.mxu0
  %v4200 = vadd.f32 %v4025, %v4199
  %v4201 = vpop.f32.mrf.mxu0
  %v4202 = vadd.f32 %v4027, %v4201
  %4203 = vmatprep.mubr.f32.mxu0 0.0
  %v4204 = vand.u32 %v223, 4294901760
  %4205 = vmatmul.mubr.f32.gmra.mxu0 %v4204
  %v4206 = vpop.f32.mrf.mxu0
  %v4207 = vadd.f32 %v4036, %v4206
  %v4208 = vpop.f32.mrf.mxu0
  %v4209 = vadd.f32 %v4038, %v4208
  %4210 = vmatprep.mubr.f32.mxu0 0.0
  %v4211 = vand.u32 %v226, 4294901760
  %4212 = vmatmul.mubr.f32.gmra.mxu0 %v4211
  %v4213 = vpop.f32.mrf.mxu0
  %v4214 = vadd.f32 %v4047, %v4213
  %v4215 = vpop.f32.mrf.mxu0
  %v4216 = vadd.f32 %v4049, %v4215
  %4217 = vmatprep.mubr.f32.mxu0 0.0
  %v4218 = vand.u32 %v229, 4294901760
  %4219 = vmatmul.mubr.f32.gmra.mxu0 %v4218
  %v4220 = vpop.f32.mrf.mxu0
  %v4221 = vadd.f32 %v4058, %v4220
  %v4222 = vpop.f32.mrf.mxu0
  %v4223 = vadd.f32 %v4060, %v4222
  %4224 = vdwg.mxu0
  %4225 = vmatprep.subr.mxu0 0.0
  %4226 = vmatpush1.msra.mxu0 0.0
  %4227 = vmatprep.subr.mxu0 0.0
  %4228 = vmatpush1.msra.mxu0 0.0
  %4229 = vmatprep.subr.mxu0 0.0
  %4230 = vmatpush1.msra.mxu0 0.0
  %4231 = vmatprep.subr.mxu0 0.0
  %4232 = vmatpush1.msra.mxu0 0.0
  %4233 = vmatprep.subr.mxu0 0.0
  %4234 = vmatpush1.msra.mxu0 0.0
  %4235 = vmatprep.subr.mxu0 0.0
  %4236 = vmatpush1.msra.mxu0 0.0
  %4237 = vmatprep.subr.mxu0 0.0
  %4238 = vmatpush1.msra.mxu0 0.0
  %4239 = vmatprep.subr.mxu0 0.0
  %4240 = vmatpush1.msra.mxu0 0.0
  %4241 = vmatprep.subr.mxu0 0.0
  %4242 = vmatpush1.msra.mxu0 0.0
  %v4243 = vand.u32 %v193, 4294901760
  %v4244 = vsub.f32 %v193, %v4243
  %4245 = vmatprep.subr.mxu0 %v4244
  %v4246 = vand.u32 %v192, 4294901760
  %v4247 = vsub.f32 %v192, %v4246
  %4248 = vmatpush1.msra.mxu0 %v4247
  %v4249 = vand.u32 %v189, 4294901760
  %v4250 = vsub.f32 %v189, %v4249
  %4251 = vmatprep.subr.mxu0 %v4250
  %v4252 = vand.u32 %v188, 4294901760
  %v4253 = vsub.f32 %v188, %v4252
  %4254 = vmatpush1.msra.mxu0 %v4253
  %v4255 = vand.u32 %v185, 4294901760
  %v4256 = vsub.f32 %v185, %v4255
  %4257 = vmatprep.subr.mxu0 %v4256
  %v4258 = vand.u32 %v184, 4294901760
  %v4259 = vsub.f32 %v184, %v4258
  %4260 = vmatpush1.msra.mxu0 %v4259
  %v4261 = vand.u32 %v181, 4294901760
  %v4262 = vsub.f32 %v181, %v4261
  %4263 = vmatprep.subr.mxu0 %v4262
  %v4264 = vand.u32 %v180, 4294901760
  %v4265 = vsub.f32 %v180, %v4264
  %4266 = vmatpush1.msra.mxu0 %v4265
  %v4267 = vand.u32 %v177, 4294901760
  %v4268 = vsub.f32 %v177, %v4267
  %4269 = vmatprep.subr.mxu0 %v4268
  %v4270 = vand.u32 %v176, 4294901760
  %v4271 = vsub.f32 %v176, %v4270
  %4272 = vmatpush1.msra.mxu0 %v4271
  %v4273 = vand.u32 %v173, 4294901760
  %v4274 = vsub.f32 %v173, %v4273
  %4275 = vmatprep.subr.mxu0 %v4274
  %v4276 = vand.u32 %v172, 4294901760
  %v4277 = vsub.f32 %v172, %v4276
  %4278 = vmatpush1.msra.mxu0 %v4277
  %v4279 = vand.u32 %v169, 4294901760
  %v4280 = vsub.f32 %v169, %v4279
  %4281 = vmatprep.subr.mxu0 %v4280
  %v4282 = vand.u32 %v168, 4294901760
  %v4283 = vsub.f32 %v168, %v4282
  %4284 = vmatpush1.msra.mxu0 %v4283
  %4285 = vmatprep.subr.mxu0 0.0
  %4286 = vmatpush2.msra.mxu0 0.0
  %4287 = vmatprep.subr.mxu0 0.0
  %4288 = vmatpush2.msra.mxu0 0.0
  %4289 = vmatprep.subr.mxu0 0.0
  %4290 = vmatpush2.msra.mxu0 0.0
  %4291 = vmatprep.subr.mxu0 0.0
  %4292 = vmatpush2.msra.mxu0 0.0
  %4293 = vmatprep.subr.mxu0 0.0
  %4294 = vmatpush2.msra.mxu0 0.0
  %4295 = vmatprep.subr.mxu0 0.0
  %4296 = vmatpush2.msra.mxu0 0.0
  %4297 = vmatprep.subr.mxu0 0.0
  %4298 = vmatpush2.msra.mxu0 0.0
  %4299 = vmatprep.subr.mxu0 0.0
  %4300 = vmatpush2.msra.mxu0 0.0
  %4301 = vmatprep.subr.mxu0 0.0
  %4302 = vmatpush2.msra.mxu0 0.0
  %4303 = vmatprep.subr.mxu0 0.0
  %4304 = vmatpush2.msra.mxu0 0.0
  %4305 = vmatprep.subr.mxu0 0.0
  %4306 = vmatpush2.msra.mxu0 0.0
  %4307 = vmatprep.subr.mxu0 0.0
  %4308 = vmatpush2.msra.mxu0 0.0
  %4309 = vmatprep.subr.mxu0 0.0
  %4310 = vmatpush2.msra.mxu0 0.0
  %4311 = vmatprep.subr.mxu0 0.0
  %4312 = vmatpush2.msra.mxu0 0.0
  %4313 = vmatprep.subr.mxu0 0.0
  %4314 = vmatpush2.msra.mxu0 0.0
  %4315 = vmatprep.subr.mxu0 0.0
  %4316 = vmatpush2.msra.mxu0 0.0
  %4317 = vmatprep.mubr.f32.mxu0 0.0
  %v4318 = vand.u32 %v220, 4294901760
  %v4319 = vsub.f32 %v220, %v4318
  %4320 = vmatmul.mubr.f32.gmra.mxu0 %v4319
  %v4321 = vpop.f32.mrf.mxu0
  %v4322 = vadd.f32 %v4200, %v4321
  %v4323 = vpop.f32.mrf.mxu0
  %v4324 = vadd.f32 %v4202, %v4323
  %4325 = vmatprep.mubr.f32.mxu0 0.0
  %v4326 = vand.u32 %v223, 4294901760
  %v4327 = vsub.f32 %v223, %v4326
  %4328 = vmatmul.mubr.f32.gmra.mxu0 %v4327
  %v4329 = vpop.f32.mrf.mxu0
  %v4330 = vadd.f32 %v4207, %v4329
  %v4331 = vpop.f32.mrf.mxu0
  %v4332 = vadd.f32 %v4209, %v4331
  %4333 = vmatprep.mubr.f32.mxu0 0.0
  %v4334 = vand.u32 %v226, 4294901760
  %v4335 = vsub.f32 %v226, %v4334
  %4336 = vmatmul.mubr.f32.gmra.mxu0 %v4335
  %v4337 = vpop.f32.mrf.mxu0
  %v4338 = vadd.f32 %v4214, %v4337
  %v4339 = vpop.f32.mrf.mxu0
  %v4340 = vadd.f32 %v4216, %v4339
  %4341 = vmatprep.mubr.f32.mxu0 0.0
  %v4342 = vand.u32 %v229, 4294901760
  %v4343 = vsub.f32 %v229, %v4342
  %4344 = vmatmul.mubr.f32.gmra.mxu0 %v4343
  %v4345 = vpop.f32.mrf.mxu0
  %v4346 = vadd.f32 %v4221, %v4345
  %v4347 = vpop.f32.mrf.mxu0
  %v4348 = vadd.f32 %v4223, %v4347
  %4349 = vdwg.mxu0
  %4350 = vmatprep.subr.mxu0 0.0
  %4351 = vmatpush1.msra.mxu0 0.0
  %4352 = vmatprep.subr.mxu0 0.0
  %4353 = vmatpush1.msra.mxu0 0.0
  %4354 = vmatprep.subr.mxu0 0.0
  %4355 = vmatpush1.msra.mxu0 0.0
  %4356 = vmatprep.subr.mxu0 0.0
  %4357 = vmatpush1.msra.mxu0 0.0
  %4358 = vmatprep.subr.mxu0 0.0
  %4359 = vmatpush1.msra.mxu0 0.0
  %4360 = vmatprep.subr.mxu0 0.0
  %4361 = vmatpush1.msra.mxu0 0.0
  %4362 = vmatprep.subr.mxu0 0.0
  %4363 = vmatpush1.msra.mxu0 0.0
  %4364 = vmatprep.subr.mxu0 0.0
  %4365 = vmatpush1.msra.mxu0 0.0
  %4366 = vmatprep.subr.mxu0 0.0
  %4367 = vmatpush1.msra.mxu0 0.0
  %v4368 = vand.u32 %v193, 4294901760
  %4369 = vmatprep.subr.mxu0 %v4368
  %v4370 = vand.u32 %v192, 4294901760
  %4371 = vmatpush1.msra.mxu0 %v4370
  %v4372 = vand.u32 %v189, 4294901760
  %4373 = vmatprep.subr.mxu0 %v4372
  %v4374 = vand.u32 %v188, 4294901760
  %4375 = vmatpush1.msra.mxu0 %v4374
  %v4376 = vand.u32 %v185, 4294901760
  %4377 = vmatprep.subr.mxu0 %v4376
  %v4378 = vand.u32 %v184, 4294901760
  %4379 = vmatpush1.msra.mxu0 %v4378
  %v4380 = vand.u32 %v181, 4294901760
  %4381 = vmatprep.subr.mxu0 %v4380
  %v4382 = vand.u32 %v180, 4294901760
  %4383 = vmatpush1.msra.mxu0 %v4382
  %v4384 = vand.u32 %v177, 4294901760
  %4385 = vmatprep.subr.mxu0 %v4384
  %v4386 = vand.u32 %v176, 4294901760
  %4387 = vmatpush1.msra.mxu0 %v4386
  %v4388 = vand.u32 %v173, 4294901760
  %4389 = vmatprep.subr.mxu0 %v4388
  %v4390 = vand.u32 %v172, 4294901760
  %4391 = vmatpush1.msra.mxu0 %v4390
  %v4392 = vand.u32 %v169, 4294901760
  %4393 = vmatprep.subr.mxu0 %v4392
  %v4394 = vand.u32 %v168, 4294901760
  %4395 = vmatpush1.msra.mxu0 %v4394
  %4396 = vmatprep.subr.mxu0 0.0
  %4397 = vmatpush2.msra.mxu0 0.0
  %4398 = vmatprep.subr.mxu0 0.0
  %4399 = vmatpush2.msra.mxu0 0.0
  %4400 = vmatprep.subr.mxu0 0.0
  %4401 = vmatpush2.msra.mxu0 0.0
  %4402 = vmatprep.subr.mxu0 0.0
  %4403 = vmatpush2.msra.mxu0 0.0
  %4404 = vmatprep.subr.mxu0 0.0
  %4405 = vmatpush2.msra.mxu0 0.0
  %4406 = vmatprep.subr.mxu0 0.0
  %4407 = vmatpush2.msra.mxu0 0.0
  %4408 = vmatprep.subr.mxu0 0.0
  %4409 = vmatpush2.msra.mxu0 0.0
  %4410 = vmatprep.subr.mxu0 0.0
  %4411 = vmatpush2.msra.mxu0 0.0
  %4412 = vmatprep.subr.mxu0 0.0
  %4413 = vmatpush2.msra.mxu0 0.0
  %4414 = vmatprep.subr.mxu0 0.0
  %4415 = vmatpush2.msra.mxu0 0.0
  %4416 = vmatprep.subr.mxu0 0.0
  %4417 = vmatpush2.msra.mxu0 0.0
  %4418 = vmatprep.subr.mxu0 0.0
  %4419 = vmatpush2.msra.mxu0 0.0
  %4420 = vmatprep.subr.mxu0 0.0
  %4421 = vmatpush2.msra.mxu0 0.0
  %4422 = vmatprep.subr.mxu0 0.0
  %4423 = vmatpush2.msra.mxu0 0.0
  %4424 = vmatprep.subr.mxu0 0.0
  %4425 = vmatpush2.msra.mxu0 0.0
  %4426 = vmatprep.subr.mxu0 0.0
  %4427 = vmatpush2.msra.mxu0 0.0
  %4428 = vmatprep.mubr.f32.mxu0 0.0
  %v4429 = vand.u32 %v220, 4294901760
  %v4430 = vsub.f32 %v220, %v4429
  %v4431 = vand.u32 %v4430, 4294901760
  %4432 = vmatmul.mubr.f32.gmra.mxu0 %v4431
  %v4433 = vpop.f32.mrf.mxu0
  %v4434 = vadd.f32 %v4322, %v4433
  %v4435 = vpop.f32.mrf.mxu0
  %v4436 = vadd.f32 %v4324, %v4435
  %4437 = vmatprep.mubr.f32.mxu0 0.0
  %v4438 = vand.u32 %v223, 4294901760
  %v4439 = vsub.f32 %v223, %v4438
  %v4440 = vand.u32 %v4439, 4294901760
  %4441 = vmatmul.mubr.f32.gmra.mxu0 %v4440
  %v4442 = vpop.f32.mrf.mxu0
  %v4443 = vadd.f32 %v4330, %v4442
  %v4444 = vpop.f32.mrf.mxu0
  %v4445 = vadd.f32 %v4332, %v4444
  %4446 = vmatprep.mubr.f32.mxu0 0.0
  %v4447 = vand.u32 %v226, 4294901760
  %v4448 = vsub.f32 %v226, %v4447
  %v4449 = vand.u32 %v4448, 4294901760
  %4450 = vmatmul.mubr.f32.gmra.mxu0 %v4449
  %v4451 = vpop.f32.mrf.mxu0
  %v4452 = vadd.f32 %v4338, %v4451
  %v4453 = vpop.f32.mrf.mxu0
  %v4454 = vadd.f32 %v4340, %v4453
  %4455 = vmatprep.mubr.f32.mxu0 0.0
  %v4456 = vand.u32 %v229, 4294901760
  %v4457 = vsub.f32 %v229, %v4456
  %v4458 = vand.u32 %v4457, 4294901760
  %4459 = vmatmul.mubr.f32.gmra.mxu0 %v4458
  %v4460 = vpop.f32.mrf.mxu0
  %v4461 = vadd.f32 %v4346, %v4460
  %v4462 = vpop.f32.mrf.mxu0
  %v4463 = vadd.f32 %v4348, %v4462
  %4464 = vdwg.mxu0
  %4465 = vmatprep.subr.mxu0 0.0
  %4466 = vmatpush1.msra.mxu0 0.0
  %4467 = vmatprep.subr.mxu0 0.0
  %4468 = vmatpush1.msra.mxu0 0.0
  %4469 = vmatprep.subr.mxu0 0.0
  %4470 = vmatpush1.msra.mxu0 0.0
  %4471 = vmatprep.subr.mxu0 0.0
  %4472 = vmatpush1.msra.mxu0 0.0
  %4473 = vmatprep.subr.mxu0 0.0
  %4474 = vmatpush1.msra.mxu0 0.0
  %4475 = vmatprep.subr.mxu0 0.0
  %4476 = vmatpush1.msra.mxu0 0.0
  %4477 = vmatprep.subr.mxu0 0.0
  %4478 = vmatpush1.msra.mxu0 0.0
  %4479 = vmatprep.subr.mxu0 0.0
  %4480 = vmatpush1.msra.mxu0 0.0
  %4481 = vmatprep.subr.mxu0 0.0
  %4482 = vmatpush1.msra.mxu0 0.0
  %v4483 = vand.u32 %v193, 4294901760
  %v4484 = vsub.f32 %v193, %v4483
  %v4485 = vand.u32 %v4484, 4294901760
  %4486 = vmatprep.subr.mxu0 %v4485
  %v4487 = vand.u32 %v192, 4294901760
  %v4488 = vsub.f32 %v192, %v4487
  %v4489 = vand.u32 %v4488, 4294901760
  %4490 = vmatpush1.msra.mxu0 %v4489
  %v4491 = vand.u32 %v189, 4294901760
  %v4492 = vsub.f32 %v189, %v4491
  %v4493 = vand.u32 %v4492, 4294901760
  %4494 = vmatprep.subr.mxu0 %v4493
  %v4495 = vand.u32 %v188, 4294901760
  %v4496 = vsub.f32 %v188, %v4495
  %v4497 = vand.u32 %v4496, 4294901760
  %4498 = vmatpush1.msra.mxu0 %v4497
  %v4499 = vand.u32 %v185, 4294901760
  %v4500 = vsub.f32 %v185, %v4499
  %v4501 = vand.u32 %v4500, 4294901760
  %4502 = vmatprep.subr.mxu0 %v4501
  %v4503 = vand.u32 %v184, 4294901760
  %v4504 = vsub.f32 %v184, %v4503
  %v4505 = vand.u32 %v4504, 4294901760
  %4506 = vmatpush1.msra.mxu0 %v4505
  %v4507 = vand.u32 %v181, 4294901760
  %v4508 = vsub.f32 %v181, %v4507
  %v4509 = vand.u32 %v4508, 4294901760
  %4510 = vmatprep.subr.mxu0 %v4509
  %v4511 = vand.u32 %v180, 4294901760
  %v4512 = vsub.f32 %v180, %v4511
  %v4513 = vand.u32 %v4512, 4294901760
  %4514 = vmatpush1.msra.mxu0 %v4513
  %v4515 = vand.u32 %v177, 4294901760
  %v4516 = vsub.f32 %v177, %v4515
  %v4517 = vand.u32 %v4516, 4294901760
  %4518 = vmatprep.subr.mxu0 %v4517
  %v4519 = vand.u32 %v176, 4294901760
  %v4520 = vsub.f32 %v176, %v4519
  %v4521 = vand.u32 %v4520, 4294901760
  %4522 = vmatpush1.msra.mxu0 %v4521
  %v4523 = vand.u32 %v173, 4294901760
  %v4524 = vsub.f32 %v173, %v4523
  %v4525 = vand.u32 %v4524, 4294901760
  %4526 = vmatprep.subr.mxu0 %v4525
  %v4527 = vand.u32 %v172, 4294901760
  %v4528 = vsub.f32 %v172, %v4527
  %v4529 = vand.u32 %v4528, 4294901760
  %4530 = vmatpush1.msra.mxu0 %v4529
  %v4531 = vand.u32 %v169, 4294901760
  %v4532 = vsub.f32 %v169, %v4531
  %v4533 = vand.u32 %v4532, 4294901760
  %4534 = vmatprep.subr.mxu0 %v4533
  %v4535 = vand.u32 %v168, 4294901760
  %v4536 = vsub.f32 %v168, %v4535
  %v4537 = vand.u32 %v4536, 4294901760
  %4538 = vmatpush1.msra.mxu0 %v4537
  %4539 = vmatprep.subr.mxu0 0.0
  %4540 = vmatpush2.msra.mxu0 0.0
  %4541 = vmatprep.subr.mxu0 0.0
  %4542 = vmatpush2.msra.mxu0 0.0
  %4543 = vmatprep.subr.mxu0 0.0
  %4544 = vmatpush2.msra.mxu0 0.0
  %4545 = vmatprep.subr.mxu0 0.0
  %4546 = vmatpush2.msra.mxu0 0.0
  %4547 = vmatprep.subr.mxu0 0.0
  %4548 = vmatpush2.msra.mxu0 0.0
  %4549 = vmatprep.subr.mxu0 0.0
  %4550 = vmatpush2.msra.mxu0 0.0
  %4551 = vmatprep.subr.mxu0 0.0
  %4552 = vmatpush2.msra.mxu0 0.0
  %4553 = vmatprep.subr.mxu0 0.0
  %4554 = vmatpush2.msra.mxu0 0.0
  %4555 = vmatprep.subr.mxu0 0.0
  %4556 = vmatpush2.msra.mxu0 0.0
  %4557 = vmatprep.subr.mxu0 0.0
  %4558 = vmatpush2.msra.mxu0 0.0
  %4559 = vmatprep.subr.mxu0 0.0
  %4560 = vmatpush2.msra.mxu0 0.0
  %4561 = vmatprep.subr.mxu0 0.0
  %4562 = vmatpush2.msra.mxu0 0.0
  %4563 = vmatprep.subr.mxu0 0.0
  %4564 = vmatpush2.msra.mxu0 0.0
  %4565 = vmatprep.subr.mxu0 0.0
  %4566 = vmatpush2.msra.mxu0 0.0
  %4567 = vmatprep.subr.mxu0 0.0
  %4568 = vmatpush2.msra.mxu0 0.0
  %4569 = vmatprep.subr.mxu0 0.0
  %4570 = vmatpush2.msra.mxu0 0.0
  %4571 = vmatprep.mubr.f32.mxu0 0.0
  %v4572 = vand.u32 %v220, 4294901760
  %4573 = vmatmul.mubr.f32.gmra.mxu0 %v4572
  %v4574 = vpop.f32.mrf.mxu0
  %v4575 = vadd.f32 %v4434, %v4574
  %v4576 = vpop.f32.mrf.mxu0
  %v4577 = vadd.f32 %v4436, %v4576
  %4578 = vmatprep.mubr.f32.mxu0 0.0
  %v4579 = vand.u32 %v223, 4294901760
  %4580 = vmatmul.mubr.f32.gmra.mxu0 %v4579
  %v4581 = vpop.f32.mrf.mxu0
  %v4582 = vadd.f32 %v4443, %v4581
  %v4583 = vpop.f32.mrf.mxu0
  %v4584 = vadd.f32 %v4445, %v4583
  %4585 = vmatprep.mubr.f32.mxu0 0.0
  %v4586 = vand.u32 %v226, 4294901760
  %4587 = vmatmul.mubr.f32.gmra.mxu0 %v4586
  %v4588 = vpop.f32.mrf.mxu0
  %v4589 = vadd.f32 %v4452, %v4588
  %v4590 = vpop.f32.mrf.mxu0
  %v4591 = vadd.f32 %v4454, %v4590
  %4592 = vmatprep.mubr.f32.mxu0 0.0
  %v4593 = vand.u32 %v229, 4294901760
  %4594 = vmatmul.mubr.f32.gmra.mxu0 %v4593
  %v4595 = vpop.f32.mrf.mxu0
  %v4596 = vadd.f32 %v4461, %v4595
  %v4597 = vpop.f32.mrf.mxu0
  %v4598 = vadd.f32 %v4463, %v4597
  %4599 = vdwg.mxu0
  %4600 = vmatprep.subr.mxu0 0.0
  %4601 = vmatpush1.msra.mxu0 0.0
  %4602 = vmatprep.subr.mxu0 0.0
  %4603 = vmatpush1.msra.mxu0 0.0
  %4604 = vmatprep.subr.mxu0 0.0
  %4605 = vmatpush1.msra.mxu0 0.0
  %4606 = vmatprep.subr.mxu0 0.0
  %4607 = vmatpush1.msra.mxu0 0.0
  %4608 = vmatprep.subr.mxu0 0.0
  %4609 = vmatpush1.msra.mxu0 0.0
  %4610 = vmatprep.subr.mxu0 0.0
  %4611 = vmatpush1.msra.mxu0 0.0
  %4612 = vmatprep.subr.mxu0 0.0
  %4613 = vmatpush1.msra.mxu0 0.0
  %4614 = vmatprep.subr.mxu0 0.0
  %4615 = vmatpush1.msra.mxu0 0.0
  %4616 = vmatprep.subr.mxu0 0.0
  %4617 = vmatpush1.msra.mxu0 0.0
  %v4618 = vand.u32 %v193, 4294901760
  %4619 = vmatprep.subr.mxu0 %v4618
  %v4620 = vand.u32 %v192, 4294901760
  %4621 = vmatpush1.msra.mxu0 %v4620
  %v4622 = vand.u32 %v189, 4294901760
  %4623 = vmatprep.subr.mxu0 %v4622
  %v4624 = vand.u32 %v188, 4294901760
  %4625 = vmatpush1.msra.mxu0 %v4624
  %v4626 = vand.u32 %v185, 4294901760
  %4627 = vmatprep.subr.mxu0 %v4626
  %v4628 = vand.u32 %v184, 4294901760
  %4629 = vmatpush1.msra.mxu0 %v4628
  %v4630 = vand.u32 %v181, 4294901760
  %4631 = vmatprep.subr.mxu0 %v4630
  %v4632 = vand.u32 %v180, 4294901760
  %4633 = vmatpush1.msra.mxu0 %v4632
  %v4634 = vand.u32 %v177, 4294901760
  %4635 = vmatprep.subr.mxu0 %v4634
  %v4636 = vand.u32 %v176, 4294901760
  %4637 = vmatpush1.msra.mxu0 %v4636
  %v4638 = vand.u32 %v173, 4294901760
  %4639 = vmatprep.subr.mxu0 %v4638
  %v4640 = vand.u32 %v172, 4294901760
  %4641 = vmatpush1.msra.mxu0 %v4640
  %v4642 = vand.u32 %v169, 4294901760
  %4643 = vmatprep.subr.mxu0 %v4642
  %v4644 = vand.u32 %v168, 4294901760
  %4645 = vmatpush1.msra.mxu0 %v4644
  %4646 = vmatprep.subr.mxu0 0.0
  %4647 = vmatpush2.msra.mxu0 0.0
  %4648 = vmatprep.subr.mxu0 0.0
  %4649 = vmatpush2.msra.mxu0 0.0
  %4650 = vmatprep.subr.mxu0 0.0
  %4651 = vmatpush2.msra.mxu0 0.0
  %4652 = vmatprep.subr.mxu0 0.0
  %4653 = vmatpush2.msra.mxu0 0.0
  %4654 = vmatprep.subr.mxu0 0.0
  %4655 = vmatpush2.msra.mxu0 0.0
  %4656 = vmatprep.subr.mxu0 0.0
  %4657 = vmatpush2.msra.mxu0 0.0
  %4658 = vmatprep.subr.mxu0 0.0
  %4659 = vmatpush2.msra.mxu0 0.0
  %4660 = vmatprep.subr.mxu0 0.0
  %4661 = vmatpush2.msra.mxu0 0.0
  %4662 = vmatprep.subr.mxu0 0.0
  %4663 = vmatpush2.msra.mxu0 0.0
  %4664 = vmatprep.subr.mxu0 0.0
  %4665 = vmatpush2.msra.mxu0 0.0
  %4666 = vmatprep.subr.mxu0 0.0
  %4667 = vmatpush2.msra.mxu0 0.0
  %4668 = vmatprep.subr.mxu0 0.0
  %4669 = vmatpush2.msra.mxu0 0.0
  %4670 = vmatprep.subr.mxu0 0.0
  %4671 = vmatpush2.msra.mxu0 0.0
  %4672 = vmatprep.subr.mxu0 0.0
  %4673 = vmatpush2.msra.mxu0 0.0
  %4674 = vmatprep.subr.mxu0 0.0
  %4675 = vmatpush2.msra.mxu0 0.0
  %4676 = vmatprep.subr.mxu0 0.0
  %4677 = vmatpush2.msra.mxu0 0.0
  %4678 = vmatprep.mubr.f32.mxu0 0.0
  %v4679 = vand.u32 %v220, 4294901760
  %4680 = vmatmul.mubr.f32.gmra.mxu0 %v4679
  %v4681 = vpop.f32.mrf.mxu0
  %v4682 = vadd.f32 %v4575, %v4681
  %v4683 = vpop.f32.mrf.mxu0
  %v4684 = vadd.f32 %v4577, %v4683
  %4685 = vmatprep.mubr.f32.mxu0 0.0
  %v4686 = vand.u32 %v223, 4294901760
  %4687 = vmatmul.mubr.f32.gmra.mxu0 %v4686
  %v4688 = vpop.f32.mrf.mxu0
  %v4689 = vadd.f32 %v4582, %v4688
  %v4690 = vpop.f32.mrf.mxu0
  %v4691 = vadd.f32 %v4584, %v4690
  %4692 = vmatprep.mubr.f32.mxu0 0.0
  %v4693 = vand.u32 %v226, 4294901760
  %4694 = vmatmul.mubr.f32.gmra.mxu0 %v4693
  %v4695 = vpop.f32.mrf.mxu0
  %v4696 = vadd.f32 %v4589, %v4695
  %v4697 = vpop.f32.mrf.mxu0
  %v4698 = vadd.f32 %v4591, %v4697
  %4699 = vmatprep.mubr.f32.mxu0 0.0
  %v4700 = vand.u32 %v229, 4294901760
  %4701 = vmatmul.mubr.f32.gmra.mxu0 %v4700
  %v4702 = vpop.f32.mrf.mxu0
  %v4703 = vadd.f32 %v4596, %v4702
  %v4704 = vpop.f32.mrf.mxu0
  %v4705 = vadd.f32 %v4598, %v4704
  %4706 = vdwg.mxu0
  %vm4707 = vcmp.ge.f32.partialorder %v2444, 0.0
  %vm4708 = vcmp.ge.f32.partialorder %v2446, 0.0
  %vm4709 = vcmp.ge.f32.partialorder %v4682, 0.0
  %vm4710 = vcmp.ge.f32.partialorder %v4684, 0.0
  %vm4711 = vcmp.ge.f32.partialorder %v2451, 0.0
  %vm4712 = vcmp.ge.f32.partialorder %v2453, 0.0
  %vm4713 = vcmp.ge.f32.partialorder %v4689, 0.0
  %vm4714 = vcmp.ge.f32.partialorder %v4691, 0.0
  %vm4715 = vcmp.ge.f32.partialorder %v2458, 0.0
  %vm4716 = vcmp.ge.f32.partialorder %v2460, 0.0
  %vm4717 = vcmp.ge.f32.partialorder %v4696, 0.0
  %vm4718 = vcmp.ge.f32.partialorder %v4698, 0.0
  %vm4719 = vcmp.ge.f32.partialorder %v2465, 0.0
  %vm4720 = vcmp.ge.f32.partialorder %v2467, 0.0
  %vm4721 = vcmp.ge.f32.partialorder %v4703, 0.0
  %vm4722 = vcmp.ge.f32.partialorder %v4705, 0.0
  %v4723 = vmul.f32 %v2444, 0.2
  %v4724 = vmul.f32 %v2446, 0.2
  %v4725 = vmul.f32 %v4682, 0.2
  %v4726 = vmul.f32 %v4684, 0.2
  %v4727 = vmul.f32 %v2451, 0.2
  %v4728 = vmul.f32 %v2453, 0.2
  %v4729 = vmul.f32 %v4689, 0.2
  %v4730 = vmul.f32 %v4691, 0.2
  %v4731 = vmul.f32 %v2458, 0.2
  %v4732 = vmul.f32 %v2460, 0.2
  %v4733 = vmul.f32 %v4696, 0.2
  %v4734 = vmul.f32 %v4698, 0.2
  %v4735 = vmul.f32 %v2465, 0.2
  %v4736 = vmul.f32 %v2467, 0.2
  %v4737 = vmul.f32 %v4703, 0.2
  %v4738 = vmul.f32 %v4705, 0.2
  %v4739 = vsel %vm4707, %v2444, %v4723
  %v4740 = vsel %vm4708, %v2446, %v4724
  %v4741 = vsel %vm4709, %v4682, %v4725
  %v4742 = vsel %vm4710, %v4684, %v4726
  %v4743 = vsel %vm4711, %v2451, %v4727
  %v4744 = vsel %vm4712, %v2453, %v4728
  %v4745 = vsel %vm4713, %v4689, %v4729
  %v4746 = vsel %vm4714, %v4691, %v4730
  %v4747 = vsel %vm4715, %v2458, %v4731
  %v4748 = vsel %vm4716, %v2460, %v4732
  %v4749 = vsel %vm4717, %v4696, %v4733
  %v4750 = vsel %vm4718, %v4698, %v4734
  %v4751 = vsel %vm4719, %v2465, %v4735
  %v4752 = vsel %vm4720, %v2467, %v4736
  %v4753 = vsel %vm4721, %v4703, %v4737
  %v4754 = vsel %vm4722, %v4705, %v4738
  %v4755 = vld [vmem:[%s4] sm:$0xff]
  %v4756 = vld [vmem:[%s4 + $0x8] sm:$0xff]
  %v4757 = vld [vmem:[%s4 + $0x10] sm:$0xff]
  %v4758 = vld [vmem:[%s4 + $0x18] sm:$0xff]
  %v4759 = vld [vmem:[%s3] sm:$0xff]
  %v4760 = vld [vmem:[%s3 + $0x8] sm:$0xff]
  %v4761 = vld [vmem:[%s3 + $0x10] sm:$0xff]
  %v4762 = vld [vmem:[%s3 + $0x18] sm:$0xff]
  %v4763 = vld [vmem:[%s3 + $0x20] sm:$0xff]
  %v4764 = vld [vmem:[%s3 + $0x28] sm:$0xff]
  %v4765 = vld [vmem:[%s3 + $0x30] sm:$0xff]
  %v4766 = vld [vmem:[%s3 + $0x38] sm:$0xff]
  %v4767 = vld [vmem:[%s3 + $0x40] sm:$0xff]
  %v4768 = vld [vmem:[%s3 + $0x48] sm:$0xff]
  %v4769 = vld [vmem:[%s3 + $0x50] sm:$0xff]
  %v4770 = vld [vmem:[%s3 + $0x58] sm:$0xff]
  %v4771 = vld [vmem:[%s3 + $0x60] sm:$0xff]
  %v4772 = vld [vmem:[%s3 + $0x68] sm:$0xff]
  %v4773 = vld [vmem:[%s3 + $0x70] sm:$0xff]
  %v4774 = vld [vmem:[%s3 + $0x78] sm:$0xff]
  %v4775 = vld [vmem:[%s3 + $0x80] sm:$0xff]
  %v4776 = vld [vmem:[%s3 + $0x88] sm:$0xff]
  %v4777 = vld [vmem:[%s3 + $0x90] sm:$0xff]
  %v4778 = vld [vmem:[%s3 + $0x98] sm:$0xff]
  %v4779 = vld [vmem:[%s3 + $0xa0] sm:$0xff]
  %v4780 = vld [vmem:[%s3 + $0xa8] sm:$0xff]
  %v4781 = vld [vmem:[%s3 + $0xb0] sm:$0xff]
  %v4782 = vld [vmem:[%s3 + $0xb8] sm:$0xff]
  %v4783 = vld [vmem:[%s3 + $0xc0] sm:$0xff]
  %v4784 = vld [vmem:[%s3 + $0xc8] sm:$0xff]
  %v4785 = vld [vmem:[%s3 + $0xd0] sm:$0xff]
  %v4786 = vld [vmem:[%s3 + $0xd8] sm:$0xff]
  %v4787 = vld [vmem:[%s3 + $0xe0] sm:$0xff]
  %v4788 = vld [vmem:[%s3 + $0xe8] sm:$0xff]
  %v4789 = vld [vmem:[%s3 + $0xf0] sm:$0xff]
  %v4790 = vld [vmem:[%s3 + $0xf8] sm:$0xff]
  %v4791 = vld [vmem:[%s3 + $0x100] sm:$0xff]
  %v4792 = vld [vmem:[%s3 + $0x108] sm:$0xff]
  %v4793 = vld [vmem:[%s3 + $0x110] sm:$0xff]
  %v4794 = vld [vmem:[%s3 + $0x118] sm:$0xff]
  %v4795 = vld [vmem:[%s3 + $0x120] sm:$0xff]
  %v4796 = vld [vmem:[%s3 + $0x128] sm:$0xff]
  %v4797 = vld [vmem:[%s3 + $0x130] sm:$0xff]
  %v4798 = vld [vmem:[%s3 + $0x138] sm:$0xff]
  %v4799 = vld [vmem:[%s3 + $0x140] sm:$0xff]
  %v4800 = vld [vmem:[%s3 + $0x148] sm:$0xff]
  %v4801 = vld [vmem:[%s3 + $0x150] sm:$0xff]
  %v4802 = vld [vmem:[%s3 + $0x158] sm:$0xff]
  %v4803 = vld [vmem:[%s3 + $0x160] sm:$0xff]
  %v4804 = vld [vmem:[%s3 + $0x168] sm:$0xff]
  %v4805 = vld [vmem:[%s3 + $0x170] sm:$0xff]
  %v4806 = vld [vmem:[%s3 + $0x178] sm:$0xff]
  %v4807 = vld [vmem:[%s3 + $0x180] sm:$0xff]
  %v4808 = vld [vmem:[%s3 + $0x188] sm:$0xff]
  %v4809 = vld [vmem:[%s3 + $0x190] sm:$0xff]
  %v4810 = vld [vmem:[%s3 + $0x198] sm:$0xff]
  %v4811 = vld [vmem:[%s3 + $0x1a0] sm:$0xff]
  %v4812 = vld [vmem:[%s3 + $0x1a8] sm:$0xff]
  %v4813 = vld [vmem:[%s3 + $0x1b0] sm:$0xff]
  %v4814 = vld [vmem:[%s3 + $0x1b8] sm:$0xff]
  %v4815 = vld [vmem:[%s3 + $0x1c0] sm:$0xff]
  %v4816 = vld [vmem:[%s3 + $0x1c8] sm:$0xff]
  %v4817 = vld [vmem:[%s3 + $0x1d0] sm:$0xff]
  %v4818 = vld [vmem:[%s3 + $0x1d8] sm:$0xff]
  %v4819 = vld [vmem:[%s3 + $0x1e0] sm:$0xff]
  %v4820 = vld [vmem:[%s3 + $0x1e8] sm:$0xff]
  %v4821 = vld [vmem:[%s3 + $0x1f0] sm:$0xff]
  %v4822 = vld [vmem:[%s3 + $0x1f8] sm:$0xff]
  %4823 = vmatprep.subr.mxu0 0.0
  %v4824 = vand.u32 %v4774, 4294901760
  %4825 = vmatpush1.msra.mxu0 %v4824
  %4826 = vmatprep.subr.mxu0 0.0
  %v4827 = vand.u32 %v4773, 4294901760
  %4828 = vmatpush1.msra.mxu0 %v4827
  %4829 = vmatprep.subr.mxu0 0.0
  %v4830 = vand.u32 %v4772, 4294901760
  %4831 = vmatpush1.msra.mxu0 %v4830
  %4832 = vmatprep.subr.mxu0 0.0
  %v4833 = vand.u32 %v4771, 4294901760
  %4834 = vmatpush1.msra.mxu0 %v4833
  %4835 = vmatprep.subr.mxu0 0.0
  %v4836 = vand.u32 %v4770, 4294901760
  %4837 = vmatpush1.msra.mxu0 %v4836
  %4838 = vmatprep.subr.mxu0 0.0
  %v4839 = vand.u32 %v4769, 4294901760
  %4840 = vmatpush1.msra.mxu0 %v4839
  %4841 = vmatprep.subr.mxu0 0.0
  %v4842 = vand.u32 %v4768, 4294901760
  %4843 = vmatpush1.msra.mxu0 %v4842
  %4844 = vmatprep.subr.mxu0 0.0
  %v4845 = vand.u32 %v4767, 4294901760
  %4846 = vmatpush1.msra.mxu0 %v4845
  %4847 = vmatprep.subr.mxu0 0.0
  %v4848 = vand.u32 %v4766, 4294901760
  %4849 = vmatpush1.msra.mxu0 %v4848
  %4850 = vmatprep.subr.mxu0 0.0
  %v4851 = vand.u32 %v4765, 4294901760
  %4852 = vmatpush1.msra.mxu0 %v4851
  %4853 = vmatprep.subr.mxu0 0.0
  %v4854 = vand.u32 %v4764, 4294901760
  %4855 = vmatpush1.msra.mxu0 %v4854
  %4856 = vmatprep.subr.mxu0 0.0
  %v4857 = vand.u32 %v4763, 4294901760
  %4858 = vmatpush1.msra.mxu0 %v4857
  %4859 = vmatprep.subr.mxu0 0.0
  %v4860 = vand.u32 %v4762, 4294901760
  %4861 = vmatpush1.msra.mxu0 %v4860
  %4862 = vmatprep.subr.mxu0 0.0
  %v4863 = vand.u32 %v4761, 4294901760
  %4864 = vmatpush1.msra.mxu0 %v4863
  %4865 = vmatprep.subr.mxu0 0.0
  %v4866 = vand.u32 %v4760, 4294901760
  %4867 = vmatpush1.msra.mxu0 %v4866
  %4868 = vmatprep.subr.mxu0 0.0
  %v4869 = vand.u32 %v4759, 4294901760
  %4870 = vmatpush1.msra.mxu0 %v4869
  %4871 = vmatprep.subr.mxu0 0.0
  %v4872 = vand.u32 %v4790, 4294901760
  %4873 = vmatpush2.msra.mxu0 %v4872
  %4874 = vmatprep.subr.mxu0 0.0
  %v4875 = vand.u32 %v4789, 4294901760
  %4876 = vmatpush2.msra.mxu0 %v4875
  %4877 = vmatprep.subr.mxu0 0.0
  %v4878 = vand.u32 %v4788, 4294901760
  %4879 = vmatpush2.msra.mxu0 %v4878
  %4880 = vmatprep.subr.mxu0 0.0
  %v4881 = vand.u32 %v4787, 4294901760
  %4882 = vmatpush2.msra.mxu0 %v4881
  %4883 = vmatprep.subr.mxu0 0.0
  %v4884 = vand.u32 %v4786, 4294901760
  %4885 = vmatpush2.msra.mxu0 %v4884
  %4886 = vmatprep.subr.mxu0 0.0
  %v4887 = vand.u32 %v4785, 4294901760
  %4888 = vmatpush2.msra.mxu0 %v4887
  %4889 = vmatprep.subr.mxu0 0.0
  %v4890 = vand.u32 %v4784, 4294901760
  %4891 = vmatpush2.msra.mxu0 %v4890
  %4892 = vmatprep.subr.mxu0 0.0
  %v4893 = vand.u32 %v4783, 4294901760
  %4894 = vmatpush2.msra.mxu0 %v4893
  %4895 = vmatprep.subr.mxu0 0.0
  %v4896 = vand.u32 %v4782, 4294901760
  %4897 = vmatpush2.msra.mxu0 %v4896
  %4898 = vmatprep.subr.mxu0 0.0
  %v4899 = vand.u32 %v4781, 4294901760
  %4900 = vmatpush2.msra.mxu0 %v4899
  %4901 = vmatprep.subr.mxu0 0.0
  %v4902 = vand.u32 %v4780, 4294901760
  %4903 = vmatpush2.msra.mxu0 %v4902
  %4904 = vmatprep.subr.mxu0 0.0
  %v4905 = vand.u32 %v4779, 4294901760
  %4906 = vmatpush2.msra.mxu0 %v4905
  %4907 = vmatprep.subr.mxu0 0.0
  %v4908 = vand.u32 %v4778, 4294901760
  %4909 = vmatpush2.msra.mxu0 %v4908
  %4910 = vmatprep.subr.mxu0 0.0
  %v4911 = vand.u32 %v4777, 4294901760
  %4912 = vmatpush2.msra.mxu0 %v4911
  %4913 = vmatprep.subr.mxu0 0.0
  %v4914 = vand.u32 %v4776, 4294901760
  %4915 = vmatpush2.msra.mxu0 %v4914
  %4916 = vmatprep.subr.mxu0 0.0
  %v4917 = vand.u32 %v4775, 4294901760
  %4918 = vmatpush2.msra.mxu0 %v4917
  %v4919 = vand.u32 %v4756, 4294901760
  %v4920 = vsub.f32 %v4756, %v4919
  %v4921 = vand.u32 %v4920, 4294901760
  %v4922 = vsub.f32 %v4920, %v4921
  %v4923 = vand.u32 %v4922, 4294901760
  %4924 = vmatprep.mubr.f32.mxu0 %v4923
  %v4925 = vand.u32 %v4755, 4294901760
  %v4926 = vsub.f32 %v4755, %v4925
  %v4927 = vand.u32 %v4926, 4294901760
  %v4928 = vsub.f32 %v4926, %v4927
  %v4929 = vand.u32 %v4928, 4294901760
  %4930 = vmatmul.mubr.f32.gmra.mxu0 %v4929
  %v4931 = vpop.f32.mrf.mxu0
  %v4932 = vadd.f32 0.0, %v4931
  %v4933 = vpop.f32.mrf.mxu0
  %4934 = vdwg.mxu0
  %4935 = vmatprep.subr.mxu0 0.0
  %v4936 = vand.u32 %v4774, 4294901760
  %v4937 = vsub.f32 %v4774, %v4936
  %v4938 = vand.u32 %v4937, 4294901760
  %v4939 = vsub.f32 %v4937, %v4938
  %v4940 = vand.u32 %v4939, 4294901760
  %4941 = vmatpush1.msra.mxu0 %v4940
  %4942 = vmatprep.subr.mxu0 0.0
  %v4943 = vand.u32 %v4773, 4294901760
  %v4944 = vsub.f32 %v4773, %v4943
  %v4945 = vand.u32 %v4944, 4294901760
  %v4946 = vsub.f32 %v4944, %v4945
  %v4947 = vand.u32 %v4946, 4294901760
  %4948 = vmatpush1.msra.mxu0 %v4947
  %4949 = vmatprep.subr.mxu0 0.0
  %v4950 = vand.u32 %v4772, 4294901760
  %v4951 = vsub.f32 %v4772, %v4950
  %v4952 = vand.u32 %v4951, 4294901760
  %v4953 = vsub.f32 %v4951, %v4952
  %v4954 = vand.u32 %v4953, 4294901760
  %4955 = vmatpush1.msra.mxu0 %v4954
  %4956 = vmatprep.subr.mxu0 0.0
  %v4957 = vand.u32 %v4771, 4294901760
  %v4958 = vsub.f32 %v4771, %v4957
  %v4959 = vand.u32 %v4958, 4294901760
  %v4960 = vsub.f32 %v4958, %v4959
  %v4961 = vand.u32 %v4960, 4294901760
  %4962 = vmatpush1.msra.mxu0 %v4961
  %4963 = vmatprep.subr.mxu0 0.0
  %v4964 = vand.u32 %v4770, 4294901760
  %v4965 = vsub.f32 %v4770, %v4964
  %v4966 = vand.u32 %v4965, 4294901760
  %v4967 = vsub.f32 %v4965, %v4966
  %v4968 = vand.u32 %v4967, 4294901760
  %4969 = vmatpush1.msra.mxu0 %v4968
  %4970 = vmatprep.subr.mxu0 0.0
  %v4971 = vand.u32 %v4769, 4294901760
  %v4972 = vsub.f32 %v4769, %v4971
  %v4973 = vand.u32 %v4972, 4294901760
  %v4974 = vsub.f32 %v4972, %v4973
  %v4975 = vand.u32 %v4974, 4294901760
  %4976 = vmatpush1.msra.mxu0 %v4975
  %4977 = vmatprep.subr.mxu0 0.0
  %v4978 = vand.u32 %v4768, 4294901760
  %v4979 = vsub.f32 %v4768, %v4978
  %v4980 = vand.u32 %v4979, 4294901760
  %v4981 = vsub.f32 %v4979, %v4980
  %v4982 = vand.u32 %v4981, 4294901760
  %4983 = vmatpush1.msra.mxu0 %v4982
  %4984 = vmatprep.subr.mxu0 0.0
  %v4985 = vand.u32 %v4767, 4294901760
  %v4986 = vsub.f32 %v4767, %v4985
  %v4987 = vand.u32 %v4986, 4294901760
  %v4988 = vsub.f32 %v4986, %v4987
  %v4989 = vand.u32 %v4988, 4294901760
  %4990 = vmatpush1.msra.mxu0 %v4989
  %4991 = vmatprep.subr.mxu0 0.0
  %v4992 = vand.u32 %v4766, 4294901760
  %v4993 = vsub.f32 %v4766, %v4992
  %v4994 = vand.u32 %v4993, 4294901760
  %v4995 = vsub.f32 %v4993, %v4994
  %v4996 = vand.u32 %v4995, 4294901760
  %4997 = vmatpush1.msra.mxu0 %v4996
  %4998 = vmatprep.subr.mxu0 0.0
  %v4999 = vand.u32 %v4765, 4294901760
  %v5000 = vsub.f32 %v4765, %v4999
  %v5001 = vand.u32 %v5000, 4294901760
  %v5002 = vsub.f32 %v5000, %v5001
  %v5003 = vand.u32 %v5002, 4294901760
  %5004 = vmatpush1.msra.mxu0 %v5003
  %5005 = vmatprep.subr.mxu0 0.0
  %v5006 = vand.u32 %v4764, 4294901760
  %v5007 = vsub.f32 %v4764, %v5006
  %v5008 = vand.u32 %v5007, 4294901760
  %v5009 = vsub.f32 %v5007, %v5008
  %v5010 = vand.u32 %v5009, 4294901760
  %5011 = vmatpush1.msra.mxu0 %v5010
  %5012 = vmatprep.subr.mxu0 0.0
  %v5013 = vand.u32 %v4763, 4294901760
  %v5014 = vsub.f32 %v4763, %v5013
  %v5015 = vand.u32 %v5014, 4294901760
  %v5016 = vsub.f32 %v5014, %v5015
  %v5017 = vand.u32 %v5016, 4294901760
  %5018 = vmatpush1.msra.mxu0 %v5017
  %5019 = vmatprep.subr.mxu0 0.0
  %v5020 = vand.u32 %v4762, 4294901760
  %v5021 = vsub.f32 %v4762, %v5020
  %v5022 = vand.u32 %v5021, 4294901760
  %v5023 = vsub.f32 %v5021, %v5022
  %v5024 = vand.u32 %v5023, 4294901760
  %5025 = vmatpush1.msra.mxu0 %v5024
  %5026 = vmatprep.subr.mxu0 0.0
  %v5027 = vand.u32 %v4761, 4294901760
  %v5028 = vsub.f32 %v4761, %v5027
  %v5029 = vand.u32 %v5028, 4294901760
  %v5030 = vsub.f32 %v5028, %v5029
  %v5031 = vand.u32 %v5030, 4294901760
  %5032 = vmatpush1.msra.mxu0 %v5031
  %5033 = vmatprep.subr.mxu0 0.0
  %v5034 = vand.u32 %v4760, 4294901760
  %v5035 = vsub.f32 %v4760, %v5034
  %v5036 = vand.u32 %v5035, 4294901760
  %v5037 = vsub.f32 %v5035, %v5036
  %v5038 = vand.u32 %v5037, 4294901760
  %5039 = vmatpush1.msra.mxu0 %v5038
  %5040 = vmatprep.subr.mxu0 0.0
  %v5041 = vand.u32 %v4759, 4294901760
  %v5042 = vsub.f32 %v4759, %v5041
  %v5043 = vand.u32 %v5042, 4294901760
  %v5044 = vsub.f32 %v5042, %v5043
  %v5045 = vand.u32 %v5044, 4294901760
  %5046 = vmatpush1.msra.mxu0 %v5045
  %5047 = vmatprep.subr.mxu0 0.0
  %v5048 = vand.u32 %v4790, 4294901760
  %v5049 = vsub.f32 %v4790, %v5048
  %v5050 = vand.u32 %v5049, 4294901760
  %v5051 = vsub.f32 %v5049, %v5050
  %v5052 = vand.u32 %v5051, 4294901760
  %5053 = vmatpush2.msra.mxu0 %v5052
  %5054 = vmatprep.subr.mxu0 0.0
  %v5055 = vand.u32 %v4789, 4294901760
  %v5056 = vsub.f32 %v4789, %v5055
  %v5057 = vand.u32 %v5056, 4294901760
  %v5058 = vsub.f32 %v5056, %v5057
  %v5059 = vand.u32 %v5058, 4294901760
  %5060 = vmatpush2.msra.mxu0 %v5059
  %5061 = vmatprep.subr.mxu0 0.0
  %v5062 = vand.u32 %v4788, 4294901760
  %v5063 = vsub.f32 %v4788, %v5062
  %v5064 = vand.u32 %v5063, 4294901760
  %v5065 = vsub.f32 %v5063, %v5064
  %v5066 = vand.u32 %v5065, 4294901760
  %5067 = vmatpush2.msra.mxu0 %v5066
  %5068 = vmatprep.subr.mxu0 0.0
  %v5069 = vand.u32 %v4787, 4294901760
  %v5070 = vsub.f32 %v4787, %v5069
  %v5071 = vand.u32 %v5070, 4294901760
  %v5072 = vsub.f32 %v5070, %v5071
  %v5073 = vand.u32 %v5072, 4294901760
  %5074 = vmatpush2.msra.mxu0 %v5073
  %5075 = vmatprep.subr.mxu0 0.0
  %v5076 = vand.u32 %v4786, 4294901760
  %v5077 = vsub.f32 %v4786, %v5076
  %v5078 = vand.u32 %v5077, 4294901760
  %v5079 = vsub.f32 %v5077, %v5078
  %v5080 = vand.u32 %v5079, 4294901760
  %5081 = vmatpush2.msra.mxu0 %v5080
  %5082 = vmatprep.subr.mxu0 0.0
  %v5083 = vand.u32 %v4785, 4294901760
  %v5084 = vsub.f32 %v4785, %v5083
  %v5085 = vand.u32 %v5084, 4294901760
  %v5086 = vsub.f32 %v5084, %v5085
  %v5087 = vand.u32 %v5086, 4294901760
  %5088 = vmatpush2.msra.mxu0 %v5087
  %5089 = vmatprep.subr.mxu0 0.0
  %v5090 = vand.u32 %v4784, 4294901760
  %v5091 = vsub.f32 %v4784, %v5090
  %v5092 = vand.u32 %v5091, 4294901760
  %v5093 = vsub.f32 %v5091, %v5092
  %v5094 = vand.u32 %v5093, 4294901760
  %5095 = vmatpush2.msra.mxu0 %v5094
  %5096 = vmatprep.subr.mxu0 0.0
  %v5097 = vand.u32 %v4783, 4294901760
  %v5098 = vsub.f32 %v4783, %v5097
  %v5099 = vand.u32 %v5098, 4294901760
  %v5100 = vsub.f32 %v5098, %v5099
  %v5101 = vand.u32 %v5100, 4294901760
  %5102 = vmatpush2.msra.mxu0 %v5101
  %5103 = vmatprep.subr.mxu0 0.0
  %v5104 = vand.u32 %v4782, 4294901760
  %v5105 = vsub.f32 %v4782, %v5104
  %v5106 = vand.u32 %v5105, 4294901760
  %v5107 = vsub.f32 %v5105, %v5106
  %v5108 = vand.u32 %v5107, 4294901760
  %5109 = vmatpush2.msra.mxu0 %v5108
  %5110 = vmatprep.subr.mxu0 0.0
  %v5111 = vand.u32 %v4781, 4294901760
  %v5112 = vsub.f32 %v4781, %v5111
  %v5113 = vand.u32 %v5112, 4294901760
  %v5114 = vsub.f32 %v5112, %v5113
  %v5115 = vand.u32 %v5114, 4294901760
  %5116 = vmatpush2.msra.mxu0 %v5115
  %5117 = vmatprep.subr.mxu0 0.0
  %v5118 = vand.u32 %v4780, 4294901760
  %v5119 = vsub.f32 %v4780, %v5118
  %v5120 = vand.u32 %v5119, 4294901760
  %v5121 = vsub.f32 %v5119, %v5120
  %v5122 = vand.u32 %v5121, 4294901760
  %5123 = vmatpush2.msra.mxu0 %v5122
  %5124 = vmatprep.subr.mxu0 0.0
  %v5125 = vand.u32 %v4779, 4294901760
  %v5126 = vsub.f32 %v4779, %v5125
  %v5127 = vand.u32 %v5126, 4294901760
  %v5128 = vsub.f32 %v5126, %v5127
  %v5129 = vand.u32 %v5128, 4294901760
  %5130 = vmatpush2.msra.mxu0 %v5129
  %5131 = vmatprep.subr.mxu0 0.0
  %v5132 = vand.u32 %v4778, 4294901760
  %v5133 = vsub.f32 %v4778, %v5132
  %v5134 = vand.u32 %v5133, 4294901760
  %v5135 = vsub.f32 %v5133, %v5134
  %v5136 = vand.u32 %v5135, 4294901760
  %5137 = vmatpush2.msra.mxu0 %v5136
  %5138 = vmatprep.subr.mxu0 0.0
  %v5139 = vand.u32 %v4777, 4294901760
  %v5140 = vsub.f32 %v4777, %v5139
  %v5141 = vand.u32 %v5140, 4294901760
  %v5142 = vsub.f32 %v5140, %v5141
  %v5143 = vand.u32 %v5142, 4294901760
  %5144 = vmatpush2.msra.mxu0 %v5143
  %5145 = vmatprep.subr.mxu0 0.0
  %v5146 = vand.u32 %v4776, 4294901760
  %v5147 = vsub.f32 %v4776, %v5146
  %v5148 = vand.u32 %v5147, 4294901760
  %v5149 = vsub.f32 %v5147, %v5148
  %v5150 = vand.u32 %v5149, 4294901760
  %5151 = vmatpush2.msra.mxu0 %v5150
  %5152 = vmatprep.subr.mxu0 0.0
  %v5153 = vand.u32 %v4775, 4294901760
  %v5154 = vsub.f32 %v4775, %v5153
  %v5155 = vand.u32 %v5154, 4294901760
  %v5156 = vsub.f32 %v5154, %v5155
  %v5157 = vand.u32 %v5156, 4294901760
  %5158 = vmatpush2.msra.mxu0 %v5157
  %v5159 = vand.u32 %v4756, 4294901760
  %5160 = vmatprep.mubr.f32.mxu0 %v5159
  %v5161 = vand.u32 %v4755, 4294901760
  %5162 = vmatmul.mubr.f32.gmra.mxu0 %v5161
  %v5163 = vpop.f32.mrf.mxu0
  %v5164 = vadd.f32 %v4932, %v5163
  %v5165 = vpop.f32.mrf.mxu0
  %5166 = vdwg.mxu0
  %5167 = vmatprep.subr.mxu0 0.0
  %v5168 = vand.u32 %v4774, 4294901760
  %v5169 = vsub.f32 %v4774, %v5168
  %5170 = vmatpush1.msra.mxu0 %v5169
  %5171 = vmatprep.subr.mxu0 0.0
  %v5172 = vand.u32 %v4773, 4294901760
  %v5173 = vsub.f32 %v4773, %v5172
  %5174 = vmatpush1.msra.mxu0 %v5173
  %5175 = vmatprep.subr.mxu0 0.0
  %v5176 = vand.u32 %v4772, 4294901760
  %v5177 = vsub.f32 %v4772, %v5176
  %5178 = vmatpush1.msra.mxu0 %v5177
  %5179 = vmatprep.subr.mxu0 0.0
  %v5180 = vand.u32 %v4771, 4294901760
  %v5181 = vsub.f32 %v4771, %v5180
  %5182 = vmatpush1.msra.mxu0 %v5181
  %5183 = vmatprep.subr.mxu0 0.0
  %v5184 = vand.u32 %v4770, 4294901760
  %v5185 = vsub.f32 %v4770, %v5184
  %5186 = vmatpush1.msra.mxu0 %v5185
  %5187 = vmatprep.subr.mxu0 0.0
  %v5188 = vand.u32 %v4769, 4294901760
  %v5189 = vsub.f32 %v4769, %v5188
  %5190 = vmatpush1.msra.mxu0 %v5189
  %5191 = vmatprep.subr.mxu0 0.0
  %v5192 = vand.u32 %v4768, 4294901760
  %v5193 = vsub.f32 %v4768, %v5192
  %5194 = vmatpush1.msra.mxu0 %v5193
  %5195 = vmatprep.subr.mxu0 0.0
  %v5196 = vand.u32 %v4767, 4294901760
  %v5197 = vsub.f32 %v4767, %v5196
  %5198 = vmatpush1.msra.mxu0 %v5197
  %5199 = vmatprep.subr.mxu0 0.0
  %v5200 = vand.u32 %v4766, 4294901760
  %v5201 = vsub.f32 %v4766, %v5200
  %5202 = vmatpush1.msra.mxu0 %v5201
  %5203 = vmatprep.subr.mxu0 0.0
  %v5204 = vand.u32 %v4765, 4294901760
  %v5205 = vsub.f32 %v4765, %v5204
  %5206 = vmatpush1.msra.mxu0 %v5205
  %5207 = vmatprep.subr.mxu0 0.0
  %v5208 = vand.u32 %v4764, 4294901760
  %v5209 = vsub.f32 %v4764, %v5208
  %5210 = vmatpush1.msra.mxu0 %v5209
  %5211 = vmatprep.subr.mxu0 0.0
  %v5212 = vand.u32 %v4763, 4294901760
  %v5213 = vsub.f32 %v4763, %v5212
  %5214 = vmatpush1.msra.mxu0 %v5213
  %5215 = vmatprep.subr.mxu0 0.0
  %v5216 = vand.u32 %v4762, 4294901760
  %v5217 = vsub.f32 %v4762, %v5216
  %5218 = vmatpush1.msra.mxu0 %v5217
  %5219 = vmatprep.subr.mxu0 0.0
  %v5220 = vand.u32 %v4761, 4294901760
  %v5221 = vsub.f32 %v4761, %v5220
  %5222 = vmatpush1.msra.mxu0 %v5221
  %5223 = vmatprep.subr.mxu0 0.0
  %v5224 = vand.u32 %v4760, 4294901760
  %v5225 = vsub.f32 %v4760, %v5224
  %5226 = vmatpush1.msra.mxu0 %v5225
  %5227 = vmatprep.subr.mxu0 0.0
  %v5228 = vand.u32 %v4759, 4294901760
  %v5229 = vsub.f32 %v4759, %v5228
  %5230 = vmatpush1.msra.mxu0 %v5229
  %5231 = vmatprep.subr.mxu0 0.0
  %v5232 = vand.u32 %v4790, 4294901760
  %v5233 = vsub.f32 %v4790, %v5232
  %5234 = vmatpush2.msra.mxu0 %v5233
  %5235 = vmatprep.subr.mxu0 0.0
  %v5236 = vand.u32 %v4789, 4294901760
  %v5237 = vsub.f32 %v4789, %v5236
  %5238 = vmatpush2.msra.mxu0 %v5237
  %5239 = vmatprep.subr.mxu0 0.0
  %v5240 = vand.u32 %v4788, 4294901760
  %v5241 = vsub.f32 %v4788, %v5240
  %5242 = vmatpush2.msra.mxu0 %v5241
  %5243 = vmatprep.subr.mxu0 0.0
  %v5244 = vand.u32 %v4787, 4294901760
  %v5245 = vsub.f32 %v4787, %v5244
  %5246 = vmatpush2.msra.mxu0 %v5245
  %5247 = vmatprep.subr.mxu0 0.0
  %v5248 = vand.u32 %v4786, 4294901760
  %v5249 = vsub.f32 %v4786, %v5248
  %5250 = vmatpush2.msra.mxu0 %v5249
  %5251 = vmatprep.subr.mxu0 0.0
  %v5252 = vand.u32 %v4785, 4294901760
  %v5253 = vsub.f32 %v4785, %v5252
  %5254 = vmatpush2.msra.mxu0 %v5253
  %5255 = vmatprep.subr.mxu0 0.0
  %v5256 = vand.u32 %v4784, 4294901760
  %v5257 = vsub.f32 %v4784, %v5256
  %5258 = vmatpush2.msra.mxu0 %v5257
  %5259 = vmatprep.subr.mxu0 0.0
  %v5260 = vand.u32 %v4783, 4294901760
  %v5261 = vsub.f32 %v4783, %v5260
  %5262 = vmatpush2.msra.mxu0 %v5261
  %5263 = vmatprep.subr.mxu0 0.0
  %v5264 = vand.u32 %v4782, 4294901760
  %v5265 = vsub.f32 %v4782, %v5264
  %5266 = vmatpush2.msra.mxu0 %v5265
  %5267 = vmatprep.subr.mxu0 0.0
  %v5268 = vand.u32 %v4781, 4294901760
  %v5269 = vsub.f32 %v4781, %v5268
  %5270 = vmatpush2.msra.mxu0 %v5269
  %5271 = vmatprep.subr.mxu0 0.0
  %v5272 = vand.u32 %v4780, 4294901760
  %v5273 = vsub.f32 %v4780, %v5272
  %5274 = vmatpush2.msra.mxu0 %v5273
  %5275 = vmatprep.subr.mxu0 0.0
  %v5276 = vand.u32 %v4779, 4294901760
  %v5277 = vsub.f32 %v4779, %v5276
  %5278 = vmatpush2.msra.mxu0 %v5277
  %5279 = vmatprep.subr.mxu0 0.0
  %v5280 = vand.u32 %v4778, 4294901760
  %v5281 = vsub.f32 %v4778, %v5280
  %5282 = vmatpush2.msra.mxu0 %v5281
  %5283 = vmatprep.subr.mxu0 0.0
  %v5284 = vand.u32 %v4777, 4294901760
  %v5285 = vsub.f32 %v4777, %v5284
  %5286 = vmatpush2.msra.mxu0 %v5285
  %5287 = vmatprep.subr.mxu0 0.0
  %v5288 = vand.u32 %v4776, 4294901760
  %v5289 = vsub.f32 %v4776, %v5288
  %5290 = vmatpush2.msra.mxu0 %v5289
  %5291 = vmatprep.subr.mxu0 0.0
  %v5292 = vand.u32 %v4775, 4294901760
  %v5293 = vsub.f32 %v4775, %v5292
  %5294 = vmatpush2.msra.mxu0 %v5293
  %v5295 = vand.u32 %v4756, 4294901760
  %v5296 = vsub.f32 %v4756, %v5295
  %5297 = vmatprep.mubr.f32.mxu0 %v5296
  %v5298 = vand.u32 %v4755, 4294901760
  %v5299 = vsub.f32 %v4755, %v5298
  %5300 = vmatmul.mubr.f32.gmra.mxu0 %v5299
  %v5301 = vpop.f32.mrf.mxu0
  %v5302 = vadd.f32 %v5164, %v5301
  %v5303 = vpop.f32.mrf.mxu0
  %5304 = vdwg.mxu0
  %5305 = vmatprep.subr.mxu0 0.0
  %v5306 = vand.u32 %v4774, 4294901760
  %5307 = vmatpush1.msra.mxu0 %v5306
  %5308 = vmatprep.subr.mxu0 0.0
  %v5309 = vand.u32 %v4773, 4294901760
  %5310 = vmatpush1.msra.mxu0 %v5309
  %5311 = vmatprep.subr.mxu0 0.0
  %v5312 = vand.u32 %v4772, 4294901760
  %5313 = vmatpush1.msra.mxu0 %v5312
  %5314 = vmatprep.subr.mxu0 0.0
  %v5315 = vand.u32 %v4771, 4294901760
  %5316 = vmatpush1.msra.mxu0 %v5315
  %5317 = vmatprep.subr.mxu0 0.0
  %v5318 = vand.u32 %v4770, 4294901760
  %5319 = vmatpush1.msra.mxu0 %v5318
  %5320 = vmatprep.subr.mxu0 0.0
  %v5321 = vand.u32 %v4769, 4294901760
  %5322 = vmatpush1.msra.mxu0 %v5321
  %5323 = vmatprep.subr.mxu0 0.0
  %v5324 = vand.u32 %v4768, 4294901760
  %5325 = vmatpush1.msra.mxu0 %v5324
  %5326 = vmatprep.subr.mxu0 0.0
  %v5327 = vand.u32 %v4767, 4294901760
  %5328 = vmatpush1.msra.mxu0 %v5327
  %5329 = vmatprep.subr.mxu0 0.0
  %v5330 = vand.u32 %v4766, 4294901760
  %5331 = vmatpush1.msra.mxu0 %v5330
  %5332 = vmatprep.subr.mxu0 0.0
  %v5333 = vand.u32 %v4765, 4294901760
  %5334 = vmatpush1.msra.mxu0 %v5333
  %5335 = vmatprep.subr.mxu0 0.0
  %v5336 = vand.u32 %v4764, 4294901760
  %5337 = vmatpush1.msra.mxu0 %v5336
  %5338 = vmatprep.subr.mxu0 0.0
  %v5339 = vand.u32 %v4763, 4294901760
  %5340 = vmatpush1.msra.mxu0 %v5339
  %5341 = vmatprep.subr.mxu0 0.0
  %v5342 = vand.u32 %v4762, 4294901760
  %5343 = vmatpush1.msra.mxu0 %v5342
  %5344 = vmatprep.subr.mxu0 0.0
  %v5345 = vand.u32 %v4761, 4294901760
  %5346 = vmatpush1.msra.mxu0 %v5345
  %5347 = vmatprep.subr.mxu0 0.0
  %v5348 = vand.u32 %v4760, 4294901760
  %5349 = vmatpush1.msra.mxu0 %v5348
  %5350 = vmatprep.subr.mxu0 0.0
  %v5351 = vand.u32 %v4759, 4294901760
  %5352 = vmatpush1.msra.mxu0 %v5351
  %5353 = vmatprep.subr.mxu0 0.0
  %v5354 = vand.u32 %v4790, 4294901760
  %5355 = vmatpush2.msra.mxu0 %v5354
  %5356 = vmatprep.subr.mxu0 0.0
  %v5357 = vand.u32 %v4789, 4294901760
  %5358 = vmatpush2.msra.mxu0 %v5357
  %5359 = vmatprep.subr.mxu0 0.0
  %v5360 = vand.u32 %v4788, 4294901760
  %5361 = vmatpush2.msra.mxu0 %v5360
  %5362 = vmatprep.subr.mxu0 0.0
  %v5363 = vand.u32 %v4787, 4294901760
  %5364 = vmatpush2.msra.mxu0 %v5363
  %5365 = vmatprep.subr.mxu0 0.0
  %v5366 = vand.u32 %v4786, 4294901760
  %5367 = vmatpush2.msra.mxu0 %v5366
  %5368 = vmatprep.subr.mxu0 0.0
  %v5369 = vand.u32 %v4785, 4294901760
  %5370 = vmatpush2.msra.mxu0 %v5369
  %5371 = vmatprep.subr.mxu0 0.0
  %v5372 = vand.u32 %v4784, 4294901760
  %5373 = vmatpush2.msra.mxu0 %v5372
  %5374 = vmatprep.subr.mxu0 0.0
  %v5375 = vand.u32 %v4783, 4294901760
  %5376 = vmatpush2.msra.mxu0 %v5375
  %5377 = vmatprep.subr.mxu0 0.0
  %v5378 = vand.u32 %v4782, 4294901760
  %5379 = vmatpush2.msra.mxu0 %v5378
  %5380 = vmatprep.subr.mxu0 0.0
  %v5381 = vand.u32 %v4781, 4294901760
  %5382 = vmatpush2.msra.mxu0 %v5381
  %5383 = vmatprep.subr.mxu0 0.0
  %v5384 = vand.u32 %v4780, 4294901760
  %5385 = vmatpush2.msra.mxu0 %v5384
  %5386 = vmatprep.subr.mxu0 0.0
  %v5387 = vand.u32 %v4779, 4294901760
  %5388 = vmatpush2.msra.mxu0 %v5387
  %5389 = vmatprep.subr.mxu0 0.0
  %v5390 = vand.u32 %v4778, 4294901760
  %5391 = vmatpush2.msra.mxu0 %v5390
  %5392 = vmatprep.subr.mxu0 0.0
  %v5393 = vand.u32 %v4777, 4294901760
  %5394 = vmatpush2.msra.mxu0 %v5393
  %5395 = vmatprep.subr.mxu0 0.0
  %v5396 = vand.u32 %v4776, 4294901760
  %5397 = vmatpush2.msra.mxu0 %v5396
  %5398 = vmatprep.subr.mxu0 0.0
  %v5399 = vand.u32 %v4775, 4294901760
  %5400 = vmatpush2.msra.mxu0 %v5399
  %v5401 = vand.u32 %v4756, 4294901760
  %v5402 = vsub.f32 %v4756, %v5401
  %v5403 = vand.u32 %v5402, 4294901760
  %5404 = vmatprep.mubr.f32.mxu0 %v5403
  %v5405 = vand.u32 %v4755, 4294901760
  %v5406 = vsub.f32 %v4755, %v5405
  %v5407 = vand.u32 %v5406, 4294901760
  %5408 = vmatmul.mubr.f32.gmra.mxu0 %v5407
  %v5409 = vpop.f32.mrf.mxu0
  %v5410 = vadd.f32 %v5302, %v5409
  %v5411 = vpop.f32.mrf.mxu0
  %5412 = vdwg.mxu0
  %5413 = vmatprep.subr.mxu0 0.0
  %v5414 = vand.u32 %v4774, 4294901760
  %v5415 = vsub.f32 %v4774, %v5414
  %v5416 = vand.u32 %v5415, 4294901760
  %5417 = vmatpush1.msra.mxu0 %v5416
  %5418 = vmatprep.subr.mxu0 0.0
  %v5419 = vand.u32 %v4773, 4294901760
  %v5420 = vsub.f32 %v4773, %v5419
  %v5421 = vand.u32 %v5420, 4294901760
  %5422 = vmatpush1.msra.mxu0 %v5421
  %5423 = vmatprep.subr.mxu0 0.0
  %v5424 = vand.u32 %v4772, 4294901760
  %v5425 = vsub.f32 %v4772, %v5424
  %v5426 = vand.u32 %v5425, 4294901760
  %5427 = vmatpush1.msra.mxu0 %v5426
  %5428 = vmatprep.subr.mxu0 0.0
  %v5429 = vand.u32 %v4771, 4294901760
  %v5430 = vsub.f32 %v4771, %v5429
  %v5431 = vand.u32 %v5430, 4294901760
  %5432 = vmatpush1.msra.mxu0 %v5431
  %5433 = vmatprep.subr.mxu0 0.0
  %v5434 = vand.u32 %v4770, 4294901760
  %v5435 = vsub.f32 %v4770, %v5434
  %v5436 = vand.u32 %v5435, 4294901760
  %5437 = vmatpush1.msra.mxu0 %v5436
  %5438 = vmatprep.subr.mxu0 0.0
  %v5439 = vand.u32 %v4769, 4294901760
  %v5440 = vsub.f32 %v4769, %v5439
  %v5441 = vand.u32 %v5440, 4294901760
  %5442 = vmatpush1.msra.mxu0 %v5441
  %5443 = vmatprep.subr.mxu0 0.0
  %v5444 = vand.u32 %v4768, 4294901760
  %v5445 = vsub.f32 %v4768, %v5444
  %v5446 = vand.u32 %v5445, 4294901760
  %5447 = vmatpush1.msra.mxu0 %v5446
  %5448 = vmatprep.subr.mxu0 0.0
  %v5449 = vand.u32 %v4767, 4294901760
  %v5450 = vsub.f32 %v4767, %v5449
  %v5451 = vand.u32 %v5450, 4294901760
  %5452 = vmatpush1.msra.mxu0 %v5451
  %5453 = vmatprep.subr.mxu0 0.0
  %v5454 = vand.u32 %v4766, 4294901760
  %v5455 = vsub.f32 %v4766, %v5454
  %v5456 = vand.u32 %v5455, 4294901760
  %5457 = vmatpush1.msra.mxu0 %v5456
  %5458 = vmatprep.subr.mxu0 0.0
  %v5459 = vand.u32 %v4765, 4294901760
  %v5460 = vsub.f32 %v4765, %v5459
  %v5461 = vand.u32 %v5460, 4294901760
  %5462 = vmatpush1.msra.mxu0 %v5461
  %5463 = vmatprep.subr.mxu0 0.0
  %v5464 = vand.u32 %v4764, 4294901760
  %v5465 = vsub.f32 %v4764, %v5464
  %v5466 = vand.u32 %v5465, 4294901760
  %5467 = vmatpush1.msra.mxu0 %v5466
  %5468 = vmatprep.subr.mxu0 0.0
  %v5469 = vand.u32 %v4763, 4294901760
  %v5470 = vsub.f32 %v4763, %v5469
  %v5471 = vand.u32 %v5470, 4294901760
  %5472 = vmatpush1.msra.mxu0 %v5471
  %5473 = vmatprep.subr.mxu0 0.0
  %v5474 = vand.u32 %v4762, 4294901760
  %v5475 = vsub.f32 %v4762, %v5474
  %v5476 = vand.u32 %v5475, 4294901760
  %5477 = vmatpush1.msra.mxu0 %v5476
  %5478 = vmatprep.subr.mxu0 0.0
  %v5479 = vand.u32 %v4761, 4294901760
  %v5480 = vsub.f32 %v4761, %v5479
  %v5481 = vand.u32 %v5480, 4294901760
  %5482 = vmatpush1.msra.mxu0 %v5481
  %5483 = vmatprep.subr.mxu0 0.0
  %v5484 = vand.u32 %v4760, 4294901760
  %v5485 = vsub.f32 %v4760, %v5484
  %v5486 = vand.u32 %v5485, 4294901760
  %5487 = vmatpush1.msra.mxu0 %v5486
  %5488 = vmatprep.subr.mxu0 0.0
  %v5489 = vand.u32 %v4759, 4294901760
  %v5490 = vsub.f32 %v4759, %v5489
  %v5491 = vand.u32 %v5490, 4294901760
  %5492 = vmatpush1.msra.mxu0 %v5491
  %5493 = vmatprep.subr.mxu0 0.0
  %v5494 = vand.u32 %v4790, 4294901760
  %v5495 = vsub.f32 %v4790, %v5494
  %v5496 = vand.u32 %v5495, 4294901760
  %5497 = vmatpush2.msra.mxu0 %v5496
  %5498 = vmatprep.subr.mxu0 0.0
  %v5499 = vand.u32 %v4789, 4294901760
  %v5500 = vsub.f32 %v4789, %v5499
  %v5501 = vand.u32 %v5500, 4294901760
  %5502 = vmatpush2.msra.mxu0 %v5501
  %5503 = vmatprep.subr.mxu0 0.0
  %v5504 = vand.u32 %v4788, 4294901760
  %v5505 = vsub.f32 %v4788, %v5504
  %v5506 = vand.u32 %v5505, 4294901760
  %5507 = vmatpush2.msra.mxu0 %v5506
  %5508 = vmatprep.subr.mxu0 0.0
  %v5509 = vand.u32 %v4787, 4294901760
  %v5510 = vsub.f32 %v4787, %v5509
  %v5511 = vand.u32 %v5510, 4294901760
  %5512 = vmatpush2.msra.mxu0 %v5511
  %5513 = vmatprep.subr.mxu0 0.0
  %v5514 = vand.u32 %v4786, 4294901760
  %v5515 = vsub.f32 %v4786, %v5514
  %v5516 = vand.u32 %v5515, 4294901760
  %5517 = vmatpush2.msra.mxu0 %v5516
  %5518 = vmatprep.subr.mxu0 0.0
  %v5519 = vand.u32 %v4785, 4294901760
  %v5520 = vsub.f32 %v4785, %v5519
  %v5521 = vand.u32 %v5520, 4294901760
  %5522 = vmatpush2.msra.mxu0 %v5521
  %5523 = vmatprep.subr.mxu0 0.0
  %v5524 = vand.u32 %v4784, 4294901760
  %v5525 = vsub.f32 %v4784, %v5524
  %v5526 = vand.u32 %v5525, 4294901760
  %5527 = vmatpush2.msra.mxu0 %v5526
  %5528 = vmatprep.subr.mxu0 0.0
  %v5529 = vand.u32 %v4783, 4294901760
  %v5530 = vsub.f32 %v4783, %v5529
  %v5531 = vand.u32 %v5530, 4294901760
  %5532 = vmatpush2.msra.mxu0 %v5531
  %5533 = vmatprep.subr.mxu0 0.0
  %v5534 = vand.u32 %v4782, 4294901760
  %v5535 = vsub.f32 %v4782, %v5534
  %v5536 = vand.u32 %v5535, 4294901760
  %5537 = vmatpush2.msra.mxu0 %v5536
  %5538 = vmatprep.subr.mxu0 0.0
  %v5539 = vand.u32 %v4781, 4294901760
  %v5540 = vsub.f32 %v4781, %v5539
  %v5541 = vand.u32 %v5540, 4294901760
  %5542 = vmatpush2.msra.mxu0 %v5541
  %5543 = vmatprep.subr.mxu0 0.0
  %v5544 = vand.u32 %v4780, 4294901760
  %v5545 = vsub.f32 %v4780, %v5544
  %v5546 = vand.u32 %v5545, 4294901760
  %5547 = vmatpush2.msra.mxu0 %v5546
  %5548 = vmatprep.subr.mxu0 0.0
  %v5549 = vand.u32 %v4779, 4294901760
  %v5550 = vsub.f32 %v4779, %v5549
  %v5551 = vand.u32 %v5550, 4294901760
  %5552 = vmatpush2.msra.mxu0 %v5551
  %5553 = vmatprep.subr.mxu0 0.0
  %v5554 = vand.u32 %v4778, 4294901760
  %v5555 = vsub.f32 %v4778, %v5554
  %v5556 = vand.u32 %v5555, 4294901760
  %5557 = vmatpush2.msra.mxu0 %v5556
  %5558 = vmatprep.subr.mxu0 0.0
  %v5559 = vand.u32 %v4777, 4294901760
  %v5560 = vsub.f32 %v4777, %v5559
  %v5561 = vand.u32 %v5560, 4294901760
  %5562 = vmatpush2.msra.mxu0 %v5561
  %5563 = vmatprep.subr.mxu0 0.0
  %v5564 = vand.u32 %v4776, 4294901760
  %v5565 = vsub.f32 %v4776, %v5564
  %v5566 = vand.u32 %v5565, 4294901760
  %5567 = vmatpush2.msra.mxu0 %v5566
  %5568 = vmatprep.subr.mxu0 0.0
  %v5569 = vand.u32 %v4775, 4294901760
  %v5570 = vsub.f32 %v4775, %v5569
  %v5571 = vand.u32 %v5570, 4294901760
  %5572 = vmatpush2.msra.mxu0 %v5571
  %v5573 = vand.u32 %v4756, 4294901760
  %5574 = vmatprep.mubr.f32.mxu0 %v5573
  %v5575 = vand.u32 %v4755, 4294901760
  %5576 = vmatmul.mubr.f32.gmra.mxu0 %v5575
  %v5577 = vpop.f32.mrf.mxu0
  %v5578 = vadd.f32 %v5410, %v5577
  %v5579 = vpop.f32.mrf.mxu0
  %5580 = vdwg.mxu0
  %5581 = vmatprep.subr.mxu0 0.0
  %v5582 = vand.u32 %v4774, 4294901760
  %5583 = vmatpush1.msra.mxu0 %v5582
  %5584 = vmatprep.subr.mxu0 0.0
  %v5585 = vand.u32 %v4773, 4294901760
  %5586 = vmatpush1.msra.mxu0 %v5585
  %5587 = vmatprep.subr.mxu0 0.0
  %v5588 = vand.u32 %v4772, 4294901760
  %5589 = vmatpush1.msra.mxu0 %v5588
  %5590 = vmatprep.subr.mxu0 0.0
  %v5591 = vand.u32 %v4771, 4294901760
  %5592 = vmatpush1.msra.mxu0 %v5591
  %5593 = vmatprep.subr.mxu0 0.0
  %v5594 = vand.u32 %v4770, 4294901760
  %5595 = vmatpush1.msra.mxu0 %v5594
  %5596 = vmatprep.subr.mxu0 0.0
  %v5597 = vand.u32 %v4769, 4294901760
  %5598 = vmatpush1.msra.mxu0 %v5597
  %5599 = vmatprep.subr.mxu0 0.0
  %v5600 = vand.u32 %v4768, 4294901760
  %5601 = vmatpush1.msra.mxu0 %v5600
  %5602 = vmatprep.subr.mxu0 0.0
  %v5603 = vand.u32 %v4767, 4294901760
  %5604 = vmatpush1.msra.mxu0 %v5603
  %5605 = vmatprep.subr.mxu0 0.0
  %v5606 = vand.u32 %v4766, 4294901760
  %5607 = vmatpush1.msra.mxu0 %v5606
  %5608 = vmatprep.subr.mxu0 0.0
  %v5609 = vand.u32 %v4765, 4294901760
  %5610 = vmatpush1.msra.mxu0 %v5609
  %5611 = vmatprep.subr.mxu0 0.0
  %v5612 = vand.u32 %v4764, 4294901760
  %5613 = vmatpush1.msra.mxu0 %v5612
  %5614 = vmatprep.subr.mxu0 0.0
  %v5615 = vand.u32 %v4763, 4294901760
  %5616 = vmatpush1.msra.mxu0 %v5615
  %5617 = vmatprep.subr.mxu0 0.0
  %v5618 = vand.u32 %v4762, 4294901760
  %5619 = vmatpush1.msra.mxu0 %v5618
  %5620 = vmatprep.subr.mxu0 0.0
  %v5621 = vand.u32 %v4761, 4294901760
  %5622 = vmatpush1.msra.mxu0 %v5621
  %5623 = vmatprep.subr.mxu0 0.0
  %v5624 = vand.u32 %v4760, 4294901760
  %5625 = vmatpush1.msra.mxu0 %v5624
  %5626 = vmatprep.subr.mxu0 0.0
  %v5627 = vand.u32 %v4759, 4294901760
  %5628 = vmatpush1.msra.mxu0 %v5627
  %5629 = vmatprep.subr.mxu0 0.0
  %v5630 = vand.u32 %v4790, 4294901760
  %5631 = vmatpush2.msra.mxu0 %v5630
  %5632 = vmatprep.subr.mxu0 0.0
  %v5633 = vand.u32 %v4789, 4294901760
  %5634 = vmatpush2.msra.mxu0 %v5633
  %5635 = vmatprep.subr.mxu0 0.0
  %v5636 = vand.u32 %v4788, 4294901760
  %5637 = vmatpush2.msra.mxu0 %v5636
  %5638 = vmatprep.subr.mxu0 0.0
  %v5639 = vand.u32 %v4787, 4294901760
  %5640 = vmatpush2.msra.mxu0 %v5639
  %5641 = vmatprep.subr.mxu0 0.0
  %v5642 = vand.u32 %v4786, 4294901760
  %5643 = vmatpush2.msra.mxu0 %v5642
  %5644 = vmatprep.subr.mxu0 0.0
  %v5645 = vand.u32 %v4785, 4294901760
  %5646 = vmatpush2.msra.mxu0 %v5645
  %5647 = vmatprep.subr.mxu0 0.0
  %v5648 = vand.u32 %v4784, 4294901760
  %5649 = vmatpush2.msra.mxu0 %v5648
  %5650 = vmatprep.subr.mxu0 0.0
  %v5651 = vand.u32 %v4783, 4294901760
  %5652 = vmatpush2.msra.mxu0 %v5651
  %5653 = vmatprep.subr.mxu0 0.0
  %v5654 = vand.u32 %v4782, 4294901760
  %5655 = vmatpush2.msra.mxu0 %v5654
  %5656 = vmatprep.subr.mxu0 0.0
  %v5657 = vand.u32 %v4781, 4294901760
  %5658 = vmatpush2.msra.mxu0 %v5657
  %5659 = vmatprep.subr.mxu0 0.0
  %v5660 = vand.u32 %v4780, 4294901760
  %5661 = vmatpush2.msra.mxu0 %v5660
  %5662 = vmatprep.subr.mxu0 0.0
  %v5663 = vand.u32 %v4779, 4294901760
  %5664 = vmatpush2.msra.mxu0 %v5663
  %5665 = vmatprep.subr.mxu0 0.0
  %v5666 = vand.u32 %v4778, 4294901760
  %5667 = vmatpush2.msra.mxu0 %v5666
  %5668 = vmatprep.subr.mxu0 0.0
  %v5669 = vand.u32 %v4777, 4294901760
  %5670 = vmatpush2.msra.mxu0 %v5669
  %5671 = vmatprep.subr.mxu0 0.0
  %v5672 = vand.u32 %v4776, 4294901760
  %5673 = vmatpush2.msra.mxu0 %v5672
  %5674 = vmatprep.subr.mxu0 0.0
  %v5675 = vand.u32 %v4775, 4294901760
  %5676 = vmatpush2.msra.mxu0 %v5675
  %v5677 = vand.u32 %v4756, 4294901760
  %5678 = vmatprep.mubr.f32.mxu0 %v5677
  %v5679 = vand.u32 %v4755, 4294901760
  %5680 = vmatmul.mubr.f32.gmra.mxu0 %v5679
  %v5681 = vpop.f32.mrf.mxu0
  %v5682 = vadd.f32 %v5578, %v5681
  %v5683 = vpop.f32.mrf.mxu0
  %5684 = vdwg.mxu0
  %5685 = vmatprep.subr.mxu0 0.0
  %v5686 = vand.u32 %v4806, 4294901760
  %5687 = vmatpush1.msra.mxu0 %v5686
  %5688 = vmatprep.subr.mxu0 0.0
  %v5689 = vand.u32 %v4805, 4294901760
  %5690 = vmatpush1.msra.mxu0 %v5689
  %5691 = vmatprep.subr.mxu0 0.0
  %v5692 = vand.u32 %v4804, 4294901760
  %5693 = vmatpush1.msra.mxu0 %v5692
  %5694 = vmatprep.subr.mxu0 0.0
  %v5695 = vand.u32 %v4803, 4294901760
  %5696 = vmatpush1.msra.mxu0 %v5695
  %5697 = vmatprep.subr.mxu0 0.0
  %v5698 = vand.u32 %v4802, 4294901760
  %5699 = vmatpush1.msra.mxu0 %v5698
  %5700 = vmatprep.subr.mxu0 0.0
  %v5701 = vand.u32 %v4801, 4294901760
  %5702 = vmatpush1.msra.mxu0 %v5701
  %5703 = vmatprep.subr.mxu0 0.0
  %v5704 = vand.u32 %v4800, 4294901760
  %5705 = vmatpush1.msra.mxu0 %v5704
  %5706 = vmatprep.subr.mxu0 0.0
  %v5707 = vand.u32 %v4799, 4294901760
  %5708 = vmatpush1.msra.mxu0 %v5707
  %5709 = vmatprep.subr.mxu0 0.0
  %v5710 = vand.u32 %v4798, 4294901760
  %5711 = vmatpush1.msra.mxu0 %v5710
  %5712 = vmatprep.subr.mxu0 0.0
  %v5713 = vand.u32 %v4797, 4294901760
  %5714 = vmatpush1.msra.mxu0 %v5713
  %5715 = vmatprep.subr.mxu0 0.0
  %v5716 = vand.u32 %v4796, 4294901760
  %5717 = vmatpush1.msra.mxu0 %v5716
  %5718 = vmatprep.subr.mxu0 0.0
  %v5719 = vand.u32 %v4795, 4294901760
  %5720 = vmatpush1.msra.mxu0 %v5719
  %5721 = vmatprep.subr.mxu0 0.0
  %v5722 = vand.u32 %v4794, 4294901760
  %5723 = vmatpush1.msra.mxu0 %v5722
  %5724 = vmatprep.subr.mxu0 0.0
  %v5725 = vand.u32 %v4793, 4294901760
  %5726 = vmatpush1.msra.mxu0 %v5725
  %5727 = vmatprep.subr.mxu0 0.0
  %v5728 = vand.u32 %v4792, 4294901760
  %5729 = vmatpush1.msra.mxu0 %v5728
  %5730 = vmatprep.subr.mxu0 0.0
  %v5731 = vand.u32 %v4791, 4294901760
  %5732 = vmatpush1.msra.mxu0 %v5731
  %5733 = vmatprep.subr.mxu0 0.0
  %v5734 = vand.u32 %v4822, 4294901760
  %5735 = vmatpush2.msra.mxu0 %v5734
  %5736 = vmatprep.subr.mxu0 0.0
  %v5737 = vand.u32 %v4821, 4294901760
  %5738 = vmatpush2.msra.mxu0 %v5737
  %5739 = vmatprep.subr.mxu0 0.0
  %v5740 = vand.u32 %v4820, 4294901760
  %5741 = vmatpush2.msra.mxu0 %v5740
  %5742 = vmatprep.subr.mxu0 0.0
  %v5743 = vand.u32 %v4819, 4294901760
  %5744 = vmatpush2.msra.mxu0 %v5743
  %5745 = vmatprep.subr.mxu0 0.0
  %v5746 = vand.u32 %v4818, 4294901760
  %5747 = vmatpush2.msra.mxu0 %v5746
  %5748 = vmatprep.subr.mxu0 0.0
  %v5749 = vand.u32 %v4817, 4294901760
  %5750 = vmatpush2.msra.mxu0 %v5749
  %5751 = vmatprep.subr.mxu0 0.0
  %v5752 = vand.u32 %v4816, 4294901760
  %5753 = vmatpush2.msra.mxu0 %v5752
  %5754 = vmatprep.subr.mxu0 0.0
  %v5755 = vand.u32 %v4815, 4294901760
  %5756 = vmatpush2.msra.mxu0 %v5755
  %5757 = vmatprep.subr.mxu0 0.0
  %v5758 = vand.u32 %v4814, 4294901760
  %5759 = vmatpush2.msra.mxu0 %v5758
  %5760 = vmatprep.subr.mxu0 0.0
  %v5761 = vand.u32 %v4813, 4294901760
  %5762 = vmatpush2.msra.mxu0 %v5761
  %5763 = vmatprep.subr.mxu0 0.0
  %v5764 = vand.u32 %v4812, 4294901760
  %5765 = vmatpush2.msra.mxu0 %v5764
  %5766 = vmatprep.subr.mxu0 0.0
  %v5767 = vand.u32 %v4811, 4294901760
  %5768 = vmatpush2.msra.mxu0 %v5767
  %5769 = vmatprep.subr.mxu0 0.0
  %v5770 = vand.u32 %v4810, 4294901760
  %5771 = vmatpush2.msra.mxu0 %v5770
  %5772 = vmatprep.subr.mxu0 0.0
  %v5773 = vand.u32 %v4809, 4294901760
  %5774 = vmatpush2.msra.mxu0 %v5773
  %5775 = vmatprep.subr.mxu0 0.0
  %v5776 = vand.u32 %v4808, 4294901760
  %5777 = vmatpush2.msra.mxu0 %v5776
  %5778 = vmatprep.subr.mxu0 0.0
  %v5779 = vand.u32 %v4807, 4294901760
  %5780 = vmatpush2.msra.mxu0 %v5779
  %v5781 = vand.u32 %v4758, 4294901760
  %v5782 = vsub.f32 %v4758, %v5781
  %v5783 = vand.u32 %v5782, 4294901760
  %v5784 = vsub.f32 %v5782, %v5783
  %v5785 = vand.u32 %v5784, 4294901760
  %5786 = vmatprep.mubr.f32.mxu0 %v5785
  %v5787 = vand.u32 %v4757, 4294901760
  %v5788 = vsub.f32 %v4757, %v5787
  %v5789 = vand.u32 %v5788, 4294901760
  %v5790 = vsub.f32 %v5788, %v5789
  %v5791 = vand.u32 %v5790, 4294901760
  %5792 = vmatmul.mubr.f32.gmra.mxu0 %v5791
  %v5793 = vpop.f32.mrf.mxu0
  %v5794 = vadd.f32 %v5682, %v5793
  %v5795 = vpop.f32.mrf.mxu0
  %5796 = vdwg.mxu0
  %5797 = vmatprep.subr.mxu0 0.0
  %v5798 = vand.u32 %v4806, 4294901760
  %v5799 = vsub.f32 %v4806, %v5798
  %v5800 = vand.u32 %v5799, 4294901760
  %v5801 = vsub.f32 %v5799, %v5800
  %v5802 = vand.u32 %v5801, 4294901760
  %5803 = vmatpush1.msra.mxu0 %v5802
  %5804 = vmatprep.subr.mxu0 0.0
  %v5805 = vand.u32 %v4805, 4294901760
  %v5806 = vsub.f32 %v4805, %v5805
  %v5807 = vand.u32 %v5806, 4294901760
  %v5808 = vsub.f32 %v5806, %v5807
  %v5809 = vand.u32 %v5808, 4294901760
  %5810 = vmatpush1.msra.mxu0 %v5809
  %5811 = vmatprep.subr.mxu0 0.0
  %v5812 = vand.u32 %v4804, 4294901760
  %v5813 = vsub.f32 %v4804, %v5812
  %v5814 = vand.u32 %v5813, 4294901760
  %v5815 = vsub.f32 %v5813, %v5814
  %v5816 = vand.u32 %v5815, 4294901760
  %5817 = vmatpush1.msra.mxu0 %v5816
  %5818 = vmatprep.subr.mxu0 0.0
  %v5819 = vand.u32 %v4803, 4294901760
  %v5820 = vsub.f32 %v4803, %v5819
  %v5821 = vand.u32 %v5820, 4294901760
  %v5822 = vsub.f32 %v5820, %v5821
  %v5823 = vand.u32 %v5822, 4294901760
  %5824 = vmatpush1.msra.mxu0 %v5823
  %5825 = vmatprep.subr.mxu0 0.0
  %v5826 = vand.u32 %v4802, 4294901760
  %v5827 = vsub.f32 %v4802, %v5826
  %v5828 = vand.u32 %v5827, 4294901760
  %v5829 = vsub.f32 %v5827, %v5828
  %v5830 = vand.u32 %v5829, 4294901760
  %5831 = vmatpush1.msra.mxu0 %v5830
  %5832 = vmatprep.subr.mxu0 0.0
  %v5833 = vand.u32 %v4801, 4294901760
  %v5834 = vsub.f32 %v4801, %v5833
  %v5835 = vand.u32 %v5834, 4294901760
  %v5836 = vsub.f32 %v5834, %v5835
  %v5837 = vand.u32 %v5836, 4294901760
  %5838 = vmatpush1.msra.mxu0 %v5837
  %5839 = vmatprep.subr.mxu0 0.0
  %v5840 = vand.u32 %v4800, 4294901760
  %v5841 = vsub.f32 %v4800, %v5840
  %v5842 = vand.u32 %v5841, 4294901760
  %v5843 = vsub.f32 %v5841, %v5842
  %v5844 = vand.u32 %v5843, 4294901760
  %5845 = vmatpush1.msra.mxu0 %v5844
  %5846 = vmatprep.subr.mxu0 0.0
  %v5847 = vand.u32 %v4799, 4294901760
  %v5848 = vsub.f32 %v4799, %v5847
  %v5849 = vand.u32 %v5848, 4294901760
  %v5850 = vsub.f32 %v5848, %v5849
  %v5851 = vand.u32 %v5850, 4294901760
  %5852 = vmatpush1.msra.mxu0 %v5851
  %5853 = vmatprep.subr.mxu0 0.0
  %v5854 = vand.u32 %v4798, 4294901760
  %v5855 = vsub.f32 %v4798, %v5854
  %v5856 = vand.u32 %v5855, 4294901760
  %v5857 = vsub.f32 %v5855, %v5856
  %v5858 = vand.u32 %v5857, 4294901760
  %5859 = vmatpush1.msra.mxu0 %v5858
  %5860 = vmatprep.subr.mxu0 0.0
  %v5861 = vand.u32 %v4797, 4294901760
  %v5862 = vsub.f32 %v4797, %v5861
  %v5863 = vand.u32 %v5862, 4294901760
  %v5864 = vsub.f32 %v5862, %v5863
  %v5865 = vand.u32 %v5864, 4294901760
  %5866 = vmatpush1.msra.mxu0 %v5865
  %5867 = vmatprep.subr.mxu0 0.0
  %v5868 = vand.u32 %v4796, 4294901760
  %v5869 = vsub.f32 %v4796, %v5868
  %v5870 = vand.u32 %v5869, 4294901760
  %v5871 = vsub.f32 %v5869, %v5870
  %v5872 = vand.u32 %v5871, 4294901760
  %5873 = vmatpush1.msra.mxu0 %v5872
  %5874 = vmatprep.subr.mxu0 0.0
  %v5875 = vand.u32 %v4795, 4294901760
  %v5876 = vsub.f32 %v4795, %v5875
  %v5877 = vand.u32 %v5876, 4294901760
  %v5878 = vsub.f32 %v5876, %v5877
  %v5879 = vand.u32 %v5878, 4294901760
  %5880 = vmatpush1.msra.mxu0 %v5879
  %5881 = vmatprep.subr.mxu0 0.0
  %v5882 = vand.u32 %v4794, 4294901760
  %v5883 = vsub.f32 %v4794, %v5882
  %v5884 = vand.u32 %v5883, 4294901760
  %v5885 = vsub.f32 %v5883, %v5884
  %v5886 = vand.u32 %v5885, 4294901760
  %5887 = vmatpush1.msra.mxu0 %v5886
  %5888 = vmatprep.subr.mxu0 0.0
  %v5889 = vand.u32 %v4793, 4294901760
  %v5890 = vsub.f32 %v4793, %v5889
  %v5891 = vand.u32 %v5890, 4294901760
  %v5892 = vsub.f32 %v5890, %v5891
  %v5893 = vand.u32 %v5892, 4294901760
  %5894 = vmatpush1.msra.mxu0 %v5893
  %5895 = vmatprep.subr.mxu0 0.0
  %v5896 = vand.u32 %v4792, 4294901760
  %v5897 = vsub.f32 %v4792, %v5896
  %v5898 = vand.u32 %v5897, 4294901760
  %v5899 = vsub.f32 %v5897, %v5898
  %v5900 = vand.u32 %v5899, 4294901760
  %5901 = vmatpush1.msra.mxu0 %v5900
  %5902 = vmatprep.subr.mxu0 0.0
  %v5903 = vand.u32 %v4791, 4294901760
  %v5904 = vsub.f32 %v4791, %v5903
  %v5905 = vand.u32 %v5904, 4294901760
  %v5906 = vsub.f32 %v5904, %v5905
  %v5907 = vand.u32 %v5906, 4294901760
  %5908 = vmatpush1.msra.mxu0 %v5907
  %5909 = vmatprep.subr.mxu0 0.0
  %v5910 = vand.u32 %v4822, 4294901760
  %v5911 = vsub.f32 %v4822, %v5910
  %v5912 = vand.u32 %v5911, 4294901760
  %v5913 = vsub.f32 %v5911, %v5912
  %v5914 = vand.u32 %v5913, 4294901760
  %5915 = vmatpush2.msra.mxu0 %v5914
  %5916 = vmatprep.subr.mxu0 0.0
  %v5917 = vand.u32 %v4821, 4294901760
  %v5918 = vsub.f32 %v4821, %v5917
  %v5919 = vand.u32 %v5918, 4294901760
  %v5920 = vsub.f32 %v5918, %v5919
  %v5921 = vand.u32 %v5920, 4294901760
  %5922 = vmatpush2.msra.mxu0 %v5921
  %5923 = vmatprep.subr.mxu0 0.0
  %v5924 = vand.u32 %v4820, 4294901760
  %v5925 = vsub.f32 %v4820, %v5924
  %v5926 = vand.u32 %v5925, 4294901760
  %v5927 = vsub.f32 %v5925, %v5926
  %v5928 = vand.u32 %v5927, 4294901760
  %5929 = vmatpush2.msra.mxu0 %v5928
  %5930 = vmatprep.subr.mxu0 0.0
  %v5931 = vand.u32 %v4819, 4294901760
  %v5932 = vsub.f32 %v4819, %v5931
  %v5933 = vand.u32 %v5932, 4294901760
  %v5934 = vsub.f32 %v5932, %v5933
  %v5935 = vand.u32 %v5934, 4294901760
  %5936 = vmatpush2.msra.mxu0 %v5935
  %5937 = vmatprep.subr.mxu0 0.0
  %v5938 = vand.u32 %v4818, 4294901760
  %v5939 = vsub.f32 %v4818, %v5938
  %v5940 = vand.u32 %v5939, 4294901760
  %v5941 = vsub.f32 %v5939, %v5940
  %v5942 = vand.u32 %v5941, 4294901760
  %5943 = vmatpush2.msra.mxu0 %v5942
  %5944 = vmatprep.subr.mxu0 0.0
  %v5945 = vand.u32 %v4817, 4294901760
  %v5946 = vsub.f32 %v4817, %v5945
  %v5947 = vand.u32 %v5946, 4294901760
  %v5948 = vsub.f32 %v5946, %v5947
  %v5949 = vand.u32 %v5948, 4294901760
  %5950 = vmatpush2.msra.mxu0 %v5949
  %5951 = vmatprep.subr.mxu0 0.0
  %v5952 = vand.u32 %v4816, 4294901760
  %v5953 = vsub.f32 %v4816, %v5952
  %v5954 = vand.u32 %v5953, 4294901760
  %v5955 = vsub.f32 %v5953, %v5954
  %v5956 = vand.u32 %v5955, 4294901760
  %5957 = vmatpush2.msra.mxu0 %v5956
  %5958 = vmatprep.subr.mxu0 0.0
  %v5959 = vand.u32 %v4815, 4294901760
  %v5960 = vsub.f32 %v4815, %v5959
  %v5961 = vand.u32 %v5960, 4294901760
  %v5962 = vsub.f32 %v5960, %v5961
  %v5963 = vand.u32 %v5962, 4294901760
  %5964 = vmatpush2.msra.mxu0 %v5963
  %5965 = vmatprep.subr.mxu0 0.0
  %v5966 = vand.u32 %v4814, 4294901760
  %v5967 = vsub.f32 %v4814, %v5966
  %v5968 = vand.u32 %v5967, 4294901760
  %v5969 = vsub.f32 %v5967, %v5968
  %v5970 = vand.u32 %v5969, 4294901760
  %5971 = vmatpush2.msra.mxu0 %v5970
  %5972 = vmatprep.subr.mxu0 0.0
  %v5973 = vand.u32 %v4813, 4294901760
  %v5974 = vsub.f32 %v4813, %v5973
  %v5975 = vand.u32 %v5974, 4294901760
  %v5976 = vsub.f32 %v5974, %v5975
  %v5977 = vand.u32 %v5976, 4294901760
  %5978 = vmatpush2.msra.mxu0 %v5977
  %5979 = vmatprep.subr.mxu0 0.0
  %v5980 = vand.u32 %v4812, 4294901760
  %v5981 = vsub.f32 %v4812, %v5980
  %v5982 = vand.u32 %v5981, 4294901760
  %v5983 = vsub.f32 %v5981, %v5982
  %v5984 = vand.u32 %v5983, 4294901760
  %5985 = vmatpush2.msra.mxu0 %v5984
  %5986 = vmatprep.subr.mxu0 0.0
  %v5987 = vand.u32 %v4811, 4294901760
  %v5988 = vsub.f32 %v4811, %v5987
  %v5989 = vand.u32 %v5988, 4294901760
  %v5990 = vsub.f32 %v5988, %v5989
  %v5991 = vand.u32 %v5990, 4294901760
  %5992 = vmatpush2.msra.mxu0 %v5991
  %5993 = vmatprep.subr.mxu0 0.0
  %v5994 = vand.u32 %v4810, 4294901760
  %v5995 = vsub.f32 %v4810, %v5994
  %v5996 = vand.u32 %v5995, 4294901760
  %v5997 = vsub.f32 %v5995, %v5996
  %v5998 = vand.u32 %v5997, 4294901760
  %5999 = vmatpush2.msra.mxu0 %v5998
  %6000 = vmatprep.subr.mxu0 0.0
  %v6001 = vand.u32 %v4809, 4294901760
  %v6002 = vsub.f32 %v4809, %v6001
  %v6003 = vand.u32 %v6002, 4294901760
  %v6004 = vsub.f32 %v6002, %v6003
  %v6005 = vand.u32 %v6004, 4294901760
  %6006 = vmatpush2.msra.mxu0 %v6005
  %6007 = vmatprep.subr.mxu0 0.0
  %v6008 = vand.u32 %v4808, 4294901760
  %v6009 = vsub.f32 %v4808, %v6008
  %v6010 = vand.u32 %v6009, 4294901760
  %v6011 = vsub.f32 %v6009, %v6010
  %v6012 = vand.u32 %v6011, 4294901760
  %6013 = vmatpush2.msra.mxu0 %v6012
  %6014 = vmatprep.subr.mxu0 0.0
  %v6015 = vand.u32 %v4807, 4294901760
  %v6016 = vsub.f32 %v4807, %v6015
  %v6017 = vand.u32 %v6016, 4294901760
  %v6018 = vsub.f32 %v6016, %v6017
  %v6019 = vand.u32 %v6018, 4294901760
  %6020 = vmatpush2.msra.mxu0 %v6019
  %v6021 = vand.u32 %v4758, 4294901760
  %6022 = vmatprep.mubr.f32.mxu0 %v6021
  %v6023 = vand.u32 %v4757, 4294901760
  %6024 = vmatmul.mubr.f32.gmra.mxu0 %v6023
  %v6025 = vpop.f32.mrf.mxu0
  %v6026 = vadd.f32 %v5794, %v6025
  %v6027 = vpop.f32.mrf.mxu0
  %6028 = vdwg.mxu0
  %6029 = vmatprep.subr.mxu0 0.0
  %v6030 = vand.u32 %v4806, 4294901760
  %v6031 = vsub.f32 %v4806, %v6030
  %6032 = vmatpush1.msra.mxu0 %v6031
  %6033 = vmatprep.subr.mxu0 0.0
  %v6034 = vand.u32 %v4805, 4294901760
  %v6035 = vsub.f32 %v4805, %v6034
  %6036 = vmatpush1.msra.mxu0 %v6035
  %6037 = vmatprep.subr.mxu0 0.0
  %v6038 = vand.u32 %v4804, 4294901760
  %v6039 = vsub.f32 %v4804, %v6038
  %6040 = vmatpush1.msra.mxu0 %v6039
  %6041 = vmatprep.subr.mxu0 0.0
  %v6042 = vand.u32 %v4803, 4294901760
  %v6043 = vsub.f32 %v4803, %v6042
  %6044 = vmatpush1.msra.mxu0 %v6043
  %6045 = vmatprep.subr.mxu0 0.0
  %v6046 = vand.u32 %v4802, 4294901760
  %v6047 = vsub.f32 %v4802, %v6046
  %6048 = vmatpush1.msra.mxu0 %v6047
  %6049 = vmatprep.subr.mxu0 0.0
  %v6050 = vand.u32 %v4801, 4294901760
  %v6051 = vsub.f32 %v4801, %v6050
  %6052 = vmatpush1.msra.mxu0 %v6051
  %6053 = vmatprep.subr.mxu0 0.0
  %v6054 = vand.u32 %v4800, 4294901760
  %v6055 = vsub.f32 %v4800, %v6054
  %6056 = vmatpush1.msra.mxu0 %v6055
  %6057 = vmatprep.subr.mxu0 0.0
  %v6058 = vand.u32 %v4799, 4294901760
  %v6059 = vsub.f32 %v4799, %v6058
  %6060 = vmatpush1.msra.mxu0 %v6059
  %6061 = vmatprep.subr.mxu0 0.0
  %v6062 = vand.u32 %v4798, 4294901760
  %v6063 = vsub.f32 %v4798, %v6062
  %6064 = vmatpush1.msra.mxu0 %v6063
  %6065 = vmatprep.subr.mxu0 0.0
  %v6066 = vand.u32 %v4797, 4294901760
  %v6067 = vsub.f32 %v4797, %v6066
  %6068 = vmatpush1.msra.mxu0 %v6067
  %6069 = vmatprep.subr.mxu0 0.0
  %v6070 = vand.u32 %v4796, 4294901760
  %v6071 = vsub.f32 %v4796, %v6070
  %6072 = vmatpush1.msra.mxu0 %v6071
  %6073 = vmatprep.subr.mxu0 0.0
  %v6074 = vand.u32 %v4795, 4294901760
  %v6075 = vsub.f32 %v4795, %v6074
  %6076 = vmatpush1.msra.mxu0 %v6075
  %6077 = vmatprep.subr.mxu0 0.0
  %v6078 = vand.u32 %v4794, 4294901760
  %v6079 = vsub.f32 %v4794, %v6078
  %6080 = vmatpush1.msra.mxu0 %v6079
  %6081 = vmatprep.subr.mxu0 0.0
  %v6082 = vand.u32 %v4793, 4294901760
  %v6083 = vsub.f32 %v4793, %v6082
  %6084 = vmatpush1.msra.mxu0 %v6083
  %6085 = vmatprep.subr.mxu0 0.0
  %v6086 = vand.u32 %v4792, 4294901760
  %v6087 = vsub.f32 %v4792, %v6086
  %6088 = vmatpush1.msra.mxu0 %v6087
  %6089 = vmatprep.subr.mxu0 0.0
  %v6090 = vand.u32 %v4791, 4294901760
  %v6091 = vsub.f32 %v4791, %v6090
  %6092 = vmatpush1.msra.mxu0 %v6091
  %6093 = vmatprep.subr.mxu0 0.0
  %v6094 = vand.u32 %v4822, 4294901760
  %v6095 = vsub.f32 %v4822, %v6094
  %6096 = vmatpush2.msra.mxu0 %v6095
  %6097 = vmatprep.subr.mxu0 0.0
  %v6098 = vand.u32 %v4821, 4294901760
  %v6099 = vsub.f32 %v4821, %v6098
  %6100 = vmatpush2.msra.mxu0 %v6099
  %6101 = vmatprep.subr.mxu0 0.0
  %v6102 = vand.u32 %v4820, 4294901760
  %v6103 = vsub.f32 %v4820, %v6102
  %6104 = vmatpush2.msra.mxu0 %v6103
  %6105 = vmatprep.subr.mxu0 0.0
  %v6106 = vand.u32 %v4819, 4294901760
  %v6107 = vsub.f32 %v4819, %v6106
  %6108 = vmatpush2.msra.mxu0 %v6107
  %6109 = vmatprep.subr.mxu0 0.0
  %v6110 = vand.u32 %v4818, 4294901760
  %v6111 = vsub.f32 %v4818, %v6110
  %6112 = vmatpush2.msra.mxu0 %v6111
  %6113 = vmatprep.subr.mxu0 0.0
  %v6114 = vand.u32 %v4817, 4294901760
  %v6115 = vsub.f32 %v4817, %v6114
  %6116 = vmatpush2.msra.mxu0 %v6115
  %6117 = vmatprep.subr.mxu0 0.0
  %v6118 = vand.u32 %v4816, 4294901760
  %v6119 = vsub.f32 %v4816, %v6118
  %6120 = vmatpush2.msra.mxu0 %v6119
  %6121 = vmatprep.subr.mxu0 0.0
  %v6122 = vand.u32 %v4815, 4294901760
  %v6123 = vsub.f32 %v4815, %v6122
  %6124 = vmatpush2.msra.mxu0 %v6123
  %6125 = vmatprep.subr.mxu0 0.0
  %v6126 = vand.u32 %v4814, 4294901760
  %v6127 = vsub.f32 %v4814, %v6126
  %6128 = vmatpush2.msra.mxu0 %v6127
  %6129 = vmatprep.subr.mxu0 0.0
  %v6130 = vand.u32 %v4813, 4294901760
  %v6131 = vsub.f32 %v4813, %v6130
  %6132 = vmatpush2.msra.mxu0 %v6131
  %6133 = vmatprep.subr.mxu0 0.0
  %v6134 = vand.u32 %v4812, 4294901760
  %v6135 = vsub.f32 %v4812, %v6134
  %6136 = vmatpush2.msra.mxu0 %v6135
  %6137 = vmatprep.subr.mxu0 0.0
  %v6138 = vand.u32 %v4811, 4294901760
  %v6139 = vsub.f32 %v4811, %v6138
  %6140 = vmatpush2.msra.mxu0 %v6139
  %6141 = vmatprep.subr.mxu0 0.0
  %v6142 = vand.u32 %v4810, 4294901760
  %v6143 = vsub.f32 %v4810, %v6142
  %6144 = vmatpush2.msra.mxu0 %v6143
  %6145 = vmatprep.subr.mxu0 0.0
  %v6146 = vand.u32 %v4809, 4294901760
  %v6147 = vsub.f32 %v4809, %v6146
  %6148 = vmatpush2.msra.mxu0 %v6147
  %6149 = vmatprep.subr.mxu0 0.0
  %v6150 = vand.u32 %v4808, 4294901760
  %v6151 = vsub.f32 %v4808, %v6150
  %6152 = vmatpush2.msra.mxu0 %v6151
  %6153 = vmatprep.subr.mxu0 0.0
  %v6154 = vand.u32 %v4807, 4294901760
  %v6155 = vsub.f32 %v4807, %v6154
  %6156 = vmatpush2.msra.mxu0 %v6155
  %v6157 = vand.u32 %v4758, 4294901760
  %v6158 = vsub.f32 %v4758, %v6157
  %6159 = vmatprep.mubr.f32.mxu0 %v6158
  %v6160 = vand.u32 %v4757, 4294901760
  %v6161 = vsub.f32 %v4757, %v6160
  %6162 = vmatmul.mubr.f32.gmra.mxu0 %v6161
  %v6163 = vpop.f32.mrf.mxu0
  %v6164 = vadd.f32 %v6026, %v6163
  %v6165 = vpop.f32.mrf.mxu0
  %6166 = vdwg.mxu0
  %6167 = vmatprep.subr.mxu0 0.0
  %v6168 = vand.u32 %v4806, 4294901760
  %6169 = vmatpush1.msra.mxu0 %v6168
  %6170 = vmatprep.subr.mxu0 0.0
  %v6171 = vand.u32 %v4805, 4294901760
  %6172 = vmatpush1.msra.mxu0 %v6171
  %6173 = vmatprep.subr.mxu0 0.0
  %v6174 = vand.u32 %v4804, 4294901760
  %6175 = vmatpush1.msra.mxu0 %v6174
  %6176 = vmatprep.subr.mxu0 0.0
  %v6177 = vand.u32 %v4803, 4294901760
  %6178 = vmatpush1.msra.mxu0 %v6177
  %6179 = vmatprep.subr.mxu0 0.0
  %v6180 = vand.u32 %v4802, 4294901760
  %6181 = vmatpush1.msra.mxu0 %v6180
  %6182 = vmatprep.subr.mxu0 0.0
  %v6183 = vand.u32 %v4801, 4294901760
  %6184 = vmatpush1.msra.mxu0 %v6183
  %6185 = vmatprep.subr.mxu0 0.0
  %v6186 = vand.u32 %v4800, 4294901760
  %6187 = vmatpush1.msra.mxu0 %v6186
  %6188 = vmatprep.subr.mxu0 0.0
  %v6189 = vand.u32 %v4799, 4294901760
  %6190 = vmatpush1.msra.mxu0 %v6189
  %6191 = vmatprep.subr.mxu0 0.0
  %v6192 = vand.u32 %v4798, 4294901760
  %6193 = vmatpush1.msra.mxu0 %v6192
  %6194 = vmatprep.subr.mxu0 0.0
  %v6195 = vand.u32 %v4797, 4294901760
  %6196 = vmatpush1.msra.mxu0 %v6195
  %6197 = vmatprep.subr.mxu0 0.0
  %v6198 = vand.u32 %v4796, 4294901760
  %6199 = vmatpush1.msra.mxu0 %v6198
  %6200 = vmatprep.subr.mxu0 0.0
  %v6201 = vand.u32 %v4795, 4294901760
  %6202 = vmatpush1.msra.mxu0 %v6201
  %6203 = vmatprep.subr.mxu0 0.0
  %v6204 = vand.u32 %v4794, 4294901760
  %6205 = vmatpush1.msra.mxu0 %v6204
  %6206 = vmatprep.subr.mxu0 0.0
  %v6207 = vand.u32 %v4793, 4294901760
  %6208 = vmatpush1.msra.mxu0 %v6207
  %6209 = vmatprep.subr.mxu0 0.0
  %v6210 = vand.u32 %v4792, 4294901760
  %6211 = vmatpush1.msra.mxu0 %v6210
  %6212 = vmatprep.subr.mxu0 0.0
  %v6213 = vand.u32 %v4791, 4294901760
  %6214 = vmatpush1.msra.mxu0 %v6213
  %6215 = vmatprep.subr.mxu0 0.0
  %v6216 = vand.u32 %v4822, 4294901760
  %6217 = vmatpush2.msra.mxu0 %v6216
  %6218 = vmatprep.subr.mxu0 0.0
  %v6219 = vand.u32 %v4821, 4294901760
  %6220 = vmatpush2.msra.mxu0 %v6219
  %6221 = vmatprep.subr.mxu0 0.0
  %v6222 = vand.u32 %v4820, 4294901760
  %6223 = vmatpush2.msra.mxu0 %v6222
  %6224 = vmatprep.subr.mxu0 0.0
  %v6225 = vand.u32 %v4819, 4294901760
  %6226 = vmatpush2.msra.mxu0 %v6225
  %6227 = vmatprep.subr.mxu0 0.0
  %v6228 = vand.u32 %v4818, 4294901760
  %6229 = vmatpush2.msra.mxu0 %v6228
  %6230 = vmatprep.subr.mxu0 0.0
  %v6231 = vand.u32 %v4817, 4294901760
  %6232 = vmatpush2.msra.mxu0 %v6231
  %6233 = vmatprep.subr.mxu0 0.0
  %v6234 = vand.u32 %v4816, 4294901760
  %6235 = vmatpush2.msra.mxu0 %v6234
  %6236 = vmatprep.subr.mxu0 0.0
  %v6237 = vand.u32 %v4815, 4294901760
  %6238 = vmatpush2.msra.mxu0 %v6237
  %6239 = vmatprep.subr.mxu0 0.0
  %v6240 = vand.u32 %v4814, 4294901760
  %6241 = vmatpush2.msra.mxu0 %v6240
  %6242 = vmatprep.subr.mxu0 0.0
  %v6243 = vand.u32 %v4813, 4294901760
  %6244 = vmatpush2.msra.mxu0 %v6243
  %6245 = vmatprep.subr.mxu0 0.0
  %v6246 = vand.u32 %v4812, 4294901760
  %6247 = vmatpush2.msra.mxu0 %v6246
  %6248 = vmatprep.subr.mxu0 0.0
  %v6249 = vand.u32 %v4811, 4294901760
  %6250 = vmatpush2.msra.mxu0 %v6249
  %6251 = vmatprep.subr.mxu0 0.0
  %v6252 = vand.u32 %v4810, 4294901760
  %6253 = vmatpush2.msra.mxu0 %v6252
  %6254 = vmatprep.subr.mxu0 0.0
  %v6255 = vand.u32 %v4809, 4294901760
  %6256 = vmatpush2.msra.mxu0 %v6255
  %6257 = vmatprep.subr.mxu0 0.0
  %v6258 = vand.u32 %v4808, 4294901760
  %6259 = vmatpush2.msra.mxu0 %v6258
  %6260 = vmatprep.subr.mxu0 0.0
  %v6261 = vand.u32 %v4807, 4294901760
  %6262 = vmatpush2.msra.mxu0 %v6261
  %v6263 = vand.u32 %v4758, 4294901760
  %v6264 = vsub.f32 %v4758, %v6263
  %v6265 = vand.u32 %v6264, 4294901760
  %6266 = vmatprep.mubr.f32.mxu0 %v6265
  %v6267 = vand.u32 %v4757, 4294901760
  %v6268 = vsub.f32 %v4757, %v6267
  %v6269 = vand.u32 %v6268, 4294901760
  %6270 = vmatmul.mubr.f32.gmra.mxu0 %v6269
  %v6271 = vpop.f32.mrf.mxu0
  %v6272 = vadd.f32 %v6164, %v6271
  %v6273 = vpop.f32.mrf.mxu0
  %6274 = vdwg.mxu0
  %6275 = vmatprep.subr.mxu0 0.0
  %v6276 = vand.u32 %v4806, 4294901760
  %v6277 = vsub.f32 %v4806, %v6276
  %v6278 = vand.u32 %v6277, 4294901760
  %6279 = vmatpush1.msra.mxu0 %v6278
  %6280 = vmatprep.subr.mxu0 0.0
  %v6281 = vand.u32 %v4805, 4294901760
  %v6282 = vsub.f32 %v4805, %v6281
  %v6283 = vand.u32 %v6282, 4294901760
  %6284 = vmatpush1.msra.mxu0 %v6283
  %6285 = vmatprep.subr.mxu0 0.0
  %v6286 = vand.u32 %v4804, 4294901760
  %v6287 = vsub.f32 %v4804, %v6286
  %v6288 = vand.u32 %v6287, 4294901760
  %6289 = vmatpush1.msra.mxu0 %v6288
  %6290 = vmatprep.subr.mxu0 0.0
  %v6291 = vand.u32 %v4803, 4294901760
  %v6292 = vsub.f32 %v4803, %v6291
  %v6293 = vand.u32 %v6292, 4294901760
  %6294 = vmatpush1.msra.mxu0 %v6293
  %6295 = vmatprep.subr.mxu0 0.0
  %v6296 = vand.u32 %v4802, 4294901760
  %v6297 = vsub.f32 %v4802, %v6296
  %v6298 = vand.u32 %v6297, 4294901760
  %6299 = vmatpush1.msra.mxu0 %v6298
  %6300 = vmatprep.subr.mxu0 0.0
  %v6301 = vand.u32 %v4801, 4294901760
  %v6302 = vsub.f32 %v4801, %v6301
  %v6303 = vand.u32 %v6302, 4294901760
  %6304 = vmatpush1.msra.mxu0 %v6303
  %6305 = vmatprep.subr.mxu0 0.0
  %v6306 = vand.u32 %v4800, 4294901760
  %v6307 = vsub.f32 %v4800, %v6306
  %v6308 = vand.u32 %v6307, 4294901760
  %6309 = vmatpush1.msra.mxu0 %v6308
  %6310 = vmatprep.subr.mxu0 0.0
  %v6311 = vand.u32 %v4799, 4294901760
  %v6312 = vsub.f32 %v4799, %v6311
  %v6313 = vand.u32 %v6312, 4294901760
  %6314 = vmatpush1.msra.mxu0 %v6313
  %6315 = vmatprep.subr.mxu0 0.0
  %v6316 = vand.u32 %v4798, 4294901760
  %v6317 = vsub.f32 %v4798, %v6316
  %v6318 = vand.u32 %v6317, 4294901760
  %6319 = vmatpush1.msra.mxu0 %v6318
  %6320 = vmatprep.subr.mxu0 0.0
  %v6321 = vand.u32 %v4797, 4294901760
  %v6322 = vsub.f32 %v4797, %v6321
  %v6323 = vand.u32 %v6322, 4294901760
  %6324 = vmatpush1.msra.mxu0 %v6323
  %6325 = vmatprep.subr.mxu0 0.0
  %v6326 = vand.u32 %v4796, 4294901760
  %v6327 = vsub.f32 %v4796, %v6326
  %v6328 = vand.u32 %v6327, 4294901760
  %6329 = vmatpush1.msra.mxu0 %v6328
  %6330 = vmatprep.subr.mxu0 0.0
  %v6331 = vand.u32 %v4795, 4294901760
  %v6332 = vsub.f32 %v4795, %v6331
  %v6333 = vand.u32 %v6332, 4294901760
  %6334 = vmatpush1.msra.mxu0 %v6333
  %6335 = vmatprep.subr.mxu0 0.0
  %v6336 = vand.u32 %v4794, 4294901760
  %v6337 = vsub.f32 %v4794, %v6336
  %v6338 = vand.u32 %v6337, 4294901760
  %6339 = vmatpush1.msra.mxu0 %v6338
  %6340 = vmatprep.subr.mxu0 0.0
  %v6341 = vand.u32 %v4793, 4294901760
  %v6342 = vsub.f32 %v4793, %v6341
  %v6343 = vand.u32 %v6342, 4294901760
  %6344 = vmatpush1.msra.mxu0 %v6343
  %6345 = vmatprep.subr.mxu0 0.0
  %v6346 = vand.u32 %v4792, 4294901760
  %v6347 = vsub.f32 %v4792, %v6346
  %v6348 = vand.u32 %v6347, 4294901760
  %6349 = vmatpush1.msra.mxu0 %v6348
  %6350 = vmatprep.subr.mxu0 0.0
  %v6351 = vand.u32 %v4791, 4294901760
  %v6352 = vsub.f32 %v4791, %v6351
  %v6353 = vand.u32 %v6352, 4294901760
  %6354 = vmatpush1.msra.mxu0 %v6353
  %6355 = vmatprep.subr.mxu0 0.0
  %v6356 = vand.u32 %v4822, 4294901760
  %v6357 = vsub.f32 %v4822, %v6356
  %v6358 = vand.u32 %v6357, 4294901760
  %6359 = vmatpush2.msra.mxu0 %v6358
  %6360 = vmatprep.subr.mxu0 0.0
  %v6361 = vand.u32 %v4821, 4294901760
  %v6362 = vsub.f32 %v4821, %v6361
  %v6363 = vand.u32 %v6362, 4294901760
  %6364 = vmatpush2.msra.mxu0 %v6363
  %6365 = vmatprep.subr.mxu0 0.0
  %v6366 = vand.u32 %v4820, 4294901760
  %v6367 = vsub.f32 %v4820, %v6366
  %v6368 = vand.u32 %v6367, 4294901760
  %6369 = vmatpush2.msra.mxu0 %v6368
  %6370 = vmatprep.subr.mxu0 0.0
  %v6371 = vand.u32 %v4819, 4294901760
  %v6372 = vsub.f32 %v4819, %v6371
  %v6373 = vand.u32 %v6372, 4294901760
  %6374 = vmatpush2.msra.mxu0 %v6373
  %6375 = vmatprep.subr.mxu0 0.0
  %v6376 = vand.u32 %v4818, 4294901760
  %v6377 = vsub.f32 %v4818, %v6376
  %v6378 = vand.u32 %v6377, 4294901760
  %6379 = vmatpush2.msra.mxu0 %v6378
  %6380 = vmatprep.subr.mxu0 0.0
  %v6381 = vand.u32 %v4817, 4294901760
  %v6382 = vsub.f32 %v4817, %v6381
  %v6383 = vand.u32 %v6382, 4294901760
  %6384 = vmatpush2.msra.mxu0 %v6383
  %6385 = vmatprep.subr.mxu0 0.0
  %v6386 = vand.u32 %v4816, 4294901760
  %v6387 = vsub.f32 %v4816, %v6386
  %v6388 = vand.u32 %v6387, 4294901760
  %6389 = vmatpush2.msra.mxu0 %v6388
  %6390 = vmatprep.subr.mxu0 0.0
  %v6391 = vand.u32 %v4815, 4294901760
  %v6392 = vsub.f32 %v4815, %v6391
  %v6393 = vand.u32 %v6392, 4294901760
  %6394 = vmatpush2.msra.mxu0 %v6393
  %6395 = vmatprep.subr.mxu0 0.0
  %v6396 = vand.u32 %v4814, 4294901760
  %v6397 = vsub.f32 %v4814, %v6396
  %v6398 = vand.u32 %v6397, 4294901760
  %6399 = vmatpush2.msra.mxu0 %v6398
  %6400 = vmatprep.subr.mxu0 0.0
  %v6401 = vand.u32 %v4813, 4294901760
  %v6402 = vsub.f32 %v4813, %v6401
  %v6403 = vand.u32 %v6402, 4294901760
  %6404 = vmatpush2.msra.mxu0 %v6403
  %6405 = vmatprep.subr.mxu0 0.0
  %v6406 = vand.u32 %v4812, 4294901760
  %v6407 = vsub.f32 %v4812, %v6406
  %v6408 = vand.u32 %v6407, 4294901760
  %6409 = vmatpush2.msra.mxu0 %v6408
  %6410 = vmatprep.subr.mxu0 0.0
  %v6411 = vand.u32 %v4811, 4294901760
  %v6412 = vsub.f32 %v4811, %v6411
  %v6413 = vand.u32 %v6412, 4294901760
  %6414 = vmatpush2.msra.mxu0 %v6413
  %6415 = vmatprep.subr.mxu0 0.0
  %v6416 = vand.u32 %v4810, 4294901760
  %v6417 = vsub.f32 %v4810, %v6416
  %v6418 = vand.u32 %v6417, 4294901760
  %6419 = vmatpush2.msra.mxu0 %v6418
  %6420 = vmatprep.subr.mxu0 0.0
  %v6421 = vand.u32 %v4809, 4294901760
  %v6422 = vsub.f32 %v4809, %v6421
  %v6423 = vand.u32 %v6422, 4294901760
  %6424 = vmatpush2.msra.mxu0 %v6423
  %6425 = vmatprep.subr.mxu0 0.0
  %v6426 = vand.u32 %v4808, 4294901760
  %v6427 = vsub.f32 %v4808, %v6426
  %v6428 = vand.u32 %v6427, 4294901760
  %6429 = vmatpush2.msra.mxu0 %v6428
  %6430 = vmatprep.subr.mxu0 0.0
  %v6431 = vand.u32 %v4807, 4294901760
  %v6432 = vsub.f32 %v4807, %v6431
  %v6433 = vand.u32 %v6432, 4294901760
  %6434 = vmatpush2.msra.mxu0 %v6433
  %v6435 = vand.u32 %v4758, 4294901760
  %6436 = vmatprep.mubr.f32.mxu0 %v6435
  %v6437 = vand.u32 %v4757, 4294901760
  %6438 = vmatmul.mubr.f32.gmra.mxu0 %v6437
  %v6439 = vpop.f32.mrf.mxu0
  %v6440 = vadd.f32 %v6272, %v6439
  %v6441 = vpop.f32.mrf.mxu0
  %6442 = vdwg.mxu0
  %6443 = vmatprep.subr.mxu0 0.0
  %v6444 = vand.u32 %v4806, 4294901760
  %6445 = vmatpush1.msra.mxu0 %v6444
  %6446 = vmatprep.subr.mxu0 0.0
  %v6447 = vand.u32 %v4805, 4294901760
  %6448 = vmatpush1.msra.mxu0 %v6447
  %6449 = vmatprep.subr.mxu0 0.0
  %v6450 = vand.u32 %v4804, 4294901760
  %6451 = vmatpush1.msra.mxu0 %v6450
  %6452 = vmatprep.subr.mxu0 0.0
  %v6453 = vand.u32 %v4803, 4294901760
  %6454 = vmatpush1.msra.mxu0 %v6453
  %6455 = vmatprep.subr.mxu0 0.0
  %v6456 = vand.u32 %v4802, 4294901760
  %6457 = vmatpush1.msra.mxu0 %v6456
  %6458 = vmatprep.subr.mxu0 0.0
  %v6459 = vand.u32 %v4801, 4294901760
  %6460 = vmatpush1.msra.mxu0 %v6459
  %6461 = vmatprep.subr.mxu0 0.0
  %v6462 = vand.u32 %v4800, 4294901760
  %6463 = vmatpush1.msra.mxu0 %v6462
  %6464 = vmatprep.subr.mxu0 0.0
  %v6465 = vand.u32 %v4799, 4294901760
  %6466 = vmatpush1.msra.mxu0 %v6465
  %6467 = vmatprep.subr.mxu0 0.0
  %v6468 = vand.u32 %v4798, 4294901760
  %6469 = vmatpush1.msra.mxu0 %v6468
  %6470 = vmatprep.subr.mxu0 0.0
  %v6471 = vand.u32 %v4797, 4294901760
  %6472 = vmatpush1.msra.mxu0 %v6471
  %6473 = vmatprep.subr.mxu0 0.0
  %v6474 = vand.u32 %v4796, 4294901760
  %6475 = vmatpush1.msra.mxu0 %v6474
  %6476 = vmatprep.subr.mxu0 0.0
  %v6477 = vand.u32 %v4795, 4294901760
  %6478 = vmatpush1.msra.mxu0 %v6477
  %6479 = vmatprep.subr.mxu0 0.0
  %v6480 = vand.u32 %v4794, 4294901760
  %6481 = vmatpush1.msra.mxu0 %v6480
  %6482 = vmatprep.subr.mxu0 0.0
  %v6483 = vand.u32 %v4793, 4294901760
  %6484 = vmatpush1.msra.mxu0 %v6483
  %6485 = vmatprep.subr.mxu0 0.0
  %v6486 = vand.u32 %v4792, 4294901760
  %6487 = vmatpush1.msra.mxu0 %v6486
  %6488 = vmatprep.subr.mxu0 0.0
  %v6489 = vand.u32 %v4791, 4294901760
  %6490 = vmatpush1.msra.mxu0 %v6489
  %6491 = vmatprep.subr.mxu0 0.0
  %v6492 = vand.u32 %v4822, 4294901760
  %6493 = vmatpush2.msra.mxu0 %v6492
  %6494 = vmatprep.subr.mxu0 0.0
  %v6495 = vand.u32 %v4821, 4294901760
  %6496 = vmatpush2.msra.mxu0 %v6495
  %6497 = vmatprep.subr.mxu0 0.0
  %v6498 = vand.u32 %v4820, 4294901760
  %6499 = vmatpush2.msra.mxu0 %v6498
  %6500 = vmatprep.subr.mxu0 0.0
  %v6501 = vand.u32 %v4819, 4294901760
  %6502 = vmatpush2.msra.mxu0 %v6501
  %6503 = vmatprep.subr.mxu0 0.0
  %v6504 = vand.u32 %v4818, 4294901760
  %6505 = vmatpush2.msra.mxu0 %v6504
  %6506 = vmatprep.subr.mxu0 0.0
  %v6507 = vand.u32 %v4817, 4294901760
  %6508 = vmatpush2.msra.mxu0 %v6507
  %6509 = vmatprep.subr.mxu0 0.0
  %v6510 = vand.u32 %v4816, 4294901760
  %6511 = vmatpush2.msra.mxu0 %v6510
  %6512 = vmatprep.subr.mxu0 0.0
  %v6513 = vand.u32 %v4815, 4294901760
  %6514 = vmatpush2.msra.mxu0 %v6513
  %6515 = vmatprep.subr.mxu0 0.0
  %v6516 = vand.u32 %v4814, 4294901760
  %6517 = vmatpush2.msra.mxu0 %v6516
  %6518 = vmatprep.subr.mxu0 0.0
  %v6519 = vand.u32 %v4813, 4294901760
  %6520 = vmatpush2.msra.mxu0 %v6519
  %6521 = vmatprep.subr.mxu0 0.0
  %v6522 = vand.u32 %v4812, 4294901760
  %6523 = vmatpush2.msra.mxu0 %v6522
  %6524 = vmatprep.subr.mxu0 0.0
  %v6525 = vand.u32 %v4811, 4294901760
  %6526 = vmatpush2.msra.mxu0 %v6525
  %6527 = vmatprep.subr.mxu0 0.0
  %v6528 = vand.u32 %v4810, 4294901760
  %6529 = vmatpush2.msra.mxu0 %v6528
  %6530 = vmatprep.subr.mxu0 0.0
  %v6531 = vand.u32 %v4809, 4294901760
  %6532 = vmatpush2.msra.mxu0 %v6531
  %6533 = vmatprep.subr.mxu0 0.0
  %v6534 = vand.u32 %v4808, 4294901760
  %6535 = vmatpush2.msra.mxu0 %v6534
  %6536 = vmatprep.subr.mxu0 0.0
  %v6537 = vand.u32 %v4807, 4294901760
  %6538 = vmatpush2.msra.mxu0 %v6537
  %v6539 = vand.u32 %v4758, 4294901760
  %6540 = vmatprep.mubr.f32.mxu0 %v6539
  %v6541 = vand.u32 %v4757, 4294901760
  %6542 = vmatmul.mubr.f32.gmra.mxu0 %v6541
  %v6543 = vpop.f32.mrf.mxu0
  %v6544 = vadd.f32 %v6440, %v6543
  %v6545 = vpop.f32.mrf.mxu0
  %6546 = vdwg.mxu0
  %v6547 = vld [vmem:[%s5] sm:$0xff]
  %v6548 = vld [vmem:[%s5 + $0x8] sm:$0xff]
  %v6549 = vld [vmem:[%s5 + $0x10] sm:$0xff]
  %v6550 = vld [vmem:[%s5 + $0x18] sm:$0xff]
  %v6551 = vld [vmem:[%s6] sm:$0xff]
  %v6552 = vld [vmem:[%s6 + $0x8] sm:$0xff]
  %v6553 = vld [vmem:[%s6 + $0x10] sm:$0xff]
  %v6554 = vld [vmem:[%s6 + $0x18] sm:$0xff]
  %6556 = vset.pattern.permute.xlu0 0
  %6557 = vperm.xlu0 %6556, %v6551
  %v6558 = vpop.permute.xlu0 %6557
  %6561 = vset.pattern.permute.xlu0 0
  %6562 = vperm.xlu0 %6561, %v6552
  %v6563 = vpop.permute.xlu0 %6562
  %6566 = vset.pattern.permute.xlu0 0
  %6567 = vperm.xlu0 %6566, %v6553
  %v6568 = vpop.permute.xlu0 %6567
  %6571 = vset.pattern.permute.xlu0 0
  %6572 = vperm.xlu0 %6571, %v6554
  %v6573 = vpop.permute.xlu0 %6572
  %vm6575 = vcmask 64512
  %v6577 = vsel %vm6575, %v6547, 0
  %v6580 = vsel %vm6575, %v6548, 0
  %v6583 = vsel %vm6575, %v6549, 0
  %v6586 = vsel %vm6575, %v6550, 0
  %6588 = vmatprep.subr.mxu0 0.0
  %6589 = vmatpush1.msra.mxu0 0.0
  %6590 = vmatprep.subr.mxu0 0.0
  %6591 = vmatpush1.msra.mxu0 0.0
  %6592 = vmatprep.subr.mxu0 0.0
  %6593 = vmatpush1.msra.mxu0 0.0
  %6594 = vmatprep.subr.mxu0 0.0
  %6595 = vmatpush1.msra.mxu0 0.0
  %6596 = vmatprep.subr.mxu0 0.0
  %6597 = vmatpush1.msra.mxu0 0.0
  %6598 = vmatprep.subr.mxu0 0.0
  %6599 = vmatpush1.msra.mxu0 0.0
  %6600 = vmatprep.subr.mxu0 0.0
  %6601 = vmatpush1.msra.mxu0 0.0
  %6602 = vmatprep.subr.mxu0 0.0
  %6603 = vmatpush1.msra.mxu0 0.0
  %6604 = vmatprep.subr.mxu0 0.0
  %6605 = vmatpush1.msra.mxu0 0.0
  %6606 = vmatprep.subr.mxu0 0.0
  %6607 = vmatpush1.msra.mxu0 0.0
  %6608 = vmatprep.subr.mxu0 0.0
  %6609 = vmatpush1.msra.mxu0 0.0
  %6610 = vmatprep.subr.mxu0 0.0
  %6611 = vmatpush1.msra.mxu0 0.0
  %6612 = vmatprep.subr.mxu0 0.0
  %6613 = vmatpush1.msra.mxu0 0.0
  %6614 = vmatprep.subr.mxu0 0.0
  %6615 = vmatpush1.msra.mxu0 0.0
  %6616 = vmatprep.subr.mxu0 0.0
  %6617 = vmatpush1.msra.mxu0 0.0
  %6618 = vmatprep.subr.mxu0 0.0
  %v6619 = vand.u32 %v6544, 4294901760
  %6620 = vmatpush1.msra.mxu0 %v6619
  %6621 = vmatprep.subr.mxu0 0.0
  %6622 = vmatpush2.msra.mxu0 0.0
  %6623 = vmatprep.subr.mxu0 0.0
  %6624 = vmatpush2.msra.mxu0 0.0
  %6625 = vmatprep.subr.mxu0 0.0
  %6626 = vmatpush2.msra.mxu0 0.0
  %6627 = vmatprep.subr.mxu0 0.0
  %6628 = vmatpush2.msra.mxu0 0.0
  %6629 = vmatprep.subr.mxu0 0.0
  %6630 = vmatpush2.msra.mxu0 0.0
  %6631 = vmatprep.subr.mxu0 0.0
  %6632 = vmatpush2.msra.mxu0 0.0
  %6633 = vmatprep.subr.mxu0 0.0
  %6634 = vmatpush2.msra.mxu0 0.0
  %6635 = vmatprep.subr.mxu0 0.0
  %6636 = vmatpush2.msra.mxu0 0.0
  %6637 = vmatprep.subr.mxu0 0.0
  %6638 = vmatpush2.msra.mxu0 0.0
  %6639 = vmatprep.subr.mxu0 0.0
  %6640 = vmatpush2.msra.mxu0 0.0
  %6641 = vmatprep.subr.mxu0 0.0
  %6642 = vmatpush2.msra.mxu0 0.0
  %6643 = vmatprep.subr.mxu0 0.0
  %6644 = vmatpush2.msra.mxu0 0.0
  %6645 = vmatprep.subr.mxu0 0.0
  %6646 = vmatpush2.msra.mxu0 0.0
  %6647 = vmatprep.subr.mxu0 0.0
  %6648 = vmatpush2.msra.mxu0 0.0
  %6649 = vmatprep.subr.mxu0 0.0
  %6650 = vmatpush2.msra.mxu0 0.0
  %6651 = vmatprep.subr.mxu0 0.0
  %6652 = vmatpush2.msra.mxu0 0.0
  %6653 = vmatprep.mubr.f32.mxu0 0.0
  %v6654 = vand.u32 %v6577, 4294901760
  %v6655 = vsub.f32 %v6577, %v6654
  %v6656 = vand.u32 %v6655, 4294901760
  %v6657 = vsub.f32 %v6655, %v6656
  %v6658 = vand.u32 %v6657, 4294901760
  %6659 = vmatmul.mubr.f32.gmra.mxu0 %v6658
  %v6660 = vpop.f32.mrf.mxu0
  %v6661 = vadd.f32 %v6558, %v6660
  %v6662 = vpop.f32.mrf.mxu0
  %6663 = vmatprep.mubr.f32.mxu0 0.0
  %v6664 = vand.u32 %v6580, 4294901760
  %v6665 = vsub.f32 %v6580, %v6664
  %v6666 = vand.u32 %v6665, 4294901760
  %v6667 = vsub.f32 %v6665, %v6666
  %v6668 = vand.u32 %v6667, 4294901760
  %6669 = vmatmul.mubr.f32.gmra.mxu0 %v6668
  %v6670 = vpop.f32.mrf.mxu0
  %v6671 = vadd.f32 %v6563, %v6670
  %v6672 = vpop.f32.mrf.mxu0
  %6673 = vmatprep.mubr.f32.mxu0 0.0
  %v6674 = vand.u32 %v6583, 4294901760
  %v6675 = vsub.f32 %v6583, %v6674
  %v6676 = vand.u32 %v6675, 4294901760
  %v6677 = vsub.f32 %v6675, %v6676
  %v6678 = vand.u32 %v6677, 4294901760
  %6679 = vmatmul.mubr.f32.gmra.mxu0 %v6678
  %v6680 = vpop.f32.mrf.mxu0
  %v6681 = vadd.f32 %v6568, %v6680
  %v6682 = vpop.f32.mrf.mxu0
  %6683 = vmatprep.mubr.f32.mxu0 0.0
  %v6684 = vand.u32 %v6586, 4294901760
  %v6685 = vsub.f32 %v6586, %v6684
  %v6686 = vand.u32 %v6685, 4294901760
  %v6687 = vsub.f32 %v6685, %v6686
  %v6688 = vand.u32 %v6687, 4294901760
  %6689 = vmatmul.mubr.f32.gmra.mxu0 %v6688
  %v6690 = vpop.f32.mrf.mxu0
  %v6691 = vadd.f32 %v6573, %v6690
  %v6692 = vpop.f32.mrf.mxu0
  %6693 = vdwg.mxu0
  %6694 = vmatprep.subr.mxu0 0.0
  %6695 = vmatpush1.msra.mxu0 0.0
  %6696 = vmatprep.subr.mxu0 0.0
  %6697 = vmatpush1.msra.mxu0 0.0
  %6698 = vmatprep.subr.mxu0 0.0
  %6699 = vmatpush1.msra.mxu0 0.0
  %6700 = vmatprep.subr.mxu0 0.0
  %6701 = vmatpush1.msra.mxu0 0.0
  %6702 = vmatprep.subr.mxu0 0.0
  %6703 = vmatpush1.msra.mxu0 0.0
  %6704 = vmatprep.subr.mxu0 0.0
  %6705 = vmatpush1.msra.mxu0 0.0
  %6706 = vmatprep.subr.mxu0 0.0
  %6707 = vmatpush1.msra.mxu0 0.0
  %6708 = vmatprep.subr.mxu0 0.0
  %6709 = vmatpush1.msra.mxu0 0.0
  %6710 = vmatprep.subr.mxu0 0.0
  %6711 = vmatpush1.msra.mxu0 0.0
  %6712 = vmatprep.subr.mxu0 0.0
  %6713 = vmatpush1.msra.mxu0 0.0
  %6714 = vmatprep.subr.mxu0 0.0
  %6715 = vmatpush1.msra.mxu0 0.0
  %6716 = vmatprep.subr.mxu0 0.0
  %6717 = vmatpush1.msra.mxu0 0.0
  %6718 = vmatprep.subr.mxu0 0.0
  %6719 = vmatpush1.msra.mxu0 0.0
  %6720 = vmatprep.subr.mxu0 0.0
  %6721 = vmatpush1.msra.mxu0 0.0
  %6722 = vmatprep.subr.mxu0 0.0
  %6723 = vmatpush1.msra.mxu0 0.0
  %6724 = vmatprep.subr.mxu0 0.0
  %v6725 = vand.u32 %v6544, 4294901760
  %v6726 = vsub.f32 %v6544, %v6725
  %v6727 = vand.u32 %v6726, 4294901760
  %v6728 = vsub.f32 %v6726, %v6727
  %v6729 = vand.u32 %v6728, 4294901760
  %6730 = vmatpush1.msra.mxu0 %v6729
  %6731 = vmatprep.subr.mxu0 0.0
  %6732 = vmatpush2.msra.mxu0 0.0
  %6733 = vmatprep.subr.mxu0 0.0
  %6734 = vmatpush2.msra.mxu0 0.0
  %6735 = vmatprep.subr.mxu0 0.0
  %6736 = vmatpush2.msra.mxu0 0.0
  %6737 = vmatprep.subr.mxu0 0.0
  %6738 = vmatpush2.msra.mxu0 0.0
  %6739 = vmatprep.subr.mxu0 0.0
  %6740 = vmatpush2.msra.mxu0 0.0
  %6741 = vmatprep.subr.mxu0 0.0
  %6742 = vmatpush2.msra.mxu0 0.0
  %6743 = vmatprep.subr.mxu0 0.0
  %6744 = vmatpush2.msra.mxu0 0.0
  %6745 = vmatprep.subr.mxu0 0.0
  %6746 = vmatpush2.msra.mxu0 0.0
  %6747 = vmatprep.subr.mxu0 0.0
  %6748 = vmatpush2.msra.mxu0 0.0
  %6749 = vmatprep.subr.mxu0 0.0
  %6750 = vmatpush2.msra.mxu0 0.0
  %6751 = vmatprep.subr.mxu0 0.0
  %6752 = vmatpush2.msra.mxu0 0.0
  %6753 = vmatprep.subr.mxu0 0.0
  %6754 = vmatpush2.msra.mxu0 0.0
  %6755 = vmatprep.subr.mxu0 0.0
  %6756 = vmatpush2.msra.mxu0 0.0
  %6757 = vmatprep.subr.mxu0 0.0
  %6758 = vmatpush2.msra.mxu0 0.0
  %6759 = vmatprep.subr.mxu0 0.0
  %6760 = vmatpush2.msra.mxu0 0.0
  %6761 = vmatprep.subr.mxu0 0.0
  %6762 = vmatpush2.msra.mxu0 0.0
  %6763 = vmatprep.mubr.f32.mxu0 0.0
  %v6764 = vand.u32 %v6577, 4294901760
  %6765 = vmatmul.mubr.f32.gmra.mxu0 %v6764
  %v6766 = vpop.f32.mrf.mxu0
  %v6767 = vadd.f32 %v6661, %v6766
  %v6768 = vpop.f32.mrf.mxu0
  %6769 = vmatprep.mubr.f32.mxu0 0.0
  %v6770 = vand.u32 %v6580, 4294901760
  %6771 = vmatmul.mubr.f32.gmra.mxu0 %v6770
  %v6772 = vpop.f32.mrf.mxu0
  %v6773 = vadd.f32 %v6671, %v6772
  %v6774 = vpop.f32.mrf.mxu0
  %6775 = vmatprep.mubr.f32.mxu0 0.0
  %v6776 = vand.u32 %v6583, 4294901760
  %6777 = vmatmul.mubr.f32.gmra.mxu0 %v6776
  %v6778 = vpop.f32.mrf.mxu0
  %v6779 = vadd.f32 %v6681, %v6778
  %v6780 = vpop.f32.mrf.mxu0
  %6781 = vmatprep.mubr.f32.mxu0 0.0
  %v6782 = vand.u32 %v6586, 4294901760
  %6783 = vmatmul.mubr.f32.gmra.mxu0 %v6782
  %v6784 = vpop.f32.mrf.mxu0
  %v6785 = vadd.f32 %v6691, %v6784
  %v6786 = vpop.f32.mrf.mxu0
  %6787 = vdwg.mxu0
  %6788 = vmatprep.subr.mxu0 0.0
  %6789 = vmatpush1.msra.mxu0 0.0
  %6790 = vmatprep.subr.mxu0 0.0
  %6791 = vmatpush1.msra.mxu0 0.0
  %6792 = vmatprep.subr.mxu0 0.0
  %6793 = vmatpush1.msra.mxu0 0.0
  %6794 = vmatprep.subr.mxu0 0.0
  %6795 = vmatpush1.msra.mxu0 0.0
  %6796 = vmatprep.subr.mxu0 0.0
  %6797 = vmatpush1.msra.mxu0 0.0
  %6798 = vmatprep.subr.mxu0 0.0
  %6799 = vmatpush1.msra.mxu0 0.0
  %6800 = vmatprep.subr.mxu0 0.0
  %6801 = vmatpush1.msra.mxu0 0.0
  %6802 = vmatprep.subr.mxu0 0.0
  %6803 = vmatpush1.msra.mxu0 0.0
  %6804 = vmatprep.subr.mxu0 0.0
  %6805 = vmatpush1.msra.mxu0 0.0
  %6806 = vmatprep.subr.mxu0 0.0
  %6807 = vmatpush1.msra.mxu0 0.0
  %6808 = vmatprep.subr.mxu0 0.0
  %6809 = vmatpush1.msra.mxu0 0.0
  %6810 = vmatprep.subr.mxu0 0.0
  %6811 = vmatpush1.msra.mxu0 0.0
  %6812 = vmatprep.subr.mxu0 0.0
  %6813 = vmatpush1.msra.mxu0 0.0
  %6814 = vmatprep.subr.mxu0 0.0
  %6815 = vmatpush1.msra.mxu0 0.0
  %6816 = vmatprep.subr.mxu0 0.0
  %6817 = vmatpush1.msra.mxu0 0.0
  %6818 = vmatprep.subr.mxu0 0.0
  %v6819 = vand.u32 %v6544, 4294901760
  %v6820 = vsub.f32 %v6544, %v6819
  %6821 = vmatpush1.msra.mxu0 %v6820
  %6822 = vmatprep.subr.mxu0 0.0
  %6823 = vmatpush2.msra.mxu0 0.0
  %6824 = vmatprep.subr.mxu0 0.0
  %6825 = vmatpush2.msra.mxu0 0.0
  %6826 = vmatprep.subr.mxu0 0.0
  %6827 = vmatpush2.msra.mxu0 0.0
  %6828 = vmatprep.subr.mxu0 0.0
  %6829 = vmatpush2.msra.mxu0 0.0
  %6830 = vmatprep.subr.mxu0 0.0
  %6831 = vmatpush2.msra.mxu0 0.0
  %6832 = vmatprep.subr.mxu0 0.0
  %6833 = vmatpush2.msra.mxu0 0.0
  %6834 = vmatprep.subr.mxu0 0.0
  %6835 = vmatpush2.msra.mxu0 0.0
  %6836 = vmatprep.subr.mxu0 0.0
  %6837 = vmatpush2.msra.mxu0 0.0
  %6838 = vmatprep.subr.mxu0 0.0
  %6839 = vmatpush2.msra.mxu0 0.0
  %6840 = vmatprep.subr.mxu0 0.0
  %6841 = vmatpush2.msra.mxu0 0.0
  %6842 = vmatprep.subr.mxu0 0.0
  %6843 = vmatpush2.msra.mxu0 0.0
  %6844 = vmatprep.subr.mxu0 0.0
  %6845 = vmatpush2.msra.mxu0 0.0
  %6846 = vmatprep.subr.mxu0 0.0
  %6847 = vmatpush2.msra.mxu0 0.0
  %6848 = vmatprep.subr.mxu0 0.0
  %6849 = vmatpush2.msra.mxu0 0.0
  %6850 = vmatprep.subr.mxu0 0.0
  %6851 = vmatpush2.msra.mxu0 0.0
  %6852 = vmatprep.subr.mxu0 0.0
  %6853 = vmatpush2.msra.mxu0 0.0
  %6854 = vmatprep.mubr.f32.mxu0 0.0
  %v6855 = vand.u32 %v6577, 4294901760
  %v6856 = vsub.f32 %v6577, %v6855
  %6857 = vmatmul.mubr.f32.gmra.mxu0 %v6856
  %v6858 = vpop.f32.mrf.mxu0
  %v6859 = vadd.f32 %v6767, %v6858
  %v6860 = vpop.f32.mrf.mxu0
  %6861 = vmatprep.mubr.f32.mxu0 0.0
  %v6862 = vand.u32 %v6580, 4294901760
  %v6863 = vsub.f32 %v6580, %v6862
  %6864 = vmatmul.mubr.f32.gmra.mxu0 %v6863
  %v6865 = vpop.f32.mrf.mxu0
  %v6866 = vadd.f32 %v6773, %v6865
  %v6867 = vpop.f32.mrf.mxu0
  %6868 = vmatprep.mubr.f32.mxu0 0.0
  %v6869 = vand.u32 %v6583, 4294901760
  %v6870 = vsub.f32 %v6583, %v6869
  %6871 = vmatmul.mubr.f32.gmra.mxu0 %v6870
  %v6872 = vpop.f32.mrf.mxu0
  %v6873 = vadd.f32 %v6779, %v6872
  %v6874 = vpop.f32.mrf.mxu0
  %6875 = vmatprep.mubr.f32.mxu0 0.0
  %v6876 = vand.u32 %v6586, 4294901760
  %v6877 = vsub.f32 %v6586, %v6876
  %6878 = vmatmul.mubr.f32.gmra.mxu0 %v6877
  %v6879 = vpop.f32.mrf.mxu0
  %v6880 = vadd.f32 %v6785, %v6879
  %v6881 = vpop.f32.mrf.mxu0
  %6882 = vdwg.mxu0
  %6883 = vmatprep.subr.mxu0 0.0
  %6884 = vmatpush1.msra.mxu0 0.0
  %6885 = vmatprep.subr.mxu0 0.0
  %6886 = vmatpush1.msra.mxu0 0.0
  %6887 = vmatprep.subr.mxu0 0.0
  %6888 = vmatpush1.msra.mxu0 0.0
  %6889 = vmatprep.subr.mxu0 0.0
  %6890 = vmatpush1.msra.mxu0 0.0
  %6891 = vmatprep.subr.mxu0 0.0
  %6892 = vmatpush1.msra.mxu0 0.0
  %6893 = vmatprep.subr.mxu0 0.0
  %6894 = vmatpush1.msra.mxu0 0.0
  %6895 = vmatprep.subr.mxu0 0.0
  %6896 = vmatpush1.msra.mxu0 0.0
  %6897 = vmatprep.subr.mxu0 0.0
  %6898 = vmatpush1.msra.mxu0 0.0
  %6899 = vmatprep.subr.mxu0 0.0
  %6900 = vmatpush1.msra.mxu0 0.0
  %6901 = vmatprep.subr.mxu0 0.0
  %6902 = vmatpush1.msra.mxu0 0.0
  %6903 = vmatprep.subr.mxu0 0.0
  %6904 = vmatpush1.msra.mxu0 0.0
  %6905 = vmatprep.subr.mxu0 0.0
  %6906 = vmatpush1.msra.mxu0 0.0
  %6907 = vmatprep.subr.mxu0 0.0
  %6908 = vmatpush1.msra.mxu0 0.0
  %6909 = vmatprep.subr.mxu0 0.0
  %6910 = vmatpush1.msra.mxu0 0.0
  %6911 = vmatprep.subr.mxu0 0.0
  %6912 = vmatpush1.msra.mxu0 0.0
  %6913 = vmatprep.subr.mxu0 0.0
  %v6914 = vand.u32 %v6544, 4294901760
  %6915 = vmatpush1.msra.mxu0 %v6914
  %6916 = vmatprep.subr.mxu0 0.0
  %6917 = vmatpush2.msra.mxu0 0.0
  %6918 = vmatprep.subr.mxu0 0.0
  %6919 = vmatpush2.msra.mxu0 0.0
  %6920 = vmatprep.subr.mxu0 0.0
  %6921 = vmatpush2.msra.mxu0 0.0
  %6922 = vmatprep.subr.mxu0 0.0
  %6923 = vmatpush2.msra.mxu0 0.0
  %6924 = vmatprep.subr.mxu0 0.0
  %6925 = vmatpush2.msra.mxu0 0.0
  %6926 = vmatprep.subr.mxu0 0.0
  %6927 = vmatpush2.msra.mxu0 0.0
  %6928 = vmatprep.subr.mxu0 0.0
  %6929 = vmatpush2.msra.mxu0 0.0
  %6930 = vmatprep.subr.mxu0 0.0
  %6931 = vmatpush2.msra.mxu0 0.0
  %6932 = vmatprep.subr.mxu0 0.0
  %6933 = vmatpush2.msra.mxu0 0.0
  %6934 = vmatprep.subr.mxu0 0.0
  %6935 = vmatpush2.msra.mxu0 0.0
  %6936 = vmatprep.subr.mxu0 0.0
  %6937 = vmatpush2.msra.mxu0 0.0
  %6938 = vmatprep.subr.mxu0 0.0
  %6939 = vmatpush2.msra.mxu0 0.0
  %6940 = vmatprep.subr.mxu0 0.0
  %6941 = vmatpush2.msra.mxu0 0.0
  %6942 = vmatprep.subr.mxu0 0.0
  %6943 = vmatpush2.msra.mxu0 0.0
  %6944 = vmatprep.subr.mxu0 0.0
  %6945 = vmatpush2.msra.mxu0 0.0
  %6946 = vmatprep.subr.mxu0 0.0
  %6947 = vmatpush2.msra.mxu0 0.0
  %6948 = vmatprep.mubr.f32.mxu0 0.0
  %v6949 = vand.u32 %v6577, 4294901760
  %v6950 = vsub.f32 %v6577, %v6949
  %v6951 = vand.u32 %v6950, 4294901760
  %6952 = vmatmul.mubr.f32.gmra.mxu0 %v6951
  %v6953 = vpop.f32.mrf.mxu0
  %v6954 = vadd.f32 %v6859, %v6953
  %v6955 = vpop.f32.mrf.mxu0
  %6956 = vmatprep.mubr.f32.mxu0 0.0
  %v6957 = vand.u32 %v6580, 4294901760
  %v6958 = vsub.f32 %v6580, %v6957
  %v6959 = vand.u32 %v6958, 4294901760
  %6960 = vmatmul.mubr.f32.gmra.mxu0 %v6959
  %v6961 = vpop.f32.mrf.mxu0
  %v6962 = vadd.f32 %v6866, %v6961
  %v6963 = vpop.f32.mrf.mxu0
  %6964 = vmatprep.mubr.f32.mxu0 0.0
  %v6965 = vand.u32 %v6583, 4294901760
  %v6966 = vsub.f32 %v6583, %v6965
  %v6967 = vand.u32 %v6966, 4294901760
  %6968 = vmatmul.mubr.f32.gmra.mxu0 %v6967
  %v6969 = vpop.f32.mrf.mxu0
  %v6970 = vadd.f32 %v6873, %v6969
  %v6971 = vpop.f32.mrf.mxu0
  %6972 = vmatprep.mubr.f32.mxu0 0.0
  %v6973 = vand.u32 %v6586, 4294901760
  %v6974 = vsub.f32 %v6586, %v6973
  %v6975 = vand.u32 %v6974, 4294901760
  %6976 = vmatmul.mubr.f32.gmra.mxu0 %v6975
  %v6977 = vpop.f32.mrf.mxu0
  %v6978 = vadd.f32 %v6880, %v6977
  %v6979 = vpop.f32.mrf.mxu0
  %6980 = vdwg.mxu0
  %6981 = vmatprep.subr.mxu0 0.0
  %6982 = vmatpush1.msra.mxu0 0.0
  %6983 = vmatprep.subr.mxu0 0.0
  %6984 = vmatpush1.msra.mxu0 0.0
  %6985 = vmatprep.subr.mxu0 0.0
  %6986 = vmatpush1.msra.mxu0 0.0
  %6987 = vmatprep.subr.mxu0 0.0
  %6988 = vmatpush1.msra.mxu0 0.0
  %6989 = vmatprep.subr.mxu0 0.0
  %6990 = vmatpush1.msra.mxu0 0.0
  %6991 = vmatprep.subr.mxu0 0.0
  %6992 = vmatpush1.msra.mxu0 0.0
  %6993 = vmatprep.subr.mxu0 0.0
  %6994 = vmatpush1.msra.mxu0 0.0
  %6995 = vmatprep.subr.mxu0 0.0
  %6996 = vmatpush1.msra.mxu0 0.0
  %6997 = vmatprep.subr.mxu0 0.0
  %6998 = vmatpush1.msra.mxu0 0.0
  %6999 = vmatprep.subr.mxu0 0.0
  %7000 = vmatpush1.msra.mxu0 0.0
  %7001 = vmatprep.subr.mxu0 0.0
  %7002 = vmatpush1.msra.mxu0 0.0
  %7003 = vmatprep.subr.mxu0 0.0
  %7004 = vmatpush1.msra.mxu0 0.0
  %7005 = vmatprep.subr.mxu0 0.0
  %7006 = vmatpush1.msra.mxu0 0.0
  %7007 = vmatprep.subr.mxu0 0.0
  %7008 = vmatpush1.msra.mxu0 0.0
  %7009 = vmatprep.subr.mxu0 0.0
  %7010 = vmatpush1.msra.mxu0 0.0
  %7011 = vmatprep.subr.mxu0 0.0
  %v7012 = vand.u32 %v6544, 4294901760
  %v7013 = vsub.f32 %v6544, %v7012
  %v7014 = vand.u32 %v7013, 4294901760
  %7015 = vmatpush1.msra.mxu0 %v7014
  %7016 = vmatprep.subr.mxu0 0.0
  %7017 = vmatpush2.msra.mxu0 0.0
  %7018 = vmatprep.subr.mxu0 0.0
  %7019 = vmatpush2.msra.mxu0 0.0
  %7020 = vmatprep.subr.mxu0 0.0
  %7021 = vmatpush2.msra.mxu0 0.0
  %7022 = vmatprep.subr.mxu0 0.0
  %7023 = vmatpush2.msra.mxu0 0.0
  %7024 = vmatprep.subr.mxu0 0.0
  %7025 = vmatpush2.msra.mxu0 0.0
  %7026 = vmatprep.subr.mxu0 0.0
  %7027 = vmatpush2.msra.mxu0 0.0
  %7028 = vmatprep.subr.mxu0 0.0
  %7029 = vmatpush2.msra.mxu0 0.0
  %7030 = vmatprep.subr.mxu0 0.0
  %7031 = vmatpush2.msra.mxu0 0.0
  %7032 = vmatprep.subr.mxu0 0.0
  %7033 = vmatpush2.msra.mxu0 0.0
  %7034 = vmatprep.subr.mxu0 0.0
  %7035 = vmatpush2.msra.mxu0 0.0
  %7036 = vmatprep.subr.mxu0 0.0
  %7037 = vmatpush2.msra.mxu0 0.0
  %7038 = vmatprep.subr.mxu0 0.0
  %7039 = vmatpush2.msra.mxu0 0.0
  %7040 = vmatprep.subr.mxu0 0.0
  %7041 = vmatpush2.msra.mxu0 0.0
  %7042 = vmatprep.subr.mxu0 0.0
  %7043 = vmatpush2.msra.mxu0 0.0
  %7044 = vmatprep.subr.mxu0 0.0
  %7045 = vmatpush2.msra.mxu0 0.0
  %7046 = vmatprep.subr.mxu0 0.0
  %7047 = vmatpush2.msra.mxu0 0.0
  %7048 = vmatprep.mubr.f32.mxu0 0.0
  %v7049 = vand.u32 %v6577, 4294901760
  %7050 = vmatmul.mubr.f32.gmra.mxu0 %v7049
  %v7051 = vpop.f32.mrf.mxu0
  %v7052 = vadd.f32 %v6954, %v7051
  %v7053 = vpop.f32.mrf.mxu0
  %7054 = vmatprep.mubr.f32.mxu0 0.0
  %v7055 = vand.u32 %v6580, 4294901760
  %7056 = vmatmul.mubr.f32.gmra.mxu0 %v7055
  %v7057 = vpop.f32.mrf.mxu0
  %v7058 = vadd.f32 %v6962, %v7057
  %v7059 = vpop.f32.mrf.mxu0
  %7060 = vmatprep.mubr.f32.mxu0 0.0
  %v7061 = vand.u32 %v6583, 4294901760
  %7062 = vmatmul.mubr.f32.gmra.mxu0 %v7061
  %v7063 = vpop.f32.mrf.mxu0
  %v7064 = vadd.f32 %v6970, %v7063
  %v7065 = vpop.f32.mrf.mxu0
  %7066 = vmatprep.mubr.f32.mxu0 0.0
  %v7067 = vand.u32 %v6586, 4294901760
  %7068 = vmatmul.mubr.f32.gmra.mxu0 %v7067
  %v7069 = vpop.f32.mrf.mxu0
  %v7070 = vadd.f32 %v6978, %v7069
  %v7071 = vpop.f32.mrf.mxu0
  %7072 = vdwg.mxu0
  %7073 = vmatprep.subr.mxu0 0.0
  %7074 = vmatpush1.msra.mxu0 0.0
  %7075 = vmatprep.subr.mxu0 0.0
  %7076 = vmatpush1.msra.mxu0 0.0
  %7077 = vmatprep.subr.mxu0 0.0
  %7078 = vmatpush1.msra.mxu0 0.0
  %7079 = vmatprep.subr.mxu0 0.0
  %7080 = vmatpush1.msra.mxu0 0.0
  %7081 = vmatprep.subr.mxu0 0.0
  %7082 = vmatpush1.msra.mxu0 0.0
  %7083 = vmatprep.subr.mxu0 0.0
  %7084 = vmatpush1.msra.mxu0 0.0
  %7085 = vmatprep.subr.mxu0 0.0
  %7086 = vmatpush1.msra.mxu0 0.0
  %7087 = vmatprep.subr.mxu0 0.0
  %7088 = vmatpush1.msra.mxu0 0.0
  %7089 = vmatprep.subr.mxu0 0.0
  %7090 = vmatpush1.msra.mxu0 0.0
  %7091 = vmatprep.subr.mxu0 0.0
  %7092 = vmatpush1.msra.mxu0 0.0
  %7093 = vmatprep.subr.mxu0 0.0
  %7094 = vmatpush1.msra.mxu0 0.0
  %7095 = vmatprep.subr.mxu0 0.0
  %7096 = vmatpush1.msra.mxu0 0.0
  %7097 = vmatprep.subr.mxu0 0.0
  %7098 = vmatpush1.msra.mxu0 0.0
  %7099 = vmatprep.subr.mxu0 0.0
  %7100 = vmatpush1.msra.mxu0 0.0
  %7101 = vmatprep.subr.mxu0 0.0
  %7102 = vmatpush1.msra.mxu0 0.0
  %7103 = vmatprep.subr.mxu0 0.0
  %v7104 = vand.u32 %v6544, 4294901760
  %7105 = vmatpush1.msra.mxu0 %v7104
  %7106 = vmatprep.subr.mxu0 0.0
  %7107 = vmatpush2.msra.mxu0 0.0
  %7108 = vmatprep.subr.mxu0 0.0
  %7109 = vmatpush2.msra.mxu0 0.0
  %7110 = vmatprep.subr.mxu0 0.0
  %7111 = vmatpush2.msra.mxu0 0.0
  %7112 = vmatprep.subr.mxu0 0.0
  %7113 = vmatpush2.msra.mxu0 0.0
  %7114 = vmatprep.subr.mxu0 0.0
  %7115 = vmatpush2.msra.mxu0 0.0
  %7116 = vmatprep.subr.mxu0 0.0
  %7117 = vmatpush2.msra.mxu0 0.0
  %7118 = vmatprep.subr.mxu0 0.0
  %7119 = vmatpush2.msra.mxu0 0.0
  %7120 = vmatprep.subr.mxu0 0.0
  %7121 = vmatpush2.msra.mxu0 0.0
  %7122 = vmatprep.subr.mxu0 0.0
  %7123 = vmatpush2.msra.mxu0 0.0
  %7124 = vmatprep.subr.mxu0 0.0
  %7125 = vmatpush2.msra.mxu0 0.0
  %7126 = vmatprep.subr.mxu0 0.0
  %7127 = vmatpush2.msra.mxu0 0.0
  %7128 = vmatprep.subr.mxu0 0.0
  %7129 = vmatpush2.msra.mxu0 0.0
  %7130 = vmatprep.subr.mxu0 0.0
  %7131 = vmatpush2.msra.mxu0 0.0
  %7132 = vmatprep.subr.mxu0 0.0
  %7133 = vmatpush2.msra.mxu0 0.0
  %7134 = vmatprep.subr.mxu0 0.0
  %7135 = vmatpush2.msra.mxu0 0.0
  %7136 = vmatprep.subr.mxu0 0.0
  %7137 = vmatpush2.msra.mxu0 0.0
  %7138 = vmatprep.mubr.f32.mxu0 0.0
  %v7139 = vand.u32 %v6577, 4294901760
  %7140 = vmatmul.mubr.f32.gmra.mxu0 %v7139
  %v7141 = vpop.f32.mrf.mxu0
  %v7142 = vadd.f32 %v7052, %v7141
  %v7143 = vpop.f32.mrf.mxu0
  %7144 = vmatprep.mubr.f32.mxu0 0.0
  %v7145 = vand.u32 %v6580, 4294901760
  %7146 = vmatmul.mubr.f32.gmra.mxu0 %v7145
  %v7147 = vpop.f32.mrf.mxu0
  %v7148 = vadd.f32 %v7058, %v7147
  %v7149 = vpop.f32.mrf.mxu0
  %7150 = vmatprep.mubr.f32.mxu0 0.0
  %v7151 = vand.u32 %v6583, 4294901760
  %7152 = vmatmul.mubr.f32.gmra.mxu0 %v7151
  %v7153 = vpop.f32.mrf.mxu0
  %v7154 = vadd.f32 %v7064, %v7153
  %v7155 = vpop.f32.mrf.mxu0
  %7156 = vmatprep.mubr.f32.mxu0 0.0
  %v7157 = vand.u32 %v6586, 4294901760
  %7158 = vmatmul.mubr.f32.gmra.mxu0 %v7157
  %v7159 = vpop.f32.mrf.mxu0
  %v7160 = vadd.f32 %v7070, %v7159
  %v7161 = vpop.f32.mrf.mxu0
  %7162 = vdwg.mxu0
  %7163 = vmatprep.subr.mxu0 0.0
  %v7164 = vand.u32 %v4774, 4294901760
  %7165 = vmatpush1.msra.mxu0 %v7164
  %7166 = vmatprep.subr.mxu0 0.0
  %v7167 = vand.u32 %v4773, 4294901760
  %7168 = vmatpush1.msra.mxu0 %v7167
  %7169 = vmatprep.subr.mxu0 0.0
  %v7170 = vand.u32 %v4772, 4294901760
  %7171 = vmatpush1.msra.mxu0 %v7170
  %7172 = vmatprep.subr.mxu0 0.0
  %v7173 = vand.u32 %v4771, 4294901760
  %7174 = vmatpush1.msra.mxu0 %v7173
  %7175 = vmatprep.subr.mxu0 0.0
  %v7176 = vand.u32 %v4770, 4294901760
  %7177 = vmatpush1.msra.mxu0 %v7176
  %7178 = vmatprep.subr.mxu0 0.0
  %v7179 = vand.u32 %v4769, 4294901760
  %7180 = vmatpush1.msra.mxu0 %v7179
  %7181 = vmatprep.subr.mxu0 0.0
  %v7182 = vand.u32 %v4768, 4294901760
  %7183 = vmatpush1.msra.mxu0 %v7182
  %7184 = vmatprep.subr.mxu0 0.0
  %v7185 = vand.u32 %v4767, 4294901760
  %7186 = vmatpush1.msra.mxu0 %v7185
  %7187 = vmatprep.subr.mxu0 0.0
  %v7188 = vand.u32 %v4766, 4294901760
  %7189 = vmatpush1.msra.mxu0 %v7188
  %7190 = vmatprep.subr.mxu0 0.0
  %v7191 = vand.u32 %v4765, 4294901760
  %7192 = vmatpush1.msra.mxu0 %v7191
  %7193 = vmatprep.subr.mxu0 0.0
  %v7194 = vand.u32 %v4764, 4294901760
  %7195 = vmatpush1.msra.mxu0 %v7194
  %7196 = vmatprep.subr.mxu0 0.0
  %v7197 = vand.u32 %v4763, 4294901760
  %7198 = vmatpush1.msra.mxu0 %v7197
  %7199 = vmatprep.subr.mxu0 0.0
  %v7200 = vand.u32 %v4762, 4294901760
  %7201 = vmatpush1.msra.mxu0 %v7200
  %7202 = vmatprep.subr.mxu0 0.0
  %v7203 = vand.u32 %v4761, 4294901760
  %7204 = vmatpush1.msra.mxu0 %v7203
  %7205 = vmatprep.subr.mxu0 0.0
  %v7206 = vand.u32 %v4760, 4294901760
  %7207 = vmatpush1.msra.mxu0 %v7206
  %7208 = vmatprep.subr.mxu0 0.0
  %v7209 = vand.u32 %v4759, 4294901760
  %7210 = vmatpush1.msra.mxu0 %v7209
  %7211 = vmatprep.subr.mxu0 0.0
  %v7212 = vand.u32 %v4790, 4294901760
  %7213 = vmatpush2.msra.mxu0 %v7212
  %7214 = vmatprep.subr.mxu0 0.0
  %v7215 = vand.u32 %v4789, 4294901760
  %7216 = vmatpush2.msra.mxu0 %v7215
  %7217 = vmatprep.subr.mxu0 0.0
  %v7218 = vand.u32 %v4788, 4294901760
  %7219 = vmatpush2.msra.mxu0 %v7218
  %7220 = vmatprep.subr.mxu0 0.0
  %v7221 = vand.u32 %v4787, 4294901760
  %7222 = vmatpush2.msra.mxu0 %v7221
  %7223 = vmatprep.subr.mxu0 0.0
  %v7224 = vand.u32 %v4786, 4294901760
  %7225 = vmatpush2.msra.mxu0 %v7224
  %7226 = vmatprep.subr.mxu0 0.0
  %v7227 = vand.u32 %v4785, 4294901760
  %7228 = vmatpush2.msra.mxu0 %v7227
  %7229 = vmatprep.subr.mxu0 0.0
  %v7230 = vand.u32 %v4784, 4294901760
  %7231 = vmatpush2.msra.mxu0 %v7230
  %7232 = vmatprep.subr.mxu0 0.0
  %v7233 = vand.u32 %v4783, 4294901760
  %7234 = vmatpush2.msra.mxu0 %v7233
  %7235 = vmatprep.subr.mxu0 0.0
  %v7236 = vand.u32 %v4782, 4294901760
  %7237 = vmatpush2.msra.mxu0 %v7236
  %7238 = vmatprep.subr.mxu0 0.0
  %v7239 = vand.u32 %v4781, 4294901760
  %7240 = vmatpush2.msra.mxu0 %v7239
  %7241 = vmatprep.subr.mxu0 0.0
  %v7242 = vand.u32 %v4780, 4294901760
  %7243 = vmatpush2.msra.mxu0 %v7242
  %7244 = vmatprep.subr.mxu0 0.0
  %v7245 = vand.u32 %v4779, 4294901760
  %7246 = vmatpush2.msra.mxu0 %v7245
  %7247 = vmatprep.subr.mxu0 0.0
  %v7248 = vand.u32 %v4778, 4294901760
  %7249 = vmatpush2.msra.mxu0 %v7248
  %7250 = vmatprep.subr.mxu0 0.0
  %v7251 = vand.u32 %v4777, 4294901760
  %7252 = vmatpush2.msra.mxu0 %v7251
  %7253 = vmatprep.subr.mxu0 0.0
  %v7254 = vand.u32 %v4776, 4294901760
  %7255 = vmatpush2.msra.mxu0 %v7254
  %7256 = vmatprep.subr.mxu0 0.0
  %v7257 = vand.u32 %v4775, 4294901760
  %7258 = vmatpush2.msra.mxu0 %v7257
  %v7259 = vand.u32 %v4740, 4294901760
  %v7260 = vsub.f32 %v4740, %v7259
  %v7261 = vand.u32 %v7260, 4294901760
  %v7262 = vsub.f32 %v7260, %v7261
  %v7263 = vand.u32 %v7262, 4294901760
  %7264 = vmatprep.mubr.f32.mxu0 %v7263
  %v7265 = vand.u32 %v4739, 4294901760
  %v7266 = vsub.f32 %v4739, %v7265
  %v7267 = vand.u32 %v7266, 4294901760
  %v7268 = vsub.f32 %v7266, %v7267
  %v7269 = vand.u32 %v7268, 4294901760
  %7270 = vmatmul.mubr.f32.gmra.mxu0 %v7269
  %v7271 = vpop.f32.mrf.mxu0
  %v7272 = vadd.f32 %v7142, %v7271
  %v7273 = vpop.f32.mrf.mxu0
  %v7274 = vand.u32 %v4744, 4294901760
  %v7275 = vsub.f32 %v4744, %v7274
  %v7276 = vand.u32 %v7275, 4294901760
  %v7277 = vsub.f32 %v7275, %v7276
  %v7278 = vand.u32 %v7277, 4294901760
  %7279 = vmatprep.mubr.f32.mxu0 %v7278
  %v7280 = vand.u32 %v4743, 4294901760
  %v7281 = vsub.f32 %v4743, %v7280
  %v7282 = vand.u32 %v7281, 4294901760
  %v7283 = vsub.f32 %v7281, %v7282
  %v7284 = vand.u32 %v7283, 4294901760
  %7285 = vmatmul.mubr.f32.gmra.mxu0 %v7284
  %v7286 = vpop.f32.mrf.mxu0
  %v7287 = vadd.f32 %v7148, %v7286
  %v7288 = vpop.f32.mrf.mxu0
  %v7289 = vand.u32 %v4748, 4294901760
  %v7290 = vsub.f32 %v4748, %v7289
  %v7291 = vand.u32 %v7290, 4294901760
  %v7292 = vsub.f32 %v7290, %v7291
  %v7293 = vand.u32 %v7292, 4294901760
  %7294 = vmatprep.mubr.f32.mxu0 %v7293
  %v7295 = vand.u32 %v4747, 4294901760
  %v7296 = vsub.f32 %v4747, %v7295
  %v7297 = vand.u32 %v7296, 4294901760
  %v7298 = vsub.f32 %v7296, %v7297
  %v7299 = vand.u32 %v7298, 4294901760
  %7300 = vmatmul.mubr.f32.gmra.mxu0 %v7299
  %v7301 = vpop.f32.mrf.mxu0
  %v7302 = vadd.f32 %v7154, %v7301
  %v7303 = vpop.f32.mrf.mxu0
  %v7304 = vand.u32 %v4752, 4294901760
  %v7305 = vsub.f32 %v4752, %v7304
  %v7306 = vand.u32 %v7305, 4294901760
  %v7307 = vsub.f32 %v7305, %v7306
  %v7308 = vand.u32 %v7307, 4294901760
  %7309 = vmatprep.mubr.f32.mxu0 %v7308
  %v7310 = vand.u32 %v4751, 4294901760
  %v7311 = vsub.f32 %v4751, %v7310
  %v7312 = vand.u32 %v7311, 4294901760
  %v7313 = vsub.f32 %v7311, %v7312
  %v7314 = vand.u32 %v7313, 4294901760
  %7315 = vmatmul.mubr.f32.gmra.mxu0 %v7314
  %v7316 = vpop.f32.mrf.mxu0
  %v7317 = vadd.f32 %v7160, %v7316
  %v7318 = vpop.f32.mrf.mxu0
  %7319 = vdwg.mxu0
  %7320 = vmatprep.subr.mxu0 0.0
  %v7321 = vand.u32 %v4774, 4294901760
  %v7322 = vsub.f32 %v4774, %v7321
  %v7323 = vand.u32 %v7322, 4294901760
  %v7324 = vsub.f32 %v7322, %v7323
  %v7325 = vand.u32 %v7324, 4294901760
  %7326 = vmatpush1.msra.mxu0 %v7325
  %7327 = vmatprep.subr.mxu0 0.0
  %v7328 = vand.u32 %v4773, 4294901760
  %v7329 = vsub.f32 %v4773, %v7328
  %v7330 = vand.u32 %v7329, 4294901760
  %v7331 = vsub.f32 %v7329, %v7330
  %v7332 = vand.u32 %v7331, 4294901760
  %7333 = vmatpush1.msra.mxu0 %v7332
  %7334 = vmatprep.subr.mxu0 0.0
  %v7335 = vand.u32 %v4772, 4294901760
  %v7336 = vsub.f32 %v4772, %v7335
  %v7337 = vand.u32 %v7336, 4294901760
  %v7338 = vsub.f32 %v7336, %v7337
  %v7339 = vand.u32 %v7338, 4294901760
  %7340 = vmatpush1.msra.mxu0 %v7339
  %7341 = vmatprep.subr.mxu0 0.0
  %v7342 = vand.u32 %v4771, 4294901760
  %v7343 = vsub.f32 %v4771, %v7342
  %v7344 = vand.u32 %v7343, 4294901760
  %v7345 = vsub.f32 %v7343, %v7344
  %v7346 = vand.u32 %v7345, 4294901760
  %7347 = vmatpush1.msra.mxu0 %v7346
  %7348 = vmatprep.subr.mxu0 0.0
  %v7349 = vand.u32 %v4770, 4294901760
  %v7350 = vsub.f32 %v4770, %v7349
  %v7351 = vand.u32 %v7350, 4294901760
  %v7352 = vsub.f32 %v7350, %v7351
  %v7353 = vand.u32 %v7352, 4294901760
  %7354 = vmatpush1.msra.mxu0 %v7353
  %7355 = vmatprep.subr.mxu0 0.0
  %v7356 = vand.u32 %v4769, 4294901760
  %v7357 = vsub.f32 %v4769, %v7356
  %v7358 = vand.u32 %v7357, 4294901760
  %v7359 = vsub.f32 %v7357, %v7358
  %v7360 = vand.u32 %v7359, 4294901760
  %7361 = vmatpush1.msra.mxu0 %v7360
  %7362 = vmatprep.subr.mxu0 0.0
  %v7363 = vand.u32 %v4768, 4294901760
  %v7364 = vsub.f32 %v4768, %v7363
  %v7365 = vand.u32 %v7364, 4294901760
  %v7366 = vsub.f32 %v7364, %v7365
  %v7367 = vand.u32 %v7366, 4294901760
  %7368 = vmatpush1.msra.mxu0 %v7367
  %7369 = vmatprep.subr.mxu0 0.0
  %v7370 = vand.u32 %v4767, 4294901760
  %v7371 = vsub.f32 %v4767, %v7370
  %v7372 = vand.u32 %v7371, 4294901760
  %v7373 = vsub.f32 %v7371, %v7372
  %v7374 = vand.u32 %v7373, 4294901760
  %7375 = vmatpush1.msra.mxu0 %v7374
  %7376 = vmatprep.subr.mxu0 0.0
  %v7377 = vand.u32 %v4766, 4294901760
  %v7378 = vsub.f32 %v4766, %v7377
  %v7379 = vand.u32 %v7378, 4294901760
  %v7380 = vsub.f32 %v7378, %v7379
  %v7381 = vand.u32 %v7380, 4294901760
  %7382 = vmatpush1.msra.mxu0 %v7381
  %7383 = vmatprep.subr.mxu0 0.0
  %v7384 = vand.u32 %v4765, 4294901760
  %v7385 = vsub.f32 %v4765, %v7384
  %v7386 = vand.u32 %v7385, 4294901760
  %v7387 = vsub.f32 %v7385, %v7386
  %v7388 = vand.u32 %v7387, 4294901760
  %7389 = vmatpush1.msra.mxu0 %v7388
  %7390 = vmatprep.subr.mxu0 0.0
  %v7391 = vand.u32 %v4764, 4294901760
  %v7392 = vsub.f32 %v4764, %v7391
  %v7393 = vand.u32 %v7392, 4294901760
  %v7394 = vsub.f32 %v7392, %v7393
  %v7395 = vand.u32 %v7394, 4294901760
  %7396 = vmatpush1.msra.mxu0 %v7395
  %7397 = vmatprep.subr.mxu0 0.0
  %v7398 = vand.u32 %v4763, 4294901760
  %v7399 = vsub.f32 %v4763, %v7398
  %v7400 = vand.u32 %v7399, 4294901760
  %v7401 = vsub.f32 %v7399, %v7400
  %v7402 = vand.u32 %v7401, 4294901760
  %7403 = vmatpush1.msra.mxu0 %v7402
  %7404 = vmatprep.subr.mxu0 0.0
  %v7405 = vand.u32 %v4762, 4294901760
  %v7406 = vsub.f32 %v4762, %v7405
  %v7407 = vand.u32 %v7406, 4294901760
  %v7408 = vsub.f32 %v7406, %v7407
  %v7409 = vand.u32 %v7408, 4294901760
  %7410 = vmatpush1.msra.mxu0 %v7409
  %7411 = vmatprep.subr.mxu0 0.0
  %v7412 = vand.u32 %v4761, 4294901760
  %v7413 = vsub.f32 %v4761, %v7412
  %v7414 = vand.u32 %v7413, 4294901760
  %v7415 = vsub.f32 %v7413, %v7414
  %v7416 = vand.u32 %v7415, 4294901760
  %7417 = vmatpush1.msra.mxu0 %v7416
  %7418 = vmatprep.subr.mxu0 0.0
  %v7419 = vand.u32 %v4760, 4294901760
  %v7420 = vsub.f32 %v4760, %v7419
  %v7421 = vand.u32 %v7420, 4294901760
  %v7422 = vsub.f32 %v7420, %v7421
  %v7423 = vand.u32 %v7422, 4294901760
  %7424 = vmatpush1.msra.mxu0 %v7423
  %7425 = vmatprep.subr.mxu0 0.0
  %v7426 = vand.u32 %v4759, 4294901760
  %v7427 = vsub.f32 %v4759, %v7426
  %v7428 = vand.u32 %v7427, 4294901760
  %v7429 = vsub.f32 %v7427, %v7428
  %v7430 = vand.u32 %v7429, 4294901760
  %7431 = vmatpush1.msra.mxu0 %v7430
  %7432 = vmatprep.subr.mxu0 0.0
  %v7433 = vand.u32 %v4790, 4294901760
  %v7434 = vsub.f32 %v4790, %v7433
  %v7435 = vand.u32 %v7434, 4294901760
  %v7436 = vsub.f32 %v7434, %v7435
  %v7437 = vand.u32 %v7436, 4294901760
  %7438 = vmatpush2.msra.mxu0 %v7437
  %7439 = vmatprep.subr.mxu0 0.0
  %v7440 = vand.u32 %v4789, 4294901760
  %v7441 = vsub.f32 %v4789, %v7440
  %v7442 = vand.u32 %v7441, 4294901760
  %v7443 = vsub.f32 %v7441, %v7442
  %v7444 = vand.u32 %v7443, 4294901760
  %7445 = vmatpush2.msra.mxu0 %v7444
  %7446 = vmatprep.subr.mxu0 0.0
  %v7447 = vand.u32 %v4788, 4294901760
  %v7448 = vsub.f32 %v4788, %v7447
  %v7449 = vand.u32 %v7448, 4294901760
  %v7450 = vsub.f32 %v7448, %v7449
  %v7451 = vand.u32 %v7450, 4294901760
  %7452 = vmatpush2.msra.mxu0 %v7451
  %7453 = vmatprep.subr.mxu0 0.0
  %v7454 = vand.u32 %v4787, 4294901760
  %v7455 = vsub.f32 %v4787, %v7454
  %v7456 = vand.u32 %v7455, 4294901760
  %v7457 = vsub.f32 %v7455, %v7456
  %v7458 = vand.u32 %v7457, 4294901760
  %7459 = vmatpush2.msra.mxu0 %v7458
  %7460 = vmatprep.subr.mxu0 0.0
  %v7461 = vand.u32 %v4786, 4294901760
  %v7462 = vsub.f32 %v4786, %v7461
  %v7463 = vand.u32 %v7462, 4294901760
  %v7464 = vsub.f32 %v7462, %v7463
  %v7465 = vand.u32 %v7464, 4294901760
  %7466 = vmatpush2.msra.mxu0 %v7465
  %7467 = vmatprep.subr.mxu0 0.0
  %v7468 = vand.u32 %v4785, 4294901760
  %v7469 = vsub.f32 %v4785, %v7468
  %v7470 = vand.u32 %v7469, 4294901760
  %v7471 = vsub.f32 %v7469, %v7470
  %v7472 = vand.u32 %v7471, 4294901760
  %7473 = vmatpush2.msra.mxu0 %v7472
  %7474 = vmatprep.subr.mxu0 0.0
  %v7475 = vand.u32 %v4784, 4294901760
  %v7476 = vsub.f32 %v4784, %v7475
  %v7477 = vand.u32 %v7476, 4294901760
  %v7478 = vsub.f32 %v7476, %v7477
  %v7479 = vand.u32 %v7478, 4294901760
  %7480 = vmatpush2.msra.mxu0 %v7479
  %7481 = vmatprep.subr.mxu0 0.0
  %v7482 = vand.u32 %v4783, 4294901760
  %v7483 = vsub.f32 %v4783, %v7482
  %v7484 = vand.u32 %v7483, 4294901760
  %v7485 = vsub.f32 %v7483, %v7484
  %v7486 = vand.u32 %v7485, 4294901760
  %7487 = vmatpush2.msra.mxu0 %v7486
  %7488 = vmatprep.subr.mxu0 0.0
  %v7489 = vand.u32 %v4782, 4294901760
  %v7490 = vsub.f32 %v4782, %v7489
  %v7491 = vand.u32 %v7490, 4294901760
  %v7492 = vsub.f32 %v7490, %v7491
  %v7493 = vand.u32 %v7492, 4294901760
  %7494 = vmatpush2.msra.mxu0 %v7493
  %7495 = vmatprep.subr.mxu0 0.0
  %v7496 = vand.u32 %v4781, 4294901760
  %v7497 = vsub.f32 %v4781, %v7496
  %v7498 = vand.u32 %v7497, 4294901760
  %v7499 = vsub.f32 %v7497, %v7498
  %v7500 = vand.u32 %v7499, 4294901760
  %7501 = vmatpush2.msra.mxu0 %v7500
  %7502 = vmatprep.subr.mxu0 0.0
  %v7503 = vand.u32 %v4780, 4294901760
  %v7504 = vsub.f32 %v4780, %v7503
  %v7505 = vand.u32 %v7504, 4294901760
  %v7506 = vsub.f32 %v7504, %v7505
  %v7507 = vand.u32 %v7506, 4294901760
  %7508 = vmatpush2.msra.mxu0 %v7507
  %7509 = vmatprep.subr.mxu0 0.0
  %v7510 = vand.u32 %v4779, 4294901760
  %v7511 = vsub.f32 %v4779, %v7510
  %v7512 = vand.u32 %v7511, 4294901760
  %v7513 = vsub.f32 %v7511, %v7512
  %v7514 = vand.u32 %v7513, 4294901760
  %7515 = vmatpush2.msra.mxu0 %v7514
  %7516 = vmatprep.subr.mxu0 0.0
  %v7517 = vand.u32 %v4778, 4294901760
  %v7518 = vsub.f32 %v4778, %v7517
  %v7519 = vand.u32 %v7518, 4294901760
  %v7520 = vsub.f32 %v7518, %v7519
  %v7521 = vand.u32 %v7520, 4294901760
  %7522 = vmatpush2.msra.mxu0 %v7521
  %7523 = vmatprep.subr.mxu0 0.0
  %v7524 = vand.u32 %v4777, 4294901760
  %v7525 = vsub.f32 %v4777, %v7524
  %v7526 = vand.u32 %v7525, 4294901760
  %v7527 = vsub.f32 %v7525, %v7526
  %v7528 = vand.u32 %v7527, 4294901760
  %7529 = vmatpush2.msra.mxu0 %v7528
  %7530 = vmatprep.subr.mxu0 0.0
  %v7531 = vand.u32 %v4776, 4294901760
  %v7532 = vsub.f32 %v4776, %v7531
  %v7533 = vand.u32 %v7532, 4294901760
  %v7534 = vsub.f32 %v7532, %v7533
  %v7535 = vand.u32 %v7534, 4294901760
  %7536 = vmatpush2.msra.mxu0 %v7535
  %7537 = vmatprep.subr.mxu0 0.0
  %v7538 = vand.u32 %v4775, 4294901760
  %v7539 = vsub.f32 %v4775, %v7538
  %v7540 = vand.u32 %v7539, 4294901760
  %v7541 = vsub.f32 %v7539, %v7540
  %v7542 = vand.u32 %v7541, 4294901760
  %7543 = vmatpush2.msra.mxu0 %v7542
  %v7544 = vand.u32 %v4740, 4294901760
  %7545 = vmatprep.mubr.f32.mxu0 %v7544
  %v7546 = vand.u32 %v4739, 4294901760
  %7547 = vmatmul.mubr.f32.gmra.mxu0 %v7546
  %v7548 = vpop.f32.mrf.mxu0
  %v7549 = vadd.f32 %v7272, %v7548
  %v7550 = vpop.f32.mrf.mxu0
  %v7551 = vand.u32 %v4744, 4294901760
  %7552 = vmatprep.mubr.f32.mxu0 %v7551
  %v7553 = vand.u32 %v4743, 4294901760
  %7554 = vmatmul.mubr.f32.gmra.mxu0 %v7553
  %v7555 = vpop.f32.mrf.mxu0
  %v7556 = vadd.f32 %v7287, %v7555
  %v7557 = vpop.f32.mrf.mxu0
  %v7558 = vand.u32 %v4748, 4294901760
  %7559 = vmatprep.mubr.f32.mxu0 %v7558
  %v7560 = vand.u32 %v4747, 4294901760
  %7561 = vmatmul.mubr.f32.gmra.mxu0 %v7560
  %v7562 = vpop.f32.mrf.mxu0
  %v7563 = vadd.f32 %v7302, %v7562
  %v7564 = vpop.f32.mrf.mxu0
  %v7565 = vand.u32 %v4752, 4294901760
  %7566 = vmatprep.mubr.f32.mxu0 %v7565
  %v7567 = vand.u32 %v4751, 4294901760
  %7568 = vmatmul.mubr.f32.gmra.mxu0 %v7567
  %v7569 = vpop.f32.mrf.mxu0
  %v7570 = vadd.f32 %v7317, %v7569
  %v7571 = vpop.f32.mrf.mxu0
  %7572 = vdwg.mxu0
  %7573 = vmatprep.subr.mxu0 0.0
  %v7574 = vand.u32 %v4774, 4294901760
  %v7575 = vsub.f32 %v4774, %v7574
  %7576 = vmatpush1.msra.mxu0 %v7575
  %7577 = vmatprep.subr.mxu0 0.0
  %v7578 = vand.u32 %v4773, 4294901760
  %v7579 = vsub.f32 %v4773, %v7578
  %7580 = vmatpush1.msra.mxu0 %v7579
  %7581 = vmatprep.subr.mxu0 0.0
  %v7582 = vand.u32 %v4772, 4294901760
  %v7583 = vsub.f32 %v4772, %v7582
  %7584 = vmatpush1.msra.mxu0 %v7583
  %7585 = vmatprep.subr.mxu0 0.0
  %v7586 = vand.u32 %v4771, 4294901760
  %v7587 = vsub.f32 %v4771, %v7586
  %7588 = vmatpush1.msra.mxu0 %v7587
  %7589 = vmatprep.subr.mxu0 0.0
  %v7590 = vand.u32 %v4770, 4294901760
  %v7591 = vsub.f32 %v4770, %v7590
  %7592 = vmatpush1.msra.mxu0 %v7591
  %7593 = vmatprep.subr.mxu0 0.0
  %v7594 = vand.u32 %v4769, 4294901760
  %v7595 = vsub.f32 %v4769, %v7594
  %7596 = vmatpush1.msra.mxu0 %v7595
  %7597 = vmatprep.subr.mxu0 0.0
  %v7598 = vand.u32 %v4768, 4294901760
  %v7599 = vsub.f32 %v4768, %v7598
  %7600 = vmatpush1.msra.mxu0 %v7599
  %7601 = vmatprep.subr.mxu0 0.0
  %v7602 = vand.u32 %v4767, 4294901760
  %v7603 = vsub.f32 %v4767, %v7602
  %7604 = vmatpush1.msra.mxu0 %v7603
  %7605 = vmatprep.subr.mxu0 0.0
  %v7606 = vand.u32 %v4766, 4294901760
  %v7607 = vsub.f32 %v4766, %v7606
  %7608 = vmatpush1.msra.mxu0 %v7607
  %7609 = vmatprep.subr.mxu0 0.0
  %v7610 = vand.u32 %v4765, 4294901760
  %v7611 = vsub.f32 %v4765, %v7610
  %7612 = vmatpush1.msra.mxu0 %v7611
  %7613 = vmatprep.subr.mxu0 0.0
  %v7614 = vand.u32 %v4764, 4294901760
  %v7615 = vsub.f32 %v4764, %v7614
  %7616 = vmatpush1.msra.mxu0 %v7615
  %7617 = vmatprep.subr.mxu0 0.0
  %v7618 = vand.u32 %v4763, 4294901760
  %v7619 = vsub.f32 %v4763, %v7618
  %7620 = vmatpush1.msra.mxu0 %v7619
  %7621 = vmatprep.subr.mxu0 0.0
  %v7622 = vand.u32 %v4762, 4294901760
  %v7623 = vsub.f32 %v4762, %v7622
  %7624 = vmatpush1.msra.mxu0 %v7623
  %7625 = vmatprep.subr.mxu0 0.0
  %v7626 = vand.u32 %v4761, 4294901760
  %v7627 = vsub.f32 %v4761, %v7626
  %7628 = vmatpush1.msra.mxu0 %v7627
  %7629 = vmatprep.subr.mxu0 0.0
  %v7630 = vand.u32 %v4760, 4294901760
  %v7631 = vsub.f32 %v4760, %v7630
  %7632 = vmatpush1.msra.mxu0 %v7631
  %7633 = vmatprep.subr.mxu0 0.0
  %v7634 = vand.u32 %v4759, 4294901760
  %v7635 = vsub.f32 %v4759, %v7634
  %7636 = vmatpush1.msra.mxu0 %v7635
  %7637 = vmatprep.subr.mxu0 0.0
  %v7638 = vand.u32 %v4790, 4294901760
  %v7639 = vsub.f32 %v4790, %v7638
  %7640 = vmatpush2.msra.mxu0 %v7639
  %7641 = vmatprep.subr.mxu0 0.0
  %v7642 = vand.u32 %v4789, 4294901760
  %v7643 = vsub.f32 %v4789, %v7642
  %7644 = vmatpush2.msra.mxu0 %v7643
  %7645 = vmatprep.subr.mxu0 0.0
  %v7646 = vand.u32 %v4788, 4294901760
  %v7647 = vsub.f32 %v4788, %v7646
  %7648 = vmatpush2.msra.mxu0 %v7647
  %7649 = vmatprep.subr.mxu0 0.0
  %v7650 = vand.u32 %v4787, 4294901760
  %v7651 = vsub.f32 %v4787, %v7650
  %7652 = vmatpush2.msra.mxu0 %v7651
  %7653 = vmatprep.subr.mxu0 0.0
  %v7654 = vand.u32 %v4786, 4294901760
  %v7655 = vsub.f32 %v4786, %v7654
  %7656 = vmatpush2.msra.mxu0 %v7655
  %7657 = vmatprep.subr.mxu0 0.0
  %v7658 = vand.u32 %v4785, 4294901760
  %v7659 = vsub.f32 %v4785, %v7658
  %7660 = vmatpush2.msra.mxu0 %v7659
  %7661 = vmatprep.subr.mxu0 0.0
  %v7662 = vand.u32 %v4784, 4294901760
  %v7663 = vsub.f32 %v4784, %v7662
  %7664 = vmatpush2.msra.mxu0 %v7663
  %7665 = vmatprep.subr.mxu0 0.0
  %v7666 = vand.u32 %v4783, 4294901760
  %v7667 = vsub.f32 %v4783, %v7666
  %7668 = vmatpush2.msra.mxu0 %v7667
  %7669 = vmatprep.subr.mxu0 0.0
  %v7670 = vand.u32 %v4782, 4294901760
  %v7671 = vsub.f32 %v4782, %v7670
  %7672 = vmatpush2.msra.mxu0 %v7671
  %7673 = vmatprep.subr.mxu0 0.0
  %v7674 = vand.u32 %v4781, 4294901760
  %v7675 = vsub.f32 %v4781, %v7674
  %7676 = vmatpush2.msra.mxu0 %v7675
  %7677 = vmatprep.subr.mxu0 0.0
  %v7678 = vand.u32 %v4780, 4294901760
  %v7679 = vsub.f32 %v4780, %v7678
  %7680 = vmatpush2.msra.mxu0 %v7679
  %7681 = vmatprep.subr.mxu0 0.0
  %v7682 = vand.u32 %v4779, 4294901760
  %v7683 = vsub.f32 %v4779, %v7682
  %7684 = vmatpush2.msra.mxu0 %v7683
  %7685 = vmatprep.subr.mxu0 0.0
  %v7686 = vand.u32 %v4778, 4294901760
  %v7687 = vsub.f32 %v4778, %v7686
  %7688 = vmatpush2.msra.mxu0 %v7687
  %7689 = vmatprep.subr.mxu0 0.0
  %v7690 = vand.u32 %v4777, 4294901760
  %v7691 = vsub.f32 %v4777, %v7690
  %7692 = vmatpush2.msra.mxu0 %v7691
  %7693 = vmatprep.subr.mxu0 0.0
  %v7694 = vand.u32 %v4776, 4294901760
  %v7695 = vsub.f32 %v4776, %v7694
  %7696 = vmatpush2.msra.mxu0 %v7695
  %7697 = vmatprep.subr.mxu0 0.0
  %v7698 = vand.u32 %v4775, 4294901760
  %v7699 = vsub.f32 %v4775, %v7698
  %7700 = vmatpush2.msra.mxu0 %v7699
  %v7701 = vand.u32 %v4740, 4294901760
  %v7702 = vsub.f32 %v4740, %v7701
  %7703 = vmatprep.mubr.f32.mxu0 %v7702
  %v7704 = vand.u32 %v4739, 4294901760
  %v7705 = vsub.f32 %v4739, %v7704
  %7706 = vmatmul.mubr.f32.gmra.mxu0 %v7705
  %v7707 = vpop.f32.mrf.mxu0
  %v7708 = vadd.f32 %v7549, %v7707
  %v7709 = vpop.f32.mrf.mxu0
  %v7710 = vand.u32 %v4744, 4294901760
  %v7711 = vsub.f32 %v4744, %v7710
  %7712 = vmatprep.mubr.f32.mxu0 %v7711
  %v7713 = vand.u32 %v4743, 4294901760
  %v7714 = vsub.f32 %v4743, %v7713
  %7715 = vmatmul.mubr.f32.gmra.mxu0 %v7714
  %v7716 = vpop.f32.mrf.mxu0
  %v7717 = vadd.f32 %v7556, %v7716
  %v7718 = vpop.f32.mrf.mxu0
  %v7719 = vand.u32 %v4748, 4294901760
  %v7720 = vsub.f32 %v4748, %v7719
  %7721 = vmatprep.mubr.f32.mxu0 %v7720
  %v7722 = vand.u32 %v4747, 4294901760
  %v7723 = vsub.f32 %v4747, %v7722
  %7724 = vmatmul.mubr.f32.gmra.mxu0 %v7723
  %v7725 = vpop.f32.mrf.mxu0
  %v7726 = vadd.f32 %v7563, %v7725
  %v7727 = vpop.f32.mrf.mxu0
  %v7728 = vand.u32 %v4752, 4294901760
  %v7729 = vsub.f32 %v4752, %v7728
  %7730 = vmatprep.mubr.f32.mxu0 %v7729
  %v7731 = vand.u32 %v4751, 4294901760
  %v7732 = vsub.f32 %v4751, %v7731
  %7733 = vmatmul.mubr.f32.gmra.mxu0 %v7732
  %v7734 = vpop.f32.mrf.mxu0
  %v7735 = vadd.f32 %v7570, %v7734
  %v7736 = vpop.f32.mrf.mxu0
  %7737 = vdwg.mxu0
  %7738 = vmatprep.subr.mxu0 0.0
  %v7739 = vand.u32 %v4774, 4294901760
  %7740 = vmatpush1.msra.mxu0 %v7739
  %7741 = vmatprep.subr.mxu0 0.0
  %v7742 = vand.u32 %v4773, 4294901760
  %7743 = vmatpush1.msra.mxu0 %v7742
  %7744 = vmatprep.subr.mxu0 0.0
  %v7745 = vand.u32 %v4772, 4294901760
  %7746 = vmatpush1.msra.mxu0 %v7745
  %7747 = vmatprep.subr.mxu0 0.0
  %v7748 = vand.u32 %v4771, 4294901760
  %7749 = vmatpush1.msra.mxu0 %v7748
  %7750 = vmatprep.subr.mxu0 0.0
  %v7751 = vand.u32 %v4770, 4294901760
  %7752 = vmatpush1.msra.mxu0 %v7751
  %7753 = vmatprep.subr.mxu0 0.0
  %v7754 = vand.u32 %v4769, 4294901760
  %7755 = vmatpush1.msra.mxu0 %v7754
  %7756 = vmatprep.subr.mxu0 0.0
  %v7757 = vand.u32 %v4768, 4294901760
  %7758 = vmatpush1.msra.mxu0 %v7757
  %7759 = vmatprep.subr.mxu0 0.0
  %v7760 = vand.u32 %v4767, 4294901760
  %7761 = vmatpush1.msra.mxu0 %v7760
  %7762 = vmatprep.subr.mxu0 0.0
  %v7763 = vand.u32 %v4766, 4294901760
  %7764 = vmatpush1.msra.mxu0 %v7763
  %7765 = vmatprep.subr.mxu0 0.0
  %v7766 = vand.u32 %v4765, 4294901760
  %7767 = vmatpush1.msra.mxu0 %v7766
  %7768 = vmatprep.subr.mxu0 0.0
  %v7769 = vand.u32 %v4764, 4294901760
  %7770 = vmatpush1.msra.mxu0 %v7769
  %7771 = vmatprep.subr.mxu0 0.0
  %v7772 = vand.u32 %v4763, 4294901760
  %7773 = vmatpush1.msra.mxu0 %v7772
  %7774 = vmatprep.subr.mxu0 0.0
  %v7775 = vand.u32 %v4762, 4294901760
  %7776 = vmatpush1.msra.mxu0 %v7775
  %7777 = vmatprep.subr.mxu0 0.0
  %v7778 = vand.u32 %v4761, 4294901760
  %7779 = vmatpush1.msra.mxu0 %v7778
  %7780 = vmatprep.subr.mxu0 0.0
  %v7781 = vand.u32 %v4760, 4294901760
  %7782 = vmatpush1.msra.mxu0 %v7781
  %7783 = vmatprep.subr.mxu0 0.0
  %v7784 = vand.u32 %v4759, 4294901760
  %7785 = vmatpush1.msra.mxu0 %v7784
  %7786 = vmatprep.subr.mxu0 0.0
  %v7787 = vand.u32 %v4790, 4294901760
  %7788 = vmatpush2.msra.mxu0 %v7787
  %7789 = vmatprep.subr.mxu0 0.0
  %v7790 = vand.u32 %v4789, 4294901760
  %7791 = vmatpush2.msra.mxu0 %v7790
  %7792 = vmatprep.subr.mxu0 0.0
  %v7793 = vand.u32 %v4788, 4294901760
  %7794 = vmatpush2.msra.mxu0 %v7793
  %7795 = vmatprep.subr.mxu0 0.0
  %v7796 = vand.u32 %v4787, 4294901760
  %7797 = vmatpush2.msra.mxu0 %v7796
  %7798 = vmatprep.subr.mxu0 0.0
  %v7799 = vand.u32 %v4786, 4294901760
  %7800 = vmatpush2.msra.mxu0 %v7799
  %7801 = vmatprep.subr.mxu0 0.0
  %v7802 = vand.u32 %v4785, 4294901760
  %7803 = vmatpush2.msra.mxu0 %v7802
  %7804 = vmatprep.subr.mxu0 0.0
  %v7805 = vand.u32 %v4784, 4294901760
  %7806 = vmatpush2.msra.mxu0 %v7805
  %7807 = vmatprep.subr.mxu0 0.0
  %v7808 = vand.u32 %v4783, 4294901760
  %7809 = vmatpush2.msra.mxu0 %v7808
  %7810 = vmatprep.subr.mxu0 0.0
  %v7811 = vand.u32 %v4782, 4294901760
  %7812 = vmatpush2.msra.mxu0 %v7811
  %7813 = vmatprep.subr.mxu0 0.0
  %v7814 = vand.u32 %v4781, 4294901760
  %7815 = vmatpush2.msra.mxu0 %v7814
  %7816 = vmatprep.subr.mxu0 0.0
  %v7817 = vand.u32 %v4780, 4294901760
  %7818 = vmatpush2.msra.mxu0 %v7817
  %7819 = vmatprep.subr.mxu0 0.0
  %v7820 = vand.u32 %v4779, 4294901760
  %7821 = vmatpush2.msra.mxu0 %v7820
  %7822 = vmatprep.subr.mxu0 0.0
  %v7823 = vand.u32 %v4778, 4294901760
  %7824 = vmatpush2.msra.mxu0 %v7823
  %7825 = vmatprep.subr.mxu0 0.0
  %v7826 = vand.u32 %v4777, 4294901760
  %7827 = vmatpush2.msra.mxu0 %v7826
  %7828 = vmatprep.subr.mxu0 0.0
  %v7829 = vand.u32 %v4776, 4294901760
  %7830 = vmatpush2.msra.mxu0 %v7829
  %7831 = vmatprep.subr.mxu0 0.0
  %v7832 = vand.u32 %v4775, 4294901760
  %7833 = vmatpush2.msra.mxu0 %v7832
  %v7834 = vand.u32 %v4740, 4294901760
  %v7835 = vsub.f32 %v4740, %v7834
  %v7836 = vand.u32 %v7835, 4294901760
  %7837 = vmatprep.mubr.f32.mxu0 %v7836
  %v7838 = vand.u32 %v4739, 4294901760
  %v7839 = vsub.f32 %v4739, %v7838
  %v7840 = vand.u32 %v7839, 4294901760
  %7841 = vmatmul.mubr.f32.gmra.mxu0 %v7840
  %v7842 = vpop.f32.mrf.mxu0
  %v7843 = vadd.f32 %v7708, %v7842
  %v7844 = vpop.f32.mrf.mxu0
  %v7845 = vand.u32 %v4744, 4294901760
  %v7846 = vsub.f32 %v4744, %v7845
  %v7847 = vand.u32 %v7846, 4294901760
  %7848 = vmatprep.mubr.f32.mxu0 %v7847
  %v7849 = vand.u32 %v4743, 4294901760
  %v7850 = vsub.f32 %v4743, %v7849
  %v7851 = vand.u32 %v7850, 4294901760
  %7852 = vmatmul.mubr.f32.gmra.mxu0 %v7851
  %v7853 = vpop.f32.mrf.mxu0
  %v7854 = vadd.f32 %v7717, %v7853
  %v7855 = vpop.f32.mrf.mxu0
  %v7856 = vand.u32 %v4748, 4294901760
  %v7857 = vsub.f32 %v4748, %v7856
  %v7858 = vand.u32 %v7857, 4294901760
  %7859 = vmatprep.mubr.f32.mxu0 %v7858
  %v7860 = vand.u32 %v4747, 4294901760
  %v7861 = vsub.f32 %v4747, %v7860
  %v7862 = vand.u32 %v7861, 4294901760
  %7863 = vmatmul.mubr.f32.gmra.mxu0 %v7862
  %v7864 = vpop.f32.mrf.mxu0
  %v7865 = vadd.f32 %v7726, %v7864
  %v7866 = vpop.f32.mrf.mxu0
  %v7867 = vand.u32 %v4752, 4294901760
  %v7868 = vsub.f32 %v4752, %v7867
  %v7869 = vand.u32 %v7868, 4294901760
  %7870 = vmatprep.mubr.f32.mxu0 %v7869
  %v7871 = vand.u32 %v4751, 4294901760
  %v7872 = vsub.f32 %v4751, %v7871
  %v7873 = vand.u32 %v7872, 4294901760
  %7874 = vmatmul.mubr.f32.gmra.mxu0 %v7873
  %v7875 = vpop.f32.mrf.mxu0
  %v7876 = vadd.f32 %v7735, %v7875
  %v7877 = vpop.f32.mrf.mxu0
  %7878 = vdwg.mxu0
  %7879 = vmatprep.subr.mxu0 0.0
  %v7880 = vand.u32 %v4774, 4294901760
  %v7881 = vsub.f32 %v4774, %v7880
  %v7882 = vand.u32 %v7881, 4294901760
  %7883 = vmatpush1.msra.mxu0 %v7882
  %7884 = vmatprep.subr.mxu0 0.0
  %v7885 = vand.u32 %v4773, 4294901760
  %v7886 = vsub.f32 %v4773, %v7885
  %v7887 = vand.u32 %v7886, 4294901760
  %7888 = vmatpush1.msra.mxu0 %v7887
  %7889 = vmatprep.subr.mxu0 0.0
  %v7890 = vand.u32 %v4772, 4294901760
  %v7891 = vsub.f32 %v4772, %v7890
  %v7892 = vand.u32 %v7891, 4294901760
  %7893 = vmatpush1.msra.mxu0 %v7892
  %7894 = vmatprep.subr.mxu0 0.0
  %v7895 = vand.u32 %v4771, 4294901760
  %v7896 = vsub.f32 %v4771, %v7895
  %v7897 = vand.u32 %v7896, 4294901760
  %7898 = vmatpush1.msra.mxu0 %v7897
  %7899 = vmatprep.subr.mxu0 0.0
  %v7900 = vand.u32 %v4770, 4294901760
  %v7901 = vsub.f32 %v4770, %v7900
  %v7902 = vand.u32 %v7901, 4294901760
  %7903 = vmatpush1.msra.mxu0 %v7902
  %7904 = vmatprep.subr.mxu0 0.0
  %v7905 = vand.u32 %v4769, 4294901760
  %v7906 = vsub.f32 %v4769, %v7905
  %v7907 = vand.u32 %v7906, 4294901760
  %7908 = vmatpush1.msra.mxu0 %v7907
  %7909 = vmatprep.subr.mxu0 0.0
  %v7910 = vand.u32 %v4768, 4294901760
  %v7911 = vsub.f32 %v4768, %v7910
  %v7912 = vand.u32 %v7911, 4294901760
  %7913 = vmatpush1.msra.mxu0 %v7912
  %7914 = vmatprep.subr.mxu0 0.0
  %v7915 = vand.u32 %v4767, 4294901760
  %v7916 = vsub.f32 %v4767, %v7915
  %v7917 = vand.u32 %v7916, 4294901760
  %7918 = vmatpush1.msra.mxu0 %v7917
  %7919 = vmatprep.subr.mxu0 0.0
  %v7920 = vand.u32 %v4766, 4294901760
  %v7921 = vsub.f32 %v4766, %v7920
  %v7922 = vand.u32 %v7921, 4294901760
  %7923 = vmatpush1.msra.mxu0 %v7922
  %7924 = vmatprep.subr.mxu0 0.0
  %v7925 = vand.u32 %v4765, 4294901760
  %v7926 = vsub.f32 %v4765, %v7925
  %v7927 = vand.u32 %v7926, 4294901760
  %7928 = vmatpush1.msra.mxu0 %v7927
  %7929 = vmatprep.subr.mxu0 0.0
  %v7930 = vand.u32 %v4764, 4294901760
  %v7931 = vsub.f32 %v4764, %v7930
  %v7932 = vand.u32 %v7931, 4294901760
  %7933 = vmatpush1.msra.mxu0 %v7932
  %7934 = vmatprep.subr.mxu0 0.0
  %v7935 = vand.u32 %v4763, 4294901760
  %v7936 = vsub.f32 %v4763, %v7935
  %v7937 = vand.u32 %v7936, 4294901760
  %7938 = vmatpush1.msra.mxu0 %v7937
  %7939 = vmatprep.subr.mxu0 0.0
  %v7940 = vand.u32 %v4762, 4294901760
  %v7941 = vsub.f32 %v4762, %v7940
  %v7942 = vand.u32 %v7941, 4294901760
  %7943 = vmatpush1.msra.mxu0 %v7942
  %7944 = vmatprep.subr.mxu0 0.0
  %v7945 = vand.u32 %v4761, 4294901760
  %v7946 = vsub.f32 %v4761, %v7945
  %v7947 = vand.u32 %v7946, 4294901760
  %7948 = vmatpush1.msra.mxu0 %v7947
  %7949 = vmatprep.subr.mxu0 0.0
  %v7950 = vand.u32 %v4760, 4294901760
  %v7951 = vsub.f32 %v4760, %v7950
  %v7952 = vand.u32 %v7951, 4294901760
  %7953 = vmatpush1.msra.mxu0 %v7952
  %7954 = vmatprep.subr.mxu0 0.0
  %v7955 = vand.u32 %v4759, 4294901760
  %v7956 = vsub.f32 %v4759, %v7955
  %v7957 = vand.u32 %v7956, 4294901760
  %7958 = vmatpush1.msra.mxu0 %v7957
  %7959 = vmatprep.subr.mxu0 0.0
  %v7960 = vand.u32 %v4790, 4294901760
  %v7961 = vsub.f32 %v4790, %v7960
  %v7962 = vand.u32 %v7961, 4294901760
  %7963 = vmatpush2.msra.mxu0 %v7962
  %7964 = vmatprep.subr.mxu0 0.0
  %v7965 = vand.u32 %v4789, 4294901760
  %v7966 = vsub.f32 %v4789, %v7965
  %v7967 = vand.u32 %v7966, 4294901760
  %7968 = vmatpush2.msra.mxu0 %v7967
  %7969 = vmatprep.subr.mxu0 0.0
  %v7970 = vand.u32 %v4788, 4294901760
  %v7971 = vsub.f32 %v4788, %v7970
  %v7972 = vand.u32 %v7971, 4294901760
  %7973 = vmatpush2.msra.mxu0 %v7972
  %7974 = vmatprep.subr.mxu0 0.0
  %v7975 = vand.u32 %v4787, 4294901760
  %v7976 = vsub.f32 %v4787, %v7975
  %v7977 = vand.u32 %v7976, 4294901760
  %7978 = vmatpush2.msra.mxu0 %v7977
  %7979 = vmatprep.subr.mxu0 0.0
  %v7980 = vand.u32 %v4786, 4294901760
  %v7981 = vsub.f32 %v4786, %v7980
  %v7982 = vand.u32 %v7981, 4294901760
  %7983 = vmatpush2.msra.mxu0 %v7982
  %7984 = vmatprep.subr.mxu0 0.0
  %v7985 = vand.u32 %v4785, 4294901760
  %v7986 = vsub.f32 %v4785, %v7985
  %v7987 = vand.u32 %v7986, 4294901760
  %7988 = vmatpush2.msra.mxu0 %v7987
  %7989 = vmatprep.subr.mxu0 0.0
  %v7990 = vand.u32 %v4784, 4294901760
  %v7991 = vsub.f32 %v4784, %v7990
  %v7992 = vand.u32 %v7991, 4294901760
  %7993 = vmatpush2.msra.mxu0 %v7992
  %7994 = vmatprep.subr.mxu0 0.0
  %v7995 = vand.u32 %v4783, 4294901760
  %v7996 = vsub.f32 %v4783, %v7995
  %v7997 = vand.u32 %v7996, 4294901760
  %7998 = vmatpush2.msra.mxu0 %v7997
  %7999 = vmatprep.subr.mxu0 0.0
  %v8000 = vand.u32 %v4782, 4294901760
  %v8001 = vsub.f32 %v4782, %v8000
  %v8002 = vand.u32 %v8001, 4294901760
  %8003 = vmatpush2.msra.mxu0 %v8002
  %8004 = vmatprep.subr.mxu0 0.0
  %v8005 = vand.u32 %v4781, 4294901760
  %v8006 = vsub.f32 %v4781, %v8005
  %v8007 = vand.u32 %v8006, 4294901760
  %8008 = vmatpush2.msra.mxu0 %v8007
  %8009 = vmatprep.subr.mxu0 0.0
  %v8010 = vand.u32 %v4780, 4294901760
  %v8011 = vsub.f32 %v4780, %v8010
  %v8012 = vand.u32 %v8011, 4294901760
  %8013 = vmatpush2.msra.mxu0 %v8012
  %8014 = vmatprep.subr.mxu0 0.0
  %v8015 = vand.u32 %v4779, 4294901760
  %v8016 = vsub.f32 %v4779, %v8015
  %v8017 = vand.u32 %v8016, 4294901760
  %8018 = vmatpush2.msra.mxu0 %v8017
  %8019 = vmatprep.subr.mxu0 0.0
  %v8020 = vand.u32 %v4778, 4294901760
  %v8021 = vsub.f32 %v4778, %v8020
  %v8022 = vand.u32 %v8021, 4294901760
  %8023 = vmatpush2.msra.mxu0 %v8022
  %8024 = vmatprep.subr.mxu0 0.0
  %v8025 = vand.u32 %v4777, 4294901760
  %v8026 = vsub.f32 %v4777, %v8025
  %v8027 = vand.u32 %v8026, 4294901760
  %8028 = vmatpush2.msra.mxu0 %v8027
  %8029 = vmatprep.subr.mxu0 0.0
  %v8030 = vand.u32 %v4776, 4294901760
  %v8031 = vsub.f32 %v4776, %v8030
  %v8032 = vand.u32 %v8031, 4294901760
  %8033 = vmatpush2.msra.mxu0 %v8032
  %8034 = vmatprep.subr.mxu0 0.0
  %v8035 = vand.u32 %v4775, 4294901760
  %v8036 = vsub.f32 %v4775, %v8035
  %v8037 = vand.u32 %v8036, 4294901760
  %8038 = vmatpush2.msra.mxu0 %v8037
  %v8039 = vand.u32 %v4740, 4294901760
  %8040 = vmatprep.mubr.f32.mxu0 %v8039
  %v8041 = vand.u32 %v4739, 4294901760
  %8042 = vmatmul.mubr.f32.gmra.mxu0 %v8041
  %v8043 = vpop.f32.mrf.mxu0
  %v8044 = vadd.f32 %v7843, %v8043
  %v8045 = vpop.f32.mrf.mxu0
  %v8046 = vand.u32 %v4744, 4294901760
  %8047 = vmatprep.mubr.f32.mxu0 %v8046
  %v8048 = vand.u32 %v4743, 4294901760
  %8049 = vmatmul.mubr.f32.gmra.mxu0 %v8048
  %v8050 = vpop.f32.mrf.mxu0
  %v8051 = vadd.f32 %v7854, %v8050
  %v8052 = vpop.f32.mrf.mxu0
  %v8053 = vand.u32 %v4748, 4294901760
  %8054 = vmatprep.mubr.f32.mxu0 %v8053
  %v8055 = vand.u32 %v4747, 4294901760
  %8056 = vmatmul.mubr.f32.gmra.mxu0 %v8055
  %v8057 = vpop.f32.mrf.mxu0
  %v8058 = vadd.f32 %v7865, %v8057
  %v8059 = vpop.f32.mrf.mxu0
  %v8060 = vand.u32 %v4752, 4294901760
  %8061 = vmatprep.mubr.f32.mxu0 %v8060
  %v8062 = vand.u32 %v4751, 4294901760
  %8063 = vmatmul.mubr.f32.gmra.mxu0 %v8062
  %v8064 = vpop.f32.mrf.mxu0
  %v8065 = vadd.f32 %v7876, %v8064
  %v8066 = vpop.f32.mrf.mxu0
  %8067 = vdwg.mxu0
  %8068 = vmatprep.subr.mxu0 0.0
  %v8069 = vand.u32 %v4774, 4294901760
  %8070 = vmatpush1.msra.mxu0 %v8069
  %8071 = vmatprep.subr.mxu0 0.0
  %v8072 = vand.u32 %v4773, 4294901760
  %8073 = vmatpush1.msra.mxu0 %v8072
  %8074 = vmatprep.subr.mxu0 0.0
  %v8075 = vand.u32 %v4772, 4294901760
  %8076 = vmatpush1.msra.mxu0 %v8075
  %8077 = vmatprep.subr.mxu0 0.0
  %v8078 = vand.u32 %v4771, 4294901760
  %8079 = vmatpush1.msra.mxu0 %v8078
  %8080 = vmatprep.subr.mxu0 0.0
  %v8081 = vand.u32 %v4770, 4294901760
  %8082 = vmatpush1.msra.mxu0 %v8081
  %8083 = vmatprep.subr.mxu0 0.0
  %v8084 = vand.u32 %v4769, 4294901760
  %8085 = vmatpush1.msra.mxu0 %v8084
  %8086 = vmatprep.subr.mxu0 0.0
  %v8087 = vand.u32 %v4768, 4294901760
  %8088 = vmatpush1.msra.mxu0 %v8087
  %8089 = vmatprep.subr.mxu0 0.0
  %v8090 = vand.u32 %v4767, 4294901760
  %8091 = vmatpush1.msra.mxu0 %v8090
  %8092 = vmatprep.subr.mxu0 0.0
  %v8093 = vand.u32 %v4766, 4294901760
  %8094 = vmatpush1.msra.mxu0 %v8093
  %8095 = vmatprep.subr.mxu0 0.0
  %v8096 = vand.u32 %v4765, 4294901760
  %8097 = vmatpush1.msra.mxu0 %v8096
  %8098 = vmatprep.subr.mxu0 0.0
  %v8099 = vand.u32 %v4764, 4294901760
  %8100 = vmatpush1.msra.mxu0 %v8099
  %8101 = vmatprep.subr.mxu0 0.0
  %v8102 = vand.u32 %v4763, 4294901760
  %8103 = vmatpush1.msra.mxu0 %v8102
  %8104 = vmatprep.subr.mxu0 0.0
  %v8105 = vand.u32 %v4762, 4294901760
  %8106 = vmatpush1.msra.mxu0 %v8105
  %8107 = vmatprep.subr.mxu0 0.0
  %v8108 = vand.u32 %v4761, 4294901760
  %8109 = vmatpush1.msra.mxu0 %v8108
  %8110 = vmatprep.subr.mxu0 0.0
  %v8111 = vand.u32 %v4760, 4294901760
  %8112 = vmatpush1.msra.mxu0 %v8111
  %8113 = vmatprep.subr.mxu0 0.0
  %v8114 = vand.u32 %v4759, 4294901760
  %8115 = vmatpush1.msra.mxu0 %v8114
  %8116 = vmatprep.subr.mxu0 0.0
  %v8117 = vand.u32 %v4790, 4294901760
  %8118 = vmatpush2.msra.mxu0 %v8117
  %8119 = vmatprep.subr.mxu0 0.0
  %v8120 = vand.u32 %v4789, 4294901760
  %8121 = vmatpush2.msra.mxu0 %v8120
  %8122 = vmatprep.subr.mxu0 0.0
  %v8123 = vand.u32 %v4788, 4294901760
  %8124 = vmatpush2.msra.mxu0 %v8123
  %8125 = vmatprep.subr.mxu0 0.0
  %v8126 = vand.u32 %v4787, 4294901760
  %8127 = vmatpush2.msra.mxu0 %v8126
  %8128 = vmatprep.subr.mxu0 0.0
  %v8129 = vand.u32 %v4786, 4294901760
  %8130 = vmatpush2.msra.mxu0 %v8129
  %8131 = vmatprep.subr.mxu0 0.0
  %v8132 = vand.u32 %v4785, 4294901760
  %8133 = vmatpush2.msra.mxu0 %v8132
  %8134 = vmatprep.subr.mxu0 0.0
  %v8135 = vand.u32 %v4784, 4294901760
  %8136 = vmatpush2.msra.mxu0 %v8135
  %8137 = vmatprep.subr.mxu0 0.0
  %v8138 = vand.u32 %v4783, 4294901760
  %8139 = vmatpush2.msra.mxu0 %v8138
  %8140 = vmatprep.subr.mxu0 0.0
  %v8141 = vand.u32 %v4782, 4294901760
  %8142 = vmatpush2.msra.mxu0 %v8141
  %8143 = vmatprep.subr.mxu0 0.0
  %v8144 = vand.u32 %v4781, 4294901760
  %8145 = vmatpush2.msra.mxu0 %v8144
  %8146 = vmatprep.subr.mxu0 0.0
  %v8147 = vand.u32 %v4780, 4294901760
  %8148 = vmatpush2.msra.mxu0 %v8147
  %8149 = vmatprep.subr.mxu0 0.0
  %v8150 = vand.u32 %v4779, 4294901760
  %8151 = vmatpush2.msra.mxu0 %v8150
  %8152 = vmatprep.subr.mxu0 0.0
  %v8153 = vand.u32 %v4778, 4294901760
  %8154 = vmatpush2.msra.mxu0 %v8153
  %8155 = vmatprep.subr.mxu0 0.0
  %v8156 = vand.u32 %v4777, 4294901760
  %8157 = vmatpush2.msra.mxu0 %v8156
  %8158 = vmatprep.subr.mxu0 0.0
  %v8159 = vand.u32 %v4776, 4294901760
  %8160 = vmatpush2.msra.mxu0 %v8159
  %8161 = vmatprep.subr.mxu0 0.0
  %v8162 = vand.u32 %v4775, 4294901760
  %8163 = vmatpush2.msra.mxu0 %v8162
  %v8164 = vand.u32 %v4740, 4294901760
  %8165 = vmatprep.mubr.f32.mxu0 %v8164
  %v8166 = vand.u32 %v4739, 4294901760
  %8167 = vmatmul.mubr.f32.gmra.mxu0 %v8166
  %v8168 = vpop.f32.mrf.mxu0
  %v8169 = vadd.f32 %v8044, %v8168
  %v8170 = vpop.f32.mrf.mxu0
  %v8171 = vand.u32 %v4744, 4294901760
  %8172 = vmatprep.mubr.f32.mxu0 %v8171
  %v8173 = vand.u32 %v4743, 4294901760
  %8174 = vmatmul.mubr.f32.gmra.mxu0 %v8173
  %v8175 = vpop.f32.mrf.mxu0
  %v8176 = vadd.f32 %v8051, %v8175
  %v8177 = vpop.f32.mrf.mxu0
  %v8178 = vand.u32 %v4748, 4294901760
  %8179 = vmatprep.mubr.f32.mxu0 %v8178
  %v8180 = vand.u32 %v4747, 4294901760
  %8181 = vmatmul.mubr.f32.gmra.mxu0 %v8180
  %v8182 = vpop.f32.mrf.mxu0
  %v8183 = vadd.f32 %v8058, %v8182
  %v8184 = vpop.f32.mrf.mxu0
  %v8185 = vand.u32 %v4752, 4294901760
  %8186 = vmatprep.mubr.f32.mxu0 %v8185
  %v8187 = vand.u32 %v4751, 4294901760
  %8188 = vmatmul.mubr.f32.gmra.mxu0 %v8187
  %v8189 = vpop.f32.mrf.mxu0
  %v8190 = vadd.f32 %v8065, %v8189
  %v8191 = vpop.f32.mrf.mxu0
  %8192 = vdwg.mxu0
  %8193 = vmatprep.subr.mxu0 0.0
  %v8194 = vand.u32 %v4806, 4294901760
  %8195 = vmatpush1.msra.mxu0 %v8194
  %8196 = vmatprep.subr.mxu0 0.0
  %v8197 = vand.u32 %v4805, 4294901760
  %8198 = vmatpush1.msra.mxu0 %v8197
  %8199 = vmatprep.subr.mxu0 0.0
  %v8200 = vand.u32 %v4804, 4294901760
  %8201 = vmatpush1.msra.mxu0 %v8200
  %8202 = vmatprep.subr.mxu0 0.0
  %v8203 = vand.u32 %v4803, 4294901760
  %8204 = vmatpush1.msra.mxu0 %v8203
  %8205 = vmatprep.subr.mxu0 0.0
  %v8206 = vand.u32 %v4802, 4294901760
  %8207 = vmatpush1.msra.mxu0 %v8206
  %8208 = vmatprep.subr.mxu0 0.0
  %v8209 = vand.u32 %v4801, 4294901760
  %8210 = vmatpush1.msra.mxu0 %v8209
  %8211 = vmatprep.subr.mxu0 0.0
  %v8212 = vand.u32 %v4800, 4294901760
  %8213 = vmatpush1.msra.mxu0 %v8212
  %8214 = vmatprep.subr.mxu0 0.0
  %v8215 = vand.u32 %v4799, 4294901760
  %8216 = vmatpush1.msra.mxu0 %v8215
  %8217 = vmatprep.subr.mxu0 0.0
  %v8218 = vand.u32 %v4798, 4294901760
  %8219 = vmatpush1.msra.mxu0 %v8218
  %8220 = vmatprep.subr.mxu0 0.0
  %v8221 = vand.u32 %v4797, 4294901760
  %8222 = vmatpush1.msra.mxu0 %v8221
  %8223 = vmatprep.subr.mxu0 0.0
  %v8224 = vand.u32 %v4796, 4294901760
  %8225 = vmatpush1.msra.mxu0 %v8224
  %8226 = vmatprep.subr.mxu0 0.0
  %v8227 = vand.u32 %v4795, 4294901760
  %8228 = vmatpush1.msra.mxu0 %v8227
  %8229 = vmatprep.subr.mxu0 0.0
  %v8230 = vand.u32 %v4794, 4294901760
  %8231 = vmatpush1.msra.mxu0 %v8230
  %8232 = vmatprep.subr.mxu0 0.0
  %v8233 = vand.u32 %v4793, 4294901760
  %8234 = vmatpush1.msra.mxu0 %v8233
  %8235 = vmatprep.subr.mxu0 0.0
  %v8236 = vand.u32 %v4792, 4294901760
  %8237 = vmatpush1.msra.mxu0 %v8236
  %8238 = vmatprep.subr.mxu0 0.0
  %v8239 = vand.u32 %v4791, 4294901760
  %8240 = vmatpush1.msra.mxu0 %v8239
  %8241 = vmatprep.subr.mxu0 0.0
  %v8242 = vand.u32 %v4822, 4294901760
  %8243 = vmatpush2.msra.mxu0 %v8242
  %8244 = vmatprep.subr.mxu0 0.0
  %v8245 = vand.u32 %v4821, 4294901760
  %8246 = vmatpush2.msra.mxu0 %v8245
  %8247 = vmatprep.subr.mxu0 0.0
  %v8248 = vand.u32 %v4820, 4294901760
  %8249 = vmatpush2.msra.mxu0 %v8248
  %8250 = vmatprep.subr.mxu0 0.0
  %v8251 = vand.u32 %v4819, 4294901760
  %8252 = vmatpush2.msra.mxu0 %v8251
  %8253 = vmatprep.subr.mxu0 0.0
  %v8254 = vand.u32 %v4818, 4294901760
  %8255 = vmatpush2.msra.mxu0 %v8254
  %8256 = vmatprep.subr.mxu0 0.0
  %v8257 = vand.u32 %v4817, 4294901760
  %8258 = vmatpush2.msra.mxu0 %v8257
  %8259 = vmatprep.subr.mxu0 0.0
  %v8260 = vand.u32 %v4816, 4294901760
  %8261 = vmatpush2.msra.mxu0 %v8260
  %8262 = vmatprep.subr.mxu0 0.0
  %v8263 = vand.u32 %v4815, 4294901760
  %8264 = vmatpush2.msra.mxu0 %v8263
  %8265 = vmatprep.subr.mxu0 0.0
  %v8266 = vand.u32 %v4814, 4294901760
  %8267 = vmatpush2.msra.mxu0 %v8266
  %8268 = vmatprep.subr.mxu0 0.0
  %v8269 = vand.u32 %v4813, 4294901760
  %8270 = vmatpush2.msra.mxu0 %v8269
  %8271 = vmatprep.subr.mxu0 0.0
  %v8272 = vand.u32 %v4812, 4294901760
  %8273 = vmatpush2.msra.mxu0 %v8272
  %8274 = vmatprep.subr.mxu0 0.0
  %v8275 = vand.u32 %v4811, 4294901760
  %8276 = vmatpush2.msra.mxu0 %v8275
  %8277 = vmatprep.subr.mxu0 0.0
  %v8278 = vand.u32 %v4810, 4294901760
  %8279 = vmatpush2.msra.mxu0 %v8278
  %8280 = vmatprep.subr.mxu0 0.0
  %v8281 = vand.u32 %v4809, 4294901760
  %8282 = vmatpush2.msra.mxu0 %v8281
  %8283 = vmatprep.subr.mxu0 0.0
  %v8284 = vand.u32 %v4808, 4294901760
  %8285 = vmatpush2.msra.mxu0 %v8284
  %8286 = vmatprep.subr.mxu0 0.0
  %v8287 = vand.u32 %v4807, 4294901760
  %8288 = vmatpush2.msra.mxu0 %v8287
  %v8289 = vand.u32 %v4742, 4294901760
  %v8290 = vsub.f32 %v4742, %v8289
  %v8291 = vand.u32 %v8290, 4294901760
  %v8292 = vsub.f32 %v8290, %v8291
  %v8293 = vand.u32 %v8292, 4294901760
  %8294 = vmatprep.mubr.f32.mxu0 %v8293
  %v8295 = vand.u32 %v4741, 4294901760
  %v8296 = vsub.f32 %v4741, %v8295
  %v8297 = vand.u32 %v8296, 4294901760
  %v8298 = vsub.f32 %v8296, %v8297
  %v8299 = vand.u32 %v8298, 4294901760
  %8300 = vmatmul.mubr.f32.gmra.mxu0 %v8299
  %v8301 = vpop.f32.mrf.mxu0
  %v8302 = vadd.f32 %v8169, %v8301
  %v8303 = vpop.f32.mrf.mxu0
  %v8304 = vand.u32 %v4746, 4294901760
  %v8305 = vsub.f32 %v4746, %v8304
  %v8306 = vand.u32 %v8305, 4294901760
  %v8307 = vsub.f32 %v8305, %v8306
  %v8308 = vand.u32 %v8307, 4294901760
  %8309 = vmatprep.mubr.f32.mxu0 %v8308
  %v8310 = vand.u32 %v4745, 4294901760
  %v8311 = vsub.f32 %v4745, %v8310
  %v8312 = vand.u32 %v8311, 4294901760
  %v8313 = vsub.f32 %v8311, %v8312
  %v8314 = vand.u32 %v8313, 4294901760
  %8315 = vmatmul.mubr.f32.gmra.mxu0 %v8314
  %v8316 = vpop.f32.mrf.mxu0
  %v8317 = vadd.f32 %v8176, %v8316
  %v8318 = vpop.f32.mrf.mxu0
  %v8319 = vand.u32 %v4750, 4294901760
  %v8320 = vsub.f32 %v4750, %v8319
  %v8321 = vand.u32 %v8320, 4294901760
  %v8322 = vsub.f32 %v8320, %v8321
  %v8323 = vand.u32 %v8322, 4294901760
  %8324 = vmatprep.mubr.f32.mxu0 %v8323
  %v8325 = vand.u32 %v4749, 4294901760
  %v8326 = vsub.f32 %v4749, %v8325
  %v8327 = vand.u32 %v8326, 4294901760
  %v8328 = vsub.f32 %v8326, %v8327
  %v8329 = vand.u32 %v8328, 4294901760
  %8330 = vmatmul.mubr.f32.gmra.mxu0 %v8329
  %v8331 = vpop.f32.mrf.mxu0
  %v8332 = vadd.f32 %v8183, %v8331
  %v8333 = vpop.f32.mrf.mxu0
  %v8334 = vand.u32 %v4754, 4294901760
  %v8335 = vsub.f32 %v4754, %v8334
  %v8336 = vand.u32 %v8335, 4294901760
  %v8337 = vsub.f32 %v8335, %v8336
  %v8338 = vand.u32 %v8337, 4294901760
  %8339 = vmatprep.mubr.f32.mxu0 %v8338
  %v8340 = vand.u32 %v4753, 4294901760
  %v8341 = vsub.f32 %v4753, %v8340
  %v8342 = vand.u32 %v8341, 4294901760
  %v8343 = vsub.f32 %v8341, %v8342
  %v8344 = vand.u32 %v8343, 4294901760
  %8345 = vmatmul.mubr.f32.gmra.mxu0 %v8344
  %v8346 = vpop.f32.mrf.mxu0
  %v8347 = vadd.f32 %v8190, %v8346
  %v8348 = vpop.f32.mrf.mxu0
  %8349 = vdwg.mxu0
  %8350 = vmatprep.subr.mxu0 0.0
  %v8351 = vand.u32 %v4806, 4294901760
  %v8352 = vsub.f32 %v4806, %v8351
  %v8353 = vand.u32 %v8352, 4294901760
  %v8354 = vsub.f32 %v8352, %v8353
  %v8355 = vand.u32 %v8354, 4294901760
  %8356 = vmatpush1.msra.mxu0 %v8355
  %8357 = vmatprep.subr.mxu0 0.0
  %v8358 = vand.u32 %v4805, 4294901760
  %v8359 = vsub.f32 %v4805, %v8358
  %v8360 = vand.u32 %v8359, 4294901760
  %v8361 = vsub.f32 %v8359, %v8360
  %v8362 = vand.u32 %v8361, 4294901760
  %8363 = vmatpush1.msra.mxu0 %v8362
  %8364 = vmatprep.subr.mxu0 0.0
  %v8365 = vand.u32 %v4804, 4294901760
  %v8366 = vsub.f32 %v4804, %v8365
  %v8367 = vand.u32 %v8366, 4294901760
  %v8368 = vsub.f32 %v8366, %v8367
  %v8369 = vand.u32 %v8368, 4294901760
  %8370 = vmatpush1.msra.mxu0 %v8369
  %8371 = vmatprep.subr.mxu0 0.0
  %v8372 = vand.u32 %v4803, 4294901760
  %v8373 = vsub.f32 %v4803, %v8372
  %v8374 = vand.u32 %v8373, 4294901760
  %v8375 = vsub.f32 %v8373, %v8374
  %v8376 = vand.u32 %v8375, 4294901760
  %8377 = vmatpush1.msra.mxu0 %v8376
  %8378 = vmatprep.subr.mxu0 0.0
  %v8379 = vand.u32 %v4802, 4294901760
  %v8380 = vsub.f32 %v4802, %v8379
  %v8381 = vand.u32 %v8380, 4294901760
  %v8382 = vsub.f32 %v8380, %v8381
  %v8383 = vand.u32 %v8382, 4294901760
  %8384 = vmatpush1.msra.mxu0 %v8383
  %8385 = vmatprep.subr.mxu0 0.0
  %v8386 = vand.u32 %v4801, 4294901760
  %v8387 = vsub.f32 %v4801, %v8386
  %v8388 = vand.u32 %v8387, 4294901760
  %v8389 = vsub.f32 %v8387, %v8388
  %v8390 = vand.u32 %v8389, 4294901760
  %8391 = vmatpush1.msra.mxu0 %v8390
  %8392 = vmatprep.subr.mxu0 0.0
  %v8393 = vand.u32 %v4800, 4294901760
  %v8394 = vsub.f32 %v4800, %v8393
  %v8395 = vand.u32 %v8394, 4294901760
  %v8396 = vsub.f32 %v8394, %v8395
  %v8397 = vand.u32 %v8396, 4294901760
  %8398 = vmatpush1.msra.mxu0 %v8397
  %8399 = vmatprep.subr.mxu0 0.0
  %v8400 = vand.u32 %v4799, 4294901760
  %v8401 = vsub.f32 %v4799, %v8400
  %v8402 = vand.u32 %v8401, 4294901760
  %v8403 = vsub.f32 %v8401, %v8402
  %v8404 = vand.u32 %v8403, 4294901760
  %8405 = vmatpush1.msra.mxu0 %v8404
  %8406 = vmatprep.subr.mxu0 0.0
  %v8407 = vand.u32 %v4798, 4294901760
  %v8408 = vsub.f32 %v4798, %v8407
  %v8409 = vand.u32 %v8408, 4294901760
  %v8410 = vsub.f32 %v8408, %v8409
  %v8411 = vand.u32 %v8410, 4294901760
  %8412 = vmatpush1.msra.mxu0 %v8411
  %8413 = vmatprep.subr.mxu0 0.0
  %v8414 = vand.u32 %v4797, 4294901760
  %v8415 = vsub.f32 %v4797, %v8414
  %v8416 = vand.u32 %v8415, 4294901760
  %v8417 = vsub.f32 %v8415, %v8416
  %v8418 = vand.u32 %v8417, 4294901760
  %8419 = vmatpush1.msra.mxu0 %v8418
  %8420 = vmatprep.subr.mxu0 0.0
  %v8421 = vand.u32 %v4796, 4294901760
  %v8422 = vsub.f32 %v4796, %v8421
  %v8423 = vand.u32 %v8422, 4294901760
  %v8424 = vsub.f32 %v8422, %v8423
  %v8425 = vand.u32 %v8424, 4294901760
  %8426 = vmatpush1.msra.mxu0 %v8425
  %8427 = vmatprep.subr.mxu0 0.0
  %v8428 = vand.u32 %v4795, 4294901760
  %v8429 = vsub.f32 %v4795, %v8428
  %v8430 = vand.u32 %v8429, 4294901760
  %v8431 = vsub.f32 %v8429, %v8430
  %v8432 = vand.u32 %v8431, 4294901760
  %8433 = vmatpush1.msra.mxu0 %v8432
  %8434 = vmatprep.subr.mxu0 0.0
  %v8435 = vand.u32 %v4794, 4294901760
  %v8436 = vsub.f32 %v4794, %v8435
  %v8437 = vand.u32 %v8436, 4294901760
  %v8438 = vsub.f32 %v8436, %v8437
  %v8439 = vand.u32 %v8438, 4294901760
  %8440 = vmatpush1.msra.mxu0 %v8439
  %8441 = vmatprep.subr.mxu0 0.0
  %v8442 = vand.u32 %v4793, 4294901760
  %v8443 = vsub.f32 %v4793, %v8442
  %v8444 = vand.u32 %v8443, 4294901760
  %v8445 = vsub.f32 %v8443, %v8444
  %v8446 = vand.u32 %v8445, 4294901760
  %8447 = vmatpush1.msra.mxu0 %v8446
  %8448 = vmatprep.subr.mxu0 0.0
  %v8449 = vand.u32 %v4792, 4294901760
  %v8450 = vsub.f32 %v4792, %v8449
  %v8451 = vand.u32 %v8450, 4294901760
  %v8452 = vsub.f32 %v8450, %v8451
  %v8453 = vand.u32 %v8452, 4294901760
  %8454 = vmatpush1.msra.mxu0 %v8453
  %8455 = vmatprep.subr.mxu0 0.0
  %v8456 = vand.u32 %v4791, 4294901760
  %v8457 = vsub.f32 %v4791, %v8456
  %v8458 = vand.u32 %v8457, 4294901760
  %v8459 = vsub.f32 %v8457, %v8458
  %v8460 = vand.u32 %v8459, 4294901760
  %8461 = vmatpush1.msra.mxu0 %v8460
  %8462 = vmatprep.subr.mxu0 0.0
  %v8463 = vand.u32 %v4822, 4294901760
  %v8464 = vsub.f32 %v4822, %v8463
  %v8465 = vand.u32 %v8464, 4294901760
  %v8466 = vsub.f32 %v8464, %v8465
  %v8467 = vand.u32 %v8466, 4294901760
  %8468 = vmatpush2.msra.mxu0 %v8467
  %8469 = vmatprep.subr.mxu0 0.0
  %v8470 = vand.u32 %v4821, 4294901760
  %v8471 = vsub.f32 %v4821, %v8470
  %v8472 = vand.u32 %v8471, 4294901760
  %v8473 = vsub.f32 %v8471, %v8472
  %v8474 = vand.u32 %v8473, 4294901760
  %8475 = vmatpush2.msra.mxu0 %v8474
  %8476 = vmatprep.subr.mxu0 0.0
  %v8477 = vand.u32 %v4820, 4294901760
  %v8478 = vsub.f32 %v4820, %v8477
  %v8479 = vand.u32 %v8478, 4294901760
  %v8480 = vsub.f32 %v8478, %v8479
  %v8481 = vand.u32 %v8480, 4294901760
  %8482 = vmatpush2.msra.mxu0 %v8481
  %8483 = vmatprep.subr.mxu0 0.0
  %v8484 = vand.u32 %v4819, 4294901760
  %v8485 = vsub.f32 %v4819, %v8484
  %v8486 = vand.u32 %v8485, 4294901760
  %v8487 = vsub.f32 %v8485, %v8486
  %v8488 = vand.u32 %v8487, 4294901760
  %8489 = vmatpush2.msra.mxu0 %v8488
  %8490 = vmatprep.subr.mxu0 0.0
  %v8491 = vand.u32 %v4818, 4294901760
  %v8492 = vsub.f32 %v4818, %v8491
  %v8493 = vand.u32 %v8492, 4294901760
  %v8494 = vsub.f32 %v8492, %v8493
  %v8495 = vand.u32 %v8494, 4294901760
  %8496 = vmatpush2.msra.mxu0 %v8495
  %8497 = vmatprep.subr.mxu0 0.0
  %v8498 = vand.u32 %v4817, 4294901760
  %v8499 = vsub.f32 %v4817, %v8498
  %v8500 = vand.u32 %v8499, 4294901760
  %v8501 = vsub.f32 %v8499, %v8500
  %v8502 = vand.u32 %v8501, 4294901760
  %8503 = vmatpush2.msra.mxu0 %v8502
  %8504 = vmatprep.subr.mxu0 0.0
  %v8505 = vand.u32 %v4816, 4294901760
  %v8506 = vsub.f32 %v4816, %v8505
  %v8507 = vand.u32 %v8506, 4294901760
  %v8508 = vsub.f32 %v8506, %v8507
  %v8509 = vand.u32 %v8508, 4294901760
  %8510 = vmatpush2.msra.mxu0 %v8509
  %8511 = vmatprep.subr.mxu0 0.0
  %v8512 = vand.u32 %v4815, 4294901760
  %v8513 = vsub.f32 %v4815, %v8512
  %v8514 = vand.u32 %v8513, 4294901760
  %v8515 = vsub.f32 %v8513, %v8514
  %v8516 = vand.u32 %v8515, 4294901760
  %8517 = vmatpush2.msra.mxu0 %v8516
  %8518 = vmatprep.subr.mxu0 0.0
  %v8519 = vand.u32 %v4814, 4294901760
  %v8520 = vsub.f32 %v4814, %v8519
  %v8521 = vand.u32 %v8520, 4294901760
  %v8522 = vsub.f32 %v8520, %v8521
  %v8523 = vand.u32 %v8522, 4294901760
  %8524 = vmatpush2.msra.mxu0 %v8523
  %8525 = vmatprep.subr.mxu0 0.0
  %v8526 = vand.u32 %v4813, 4294901760
  %v8527 = vsub.f32 %v4813, %v8526
  %v8528 = vand.u32 %v8527, 4294901760
  %v8529 = vsub.f32 %v8527, %v8528
  %v8530 = vand.u32 %v8529, 4294901760
  %8531 = vmatpush2.msra.mxu0 %v8530
  %8532 = vmatprep.subr.mxu0 0.0
  %v8533 = vand.u32 %v4812, 4294901760
  %v8534 = vsub.f32 %v4812, %v8533
  %v8535 = vand.u32 %v8534, 4294901760
  %v8536 = vsub.f32 %v8534, %v8535
  %v8537 = vand.u32 %v8536, 4294901760
  %8538 = vmatpush2.msra.mxu0 %v8537
  %8539 = vmatprep.subr.mxu0 0.0
  %v8540 = vand.u32 %v4811, 4294901760
  %v8541 = vsub.f32 %v4811, %v8540
  %v8542 = vand.u32 %v8541, 4294901760
  %v8543 = vsub.f32 %v8541, %v8542
  %v8544 = vand.u32 %v8543, 4294901760
  %8545 = vmatpush2.msra.mxu0 %v8544
  %8546 = vmatprep.subr.mxu0 0.0
  %v8547 = vand.u32 %v4810, 4294901760
  %v8548 = vsub.f32 %v4810, %v8547
  %v8549 = vand.u32 %v8548, 4294901760
  %v8550 = vsub.f32 %v8548, %v8549
  %v8551 = vand.u32 %v8550, 4294901760
  %8552 = vmatpush2.msra.mxu0 %v8551
  %8553 = vmatprep.subr.mxu0 0.0
  %v8554 = vand.u32 %v4809, 4294901760
  %v8555 = vsub.f32 %v4809, %v8554
  %v8556 = vand.u32 %v8555, 4294901760
  %v8557 = vsub.f32 %v8555, %v8556
  %v8558 = vand.u32 %v8557, 4294901760
  %8559 = vmatpush2.msra.mxu0 %v8558
  %8560 = vmatprep.subr.mxu0 0.0
  %v8561 = vand.u32 %v4808, 4294901760
  %v8562 = vsub.f32 %v4808, %v8561
  %v8563 = vand.u32 %v8562, 4294901760
  %v8564 = vsub.f32 %v8562, %v8563
  %v8565 = vand.u32 %v8564, 4294901760
  %8566 = vmatpush2.msra.mxu0 %v8565
  %8567 = vmatprep.subr.mxu0 0.0
  %v8568 = vand.u32 %v4807, 4294901760
  %v8569 = vsub.f32 %v4807, %v8568
  %v8570 = vand.u32 %v8569, 4294901760
  %v8571 = vsub.f32 %v8569, %v8570
  %v8572 = vand.u32 %v8571, 4294901760
  %8573 = vmatpush2.msra.mxu0 %v8572
  %v8574 = vand.u32 %v4742, 4294901760
  %8575 = vmatprep.mubr.f32.mxu0 %v8574
  %v8576 = vand.u32 %v4741, 4294901760
  %8577 = vmatmul.mubr.f32.gmra.mxu0 %v8576
  %v8578 = vpop.f32.mrf.mxu0
  %v8579 = vadd.f32 %v8302, %v8578
  %v8580 = vpop.f32.mrf.mxu0
  %v8581 = vand.u32 %v4746, 4294901760
  %8582 = vmatprep.mubr.f32.mxu0 %v8581
  %v8583 = vand.u32 %v4745, 4294901760
  %8584 = vmatmul.mubr.f32.gmra.mxu0 %v8583
  %v8585 = vpop.f32.mrf.mxu0
  %v8586 = vadd.f32 %v8317, %v8585
  %v8587 = vpop.f32.mrf.mxu0
  %v8588 = vand.u32 %v4750, 4294901760
  %8589 = vmatprep.mubr.f32.mxu0 %v8588
  %v8590 = vand.u32 %v4749, 4294901760
  %8591 = vmatmul.mubr.f32.gmra.mxu0 %v8590
  %v8592 = vpop.f32.mrf.mxu0
  %v8593 = vadd.f32 %v8332, %v8592
  %v8594 = vpop.f32.mrf.mxu0
  %v8595 = vand.u32 %v4754, 4294901760
  %8596 = vmatprep.mubr.f32.mxu0 %v8595
  %v8597 = vand.u32 %v4753, 4294901760
  %8598 = vmatmul.mubr.f32.gmra.mxu0 %v8597
  %v8599 = vpop.f32.mrf.mxu0
  %v8600 = vadd.f32 %v8347, %v8599
  %v8601 = vpop.f32.mrf.mxu0
  %8602 = vdwg.mxu0
  %8603 = vmatprep.subr.mxu0 0.0
  %v8604 = vand.u32 %v4806, 4294901760
  %v8605 = vsub.f32 %v4806, %v8604
  %8606 = vmatpush1.msra.mxu0 %v8605
  %8607 = vmatprep.subr.mxu0 0.0
  %v8608 = vand.u32 %v4805, 4294901760
  %v8609 = vsub.f32 %v4805, %v8608
  %8610 = vmatpush1.msra.mxu0 %v8609
  %8611 = vmatprep.subr.mxu0 0.0
  %v8612 = vand.u32 %v4804, 4294901760
  %v8613 = vsub.f32 %v4804, %v8612
  %8614 = vmatpush1.msra.mxu0 %v8613
  %8615 = vmatprep.subr.mxu0 0.0
  %v8616 = vand.u32 %v4803, 4294901760
  %v8617 = vsub.f32 %v4803, %v8616
  %8618 = vmatpush1.msra.mxu0 %v8617
  %8619 = vmatprep.subr.mxu0 0.0
  %v8620 = vand.u32 %v4802, 4294901760
  %v8621 = vsub.f32 %v4802, %v8620
  %8622 = vmatpush1.msra.mxu0 %v8621
  %8623 = vmatprep.subr.mxu0 0.0
  %v8624 = vand.u32 %v4801, 4294901760
  %v8625 = vsub.f32 %v4801, %v8624
  %8626 = vmatpush1.msra.mxu0 %v8625
  %8627 = vmatprep.subr.mxu0 0.0
  %v8628 = vand.u32 %v4800, 4294901760
  %v8629 = vsub.f32 %v4800, %v8628
  %8630 = vmatpush1.msra.mxu0 %v8629
  %8631 = vmatprep.subr.mxu0 0.0
  %v8632 = vand.u32 %v4799, 4294901760
  %v8633 = vsub.f32 %v4799, %v8632
  %8634 = vmatpush1.msra.mxu0 %v8633
  %8635 = vmatprep.subr.mxu0 0.0
  %v8636 = vand.u32 %v4798, 4294901760
  %v8637 = vsub.f32 %v4798, %v8636
  %8638 = vmatpush1.msra.mxu0 %v8637
  %8639 = vmatprep.subr.mxu0 0.0
  %v8640 = vand.u32 %v4797, 4294901760
  %v8641 = vsub.f32 %v4797, %v8640
  %8642 = vmatpush1.msra.mxu0 %v8641
  %8643 = vmatprep.subr.mxu0 0.0
  %v8644 = vand.u32 %v4796, 4294901760
  %v8645 = vsub.f32 %v4796, %v8644
  %8646 = vmatpush1.msra.mxu0 %v8645
  %8647 = vmatprep.subr.mxu0 0.0
  %v8648 = vand.u32 %v4795, 4294901760
  %v8649 = vsub.f32 %v4795, %v8648
  %8650 = vmatpush1.msra.mxu0 %v8649
  %8651 = vmatprep.subr.mxu0 0.0
  %v8652 = vand.u32 %v4794, 4294901760
  %v8653 = vsub.f32 %v4794, %v8652
  %8654 = vmatpush1.msra.mxu0 %v8653
  %8655 = vmatprep.subr.mxu0 0.0
  %v8656 = vand.u32 %v4793, 4294901760
  %v8657 = vsub.f32 %v4793, %v8656
  %8658 = vmatpush1.msra.mxu0 %v8657
  %8659 = vmatprep.subr.mxu0 0.0
  %v8660 = vand.u32 %v4792, 4294901760
  %v8661 = vsub.f32 %v4792, %v8660
  %8662 = vmatpush1.msra.mxu0 %v8661
  %8663 = vmatprep.subr.mxu0 0.0
  %v8664 = vand.u32 %v4791, 4294901760
  %v8665 = vsub.f32 %v4791, %v8664
  %8666 = vmatpush1.msra.mxu0 %v8665
  %8667 = vmatprep.subr.mxu0 0.0
  %v8668 = vand.u32 %v4822, 4294901760
  %v8669 = vsub.f32 %v4822, %v8668
  %8670 = vmatpush2.msra.mxu0 %v8669
  %8671 = vmatprep.subr.mxu0 0.0
  %v8672 = vand.u32 %v4821, 4294901760
  %v8673 = vsub.f32 %v4821, %v8672
  %8674 = vmatpush2.msra.mxu0 %v8673
  %8675 = vmatprep.subr.mxu0 0.0
  %v8676 = vand.u32 %v4820, 4294901760
  %v8677 = vsub.f32 %v4820, %v8676
  %8678 = vmatpush2.msra.mxu0 %v8677
  %8679 = vmatprep.subr.mxu0 0.0
  %v8680 = vand.u32 %v4819, 4294901760
  %v8681 = vsub.f32 %v4819, %v8680
  %8682 = vmatpush2.msra.mxu0 %v8681
  %8683 = vmatprep.subr.mxu0 0.0
  %v8684 = vand.u32 %v4818, 4294901760
  %v8685 = vsub.f32 %v4818, %v8684
  %8686 = vmatpush2.msra.mxu0 %v8685
  %8687 = vmatprep.subr.mxu0 0.0
  %v8688 = vand.u32 %v4817, 4294901760
  %v8689 = vsub.f32 %v4817, %v8688
  %8690 = vmatpush2.msra.mxu0 %v8689
  %8691 = vmatprep.subr.mxu0 0.0
  %v8692 = vand.u32 %v4816, 4294901760
  %v8693 = vsub.f32 %v4816, %v8692
  %8694 = vmatpush2.msra.mxu0 %v8693
  %8695 = vmatprep.subr.mxu0 0.0
  %v8696 = vand.u32 %v4815, 4294901760
  %v8697 = vsub.f32 %v4815, %v8696
  %8698 = vmatpush2.msra.mxu0 %v8697
  %8699 = vmatprep.subr.mxu0 0.0
  %v8700 = vand.u32 %v4814, 4294901760
  %v8701 = vsub.f32 %v4814, %v8700
  %8702 = vmatpush2.msra.mxu0 %v8701
  %8703 = vmatprep.subr.mxu0 0.0
  %v8704 = vand.u32 %v4813, 4294901760
  %v8705 = vsub.f32 %v4813, %v8704
  %8706 = vmatpush2.msra.mxu0 %v8705
  %8707 = vmatprep.subr.mxu0 0.0
  %v8708 = vand.u32 %v4812, 4294901760
  %v8709 = vsub.f32 %v4812, %v8708
  %8710 = vmatpush2.msra.mxu0 %v8709
  %8711 = vmatprep.subr.mxu0 0.0
  %v8712 = vand.u32 %v4811, 4294901760
  %v8713 = vsub.f32 %v4811, %v8712
  %8714 = vmatpush2.msra.mxu0 %v8713
  %8715 = vmatprep.subr.mxu0 0.0
  %v8716 = vand.u32 %v4810, 4294901760
  %v8717 = vsub.f32 %v4810, %v8716
  %8718 = vmatpush2.msra.mxu0 %v8717
  %8719 = vmatprep.subr.mxu0 0.0
  %v8720 = vand.u32 %v4809, 4294901760
  %v8721 = vsub.f32 %v4809, %v8720
  %8722 = vmatpush2.msra.mxu0 %v8721
  %8723 = vmatprep.subr.mxu0 0.0
  %v8724 = vand.u32 %v4808, 4294901760
  %v8725 = vsub.f32 %v4808, %v8724
  %8726 = vmatpush2.msra.mxu0 %v8725
  %8727 = vmatprep.subr.mxu0 0.0
  %v8728 = vand.u32 %v4807, 4294901760
  %v8729 = vsub.f32 %v4807, %v8728
  %8730 = vmatpush2.msra.mxu0 %v8729
  %v8731 = vand.u32 %v4742, 4294901760
  %v8732 = vsub.f32 %v4742, %v8731
  %8733 = vmatprep.mubr.f32.mxu0 %v8732
  %v8734 = vand.u32 %v4741, 4294901760
  %v8735 = vsub.f32 %v4741, %v8734
  %8736 = vmatmul.mubr.f32.gmra.mxu0 %v8735
  %v8737 = vpop.f32.mrf.mxu0
  %v8738 = vadd.f32 %v8579, %v8737
  %v8739 = vpop.f32.mrf.mxu0
  %v8740 = vand.u32 %v4746, 4294901760
  %v8741 = vsub.f32 %v4746, %v8740
  %8742 = vmatprep.mubr.f32.mxu0 %v8741
  %v8743 = vand.u32 %v4745, 4294901760
  %v8744 = vsub.f32 %v4745, %v8743
  %8745 = vmatmul.mubr.f32.gmra.mxu0 %v8744
  %v8746 = vpop.f32.mrf.mxu0
  %v8747 = vadd.f32 %v8586, %v8746
  %v8748 = vpop.f32.mrf.mxu0
  %v8749 = vand.u32 %v4750, 4294901760
  %v8750 = vsub.f32 %v4750, %v8749
  %8751 = vmatprep.mubr.f32.mxu0 %v8750
  %v8752 = vand.u32 %v4749, 4294901760
  %v8753 = vsub.f32 %v4749, %v8752
  %8754 = vmatmul.mubr.f32.gmra.mxu0 %v8753
  %v8755 = vpop.f32.mrf.mxu0
  %v8756 = vadd.f32 %v8593, %v8755
  %v8757 = vpop.f32.mrf.mxu0
  %v8758 = vand.u32 %v4754, 4294901760
  %v8759 = vsub.f32 %v4754, %v8758
  %8760 = vmatprep.mubr.f32.mxu0 %v8759
  %v8761 = vand.u32 %v4753, 4294901760
  %v8762 = vsub.f32 %v4753, %v8761
  %8763 = vmatmul.mubr.f32.gmra.mxu0 %v8762
  %v8764 = vpop.f32.mrf.mxu0
  %v8765 = vadd.f32 %v8600, %v8764
  %v8766 = vpop.f32.mrf.mxu0
  %8767 = vdwg.mxu0
  %8768 = vmatprep.subr.mxu0 0.0
  %v8769 = vand.u32 %v4806, 4294901760
  %8770 = vmatpush1.msra.mxu0 %v8769
  %8771 = vmatprep.subr.mxu0 0.0
  %v8772 = vand.u32 %v4805, 4294901760
  %8773 = vmatpush1.msra.mxu0 %v8772
  %8774 = vmatprep.subr.mxu0 0.0
  %v8775 = vand.u32 %v4804, 4294901760
  %8776 = vmatpush1.msra.mxu0 %v8775
  %8777 = vmatprep.subr.mxu0 0.0
  %v8778 = vand.u32 %v4803, 4294901760
  %8779 = vmatpush1.msra.mxu0 %v8778
  %8780 = vmatprep.subr.mxu0 0.0
  %v8781 = vand.u32 %v4802, 4294901760
  %8782 = vmatpush1.msra.mxu0 %v8781
  %8783 = vmatprep.subr.mxu0 0.0
  %v8784 = vand.u32 %v4801, 4294901760
  %8785 = vmatpush1.msra.mxu0 %v8784
  %8786 = vmatprep.subr.mxu0 0.0
  %v8787 = vand.u32 %v4800, 4294901760
  %8788 = vmatpush1.msra.mxu0 %v8787
  %8789 = vmatprep.subr.mxu0 0.0
  %v8790 = vand.u32 %v4799, 4294901760
  %8791 = vmatpush1.msra.mxu0 %v8790
  %8792 = vmatprep.subr.mxu0 0.0
  %v8793 = vand.u32 %v4798, 4294901760
  %8794 = vmatpush1.msra.mxu0 %v8793
  %8795 = vmatprep.subr.mxu0 0.0
  %v8796 = vand.u32 %v4797, 4294901760
  %8797 = vmatpush1.msra.mxu0 %v8796
  %8798 = vmatprep.subr.mxu0 0.0
  %v8799 = vand.u32 %v4796, 4294901760
  %8800 = vmatpush1.msra.mxu0 %v8799
  %8801 = vmatprep.subr.mxu0 0.0
  %v8802 = vand.u32 %v4795, 4294901760
  %8803 = vmatpush1.msra.mxu0 %v8802
  %8804 = vmatprep.subr.mxu0 0.0
  %v8805 = vand.u32 %v4794, 4294901760
  %8806 = vmatpush1.msra.mxu0 %v8805
  %8807 = vmatprep.subr.mxu0 0.0
  %v8808 = vand.u32 %v4793, 4294901760
  %8809 = vmatpush1.msra.mxu0 %v8808
  %8810 = vmatprep.subr.mxu0 0.0
  %v8811 = vand.u32 %v4792, 4294901760
  %8812 = vmatpush1.msra.mxu0 %v8811
  %8813 = vmatprep.subr.mxu0 0.0
  %v8814 = vand.u32 %v4791, 4294901760
  %8815 = vmatpush1.msra.mxu0 %v8814
  %8816 = vmatprep.subr.mxu0 0.0
  %v8817 = vand.u32 %v4822, 4294901760
  %8818 = vmatpush2.msra.mxu0 %v8817
  %8819 = vmatprep.subr.mxu0 0.0
  %v8820 = vand.u32 %v4821, 4294901760
  %8821 = vmatpush2.msra.mxu0 %v8820
  %8822 = vmatprep.subr.mxu0 0.0
  %v8823 = vand.u32 %v4820, 4294901760
  %8824 = vmatpush2.msra.mxu0 %v8823
  %8825 = vmatprep.subr.mxu0 0.0
  %v8826 = vand.u32 %v4819, 4294901760
  %8827 = vmatpush2.msra.mxu0 %v8826
  %8828 = vmatprep.subr.mxu0 0.0
  %v8829 = vand.u32 %v4818, 4294901760
  %8830 = vmatpush2.msra.mxu0 %v8829
  %8831 = vmatprep.subr.mxu0 0.0
  %v8832 = vand.u32 %v4817, 4294901760
  %8833 = vmatpush2.msra.mxu0 %v8832
  %8834 = vmatprep.subr.mxu0 0.0
  %v8835 = vand.u32 %v4816, 4294901760
  %8836 = vmatpush2.msra.mxu0 %v8835
  %8837 = vmatprep.subr.mxu0 0.0
  %v8838 = vand.u32 %v4815, 4294901760
  %8839 = vmatpush2.msra.mxu0 %v8838
  %8840 = vmatprep.subr.mxu0 0.0
  %v8841 = vand.u32 %v4814, 4294901760
  %8842 = vmatpush2.msra.mxu0 %v8841
  %8843 = vmatprep.subr.mxu0 0.0
  %v8844 = vand.u32 %v4813, 4294901760
  %8845 = vmatpush2.msra.mxu0 %v8844
  %8846 = vmatprep.subr.mxu0 0.0
  %v8847 = vand.u32 %v4812, 4294901760
  %8848 = vmatpush2.msra.mxu0 %v8847
  %8849 = vmatprep.subr.mxu0 0.0
  %v8850 = vand.u32 %v4811, 4294901760
  %8851 = vmatpush2.msra.mxu0 %v8850
  %8852 = vmatprep.subr.mxu0 0.0
  %v8853 = vand.u32 %v4810, 4294901760
  %8854 = vmatpush2.msra.mxu0 %v8853
  %8855 = vmatprep.subr.mxu0 0.0
  %v8856 = vand.u32 %v4809, 4294901760
  %8857 = vmatpush2.msra.mxu0 %v8856
  %8858 = vmatprep.subr.mxu0 0.0
  %v8859 = vand.u32 %v4808, 4294901760
  %8860 = vmatpush2.msra.mxu0 %v8859
  %8861 = vmatprep.subr.mxu0 0.0
  %v8862 = vand.u32 %v4807, 4294901760
  %8863 = vmatpush2.msra.mxu0 %v8862
  %v8864 = vand.u32 %v4742, 4294901760
  %v8865 = vsub.f32 %v4742, %v8864
  %v8866 = vand.u32 %v8865, 4294901760
  %8867 = vmatprep.mubr.f32.mxu0 %v8866
  %v8868 = vand.u32 %v4741, 4294901760
  %v8869 = vsub.f32 %v4741, %v8868
  %v8870 = vand.u32 %v8869, 4294901760
  %8871 = vmatmul.mubr.f32.gmra.mxu0 %v8870
  %v8872 = vpop.f32.mrf.mxu0
  %v8873 = vadd.f32 %v8738, %v8872
  %v8874 = vpop.f32.mrf.mxu0
  %v8875 = vand.u32 %v4746, 4294901760
  %v8876 = vsub.f32 %v4746, %v8875
  %v8877 = vand.u32 %v8876, 4294901760
  %8878 = vmatprep.mubr.f32.mxu0 %v8877
  %v8879 = vand.u32 %v4745, 4294901760
  %v8880 = vsub.f32 %v4745, %v8879
  %v8881 = vand.u32 %v8880, 4294901760
  %8882 = vmatmul.mubr.f32.gmra.mxu0 %v8881
  %v8883 = vpop.f32.mrf.mxu0
  %v8884 = vadd.f32 %v8747, %v8883
  %v8885 = vpop.f32.mrf.mxu0
  %v8886 = vand.u32 %v4750, 4294901760
  %v8887 = vsub.f32 %v4750, %v8886
  %v8888 = vand.u32 %v8887, 4294901760
  %8889 = vmatprep.mubr.f32.mxu0 %v8888
  %v8890 = vand.u32 %v4749, 4294901760
  %v8891 = vsub.f32 %v4749, %v8890
  %v8892 = vand.u32 %v8891, 4294901760
  %8893 = vmatmul.mubr.f32.gmra.mxu0 %v8892
  %v8894 = vpop.f32.mrf.mxu0
  %v8895 = vadd.f32 %v8756, %v8894
  %v8896 = vpop.f32.mrf.mxu0
  %v8897 = vand.u32 %v4754, 4294901760
  %v8898 = vsub.f32 %v4754, %v8897
  %v8899 = vand.u32 %v8898, 4294901760
  %8900 = vmatprep.mubr.f32.mxu0 %v8899
  %v8901 = vand.u32 %v4753, 4294901760
  %v8902 = vsub.f32 %v4753, %v8901
  %v8903 = vand.u32 %v8902, 4294901760
  %8904 = vmatmul.mubr.f32.gmra.mxu0 %v8903
  %v8905 = vpop.f32.mrf.mxu0
  %v8906 = vadd.f32 %v8765, %v8905
  %v8907 = vpop.f32.mrf.mxu0
  %8908 = vdwg.mxu0
  %8909 = vmatprep.subr.mxu0 0.0
  %v8910 = vand.u32 %v4806, 4294901760
  %v8911 = vsub.f32 %v4806, %v8910
  %v8912 = vand.u32 %v8911, 4294901760
  %8913 = vmatpush1.msra.mxu0 %v8912
  %8914 = vmatprep.subr.mxu0 0.0
  %v8915 = vand.u32 %v4805, 4294901760
  %v8916 = vsub.f32 %v4805, %v8915
  %v8917 = vand.u32 %v8916, 4294901760
  %8918 = vmatpush1.msra.mxu0 %v8917
  %8919 = vmatprep.subr.mxu0 0.0
  %v8920 = vand.u32 %v4804, 4294901760
  %v8921 = vsub.f32 %v4804, %v8920
  %v8922 = vand.u32 %v8921, 4294901760
  %8923 = vmatpush1.msra.mxu0 %v8922
  %8924 = vmatprep.subr.mxu0 0.0
  %v8925 = vand.u32 %v4803, 4294901760
  %v8926 = vsub.f32 %v4803, %v8925
  %v8927 = vand.u32 %v8926, 4294901760
  %8928 = vmatpush1.msra.mxu0 %v8927
  %8929 = vmatprep.subr.mxu0 0.0
  %v8930 = vand.u32 %v4802, 4294901760
  %v8931 = vsub.f32 %v4802, %v8930
  %v8932 = vand.u32 %v8931, 4294901760
  %8933 = vmatpush1.msra.mxu0 %v8932
  %8934 = vmatprep.subr.mxu0 0.0
  %v8935 = vand.u32 %v4801, 4294901760
  %v8936 = vsub.f32 %v4801, %v8935
  %v8937 = vand.u32 %v8936, 4294901760
  %8938 = vmatpush1.msra.mxu0 %v8937
  %8939 = vmatprep.subr.mxu0 0.0
  %v8940 = vand.u32 %v4800, 4294901760
  %v8941 = vsub.f32 %v4800, %v8940
  %v8942 = vand.u32 %v8941, 4294901760
  %8943 = vmatpush1.msra.mxu0 %v8942
  %8944 = vmatprep.subr.mxu0 0.0
  %v8945 = vand.u32 %v4799, 4294901760
  %v8946 = vsub.f32 %v4799, %v8945
  %v8947 = vand.u32 %v8946, 4294901760
  %8948 = vmatpush1.msra.mxu0 %v8947
  %8949 = vmatprep.subr.mxu0 0.0
  %v8950 = vand.u32 %v4798, 4294901760
  %v8951 = vsub.f32 %v4798, %v8950
  %v8952 = vand.u32 %v8951, 4294901760
  %8953 = vmatpush1.msra.mxu0 %v8952
  %8954 = vmatprep.subr.mxu0 0.0
  %v8955 = vand.u32 %v4797, 4294901760
  %v8956 = vsub.f32 %v4797, %v8955
  %v8957 = vand.u32 %v8956, 4294901760
  %8958 = vmatpush1.msra.mxu0 %v8957
  %8959 = vmatprep.subr.mxu0 0.0
  %v8960 = vand.u32 %v4796, 4294901760
  %v8961 = vsub.f32 %v4796, %v8960
  %v8962 = vand.u32 %v8961, 4294901760
  %8963 = vmatpush1.msra.mxu0 %v8962
  %8964 = vmatprep.subr.mxu0 0.0
  %v8965 = vand.u32 %v4795, 4294901760
  %v8966 = vsub.f32 %v4795, %v8965
  %v8967 = vand.u32 %v8966, 4294901760
  %8968 = vmatpush1.msra.mxu0 %v8967
  %8969 = vmatprep.subr.mxu0 0.0
  %v8970 = vand.u32 %v4794, 4294901760
  %v8971 = vsub.f32 %v4794, %v8970
  %v8972 = vand.u32 %v8971, 4294901760
  %8973 = vmatpush1.msra.mxu0 %v8972
  %8974 = vmatprep.subr.mxu0 0.0
  %v8975 = vand.u32 %v4793, 4294901760
  %v8976 = vsub.f32 %v4793, %v8975
  %v8977 = vand.u32 %v8976, 4294901760
  %8978 = vmatpush1.msra.mxu0 %v8977
  %8979 = vmatprep.subr.mxu0 0.0
  %v8980 = vand.u32 %v4792, 4294901760
  %v8981 = vsub.f32 %v4792, %v8980
  %v8982 = vand.u32 %v8981, 4294901760
  %8983 = vmatpush1.msra.mxu0 %v8982
  %8984 = vmatprep.subr.mxu0 0.0
  %v8985 = vand.u32 %v4791, 4294901760
  %v8986 = vsub.f32 %v4791, %v8985
  %v8987 = vand.u32 %v8986, 4294901760
  %8988 = vmatpush1.msra.mxu0 %v8987
  %8989 = vmatprep.subr.mxu0 0.0
  %v8990 = vand.u32 %v4822, 4294901760
  %v8991 = vsub.f32 %v4822, %v8990
  %v8992 = vand.u32 %v8991, 4294901760
  %8993 = vmatpush2.msra.mxu0 %v8992
  %8994 = vmatprep.subr.mxu0 0.0
  %v8995 = vand.u32 %v4821, 4294901760
  %v8996 = vsub.f32 %v4821, %v8995
  %v8997 = vand.u32 %v8996, 4294901760
  %8998 = vmatpush2.msra.mxu0 %v8997
  %8999 = vmatprep.subr.mxu0 0.0
  %v9000 = vand.u32 %v4820, 4294901760
  %v9001 = vsub.f32 %v4820, %v9000
  %v9002 = vand.u32 %v9001, 4294901760
  %9003 = vmatpush2.msra.mxu0 %v9002
  %9004 = vmatprep.subr.mxu0 0.0
  %v9005 = vand.u32 %v4819, 4294901760
  %v9006 = vsub.f32 %v4819, %v9005
  %v9007 = vand.u32 %v9006, 4294901760
  %9008 = vmatpush2.msra.mxu0 %v9007
  %9009 = vmatprep.subr.mxu0 0.0
  %v9010 = vand.u32 %v4818, 4294901760
  %v9011 = vsub.f32 %v4818, %v9010
  %v9012 = vand.u32 %v9011, 4294901760
  %9013 = vmatpush2.msra.mxu0 %v9012
  %9014 = vmatprep.subr.mxu0 0.0
  %v9015 = vand.u32 %v4817, 4294901760
  %v9016 = vsub.f32 %v4817, %v9015
  %v9017 = vand.u32 %v9016, 4294901760
  %9018 = vmatpush2.msra.mxu0 %v9017
  %9019 = vmatprep.subr.mxu0 0.0
  %v9020 = vand.u32 %v4816, 4294901760
  %v9021 = vsub.f32 %v4816, %v9020
  %v9022 = vand.u32 %v9021, 4294901760
  %9023 = vmatpush2.msra.mxu0 %v9022
  %9024 = vmatprep.subr.mxu0 0.0
  %v9025 = vand.u32 %v4815, 4294901760
  %v9026 = vsub.f32 %v4815, %v9025
  %v9027 = vand.u32 %v9026, 4294901760
  %9028 = vmatpush2.msra.mxu0 %v9027
  %9029 = vmatprep.subr.mxu0 0.0
  %v9030 = vand.u32 %v4814, 4294901760
  %v9031 = vsub.f32 %v4814, %v9030
  %v9032 = vand.u32 %v9031, 4294901760
  %9033 = vmatpush2.msra.mxu0 %v9032
  %9034 = vmatprep.subr.mxu0 0.0
  %v9035 = vand.u32 %v4813, 4294901760
  %v9036 = vsub.f32 %v4813, %v9035
  %v9037 = vand.u32 %v9036, 4294901760
  %9038 = vmatpush2.msra.mxu0 %v9037
  %9039 = vmatprep.subr.mxu0 0.0
  %v9040 = vand.u32 %v4812, 4294901760
  %v9041 = vsub.f32 %v4812, %v9040
  %v9042 = vand.u32 %v9041, 4294901760
  %9043 = vmatpush2.msra.mxu0 %v9042
  %9044 = vmatprep.subr.mxu0 0.0
  %v9045 = vand.u32 %v4811, 4294901760
  %v9046 = vsub.f32 %v4811, %v9045
  %v9047 = vand.u32 %v9046, 4294901760
  %9048 = vmatpush2.msra.mxu0 %v9047
  %9049 = vmatprep.subr.mxu0 0.0
  %v9050 = vand.u32 %v4810, 4294901760
  %v9051 = vsub.f32 %v4810, %v9050
  %v9052 = vand.u32 %v9051, 4294901760
  %9053 = vmatpush2.msra.mxu0 %v9052
  %9054 = vmatprep.subr.mxu0 0.0
  %v9055 = vand.u32 %v4809, 4294901760
  %v9056 = vsub.f32 %v4809, %v9055
  %v9057 = vand.u32 %v9056, 4294901760
  %9058 = vmatpush2.msra.mxu0 %v9057
  %9059 = vmatprep.subr.mxu0 0.0
  %v9060 = vand.u32 %v4808, 4294901760
  %v9061 = vsub.f32 %v4808, %v9060
  %v9062 = vand.u32 %v9061, 4294901760
  %9063 = vmatpush2.msra.mxu0 %v9062
  %9064 = vmatprep.subr.mxu0 0.0
  %v9065 = vand.u32 %v4807, 4294901760
  %v9066 = vsub.f32 %v4807, %v9065
  %v9067 = vand.u32 %v9066, 4294901760
  %9068 = vmatpush2.msra.mxu0 %v9067
  %v9069 = vand.u32 %v4742, 4294901760
  %9070 = vmatprep.mubr.f32.mxu0 %v9069
  %v9071 = vand.u32 %v4741, 4294901760
  %9072 = vmatmul.mubr.f32.gmra.mxu0 %v9071
  %v9073 = vpop.f32.mrf.mxu0
  %v9074 = vadd.f32 %v8873, %v9073
  %v9075 = vpop.f32.mrf.mxu0
  %v9076 = vand.u32 %v4746, 4294901760
  %9077 = vmatprep.mubr.f32.mxu0 %v9076
  %v9078 = vand.u32 %v4745, 4294901760
  %9079 = vmatmul.mubr.f32.gmra.mxu0 %v9078
  %v9080 = vpop.f32.mrf.mxu0
  %v9081 = vadd.f32 %v8884, %v9080
  %v9082 = vpop.f32.mrf.mxu0
  %v9083 = vand.u32 %v4750, 4294901760
  %9084 = vmatprep.mubr.f32.mxu0 %v9083
  %v9085 = vand.u32 %v4749, 4294901760
  %9086 = vmatmul.mubr.f32.gmra.mxu0 %v9085
  %v9087 = vpop.f32.mrf.mxu0
  %v9088 = vadd.f32 %v8895, %v9087
  %v9089 = vpop.f32.mrf.mxu0
  %v9090 = vand.u32 %v4754, 4294901760
  %9091 = vmatprep.mubr.f32.mxu0 %v9090
  %v9092 = vand.u32 %v4753, 4294901760
  %9093 = vmatmul.mubr.f32.gmra.mxu0 %v9092
  %v9094 = vpop.f32.mrf.mxu0
  %v9095 = vadd.f32 %v8906, %v9094
  %v9096 = vpop.f32.mrf.mxu0
  %9097 = vdwg.mxu0
  %9098 = vmatprep.subr.mxu0 0.0
  %v9099 = vand.u32 %v4806, 4294901760
  %9100 = vmatpush1.msra.mxu0 %v9099
  %9101 = vmatprep.subr.mxu0 0.0
  %v9102 = vand.u32 %v4805, 4294901760
  %9103 = vmatpush1.msra.mxu0 %v9102
  %9104 = vmatprep.subr.mxu0 0.0
  %v9105 = vand.u32 %v4804, 4294901760
  %9106 = vmatpush1.msra.mxu0 %v9105
  %9107 = vmatprep.subr.mxu0 0.0
  %v9108 = vand.u32 %v4803, 4294901760
  %9109 = vmatpush1.msra.mxu0 %v9108
  %9110 = vmatprep.subr.mxu0 0.0
  %v9111 = vand.u32 %v4802, 4294901760
  %9112 = vmatpush1.msra.mxu0 %v9111
  %9113 = vmatprep.subr.mxu0 0.0
  %v9114 = vand.u32 %v4801, 4294901760
  %9115 = vmatpush1.msra.mxu0 %v9114
  %9116 = vmatprep.subr.mxu0 0.0
  %v9117 = vand.u32 %v4800, 4294901760
  %9118 = vmatpush1.msra.mxu0 %v9117
  %9119 = vmatprep.subr.mxu0 0.0
  %v9120 = vand.u32 %v4799, 4294901760
  %9121 = vmatpush1.msra.mxu0 %v9120
  %9122 = vmatprep.subr.mxu0 0.0
  %v9123 = vand.u32 %v4798, 4294901760
  %9124 = vmatpush1.msra.mxu0 %v9123
  %9125 = vmatprep.subr.mxu0 0.0
  %v9126 = vand.u32 %v4797, 4294901760
  %9127 = vmatpush1.msra.mxu0 %v9126
  %9128 = vmatprep.subr.mxu0 0.0
  %v9129 = vand.u32 %v4796, 4294901760
  %9130 = vmatpush1.msra.mxu0 %v9129
  %9131 = vmatprep.subr.mxu0 0.0
  %v9132 = vand.u32 %v4795, 4294901760
  %9133 = vmatpush1.msra.mxu0 %v9132
  %9134 = vmatprep.subr.mxu0 0.0
  %v9135 = vand.u32 %v4794, 4294901760
  %9136 = vmatpush1.msra.mxu0 %v9135
  %9137 = vmatprep.subr.mxu0 0.0
  %v9138 = vand.u32 %v4793, 4294901760
  %9139 = vmatpush1.msra.mxu0 %v9138
  %9140 = vmatprep.subr.mxu0 0.0
  %v9141 = vand.u32 %v4792, 4294901760
  %9142 = vmatpush1.msra.mxu0 %v9141
  %9143 = vmatprep.subr.mxu0 0.0
  %v9144 = vand.u32 %v4791, 4294901760
  %9145 = vmatpush1.msra.mxu0 %v9144
  %9146 = vmatprep.subr.mxu0 0.0
  %v9147 = vand.u32 %v4822, 4294901760
  %9148 = vmatpush2.msra.mxu0 %v9147
  %9149 = vmatprep.subr.mxu0 0.0
  %v9150 = vand.u32 %v4821, 4294901760
  %9151 = vmatpush2.msra.mxu0 %v9150
  %9152 = vmatprep.subr.mxu0 0.0
  %v9153 = vand.u32 %v4820, 4294901760
  %9154 = vmatpush2.msra.mxu0 %v9153
  %9155 = vmatprep.subr.mxu0 0.0
  %v9156 = vand.u32 %v4819, 4294901760
  %9157 = vmatpush2.msra.mxu0 %v9156
  %9158 = vmatprep.subr.mxu0 0.0
  %v9159 = vand.u32 %v4818, 4294901760
  %9160 = vmatpush2.msra.mxu0 %v9159
  %9161 = vmatprep.subr.mxu0 0.0
  %v9162 = vand.u32 %v4817, 4294901760
  %9163 = vmatpush2.msra.mxu0 %v9162
  %9164 = vmatprep.subr.mxu0 0.0
  %v9165 = vand.u32 %v4816, 4294901760
  %9166 = vmatpush2.msra.mxu0 %v9165
  %9167 = vmatprep.subr.mxu0 0.0
  %v9168 = vand.u32 %v4815, 4294901760
  %9169 = vmatpush2.msra.mxu0 %v9168
  %9170 = vmatprep.subr.mxu0 0.0
  %v9171 = vand.u32 %v4814, 4294901760
  %9172 = vmatpush2.msra.mxu0 %v9171
  %9173 = vmatprep.subr.mxu0 0.0
  %v9174 = vand.u32 %v4813, 4294901760
  %9175 = vmatpush2.msra.mxu0 %v9174
  %9176 = vmatprep.subr.mxu0 0.0
  %v9177 = vand.u32 %v4812, 4294901760
  %9178 = vmatpush2.msra.mxu0 %v9177
  %9179 = vmatprep.subr.mxu0 0.0
  %v9180 = vand.u32 %v4811, 4294901760
  %9181 = vmatpush2.msra.mxu0 %v9180
  %9182 = vmatprep.subr.mxu0 0.0
  %v9183 = vand.u32 %v4810, 4294901760
  %9184 = vmatpush2.msra.mxu0 %v9183
  %9185 = vmatprep.subr.mxu0 0.0
  %v9186 = vand.u32 %v4809, 4294901760
  %9187 = vmatpush2.msra.mxu0 %v9186
  %9188 = vmatprep.subr.mxu0 0.0
  %v9189 = vand.u32 %v4808, 4294901760
  %9190 = vmatpush2.msra.mxu0 %v9189
  %9191 = vmatprep.subr.mxu0 0.0
  %v9192 = vand.u32 %v4807, 4294901760
  %9193 = vmatpush2.msra.mxu0 %v9192
  %v9194 = vand.u32 %v4742, 4294901760
  %9195 = vmatprep.mubr.f32.mxu0 %v9194
  %v9196 = vand.u32 %v4741, 4294901760
  %9197 = vmatmul.mubr.f32.gmra.mxu0 %v9196
  %v9198 = vpop.f32.mrf.mxu0
  %v9199 = vadd.f32 %v9074, %v9198
  %v9200 = vpop.f32.mrf.mxu0
  %v9201 = vand.u32 %v4746, 4294901760
  %9202 = vmatprep.mubr.f32.mxu0 %v9201
  %v9203 = vand.u32 %v4745, 4294901760
  %9204 = vmatmul.mubr.f32.gmra.mxu0 %v9203
  %v9205 = vpop.f32.mrf.mxu0
  %v9206 = vadd.f32 %v9081, %v9205
  %v9207 = vpop.f32.mrf.mxu0
  %v9208 = vand.u32 %v4750, 4294901760
  %9209 = vmatprep.mubr.f32.mxu0 %v9208
  %v9210 = vand.u32 %v4749, 4294901760
  %9211 = vmatmul.mubr.f32.gmra.mxu0 %v9210
  %v9212 = vpop.f32.mrf.mxu0
  %v9213 = vadd.f32 %v9088, %v9212
  %v9214 = vpop.f32.mrf.mxu0
  %v9215 = vand.u32 %v4754, 4294901760
  %9216 = vmatprep.mubr.f32.mxu0 %v9215
  %v9217 = vand.u32 %v4753, 4294901760
  %9218 = vmatmul.mubr.f32.gmra.mxu0 %v9217
  %v9219 = vpop.f32.mrf.mxu0
  %v9220 = vadd.f32 %v9095, %v9219
  %v9221 = vpop.f32.mrf.mxu0
  %9222 = vdwg.mxu0
  %v9223 = vmul.f32 %v9199, 0.70710677
  %v9224 = vmul.f32 %v9206, 0.70710677
  %v9225 = vmul.f32 %v9213, 0.70710677
  %v9226 = vmul.f32 %v9220, 0.70710677
  %9227 = vst [vmem:[%s7] sm:$0xff] %v9223
  %9228 = vst [vmem:[%s7 + $0x8] sm:$0xff] %v9224
  %9229 = vst [vmem:[%s7 + $0x10] sm:$0xff] %v9225
  %9230 = vst [vmem:[%s7 + $0x18] sm:$0xff] %v9226
  // Predicated region
  $region30: #{residual_coordconv_block.3} parent=0 // pred_check
    _
  $region31: #{residual_coordconv_block.3} parent=0 // pred_check_branch
    %9232 = sbr.rel (0) target = $region33
  $region32: #{residual_coordconv_block.3} parent=0 // pred_region
    _
  $region33: #{residual_coordconv_block.3} parent=0 // pred_fallthru
    _
  // Predicated region
  $region34: #{residual_coordconv_block.3} parent=0 // pred_check
    _
  $region35: #{residual_coordconv_block.3} parent=0 // pred_check_branch
    %9234 = sbr.rel (0) target = $region37
  $region36: #{residual_coordconv_block.3} parent=0 // pred_region
    _
  $region37: #{residual_coordconv_block.3} parent=0 // pred_fallthru
    _

</llo_original>
